<compile_context>
chip_gen: v7x
topology: tpu7x:2x2x1
jax: 0.10.0
libtpu: 0.0.40
codegen_flags: <defaults>
</compile_context>

<pallas_src>
import numpy as np
import jax
import jax.numpy as jnp
from jax.experimental import pallas as pl
from jax.experimental.pallas import tpu as pltpu

# ----------------------------- static geometry -----------------------------
N = 2                        # batch
H0, W0 = 16, 16              # input spatial size
H_ROWS = 16                  # every layer is evaluated on 16 output rows per image
R = N * H_ROWS               # batch-stacked matmul M dimension (= 32)
W_OUT_FINAL = 15             # final output width (16x16 -> 8x8 -> ConvT(op=(1,0)) -> 16x15)

_LAYER_ORDER = ("e1", "e2", "e3", "d1", "d2", "d3")
# name -> (kind, ic, oc, w_in, w_out, stride_w, pad_w)
_LAYER_CFG = {
    "e1": ("conv",  1,  4,  16, 16, 1, 1),
    "e2": ("conv",  4,  16, 16, 16, 1, 1),
    "e3": ("conv",  16, 64, 16, 8,  2, 1),   # W-stride 2 folded into G; H-stride via even-row mask
    "d1": ("convT", 64, 16, 8,  15, 2, 1),   # output_padding=(1,0) handled by the geometry
    "d2": ("conv",  16, 4,  15, 15, 1, 1),
    "d3": ("conv",  4,  1,  15, 15, 1, 1),
}
# decoder G's are DMA'd manually so their load overlaps with the encoder compute
_HBM_WEIGHTS = frozenset({"d1", "d2", "d3"})


# ----------------------- host-side weight preparation -----------------------

def _conv_toeplitz(w_oihw, w_in, w_out, stride, pad):
    """Conv2d weight (oc, ic, kh, kw) -> G of shape (kh, w_in*ic, w_out*oc)."""
    oc, ic, kh, kw = w_oihw.shape
    wt = np.transpose(np.asarray(w_oihw, np.float32), (2, 3, 1, 0))      # (kh, kw, ic, oc)
    g = np.zeros((kh, w_in * ic, w_out * oc), np.float32)
    for dh in range(kh):
        for wo in range(w_out):
            for dw in range(kw):
                wi = wo * stride + dw - pad
                if 0 <= wi < w_in:
                    g[dh, wi * ic:(wi + 1) * ic, wo * oc:(wo + 1) * oc] = wt[dh, dw]
    return g


def _convT_toeplitz(w_iohw, w_in, w_out, stride, pad):
    """ConvTranspose2d weight (ic, oc, kh, kw) as stride-1 correlation with flipped
    weights; W zero-insertion and asymmetric W padding folded into G."""
    ic, oc, kh, kw = w_iohw.shape
    wflip = np.transpose(np.asarray(w_iohw, np.float32)[:, :, ::-1, ::-1], (2, 3, 0, 1))
    wd = (w_in - 1) * stride + 1          # dilated width
    pad_l = kw - 1 - pad                  # left pad of the equivalent correlation
    g = np.zeros((kh, w_in * ic, w_out * oc), np.float32)
    for dh in range(kh):
        for wo in range(w_out):
            for dw in range(kw):
                j = wo + dw - pad_l       # position on the dilated axis
                if 0 <= j < wd and j % stride == 0:
                    wi = j // stride
                    g[dh, wi * ic:(wi + 1) * ic, wo * oc:(wo + 1) * oc] = wflip[dh, dw]
    return g


def prepare_params(params):
    """One-time (numpy) conversion of PyTorch-layout params to kernel inputs."""
    prep = {}
    rows = np.arange(R)
    # even-row mask: applies the e3 H-stride-2 AND the ConvTranspose H zero-insertion
    prep["hmask"] = jnp.asarray(((rows % 2) == 0).astype(np.float32)[:, None])
    # (32,32) shift matrices: S_dn @ P shifts rows down by 1, S_up @ P shifts rows up by 1,
    # with the per-image top/bottom zero halo and the image boundary handled by zero rows.
    sdn = np.zeros((R, R), np.float32)
    sup = np.zeros((R, R), np.float32)
    for i in range(R):
        if i % H_ROWS != 0:
            sdn[i, i - 1] = 1.0
        if i % H_ROWS != H_ROWS - 1:
            sup[i, i + 1] = 1.0
    prep["sdn"] = jnp.asarray(sdn)
    prep["sup"] = jnp.asarray(sup)

    for name in _LAYER_ORDER:
        kind, _ic, _oc, w_in, w_out, stride, pad = _LAYER_CFG[name]
        w, b = params[name]
        build = _conv_toeplitz if kind == "conv" else _convT_toeplitz
        g = build(w, w_in, w_out, stride, pad)
        b_row = np.tile(np.asarray(b, np.float32), w_out)[None, :]       # (1, w_out*oc)
        prep[name] = (jnp.asarray(g, jnp.bfloat16),                      # bf16 Toeplitz weight
                      jnp.asarray(b_row, jnp.float32))                   # f32 bias row
    return prep


# -------------------------------- the kernel --------------------------------

def _simple_conv_kernel(x_ref, hmask_ref, sdn_ref, sup_ref,
                        g1, b1, g2, b2, g3, b3,
                        g4_hbm, b4, g5_hbm, b5, g6_hbm, b6,
                        o_ref,
                        vg4, vg5, vg6, dma_sem):
    # Kick off decoder-weight HBM->VMEM DMAs now; they overlap with the encoder matmuls
    # and are waited on individually right before each decoder layer.
    cp_d1 = pltpu.make_async_copy(g4_hbm, vg4, dma_sem.at[0])
    cp_d2 = pltpu.make_async_copy(g5_hbm, vg5, dma_sem.at[1])
    cp_d3 = pltpu.make_async_copy(g6_hbm, vg6, dma_sem.at[2])
    cp_d1.start(); cp_d2.start(); cp_d3.start()

    sdn = sdn_ref[...]          # (32, 32) f32
    sup = sup_ref[...]          # (32, 32) f32

    def layer(a, g_ref, b_ref):
        # a: (32, w_in*c_in) bf16.  One bf16 MXU matmul per kh tap (batch folded into
        # M=32); the +-1 H-shift of the dh=0/2 taps is applied to the f32 tap results
        # with tiny (32,32) shift matmuls, so there are no sublane-unaligned reads.
        p0 = jnp.dot(a, g_ref[0], preferred_element_type=jnp.float32)
        p1 = jnp.dot(a, g_ref[1], preferred_element_type=jnp.float32)
        p2 = jnp.dot(a, g_ref[2], preferred_element_type=jnp.float32)
        acc = (p1
               + jnp.dot(sdn, p0, preferred_element_type=jnp.float32)
               + jnp.dot(sup, p2, preferred_element_type=jnp.float32))
        return jnp.maximum(acc + b_ref[...], 0.0)            # f32 bias + ReLU (VPU)

    # ---- encoder ----
    a = x_ref[...]                                           # (32, 16)  bf16
    a = layer(a, g1, b1).astype(jnp.bfloat16)                # e1 -> (32, 64)
    a = layer(a, g2, b2).astype(jnp.bfloat16)                # e2 -> (32, 256)
    # e3 at H-stride 1 times the even-row mask == the zero-dilated ConvTranspose input
    # (the encoder H-stride-2 and the decoder H zero-insertion cancel); the masked row 15
    # is also the op=(1,0) bottom padding row.
    a = (layer(a, g3, b3) * hmask_ref[...]).astype(jnp.bfloat16)   # e3 -> (32, 512)

    # ---- decoder ----
    cp_d1.wait()
    a = layer(a, vg4, b4).astype(jnp.bfloat16)               # d1 -> (32, 240)
    cp_d2.wait()
    a = layer(a, vg5, b5).astype(jnp.bfloat16)               # d2 -> (32, 60)
    cp_d3.wait()
    o_ref[...] = layer(a, vg6, b6)                           # d3 -> (32, 15) f32


# ------------------------------ forward wrapper ------------------------------

@jax.jit
def simple_conv_forward(prep, x_nchw):
    # ic == 1: NCHW (N,1,H,W) -> batch-stacked kernel layout (N*H, W*C) = (32, 16)
    x = x_nchw[:, 0, :, :].reshape(R, W0).astype(jnp.bfloat16)

    inputs, in_specs = [], []

    def add(arr, *, hbm=False):
        inputs.append(arr)
        if hbm:
            in_specs.append(pl.BlockSpec(memory_space=pl.ANY))
        else:
            nd = arr.ndim
            in_specs.append(pl.BlockSpec(arr.shape, lambda i, _nd=nd: (0,) * _nd))

    add(x); add(prep["hmask"]); add(prep["sdn"]); add(prep["sup"])
    for name in _LAYER_ORDER:
        g, b = prep[name]
        add(g, hbm=(name in _HBM_WEIGHTS))
        add(b)

    out = pl.pallas_call(
        _simple_conv_kernel,
        out_shape=jax.ShapeDtypeStruct((R, W_OUT_FINAL), jnp.float32),
        grid=(1,),
        in_specs=in_specs,
        out_specs=pl.BlockSpec((R, W_OUT_FINAL), lambda i: (0, 0)),
        scratch_shapes=[
            pltpu.VMEM(prep["d1"][0].shape, jnp.bfloat16),   # d1 G landing buffer
            pltpu.VMEM(prep["d2"][0].shape, jnp.bfloat16),   # d2 G landing buffer
            pltpu.VMEM(prep["d3"][0].shape, jnp.bfloat16),   # d3 G landing buffer
            pltpu.SemaphoreType.DMA((3,)),
        ],
        compiler_params=pltpu.CompilerParams(dimension_semantics=("arbitrary",)),
    )(*inputs)
    return out.reshape(N, H_ROWS, W_OUT_FINAL)[:, None, :, :]     # NCHW (N, 1, 16, 15)


# ----------------------------- params & reference -----------------------------

def init_params(key):
    def conv_w(k, oc, ic, ksz):
        fan_in = ic * ksz * ksz
        kw_, kb_ = jax.random.split(k)
        w = jax.random.normal(kw_, (oc, ic, ksz, ksz), jnp.float32) / np.sqrt(fan_in)
        b = jax.random.normal(kb_, (oc,), jnp.float32) * 0.05
        return w, b

    keys = jax.random.split(key, 6)
    p = {}
    p["e1"] = conv_w(keys[0], 4, 1, 3)     # ConvBlock(1 -> 4,  k=3, s=1, p='same')
    p["e2"] = conv_w(keys[1], 16, 4, 3)    # ConvBlock(4 -> 16, k=3, s=1, p='same')
    p["e3"] = conv_w(keys[2], 64, 16, 3)   # ConvBlock(16 -> 64, k=3, s=2, p=1)
    kw_, kb_ = jax.random.split(keys[3])   # ConvTransposeBlock(64 -> 16, k=3, s=2, p=1, op=(1,0))
    p["d1"] = (jax.random.normal(kw_, (64, 16, 3, 3), jnp.float32) / np.sqrt(64 * 9),
               jax.random.normal(kb_, (16,), jnp.float32) * 0.05)
    p["d2"] = conv_w(keys[4], 4, 16, 3)    # ConvBlock(16 -> 4, k=3, s=1, p='same')
    p["d3"] = conv_w(keys[5], 1, 4, 3)     # ConvBlock(4 -> 1,  k=3, s=1, p='same')
    return p


def ref_forward(params, x_nchw, *, compute_dtype=jnp.float32):
    """Pure-XLA reference.  compute_dtype=bfloat16 mirrors the kernel's numerics
    (bf16 conv operands, f32 accumulation, f32 bias + ReLU between layers)."""
    cast = lambda a: a.astype(compute_dtype)
    x = jnp.transpose(x_nchw, (0, 2, 3, 1)).astype(jnp.float32)

    def conv(x, w_oihw, b, stride, pad):
        w = jnp.transpose(w_oihw, (2, 3, 1, 0))  # HWIO
        y = jax.lax.conv_general_dilated(
            cast(x), cast(w), (stride, stride), [(pad, pad), (pad, pad)],
            dimension_numbers=("NHWC", "HWIO", "NHWC"),
            preferred_element_type=jnp.float32)
        return jax.nn.relu(y + b)

    def convT(x, w_iohw, b, stride, pad, out_pad):
        k = w_iohw.shape[2]
        w = jnp.transpose(jnp.flip(w_iohw, axis=(2, 3)), (2, 3, 0, 1))
        ph = k - 1 - pad
        y = jax.lax.conv_general_dilated(
            cast(x), cast(w), (1, 1),
            [(ph, ph + out_pad[0]), (ph, ph + out_pad[1])],
            lhs_dilation=(stride, stride),
            dimension_numbers=("NHWC", "HWIO", "NHWC"),
            preferred_element_type=jnp.float32)
        return jax.nn.relu(y + b)

    x = conv(x, *params["e1"], 1, 1)
    x = conv(x, *params["e2"], 1, 1)
    x = conv(x, *params["e3"], 2, 1)
    x = convT(x, *params["d1"], 2, 1, (1, 0))
    x = conv(x, *params["d2"], 1, 1)
    x = conv(x, *params["d3"], 1, 1)
    return jnp.transpose(x, (0, 3, 1, 2))


if __name__ == "__main__":
    key = jax.random.PRNGKey(0)
    pkey, xkey = jax.random.split(key)
    params = init_params(pkey)
    prep = prepare_params(params)

    # ic=1 -> input NCHW (batch=2, channels=1, H=16, W=16)
    x = jax.random.normal(xkey, (N, 1, H0, W0), jnp.float32)

    out = jax.block_until_ready(simple_conv_forward(prep, x))
    # PyTorch shape trace: 16x16 -> (s=2) 8x8 -> ConvT(s=2, op=(1,0)) -> 16x15
    assert out.shape == (N, 1, 16, 15), out.shape

    # Tight check vs a precision-matched reference (bf16 weights/activations, f32 accum):
    # catches any Toeplitz / padding / output_padding / shift-geometry bug.
    ref_bf16 = jax.block_until_ready(ref_forward(params, x, compute_dtype=jnp.bfloat16))
    np.testing.assert_allclose(np.asarray(out), np.asarray(ref_bf16), atol=5e-3, rtol=5e-3)

    # Loose sanity check vs the full-f32 reference: bounds the bf16 quantization error.
    ref_f32 = jax.block_until_ready(ref_forward(params, x))
    np.testing.assert_allclose(np.asarray(out), np.asarray(ref_f32), atol=5e-2, rtol=5e-2)

    print("KERNEL_OK")
</pallas_src>

<mosaic_0001>
module attributes {stable_mosaic.version = 11 : i64} {
  func.func @_simple_conv_kernel(%arg0: i32, %arg1: memref<32x16xbf16, #tpu.memory_space<vmem>>, %arg2: memref<32x1xf32, #tpu.memory_space<vmem>>, %arg3: memref<32x32xf32, #tpu.memory_space<vmem>>, %arg4: memref<32x32xf32, #tpu.memory_space<vmem>>, %arg5: memref<3x16x64xbf16, #tpu.memory_space<vmem>>, %arg6: memref<1x64xf32, #tpu.memory_space<vmem>>, %arg7: memref<3x64x256xbf16, #tpu.memory_space<vmem>>, %arg8: memref<1x256xf32, #tpu.memory_space<vmem>>, %arg9: memref<3x256x512xbf16, #tpu.memory_space<vmem>>, %arg10: memref<1x512xf32, #tpu.memory_space<vmem>>, %arg11: memref<3x512x240xbf16, #tpu.memory_space<any>>, %arg12: memref<1x240xf32, #tpu.memory_space<vmem>>, %arg13: memref<3x240x60xbf16, #tpu.memory_space<any>>, %arg14: memref<1x60xf32, #tpu.memory_space<vmem>>, %arg15: memref<3x60x15xbf16, #tpu.memory_space<any>>, %arg16: memref<1x15xf32, #tpu.memory_space<vmem>>, %arg17: memref<32x15xf32, #tpu.memory_space<vmem>>, %arg18: memref<3x512x240xbf16, #tpu.memory_space<vmem>>, %arg19: memref<3x240x60xbf16, #tpu.memory_space<vmem>>, %arg20: memref<3x60x15xbf16, #tpu.memory_space<vmem>>, %arg21: memref<3x!tpu.dma_semaphore, #tpu.memory_space<semaphore_mem>>) attributes {dimension_semantics = [#tpu.dimension_semantics<arbitrary>], iteration_bounds = array<i64: 1>, scalar_prefetch = 0 : i64, scratch_operands = 4 : i64, tpu.core_type = #tpu.core_type<tc>, window_params = [{pipeline_mode = #tpu.pipeline_mode<synchronous>, transform_indices = @transform_0, window_bounds = array<i64: 32, 16>}, {pipeline_mode = #tpu.pipeline_mode<synchronous>, transform_indices = @transform_1, window_bounds = array<i64: 32, 1>}, {pipeline_mode = #tpu.pipeline_mode<synchronous>, transform_indices = @transform_2, window_bounds = array<i64: 32, 32>}, {pipeline_mode = #tpu.pipeline_mode<synchronous>, transform_indices = @transform_3, window_bounds = array<i64: 32, 32>}, {pipeline_mode = #tpu.pipeline_mode<synchronous>, transform_indices = @transform_4, window_bounds = array<i64: 3, 16, 64>}, {pipeline_mode = #tpu.pipeline_mode<synchronous>, transform_indices = @transform_5, window_bounds = array<i64: 1, 64>}, {pipeline_mode = #tpu.pipeline_mode<synchronous>, transform_indices = @transform_6, window_bounds = array<i64: 3, 64, 256>}, {pipeline_mode = #tpu.pipeline_mode<synchronous>, transform_indices = @transform_7, window_bounds = array<i64: 1, 256>}, {pipeline_mode = #tpu.pipeline_mode<synchronous>, transform_indices = @transform_8, window_bounds = array<i64: 3, 256, 512>}, {pipeline_mode = #tpu.pipeline_mode<synchronous>, transform_indices = @transform_9, window_bounds = array<i64: 1, 512>}, {}, {pipeline_mode = #tpu.pipeline_mode<synchronous>, transform_indices = @transform_11, window_bounds = array<i64: 1, 240>}, {}, {pipeline_mode = #tpu.pipeline_mode<synchronous>, transform_indices = @transform_13, window_bounds = array<i64: 1, 60>}, {}, {pipeline_mode = #tpu.pipeline_mode<synchronous>, transform_indices = @transform_15, window_bounds = array<i64: 1, 15>}, {pipeline_mode = #tpu.pipeline_mode<synchronous>, transform_indices = @transform_16, window_bounds = array<i64: 32, 15>}]} {
    %c0_i32 = arith.constant 0 : i32
    %0 = tpu.memref_slice %arg21[%c0_i32] : memref<3x!tpu.dma_semaphore, #tpu.memory_space<semaphore_mem>> -> memref<1x!tpu.dma_semaphore, #tpu.memory_space<semaphore_mem>>
    %1 = tpu.memref_squeeze %0 : memref<1x!tpu.dma_semaphore, #tpu.memory_space<semaphore_mem>> -> memref<!tpu.dma_semaphore, #tpu.memory_space<semaphore_mem>>
    tpu.enqueue_dma source(%arg11 : memref<3x512x240xbf16, #tpu.memory_space<any>>) target(%arg18 : memref<3x512x240xbf16, #tpu.memory_space<vmem>>) target_semaphore(%1 : memref<!tpu.dma_semaphore, #tpu.memory_space<semaphore_mem>>)
    %c1_i32 = arith.constant 1 : i32
    %2 = tpu.memref_slice %arg21[%c1_i32] : memref<3x!tpu.dma_semaphore, #tpu.memory_space<semaphore_mem>> -> memref<1x!tpu.dma_semaphore, #tpu.memory_space<semaphore_mem>>
    %3 = tpu.memref_squeeze %2 : memref<1x!tpu.dma_semaphore, #tpu.memory_space<semaphore_mem>> -> memref<!tpu.dma_semaphore, #tpu.memory_space<semaphore_mem>>
    tpu.enqueue_dma source(%arg13 : memref<3x240x60xbf16, #tpu.memory_space<any>>) target(%arg19 : memref<3x240x60xbf16, #tpu.memory_space<vmem>>) target_semaphore(%3 : memref<!tpu.dma_semaphore, #tpu.memory_space<semaphore_mem>>)
    %c2_i32 = arith.constant 2 : i32
    %4 = tpu.memref_slice %arg21[%c2_i32] : memref<3x!tpu.dma_semaphore, #tpu.memory_space<semaphore_mem>> -> memref<1x!tpu.dma_semaphore, #tpu.memory_space<semaphore_mem>>
    %5 = tpu.memref_squeeze %4 : memref<1x!tpu.dma_semaphore, #tpu.memory_space<semaphore_mem>> -> memref<!tpu.dma_semaphore, #tpu.memory_space<semaphore_mem>>
    tpu.enqueue_dma source(%arg15 : memref<3x60x15xbf16, #tpu.memory_space<any>>) target(%arg20 : memref<3x60x15xbf16, #tpu.memory_space<vmem>>) target_semaphore(%5 : memref<!tpu.dma_semaphore, #tpu.memory_space<semaphore_mem>>)
    %c0 = arith.constant 0 : index
    %c0_0 = arith.constant 0 : index
    %6 = vector.load %arg3[%c0, %c0_0] : memref<32x32xf32, #tpu.memory_space<vmem>>, vector<32x32xf32>
    %c0_1 = arith.constant 0 : index
    %c0_2 = arith.constant 0 : index
    %7 = vector.load %arg4[%c0_1, %c0_2] : memref<32x32xf32, #tpu.memory_space<vmem>>, vector<32x32xf32>
    %c0_3 = arith.constant 0 : index
    %c0_4 = arith.constant 0 : index
    %8 = vector.load %arg1[%c0_3, %c0_4] : memref<32x16xbf16, #tpu.memory_space<vmem>>, vector<32x16xbf16>
    %c0_5 = arith.constant 0 : index
    %c0_6 = arith.constant 0 : index
    %c0_7 = arith.constant 0 : index
    %9 = vector.load %arg5[%c0_5, %c0_6, %c0_7] : memref<3x16x64xbf16, #tpu.memory_space<vmem>>, vector<1x16x64xbf16>
    %10 = vector.shape_cast %9 : vector<1x16x64xbf16> to vector<16x64xbf16>
    %cst = arith.constant dense<0.000000e+00> : vector<32x64xf32>
    %11 = tpu.matmul %8, %10, %cst {dimension_numbers = #tpu.dot_dimension_numbers<[1], [0], [0], [1], [0, 0, 1, 1], [], []>} : vector<32x16xbf16>, vector<16x64xbf16>, vector<32x64xf32> -> vector<32x64xf32>
    %c1 = arith.constant 1 : index
    %c0_8 = arith.constant 0 : index
    %c0_9 = arith.constant 0 : index
    %12 = vector.load %arg5[%c1, %c0_8, %c0_9] : memref<3x16x64xbf16, #tpu.memory_space<vmem>>, vector<1x16x64xbf16>
    %13 = vector.shape_cast %12 : vector<1x16x64xbf16> to vector<16x64xbf16>
    %cst_10 = arith.constant dense<0.000000e+00> : vector<32x64xf32>
    %14 = tpu.matmul %8, %13, %cst_10 {dimension_numbers = #tpu.dot_dimension_numbers<[1], [0], [0], [1], [0, 0, 1, 1], [], []>} : vector<32x16xbf16>, vector<16x64xbf16>, vector<32x64xf32> -> vector<32x64xf32>
    %c2 = arith.constant 2 : index
    %c0_11 = arith.constant 0 : index
    %c0_12 = arith.constant 0 : index
    %15 = vector.load %arg5[%c2, %c0_11, %c0_12] : memref<3x16x64xbf16, #tpu.memory_space<vmem>>, vector<1x16x64xbf16>
    %16 = vector.shape_cast %15 : vector<1x16x64xbf16> to vector<16x64xbf16>
    %cst_13 = arith.constant dense<0.000000e+00> : vector<32x64xf32>
    %17 = tpu.matmul %8, %16, %cst_13 {dimension_numbers = #tpu.dot_dimension_numbers<[1], [0], [0], [1], [0, 0, 1, 1], [], []>} : vector<32x16xbf16>, vector<16x64xbf16>, vector<32x64xf32> -> vector<32x64xf32>
    %cst_14 = arith.constant dense<0.000000e+00> : vector<32x64xf32>
    %18 = tpu.matmul %6, %11, %cst_14 {dimension_numbers = #tpu.dot_dimension_numbers<[1], [0], [0], [1], [0, 0, 1, 1], [], []>} : vector<32x32xf32>, vector<32x64xf32>, vector<32x64xf32> -> vector<32x64xf32>
    %19 = arith.addf %14, %18 : vector<32x64xf32>
    %cst_15 = arith.constant dense<0.000000e+00> : vector<32x64xf32>
    %20 = tpu.matmul %7, %17, %cst_15 {dimension_numbers = #tpu.dot_dimension_numbers<[1], [0], [0], [1], [0, 0, 1, 1], [], []>} : vector<32x32xf32>, vector<32x64xf32>, vector<32x64xf32> -> vector<32x64xf32>
    %21 = arith.addf %19, %20 : vector<32x64xf32>
    %c0_16 = arith.constant 0 : index
    %c0_17 = arith.constant 0 : index
    %22 = vector.load %arg6[%c0_16, %c0_17] : memref<1x64xf32, #tpu.memory_space<vmem>>, vector<1x64xf32>
    %23 = vector.broadcast %22 : vector<1x64xf32> to vector<32x64xf32>
    %24 = arith.addf %21, %23 : vector<32x64xf32>
    %cst_18 = arith.constant 0.000000e+00 : f32
    %25 = vector.broadcast %cst_18 : f32 to vector<32x64xf32>
    %26 = arith.maximumf %24, %25 : vector<32x64xf32>
    %27 = arith.truncf %26 : vector<32x64xf32> to vector<32x64xbf16>
    %c0_19 = arith.constant 0 : index
    %c0_20 = arith.constant 0 : index
    %c0_21 = arith.constant 0 : index
    %28 = vector.load %arg7[%c0_19, %c0_20, %c0_21] : memref<3x64x256xbf16, #tpu.memory_space<vmem>>, vector<1x64x256xbf16>
    %29 = vector.shape_cast %28 : vector<1x64x256xbf16> to vector<64x256xbf16>
    %cst_22 = arith.constant dense<0.000000e+00> : vector<32x256xf32>
    %30 = tpu.matmul %27, %29, %cst_22 {dimension_numbers = #tpu.dot_dimension_numbers<[1], [0], [0], [1], [0, 0, 1, 1], [], []>} : vector<32x64xbf16>, vector<64x256xbf16>, vector<32x256xf32> -> vector<32x256xf32>
    %c1_23 = arith.constant 1 : index
    %c0_24 = arith.constant 0 : index
    %c0_25 = arith.constant 0 : index
    %31 = vector.load %arg7[%c1_23, %c0_24, %c0_25] : memref<3x64x256xbf16, #tpu.memory_space<vmem>>, vector<1x64x256xbf16>
    %32 = vector.shape_cast %31 : vector<1x64x256xbf16> to vector<64x256xbf16>
    %cst_26 = arith.constant dense<0.000000e+00> : vector<32x256xf32>
    %33 = tpu.matmul %27, %32, %cst_26 {dimension_numbers = #tpu.dot_dimension_numbers<[1], [0], [0], [1], [0, 0, 1, 1], [], []>} : vector<32x64xbf16>, vector<64x256xbf16>, vector<32x256xf32> -> vector<32x256xf32>
    %c2_27 = arith.constant 2 : index
    %c0_28 = arith.constant 0 : index
    %c0_29 = arith.constant 0 : index
    %34 = vector.load %arg7[%c2_27, %c0_28, %c0_29] : memref<3x64x256xbf16, #tpu.memory_space<vmem>>, vector<1x64x256xbf16>
    %35 = vector.shape_cast %34 : vector<1x64x256xbf16> to vector<64x256xbf16>
    %cst_30 = arith.constant dense<0.000000e+00> : vector<32x256xf32>
    %36 = tpu.matmul %27, %35, %cst_30 {dimension_numbers = #tpu.dot_dimension_numbers<[1], [0], [0], [1], [0, 0, 1, 1], [], []>} : vector<32x64xbf16>, vector<64x256xbf16>, vector<32x256xf32> -> vector<32x256xf32>
    %cst_31 = arith.constant dense<0.000000e+00> : vector<32x256xf32>
    %37 = tpu.matmul %6, %30, %cst_31 {dimension_numbers = #tpu.dot_dimension_numbers<[1], [0], [0], [1], [0, 0, 1, 1], [], []>} : vector<32x32xf32>, vector<32x256xf32>, vector<32x256xf32> -> vector<32x256xf32>
    %38 = arith.addf %33, %37 : vector<32x256xf32>
    %cst_32 = arith.constant dense<0.000000e+00> : vector<32x256xf32>
    %39 = tpu.matmul %7, %36, %cst_32 {dimension_numbers = #tpu.dot_dimension_numbers<[1], [0], [0], [1], [0, 0, 1, 1], [], []>} : vector<32x32xf32>, vector<32x256xf32>, vector<32x256xf32> -> vector<32x256xf32>
    %40 = arith.addf %38, %39 : vector<32x256xf32>
    %c0_33 = arith.constant 0 : index
    %c0_34 = arith.constant 0 : index
    %41 = vector.load %arg8[%c0_33, %c0_34] : memref<1x256xf32, #tpu.memory_space<vmem>>, vector<1x256xf32>
    %42 = vector.broadcast %41 : vector<1x256xf32> to vector<32x256xf32>
    %43 = arith.addf %40, %42 : vector<32x256xf32>
    %cst_35 = arith.constant 0.000000e+00 : f32
    %44 = vector.broadcast %cst_35 : f32 to vector<32x256xf32>
    %45 = arith.maximumf %43, %44 : vector<32x256xf32>
    %46 = arith.truncf %45 : vector<32x256xf32> to vector<32x256xbf16>
    %c0_36 = arith.constant 0 : index
    %c0_37 = arith.constant 0 : index
    %c0_38 = arith.constant 0 : index
    %47 = vector.load %arg9[%c0_36, %c0_37, %c0_38] : memref<3x256x512xbf16, #tpu.memory_space<vmem>>, vector<1x256x512xbf16>
    %48 = vector.shape_cast %47 : vector<1x256x512xbf16> to vector<256x512xbf16>
    %cst_39 = arith.constant dense<0.000000e+00> : vector<32x512xf32>
    %49 = tpu.matmul %46, %48, %cst_39 {dimension_numbers = #tpu.dot_dimension_numbers<[1], [0], [0], [1], [0, 0, 1, 1], [], []>} : vector<32x256xbf16>, vector<256x512xbf16>, vector<32x512xf32> -> vector<32x512xf32>
    %c1_40 = arith.constant 1 : index
    %c0_41 = arith.constant 0 : index
    %c0_42 = arith.constant 0 : index
    %50 = vector.load %arg9[%c1_40, %c0_41, %c0_42] : memref<3x256x512xbf16, #tpu.memory_space<vmem>>, vector<1x256x512xbf16>
    %51 = vector.shape_cast %50 : vector<1x256x512xbf16> to vector<256x512xbf16>
    %cst_43 = arith.constant dense<0.000000e+00> : vector<32x512xf32>
    %52 = tpu.matmul %46, %51, %cst_43 {dimension_numbers = #tpu.dot_dimension_numbers<[1], [0], [0], [1], [0, 0, 1, 1], [], []>} : vector<32x256xbf16>, vector<256x512xbf16>, vector<32x512xf32> -> vector<32x512xf32>
    %c2_44 = arith.constant 2 : index
    %c0_45 = arith.constant 0 : index
    %c0_46 = arith.constant 0 : index
    %53 = vector.load %arg9[%c2_44, %c0_45, %c0_46] : memref<3x256x512xbf16, #tpu.memory_space<vmem>>, vector<1x256x512xbf16>
    %54 = vector.shape_cast %53 : vector<1x256x512xbf16> to vector<256x512xbf16>
    %cst_47 = arith.constant dense<0.000000e+00> : vector<32x512xf32>
    %55 = tpu.matmul %46, %54, %cst_47 {dimension_numbers = #tpu.dot_dimension_numbers<[1], [0], [0], [1], [0, 0, 1, 1], [], []>} : vector<32x256xbf16>, vector<256x512xbf16>, vector<32x512xf32> -> vector<32x512xf32>
    %cst_48 = arith.constant dense<0.000000e+00> : vector<32x512xf32>
    %56 = tpu.matmul %6, %49, %cst_48 {dimension_numbers = #tpu.dot_dimension_numbers<[1], [0], [0], [1], [0, 0, 1, 1], [], []>} : vector<32x32xf32>, vector<32x512xf32>, vector<32x512xf32> -> vector<32x512xf32>
    %57 = arith.addf %52, %56 : vector<32x512xf32>
    %cst_49 = arith.constant dense<0.000000e+00> : vector<32x512xf32>
    %58 = tpu.matmul %7, %55, %cst_49 {dimension_numbers = #tpu.dot_dimension_numbers<[1], [0], [0], [1], [0, 0, 1, 1], [], []>} : vector<32x32xf32>, vector<32x512xf32>, vector<32x512xf32> -> vector<32x512xf32>
    %59 = arith.addf %57, %58 : vector<32x512xf32>
    %c0_50 = arith.constant 0 : index
    %c0_51 = arith.constant 0 : index
    %60 = vector.load %arg10[%c0_50, %c0_51] : memref<1x512xf32, #tpu.memory_space<vmem>>, vector<1x512xf32>
    %61 = vector.broadcast %60 : vector<1x512xf32> to vector<32x512xf32>
    %62 = arith.addf %59, %61 : vector<32x512xf32>
    %cst_52 = arith.constant 0.000000e+00 : f32
    %63 = vector.broadcast %cst_52 : f32 to vector<32x512xf32>
    %64 = arith.maximumf %62, %63 : vector<32x512xf32>
    %c0_53 = arith.constant 0 : index
    %c0_54 = arith.constant 0 : index
    %65 = vector.load %arg2[%c0_53, %c0_54] : memref<32x1xf32, #tpu.memory_space<vmem>>, vector<32x1xf32>
    %66 = vector.broadcast %65 : vector<32x1xf32> to vector<32x512xf32>
    %67 = arith.mulf %64, %66 : vector<32x512xf32>
    %68 = arith.truncf %67 : vector<32x512xf32> to vector<32x512xbf16>
    %c0_i32_55 = arith.constant 0 : i32
    %69 = tpu.memref_slice %arg21[%c0_i32_55] : memref<3x!tpu.dma_semaphore, #tpu.memory_space<semaphore_mem>> -> memref<1x!tpu.dma_semaphore, #tpu.memory_space<semaphore_mem>>
    %70 = tpu.memref_squeeze %69 : memref<1x!tpu.dma_semaphore, #tpu.memory_space<semaphore_mem>> -> memref<!tpu.dma_semaphore, #tpu.memory_space<semaphore_mem>>
    tpu.wait_dma2 semaphore(%70 : memref<!tpu.dma_semaphore, #tpu.memory_space<semaphore_mem>>) src(%arg11 : memref<3x512x240xbf16, #tpu.memory_space<any>>) dst(%arg18 : memref<3x512x240xbf16, #tpu.memory_space<vmem>>)
    %c0_56 = arith.constant 0 : index
    %c0_57 = arith.constant 0 : index
    %c0_58 = arith.constant 0 : index
    %71 = vector.load %arg18[%c0_56, %c0_57, %c0_58] : memref<3x512x240xbf16, #tpu.memory_space<vmem>>, vector<1x512x240xbf16>
    %72 = vector.shape_cast %71 : vector<1x512x240xbf16> to vector<512x240xbf16>
    %cst_59 = arith.constant dense<0.000000e+00> : vector<32x240xf32>
    %73 = tpu.matmul %68, %72, %cst_59 {dimension_numbers = #tpu.dot_dimension_numbers<[1], [0], [0], [1], [0, 0, 1, 1], [], []>} : vector<32x512xbf16>, vector<512x240xbf16>, vector<32x240xf32> -> vector<32x240xf32>
    %c1_60 = arith.constant 1 : index
    %c0_61 = arith.constant 0 : index
    %c0_62 = arith.constant 0 : index
    %74 = vector.load %arg18[%c1_60, %c0_61, %c0_62] : memref<3x512x240xbf16, #tpu.memory_space<vmem>>, vector<1x512x240xbf16>
    %75 = vector.shape_cast %74 : vector<1x512x240xbf16> to vector<512x240xbf16>
    %cst_63 = arith.constant dense<0.000000e+00> : vector<32x240xf32>
    %76 = tpu.matmul %68, %75, %cst_63 {dimension_numbers = #tpu.dot_dimension_numbers<[1], [0], [0], [1], [0, 0, 1, 1], [], []>} : vector<32x512xbf16>, vector<512x240xbf16>, vector<32x240xf32> -> vector<32x240xf32>
    %c2_64 = arith.constant 2 : index
    %c0_65 = arith.constant 0 : index
    %c0_66 = arith.constant 0 : index
    %77 = vector.load %arg18[%c2_64, %c0_65, %c0_66] : memref<3x512x240xbf16, #tpu.memory_space<vmem>>, vector<1x512x240xbf16>
    %78 = vector.shape_cast %77 : vector<1x512x240xbf16> to vector<512x240xbf16>
    %cst_67 = arith.constant dense<0.000000e+00> : vector<32x240xf32>
    %79 = tpu.matmul %68, %78, %cst_67 {dimension_numbers = #tpu.dot_dimension_numbers<[1], [0], [0], [1], [0, 0, 1, 1], [], []>} : vector<32x512xbf16>, vector<512x240xbf16>, vector<32x240xf32> -> vector<32x240xf32>
    %cst_68 = arith.constant dense<0.000000e+00> : vector<32x240xf32>
    %80 = tpu.matmul %6, %73, %cst_68 {dimension_numbers = #tpu.dot_dimension_numbers<[1], [0], [0], [1], [0, 0, 1, 1], [], []>} : vector<32x32xf32>, vector<32x240xf32>, vector<32x240xf32> -> vector<32x240xf32>
    %81 = arith.addf %76, %80 : vector<32x240xf32>
    %cst_69 = arith.constant dense<0.000000e+00> : vector<32x240xf32>
    %82 = tpu.matmul %7, %79, %cst_69 {dimension_numbers = #tpu.dot_dimension_numbers<[1], [0], [0], [1], [0, 0, 1, 1], [], []>} : vector<32x32xf32>, vector<32x240xf32>, vector<32x240xf32> -> vector<32x240xf32>
    %83 = arith.addf %81, %82 : vector<32x240xf32>
    %c0_70 = arith.constant 0 : index
    %c0_71 = arith.constant 0 : index
    %84 = vector.load %arg12[%c0_70, %c0_71] : memref<1x240xf32, #tpu.memory_space<vmem>>, vector<1x240xf32>
    %85 = vector.broadcast %84 : vector<1x240xf32> to vector<32x240xf32>
    %86 = arith.addf %83, %85 : vector<32x240xf32>
    %cst_72 = arith.constant 0.000000e+00 : f32
    %87 = vector.broadcast %cst_72 : f32 to vector<32x240xf32>
    %88 = arith.maximumf %86, %87 : vector<32x240xf32>
    %89 = arith.truncf %88 : vector<32x240xf32> to vector<32x240xbf16>
    %c1_i32_73 = arith.constant 1 : i32
    %90 = tpu.memref_slice %arg21[%c1_i32_73] : memref<3x!tpu.dma_semaphore, #tpu.memory_space<semaphore_mem>> -> memref<1x!tpu.dma_semaphore, #tpu.memory_space<semaphore_mem>>
    %91 = tpu.memref_squeeze %90 : memref<1x!tpu.dma_semaphore, #tpu.memory_space<semaphore_mem>> -> memref<!tpu.dma_semaphore, #tpu.memory_space<semaphore_mem>>
    tpu.wait_dma2 semaphore(%91 : memref<!tpu.dma_semaphore, #tpu.memory_space<semaphore_mem>>) src(%arg13 : memref<3x240x60xbf16, #tpu.memory_space<any>>) dst(%arg19 : memref<3x240x60xbf16, #tpu.memory_space<vmem>>)
    %c0_74 = arith.constant 0 : index
    %c0_75 = arith.constant 0 : index
    %c0_76 = arith.constant 0 : index
    %92 = vector.load %arg19[%c0_74, %c0_75, %c0_76] : memref<3x240x60xbf16, #tpu.memory_space<vmem>>, vector<1x240x60xbf16>
    %93 = vector.shape_cast %92 : vector<1x240x60xbf16> to vector<240x60xbf16>
    %cst_77 = arith.constant dense<0.000000e+00> : vector<32x60xf32>
    %94 = tpu.matmul %89, %93, %cst_77 {dimension_numbers = #tpu.dot_dimension_numbers<[1], [0], [0], [1], [0, 0, 1, 1], [], []>} : vector<32x240xbf16>, vector<240x60xbf16>, vector<32x60xf32> -> vector<32x60xf32>
    %c1_78 = arith.constant 1 : index
    %c0_79 = arith.constant 0 : index
    %c0_80 = arith.constant 0 : index
    %95 = vector.load %arg19[%c1_78, %c0_79, %c0_80] : memref<3x240x60xbf16, #tpu.memory_space<vmem>>, vector<1x240x60xbf16>
    %96 = vector.shape_cast %95 : vector<1x240x60xbf16> to vector<240x60xbf16>
    %cst_81 = arith.constant dense<0.000000e+00> : vector<32x60xf32>
    %97 = tpu.matmul %89, %96, %cst_81 {dimension_numbers = #tpu.dot_dimension_numbers<[1], [0], [0], [1], [0, 0, 1, 1], [], []>} : vector<32x240xbf16>, vector<240x60xbf16>, vector<32x60xf32> -> vector<32x60xf32>
    %c2_82 = arith.constant 2 : index
    %c0_83 = arith.constant 0 : index
    %c0_84 = arith.constant 0 : index
    %98 = vector.load %arg19[%c2_82, %c0_83, %c0_84] : memref<3x240x60xbf16, #tpu.memory_space<vmem>>, vector<1x240x60xbf16>
    %99 = vector.shape_cast %98 : vector<1x240x60xbf16> to vector<240x60xbf16>
    %cst_85 = arith.constant dense<0.000000e+00> : vector<32x60xf32>
    %100 = tpu.matmul %89, %99, %cst_85 {dimension_numbers = #tpu.dot_dimension_numbers<[1], [0], [0], [1], [0, 0, 1, 1], [], []>} : vector<32x240xbf16>, vector<240x60xbf16>, vector<32x60xf32> -> vector<32x60xf32>
    %cst_86 = arith.constant dense<0.000000e+00> : vector<32x60xf32>
    %101 = tpu.matmul %6, %94, %cst_86 {dimension_numbers = #tpu.dot_dimension_numbers<[1], [0], [0], [1], [0, 0, 1, 1], [], []>} : vector<32x32xf32>, vector<32x60xf32>, vector<32x60xf32> -> vector<32x60xf32>
    %102 = arith.addf %97, %101 : vector<32x60xf32>
    %cst_87 = arith.constant dense<0.000000e+00> : vector<32x60xf32>
    %103 = tpu.matmul %7, %100, %cst_87 {dimension_numbers = #tpu.dot_dimension_numbers<[1], [0], [0], [1], [0, 0, 1, 1], [], []>} : vector<32x32xf32>, vector<32x60xf32>, vector<32x60xf32> -> vector<32x60xf32>
    %104 = arith.addf %102, %103 : vector<32x60xf32>
    %c0_88 = arith.constant 0 : index
    %c0_89 = arith.constant 0 : index
    %105 = vector.load %arg14[%c0_88, %c0_89] : memref<1x60xf32, #tpu.memory_space<vmem>>, vector<1x60xf32>
    %106 = vector.broadcast %105 : vector<1x60xf32> to vector<32x60xf32>
    %107 = arith.addf %104, %106 : vector<32x60xf32>
    %cst_90 = arith.constant 0.000000e+00 : f32
    %108 = vector.broadcast %cst_90 : f32 to vector<32x60xf32>
    %109 = arith.maximumf %107, %108 : vector<32x60xf32>
    %110 = arith.truncf %109 : vector<32x60xf32> to vector<32x60xbf16>
    %c2_i32_91 = arith.constant 2 : i32
    %111 = tpu.memref_slice %arg21[%c2_i32_91] : memref<3x!tpu.dma_semaphore, #tpu.memory_space<semaphore_mem>> -> memref<1x!tpu.dma_semaphore, #tpu.memory_space<semaphore_mem>>
    %112 = tpu.memref_squeeze %111 : memref<1x!tpu.dma_semaphore, #tpu.memory_space<semaphore_mem>> -> memref<!tpu.dma_semaphore, #tpu.memory_space<semaphore_mem>>
    tpu.wait_dma2 semaphore(%112 : memref<!tpu.dma_semaphore, #tpu.memory_space<semaphore_mem>>) src(%arg15 : memref<3x60x15xbf16, #tpu.memory_space<any>>) dst(%arg20 : memref<3x60x15xbf16, #tpu.memory_space<vmem>>)
    %c0_92 = arith.constant 0 : index
    %c0_93 = arith.constant 0 : index
    %c0_94 = arith.constant 0 : index
    %113 = vector.load %arg20[%c0_92, %c0_93, %c0_94] : memref<3x60x15xbf16, #tpu.memory_space<vmem>>, vector<1x60x15xbf16>
    %114 = vector.shape_cast %113 : vector<1x60x15xbf16> to vector<60x15xbf16>
    %cst_95 = arith.constant dense<0.000000e+00> : vector<32x15xf32>
    %115 = tpu.matmul %110, %114, %cst_95 {dimension_numbers = #tpu.dot_dimension_numbers<[1], [0], [0], [1], [0, 0, 1, 1], [], []>} : vector<32x60xbf16>, vector<60x15xbf16>, vector<32x15xf32> -> vector<32x15xf32>
    %c1_96 = arith.constant 1 : index
    %c0_97 = arith.constant 0 : index
    %c0_98 = arith.constant 0 : index
    %116 = vector.load %arg20[%c1_96, %c0_97, %c0_98] : memref<3x60x15xbf16, #tpu.memory_space<vmem>>, vector<1x60x15xbf16>
    %117 = vector.shape_cast %116 : vector<1x60x15xbf16> to vector<60x15xbf16>
    %cst_99 = arith.constant dense<0.000000e+00> : vector<32x15xf32>
    %118 = tpu.matmul %110, %117, %cst_99 {dimension_numbers = #tpu.dot_dimension_numbers<[1], [0], [0], [1], [0, 0, 1, 1], [], []>} : vector<32x60xbf16>, vector<60x15xbf16>, vector<32x15xf32> -> vector<32x15xf32>
    %c2_100 = arith.constant 2 : index
    %c0_101 = arith.constant 0 : index
    %c0_102 = arith.constant 0 : index
    %119 = vector.load %arg20[%c2_100, %c0_101, %c0_102] : memref<3x60x15xbf16, #tpu.memory_space<vmem>>, vector<1x60x15xbf16>
    %120 = vector.shape_cast %119 : vector<1x60x15xbf16> to vector<60x15xbf16>
    %cst_103 = arith.constant dense<0.000000e+00> : vector<32x15xf32>
    %121 = tpu.matmul %110, %120, %cst_103 {dimension_numbers = #tpu.dot_dimension_numbers<[1], [0], [0], [1], [0, 0, 1, 1], [], []>} : vector<32x60xbf16>, vector<60x15xbf16>, vector<32x15xf32> -> vector<32x15xf32>
    %cst_104 = arith.constant dense<0.000000e+00> : vector<32x15xf32>
    %122 = tpu.matmul %6, %115, %cst_104 {dimension_numbers = #tpu.dot_dimension_numbers<[1], [0], [0], [1], [0, 0, 1, 1], [], []>} : vector<32x32xf32>, vector<32x15xf32>, vector<32x15xf32> -> vector<32x15xf32>
    %123 = arith.addf %118, %122 : vector<32x15xf32>
    %cst_105 = arith.constant dense<0.000000e+00> : vector<32x15xf32>
    %124 = tpu.matmul %7, %121, %cst_105 {dimension_numbers = #tpu.dot_dimension_numbers<[1], [0], [0], [1], [0, 0, 1, 1], [], []>} : vector<32x32xf32>, vector<32x15xf32>, vector<32x15xf32> -> vector<32x15xf32>
    %125 = arith.addf %123, %124 : vector<32x15xf32>
    %c0_106 = arith.constant 0 : index
    %c0_107 = arith.constant 0 : index
    %126 = vector.load %arg16[%c0_106, %c0_107] : memref<1x15xf32, #tpu.memory_space<vmem>>, vector<1x15xf32>
    %127 = vector.broadcast %126 : vector<1x15xf32> to vector<32x15xf32>
    %128 = arith.addf %125, %127 : vector<32x15xf32>
    %cst_108 = arith.constant 0.000000e+00 : f32
    %129 = vector.broadcast %cst_108 : f32 to vector<32x15xf32>
    %130 = arith.maximumf %128, %129 : vector<32x15xf32>
    %c0_109 = arith.constant 0 : index
    %c0_110 = arith.constant 0 : index
    %131 = vector.load %arg17[%c0_109, %c0_110] : memref<32x15xf32, #tpu.memory_space<vmem>>, vector<32x15xf32>
    tpu.vector_store %arg17[%c0_109, %c0_110], %130 {strides = array<i32>} : memref<32x15xf32, #tpu.memory_space<vmem>>, vector<32x15xf32>,
    return
  }
  func.func @transform_0(%arg0: i32) -> (i32, i32) {
    %c0_i32 = arith.constant 0 : i32
    %c0_i32_0 = arith.constant 0 : i32
    %c0_i32_1 = arith.constant 0 : i32
    return %c0_i32, %c0_i32_0 : i32, i32
  }
  func.func @transform_1(%arg0: i32) -> (i32, i32) {
    %c0_i32 = arith.constant 0 : i32
    %c0_i32_0 = arith.constant 0 : i32
    %c0_i32_1 = arith.constant 0 : i32
    return %c0_i32, %c0_i32_0 : i32, i32
  }
  func.func @transform_2(%arg0: i32) -> (i32, i32) {
    %c0_i32 = arith.constant 0 : i32
    %c0_i32_0 = arith.constant 0 : i32
    %c0_i32_1 = arith.constant 0 : i32
    return %c0_i32, %c0_i32_0 : i32, i32
  }
  func.func @transform_3(%arg0: i32) -> (i32, i32) {
    %c0_i32 = arith.constant 0 : i32
    %c0_i32_0 = arith.constant 0 : i32
    %c0_i32_1 = arith.constant 0 : i32
    return %c0_i32, %c0_i32_0 : i32, i32
  }
  func.func @transform_4(%arg0: i32) -> (i32, i32, i32) {
    %c0_i32 = arith.constant 0 : i32
    %c0_i32_0 = arith.constant 0 : i32
    %c0_i32_1 = arith.constant 0 : i32
    %c0_i32_2 = arith.constant 0 : i32
    return %c0_i32, %c0_i32_0, %c0_i32_1 : i32, i32, i32
  }
  func.func @transform_5(%arg0: i32) -> (i32, i32) {
    %c0_i32 = arith.constant 0 : i32
    %c0_i32_0 = arith.constant 0 : i32
    %c0_i32_1 = arith.constant 0 : i32
    return %c0_i32, %c0_i32_0 : i32, i32
  }
  func.func @transform_6(%arg0: i32) -> (i32, i32, i32) {
    %c0_i32 = arith.constant 0 : i32
    %c0_i32_0 = arith.constant 0 : i32
    %c0_i32_1 = arith.constant 0 : i32
    %c0_i32_2 = arith.constant 0 : i32
    return %c0_i32, %c0_i32_0, %c0_i32_1 : i32, i32, i32
  }
  func.func @transform_7(%arg0: i32) -> (i32, i32) {
    %c0_i32 = arith.constant 0 : i32
    %c0_i32_0 = arith.constant 0 : i32
    %c0_i32_1 = arith.constant 0 : i32
    return %c0_i32, %c0_i32_0 : i32, i32
  }
  func.func @transform_8(%arg0: i32) -> (i32, i32, i32) {
    %c0_i32 = arith.constant 0 : i32
    %c0_i32_0 = arith.constant 0 : i32
    %c0_i32_1 = arith.constant 0 : i32
    %c0_i32_2 = arith.constant 0 : i32
    return %c0_i32, %c0_i32_0, %c0_i32_1 : i32, i32, i32
  }
  func.func @transform_9(%arg0: i32) -> (i32, i32) {
    %c0_i32 = arith.constant 0 : i32
    %c0_i32_0 = arith.constant 0 : i32
    %c0_i32_1 = arith.constant 0 : i32
    return %c0_i32, %c0_i32_0 : i32, i32
  }
  func.func @transform_11(%arg0: i32) -> (i32, i32) {
    %c0_i32 = arith.constant 0 : i32
    %c0_i32_0 = arith.constant 0 : i32
    %c0_i32_1 = arith.constant 0 : i32
    return %c0_i32, %c0_i32_0 : i32, i32
  }
  func.func @transform_13(%arg0: i32) -> (i32, i32) {
    %c0_i32 = arith.constant 0 : i32
    %c0_i32_0 = arith.constant 0 : i32
    %c0_i32_1 = arith.constant 0 : i32
    return %c0_i32, %c0_i32_0 : i32, i32
  }
  func.func @transform_15(%arg0: i32) -> (i32, i32) {
    %c0_i32 = arith.constant 0 : i32
    %c0_i32_0 = arith.constant 0 : i32
    %c0_i32_1 = arith.constant 0 : i32
    return %c0_i32, %c0_i32_0 : i32, i32
  }
  func.func @transform_16(%arg0: i32) -> (i32, i32) {
    %c0_i32 = arith.constant 0 : i32
    %c0_i32_0 = arith.constant 0 : i32
    %c0_i32_1 = arith.constant 0 : i32
    return %c0_i32, %c0_i32_0 : i32, i32
  }
}

</mosaic_0001>

<llo_original>
// kernel: simple_conv_forward.1
$region0: #{simple_conv_forward.1}
  #allocation0 [shape = 'u32[]', space=smem, size = 0x4, offset = 0x4, fixed_abs, tag = 'smem constant byte address 0x4 - core index']
  #allocation1 [shape = 'u32[144,128]{1,0:T(1,128)}', space=vmem, size = 0x12000, scoped, tag = 'internal scratch']
  #allocation2 [shape = 'bf16[3,512,240]{2,1,0:T(16,128)(2,1)}', space=vmem, size = 0xc0000, scoped, tag = 'scratch operand']
  #allocation3 [shape = 'bf16[3,240,60]{2,1,0:T(16,128)(2,1)}', space=vmem, size = 0x2d000, scoped, tag = 'scratch operand']
  #allocation4 [shape = 'bf16[3,60,15]{2,1,0:T(8,128)(2,1)}', space=vmem, size = 0xc000, scoped, tag = 'scratch operand']
  #allocation5 [shape = 's32[3]{0}', space=sflag, size = 0xc, scoped, tag = 'scratch operand']
  #allocation6 [shape = 's32[]', space=sflag, size = 0x4, offset = 0, fixed_abs, tag = 'sflag constant byte address 0x0 - dummy sync flag']
  #allocation7 [shape = 's32[]', space=sflag, size = 0x4, offset = 0, fixed_abs, tag = 'sflag constant byte address 0x0 - dummy sync flag']
  #allocation8 [shape = 's32[]', space=sflag, size = 0x4, offset = 0, fixed_abs, tag = 'sflag constant byte address 0x0 - dummy sync flag']
  %s0 = inlined_call_operand.vmem [shape: bf16[32,16], index: 0, kind: input, shape index: {}]
  %s1 = inlined_call_operand.vmem [shape: f32[32,1], index: 1, kind: input, shape index: {}]
  %s2 = inlined_call_operand.vmem [shape: f32[32,32], index: 2, kind: input, shape index: {}]
  %s3 = inlined_call_operand.vmem [shape: f32[32,32], index: 3, kind: input, shape index: {}]
  %s4 = inlined_call_operand.vmem [shape: bf16[3,16,64], index: 4, kind: input, shape index: {}]
  %s5 = inlined_call_operand.vmem [shape: f32[1,64], index: 5, kind: input, shape index: {}]
  %s6 = inlined_call_operand.vmem [shape: bf16[3,64,256], index: 6, kind: input, shape index: {}]
  %s7 = inlined_call_operand.vmem [shape: f32[1,256], index: 7, kind: input, shape index: {}]
  %s8 = inlined_call_operand.vmem [shape: bf16[3,256,512], index: 8, kind: input, shape index: {}]
  %s9 = inlined_call_operand.vmem [shape: f32[1,512], index: 9, kind: input, shape index: {}]
  %s10 = inlined_call_operand.vmem [shape: bf16[3,512,240], index: 10, kind: input, shape index: {}]
  %s11 = inlined_call_operand.vmem [shape: f32[1,240], index: 11, kind: input, shape index: {}]
  %s12 = inlined_call_operand.vmem [shape: bf16[3,240,60], index: 12, kind: input, shape index: {}]
  %s13 = inlined_call_operand.vmem [shape: f32[1,60], index: 13, kind: input, shape index: {}]
  %s14 = inlined_call_operand.vmem [shape: bf16[3,60,15], index: 14, kind: input, shape index: {}]
  %s15 = inlined_call_operand.vmem [shape: f32[1,15], index: 15, kind: input, shape index: {}]
  %s16 = inlined_call_operand.vmem [shape: f32[32,15], index: 16, kind: output, shape index: {}]
  %s17 = sld [smem:[#allocation0]]
  $region167: #{simple_conv_forward.1} parent=0
    _
  %s19 = ssub.s32 1, %s17
  %s20 = scalar_select 0, %s19, %s17
  // Predicated region
  $region2: #{simple_conv_forward.1} parent=0 // pred_check
    _
  $region3: #{simple_conv_forward.1} parent=0 // pred_check_branch
    %22 = sbr.rel (0) target = $region5
  $region4: #{simple_conv_forward.1} parent=0 // pred_region
    _
  $region5: #{simple_conv_forward.1} parent=0 // pred_fallthru
    _
  // Predicated region
  $region6: #{simple_conv_forward.1} parent=0 // pred_check
    _
  $region7: #{simple_conv_forward.1} parent=0 // pred_check_branch
    %24 = sbr.rel (0) target = $region9
  $region8: #{simple_conv_forward.1} parent=0 // pred_region
    _
  $region9: #{simple_conv_forward.1} parent=0 // pred_fallthru
    _
  // Predicated region
  $region10: #{simple_conv_forward.1} parent=0 // pred_check
    _
  $region11: #{simple_conv_forward.1} parent=0 // pred_check_branch
    %26 = sbr.rel (0) target = $region13
  $region12: #{simple_conv_forward.1} parent=0 // pred_region
    _
  $region13: #{simple_conv_forward.1} parent=0 // pred_fallthru
    _
  // Predicated region
  $region14: #{simple_conv_forward.1} parent=0 // pred_check
    _
  $region15: #{simple_conv_forward.1} parent=0 // pred_check_branch
    %28 = sbr.rel (0) target = $region17
  $region16: #{simple_conv_forward.1} parent=0 // pred_region
    _
  $region17: #{simple_conv_forward.1} parent=0 // pred_fallthru
    _
  // Predicated region
  $region18: #{simple_conv_forward.1} parent=0 // pred_check
    _
  $region19: #{simple_conv_forward.1} parent=0 // pred_check_branch
    %30 = sbr.rel (0) target = $region21
  $region20: #{simple_conv_forward.1} parent=0 // pred_region
    _
  $region21: #{simple_conv_forward.1} parent=0 // pred_fallthru
    _
  // Predicated region
  $region22: #{simple_conv_forward.1} parent=0 // pred_check
    _
  $region23: #{simple_conv_forward.1} parent=0 // pred_check_branch
    %32 = sbr.rel (0) target = $region25
  $region24: #{simple_conv_forward.1} parent=0 // pred_region
    _
  $region25: #{simple_conv_forward.1} parent=0 // pred_fallthru
    _
  // Predicated region
  $region26: #{simple_conv_forward.1} parent=0 // pred_check
    _
  $region27: #{simple_conv_forward.1} parent=0 // pred_check_branch
    %34 = sbr.rel (0) target = $region29
  $region28: #{simple_conv_forward.1} parent=0 // pred_region
    _
  $region29: #{simple_conv_forward.1} parent=0 // pred_fallthru
    _
  // Predicated region
  $region30: #{simple_conv_forward.1} parent=0 // pred_check
    _
  $region31: #{simple_conv_forward.1} parent=0 // pred_check_branch
    %36 = sbr.rel (0) target = $region33
  $region32: #{simple_conv_forward.1} parent=0 // pred_region
    _
  $region33: #{simple_conv_forward.1} parent=0 // pred_fallthru
    _
  // Predicated region
  $region34: #{simple_conv_forward.1} parent=0 // pred_check
    _
  $region35: #{simple_conv_forward.1} parent=0 // pred_check_branch
    %38 = sbr.rel (0) target = $region37
  $region36: #{simple_conv_forward.1} parent=0 // pred_region
    _
  $region37: #{simple_conv_forward.1} parent=0 // pred_fallthru
    _
  // Predicated region
  $region38: #{simple_conv_forward.1} parent=0 // pred_check
    _
  $region39: #{simple_conv_forward.1} parent=0 // pred_check_branch
    %40 = sbr.rel (0) target = $region41
  $region40: #{simple_conv_forward.1} parent=0 // pred_region
    _
  $region41: #{simple_conv_forward.1} parent=0 // pred_fallthru
    _
  // Predicated region
  $region42: #{simple_conv_forward.1} parent=0 // pred_check
    _
  $region43: #{simple_conv_forward.1} parent=0 // pred_check_branch
    %42 = sbr.rel (0) target = $region45
  $region44: #{simple_conv_forward.1} parent=0 // pred_region
    _
  $region45: #{simple_conv_forward.1} parent=0 // pred_fallthru
    _
  // Predicated region
  $region46: #{simple_conv_forward.1} parent=0 // pred_check
    _
  $region47: #{simple_conv_forward.1} parent=0 // pred_check_branch
    %44 = sbr.rel (0) target = $region49
  $region48: #{simple_conv_forward.1} parent=0 // pred_region
    _
  $region49: #{simple_conv_forward.1} parent=0 // pred_fallthru
    _
  // Predicated region
  $region50: #{simple_conv_forward.1} parent=0 // pred_check
    _
  $region51: #{simple_conv_forward.1} parent=0 // pred_check_branch
    %46 = sbr.rel (0) target = $region53
  $region52: #{simple_conv_forward.1} parent=0 // pred_region
    _
  $region53: #{simple_conv_forward.1} parent=0 // pred_fallthru
    _
  %p49 = scmp.lt.u32.totalorder 4, 8
  %p50 = pneg %p49
  // Predicated region
  $region54: #{simple_conv_forward.1} parent=0 // pred_check
    _
  $region55: #{simple_conv_forward.1} parent=0 // pred_check_branch
    %52 = sbr.rel (%p49) target = $region57
  $region56: #{simple_conv_forward.1} parent=0 // pred_region
    %s833 = sand.u32 4, 7
    %p834 = scmp.eq.s32.totalorder %s833, 0
    %p835 = pneg %p834
    // Predicated region
    $region69: #{simple_conv_forward.1} parent=56 // pred_check
      _
    $region70: #{simple_conv_forward.1} parent=56 // pred_check_branch
      %837 = sbr.rel (%p834) target = $region72
    $region71: #{simple_conv_forward.1} parent=56 // pred_region
      %s838 = sand.u32 4, 7
      %s839 = ssub.s32 4, %s838
      %s840 = scalar_lea.vmem %s10, %s839
      %s841 = ssub.s32 4, %s838
      %s842 = scalar_lea.vmem [#allocation2], %s841
      loop: start=0, step=1, limit=1
      $region73: #{simple_conv_forward.1} parent=71 // loop_pre_header
        _
      $region74: #{simple_conv_forward.1} parent=71 // loop_header
        %s844 = sphi 0, %s848
        %p845 = scmp.ge.s32.totalorder %s844, 1
        %s849 = sphi %s10, %s10
        %s850 = sphi [#allocation2], [#allocation2]
      $region75: #{simple_conv_forward.1} parent=71 // loop_header_branch
        %847 = sbr.rel (%p845) target = $region79
      $region76: #{simple_conv_forward.1} parent=71 // loop_body
        _
      $region77: #{simple_conv_forward.1} parent=71 // loop_footer
        %s848 = sadd.s32 1, %s844
      $region78: #{simple_conv_forward.1} parent=71 // loop_footer_branch
        %843 = sbr.rel target = $region74
      $region79: #{simple_conv_forward.1} parent=71 // loop_exit
        _
      %s851 = sshllo.u32 0, %s838
      loop: start=0, step=1, limit=1
      $region80: #{simple_conv_forward.1} parent=71 // loop_pre_header
        _
      $region81: #{simple_conv_forward.1} parent=71 // loop_header
        %s853 = sphi 0, %s857
        %p854 = scmp.ge.s32.totalorder %s853, 1
        %s858 = sphi %s840, %s840
        %s859 = sphi %s842, %s842
      $region82: #{simple_conv_forward.1} parent=71 // loop_header_branch
        %856 = sbr.rel (%p854) target = $region86
      $region83: #{simple_conv_forward.1} parent=71 // loop_body
        %v860 = vld [vmem:[%s858] sm:%s851]
        %861 = vst [vmem:[%s859] sm:%s851] %v860
        %v862 = vld [vmem:[%s858 + $0x8] sm:%s851]
        %863 = vst [vmem:[%s859 + $0x4] sm:%s851] %v862
        %v864 = vld [vmem:[%s858 + $0x4] sm:%s851]
        %865 = vst [vmem:[%s859 + $0x8] sm:%s851] %v864
        %v866 = vld [vmem:[%s858 + $0xc] sm:%s851]
        %867 = vst [vmem:[%s859 + $0xc] sm:%s851] %v866
        %v868 = vld [vmem:[%s858 + $0x10] sm:%s851]
        %869 = vst [vmem:[%s859 + $0x10] sm:%s851] %v868
        %v870 = vld [vmem:[%s858 + $0x18] sm:%s851]
        %871 = vst [vmem:[%s859 + $0x14] sm:%s851] %v870
        %v872 = vld [vmem:[%s858 + $0x14] sm:%s851]
        %873 = vst [vmem:[%s859 + $0x18] sm:%s851] %v872
        %v874 = vld [vmem:[%s858 + $0x1c] sm:%s851]
        %875 = vst [vmem:[%s859 + $0x1c] sm:%s851] %v874
        %v876 = vld [vmem:[%s858 + $0x20] sm:%s851]
        %877 = vst [vmem:[%s859 + $0x20] sm:%s851] %v876
        %v878 = vld [vmem:[%s858 + $0x28] sm:%s851]
        %879 = vst [vmem:[%s859 + $0x24] sm:%s851] %v878
        %v880 = vld [vmem:[%s858 + $0x24] sm:%s851]
        %881 = vst [vmem:[%s859 + $0x28] sm:%s851] %v880
        %v882 = vld [vmem:[%s858 + $0x2c] sm:%s851]
        %883 = vst [vmem:[%s859 + $0x2c] sm:%s851] %v882
        %v884 = vld [vmem:[%s858 + $0x30] sm:%s851]
        %885 = vst [vmem:[%s859 + $0x30] sm:%s851] %v884
        %v886 = vld [vmem:[%s858 + $0x38] sm:%s851]
        %887 = vst [vmem:[%s859 + $0x34] sm:%s851] %v886
        %v888 = vld [vmem:[%s858 + $0x34] sm:%s851]
        %889 = vst [vmem:[%s859 + $0x38] sm:%s851] %v888
        %v890 = vld [vmem:[%s858 + $0x3c] sm:%s851]
        %891 = vst [vmem:[%s859 + $0x3c] sm:%s851] %v890
        %v892 = vld [vmem:[%s858 + $0x40] sm:%s851]
        %893 = vst [vmem:[%s859 + $0x40] sm:%s851] %v892
        %v894 = vld [vmem:[%s858 + $0x48] sm:%s851]
        %895 = vst [vmem:[%s859 + $0x44] sm:%s851] %v894
        %v896 = vld [vmem:[%s858 + $0x44] sm:%s851]
        %897 = vst [vmem:[%s859 + $0x48] sm:%s851] %v896
        %v898 = vld [vmem:[%s858 + $0x4c] sm:%s851]
        %899 = vst [vmem:[%s859 + $0x4c] sm:%s851] %v898
        %v900 = vld [vmem:[%s858 + $0x50] sm:%s851]
        %901 = vst [vmem:[%s859 + $0x50] sm:%s851] %v900
        %v902 = vld [vmem:[%s858 + $0x58] sm:%s851]
        %903 = vst [vmem:[%s859 + $0x54] sm:%s851] %v902
        %v904 = vld [vmem:[%s858 + $0x54] sm:%s851]
        %905 = vst [vmem:[%s859 + $0x58] sm:%s851] %v904
        %v906 = vld [vmem:[%s858 + $0x5c] sm:%s851]
        %907 = vst [vmem:[%s859 + $0x5c] sm:%s851] %v906
        %v908 = vld [vmem:[%s858 + $0x60] sm:%s851]
        %909 = vst [vmem:[%s859 + $0x60] sm:%s851] %v908
        %v910 = vld [vmem:[%s858 + $0x68] sm:%s851]
        %911 = vst [vmem:[%s859 + $0x64] sm:%s851] %v910
        %v912 = vld [vmem:[%s858 + $0x64] sm:%s851]
        %913 = vst [vmem:[%s859 + $0x68] sm:%s851] %v912
        %v914 = vld [vmem:[%s858 + $0x6c] sm:%s851]
        %915 = vst [vmem:[%s859 + $0x6c] sm:%s851] %v914
        %v916 = vld [vmem:[%s858 + $0x70] sm:%s851]
        %917 = vst [vmem:[%s859 + $0x70] sm:%s851] %v916
        %v918 = vld [vmem:[%s858 + $0x78] sm:%s851]
        %919 = vst [vmem:[%s859 + $0x74] sm:%s851] %v918
        %v920 = vld [vmem:[%s858 + $0x74] sm:%s851]
        %921 = vst [vmem:[%s859 + $0x78] sm:%s851] %v920
        %v922 = vld [vmem:[%s858 + $0x7c] sm:%s851]
        %923 = vst [vmem:[%s859 + $0x7c] sm:%s851] %v922
        %v924 = vld [vmem:[%s858 + $0x80] sm:%s851]
        %925 = vst [vmem:[%s859 + $0x80] sm:%s851] %v924
        %v926 = vld [vmem:[%s858 + $0x88] sm:%s851]
        %927 = vst [vmem:[%s859 + $0x84] sm:%s851] %v926
        %v928 = vld [vmem:[%s858 + $0x84] sm:%s851]
        %929 = vst [vmem:[%s859 + $0x88] sm:%s851] %v928
        %v930 = vld [vmem:[%s858 + $0x8c] sm:%s851]
        %931 = vst [vmem:[%s859 + $0x8c] sm:%s851] %v930
        %v932 = vld [vmem:[%s858 + $0x90] sm:%s851]
        %933 = vst [vmem:[%s859 + $0x90] sm:%s851] %v932
        %v934 = vld [vmem:[%s858 + $0x98] sm:%s851]
        %935 = vst [vmem:[%s859 + $0x94] sm:%s851] %v934
        %v936 = vld [vmem:[%s858 + $0x94] sm:%s851]
        %937 = vst [vmem:[%s859 + $0x98] sm:%s851] %v936
        %v938 = vld [vmem:[%s858 + $0x9c] sm:%s851]
        %939 = vst [vmem:[%s859 + $0x9c] sm:%s851] %v938
        %v940 = vld [vmem:[%s858 + $0xa0] sm:%s851]
        %941 = vst [vmem:[%s859 + $0xa0] sm:%s851] %v940
        %v942 = vld [vmem:[%s858 + $0xa8] sm:%s851]
        %943 = vst [vmem:[%s859 + $0xa4] sm:%s851] %v942
        %v944 = vld [vmem:[%s858 + $0xa4] sm:%s851]
        %945 = vst [vmem:[%s859 + $0xa8] sm:%s851] %v944
        %v946 = vld [vmem:[%s858 + $0xac] sm:%s851]
        %947 = vst [vmem:[%s859 + $0xac] sm:%s851] %v946
        %v948 = vld [vmem:[%s858 + $0xb0] sm:%s851]
        %949 = vst [vmem:[%s859 + $0xb0] sm:%s851] %v948
        %v950 = vld [vmem:[%s858 + $0xb8] sm:%s851]
        %951 = vst [vmem:[%s859 + $0xb4] sm:%s851] %v950
        %v952 = vld [vmem:[%s858 + $0xb4] sm:%s851]
        %953 = vst [vmem:[%s859 + $0xb8] sm:%s851] %v952
        %v954 = vld [vmem:[%s858 + $0xbc] sm:%s851]
        %955 = vst [vmem:[%s859 + $0xbc] sm:%s851] %v954
        %v956 = vld [vmem:[%s858 + $0xc0] sm:%s851]
        %957 = vst [vmem:[%s859 + $0xc0] sm:%s851] %v956
        %v958 = vld [vmem:[%s858 + $0xc8] sm:%s851]
        %959 = vst [vmem:[%s859 + $0xc4] sm:%s851] %v958
        %v960 = vld [vmem:[%s858 + $0xc4] sm:%s851]
        %961 = vst [vmem:[%s859 + $0xc8] sm:%s851] %v960
        %v962 = vld [vmem:[%s858 + $0xcc] sm:%s851]
        %963 = vst [vmem:[%s859 + $0xcc] sm:%s851] %v962
        %v964 = vld [vmem:[%s858 + $0xd0] sm:%s851]
        %965 = vst [vmem:[%s859 + $0xd0] sm:%s851] %v964
        %v966 = vld [vmem:[%s858 + $0xd8] sm:%s851]
        %967 = vst [vmem:[%s859 + $0xd4] sm:%s851] %v966
        %v968 = vld [vmem:[%s858 + $0xd4] sm:%s851]
        %969 = vst [vmem:[%s859 + $0xd8] sm:%s851] %v968
        %v970 = vld [vmem:[%s858 + $0xdc] sm:%s851]
        %971 = vst [vmem:[%s859 + $0xdc] sm:%s851] %v970
        %v972 = vld [vmem:[%s858 + $0xe0] sm:%s851]
        %973 = vst [vmem:[%s859 + $0xe0] sm:%s851] %v972
        %v974 = vld [vmem:[%s858 + $0xe8] sm:%s851]
        %975 = vst [vmem:[%s859 + $0xe4] sm:%s851] %v974
        %v976 = vld [vmem:[%s858 + $0xe4] sm:%s851]
        %977 = vst [vmem:[%s859 + $0xe8] sm:%s851] %v976
        %v978 = vld [vmem:[%s858 + $0xec] sm:%s851]
        %979 = vst [vmem:[%s859 + $0xec] sm:%s851] %v978
        %v980 = vld [vmem:[%s858 + $0xf0] sm:%s851]
        %981 = vst [vmem:[%s859 + $0xf0] sm:%s851] %v980
        %v982 = vld [vmem:[%s858 + $0xf8] sm:%s851]
        %983 = vst [vmem:[%s859 + $0xf4] sm:%s851] %v982
        %v984 = vld [vmem:[%s858 + $0xf4] sm:%s851]
        %985 = vst [vmem:[%s859 + $0xf8] sm:%s851] %v984
        %v986 = vld [vmem:[%s858 + $0xfc] sm:%s851]
        %987 = vst [vmem:[%s859 + $0xfc] sm:%s851] %v986
        %v988 = vld [vmem:[%s858 + $0x100] sm:%s851]
        %989 = vst [vmem:[%s859 + $0x100] sm:%s851] %v988
        %v990 = vld [vmem:[%s858 + $0x108] sm:%s851]
        %991 = vst [vmem:[%s859 + $0x104] sm:%s851] %v990
        %v992 = vld [vmem:[%s858 + $0x104] sm:%s851]
        %993 = vst [vmem:[%s859 + $0x108] sm:%s851] %v992
        %v994 = vld [vmem:[%s858 + $0x10c] sm:%s851]
        %995 = vst [vmem:[%s859 + $0x10c] sm:%s851] %v994
        %v996 = vld [vmem:[%s858 + $0x110] sm:%s851]
        %997 = vst [vmem:[%s859 + $0x110] sm:%s851] %v996
        %v998 = vld [vmem:[%s858 + $0x118] sm:%s851]
        %999 = vst [vmem:[%s859 + $0x114] sm:%s851] %v998
        %v1000 = vld [vmem:[%s858 + $0x114] sm:%s851]
        %1001 = vst [vmem:[%s859 + $0x118] sm:%s851] %v1000
        %v1002 = vld [vmem:[%s858 + $0x11c] sm:%s851]
        %1003 = vst [vmem:[%s859 + $0x11c] sm:%s851] %v1002
        %v1004 = vld [vmem:[%s858 + $0x120] sm:%s851]
        %1005 = vst [vmem:[%s859 + $0x120] sm:%s851] %v1004
        %v1006 = vld [vmem:[%s858 + $0x128] sm:%s851]
        %1007 = vst [vmem:[%s859 + $0x124] sm:%s851] %v1006
        %v1008 = vld [vmem:[%s858 + $0x124] sm:%s851]
        %1009 = vst [vmem:[%s859 + $0x128] sm:%s851] %v1008
        %v1010 = vld [vmem:[%s858 + $0x12c] sm:%s851]
        %1011 = vst [vmem:[%s859 + $0x12c] sm:%s851] %v1010
        %v1012 = vld [vmem:[%s858 + $0x130] sm:%s851]
        %1013 = vst [vmem:[%s859 + $0x130] sm:%s851] %v1012
        %v1014 = vld [vmem:[%s858 + $0x138] sm:%s851]
        %1015 = vst [vmem:[%s859 + $0x134] sm:%s851] %v1014
        %v1016 = vld [vmem:[%s858 + $0x134] sm:%s851]
        %1017 = vst [vmem:[%s859 + $0x138] sm:%s851] %v1016
        %v1018 = vld [vmem:[%s858 + $0x13c] sm:%s851]
        %1019 = vst [vmem:[%s859 + $0x13c] sm:%s851] %v1018
        %v1020 = vld [vmem:[%s858 + $0x140] sm:%s851]
        %1021 = vst [vmem:[%s859 + $0x140] sm:%s851] %v1020
        %v1022 = vld [vmem:[%s858 + $0x148] sm:%s851]
        %1023 = vst [vmem:[%s859 + $0x144] sm:%s851] %v1022
        %v1024 = vld [vmem:[%s858 + $0x144] sm:%s851]
        %1025 = vst [vmem:[%s859 + $0x148] sm:%s851] %v1024
        %v1026 = vld [vmem:[%s858 + $0x14c] sm:%s851]
        %1027 = vst [vmem:[%s859 + $0x14c] sm:%s851] %v1026
        %v1028 = vld [vmem:[%s858 + $0x150] sm:%s851]
        %1029 = vst [vmem:[%s859 + $0x150] sm:%s851] %v1028
        %v1030 = vld [vmem:[%s858 + $0x158] sm:%s851]
        %1031 = vst [vmem:[%s859 + $0x154] sm:%s851] %v1030
        %v1032 = vld [vmem:[%s858 + $0x154] sm:%s851]
        %1033 = vst [vmem:[%s859 + $0x158] sm:%s851] %v1032
        %v1034 = vld [vmem:[%s858 + $0x15c] sm:%s851]
        %1035 = vst [vmem:[%s859 + $0x15c] sm:%s851] %v1034
        %v1036 = vld [vmem:[%s858 + $0x160] sm:%s851]
        %1037 = vst [vmem:[%s859 + $0x160] sm:%s851] %v1036
        %v1038 = vld [vmem:[%s858 + $0x168] sm:%s851]
        %1039 = vst [vmem:[%s859 + $0x164] sm:%s851] %v1038
        %v1040 = vld [vmem:[%s858 + $0x164] sm:%s851]
        %1041 = vst [vmem:[%s859 + $0x168] sm:%s851] %v1040
        %v1042 = vld [vmem:[%s858 + $0x16c] sm:%s851]
        %1043 = vst [vmem:[%s859 + $0x16c] sm:%s851] %v1042
        %v1044 = vld [vmem:[%s858 + $0x170] sm:%s851]
        %1045 = vst [vmem:[%s859 + $0x170] sm:%s851] %v1044
        %v1046 = vld [vmem:[%s858 + $0x178] sm:%s851]
        %1047 = vst [vmem:[%s859 + $0x174] sm:%s851] %v1046
        %v1048 = vld [vmem:[%s858 + $0x174] sm:%s851]
        %1049 = vst [vmem:[%s859 + $0x178] sm:%s851] %v1048
        %v1050 = vld [vmem:[%s858 + $0x17c] sm:%s851]
        %1051 = vst [vmem:[%s859 + $0x17c] sm:%s851] %v1050
        %v1052 = vld [vmem:[%s858 + $0x180] sm:%s851]
        %1053 = vst [vmem:[%s859 + $0x180] sm:%s851] %v1052
        %v1054 = vld [vmem:[%s858 + $0x188] sm:%s851]
        %1055 = vst [vmem:[%s859 + $0x184] sm:%s851] %v1054
        %v1056 = vld [vmem:[%s858 + $0x184] sm:%s851]
        %1057 = vst [vmem:[%s859 + $0x188] sm:%s851] %v1056
        %v1058 = vld [vmem:[%s858 + $0x18c] sm:%s851]
        %1059 = vst [vmem:[%s859 + $0x18c] sm:%s851] %v1058
        %v1060 = vld [vmem:[%s858 + $0x190] sm:%s851]
        %1061 = vst [vmem:[%s859 + $0x190] sm:%s851] %v1060
        %v1062 = vld [vmem:[%s858 + $0x198] sm:%s851]
        %1063 = vst [vmem:[%s859 + $0x194] sm:%s851] %v1062
        %v1064 = vld [vmem:[%s858 + $0x194] sm:%s851]
        %1065 = vst [vmem:[%s859 + $0x198] sm:%s851] %v1064
        %v1066 = vld [vmem:[%s858 + $0x19c] sm:%s851]
        %1067 = vst [vmem:[%s859 + $0x19c] sm:%s851] %v1066
        %v1068 = vld [vmem:[%s858 + $0x1a0] sm:%s851]
        %1069 = vst [vmem:[%s859 + $0x1a0] sm:%s851] %v1068
        %v1070 = vld [vmem:[%s858 + $0x1a8] sm:%s851]
        %1071 = vst [vmem:[%s859 + $0x1a4] sm:%s851] %v1070
        %v1072 = vld [vmem:[%s858 + $0x1a4] sm:%s851]
        %1073 = vst [vmem:[%s859 + $0x1a8] sm:%s851] %v1072
        %v1074 = vld [vmem:[%s858 + $0x1ac] sm:%s851]
        %1075 = vst [vmem:[%s859 + $0x1ac] sm:%s851] %v1074
        %v1076 = vld [vmem:[%s858 + $0x1b0] sm:%s851]
        %1077 = vst [vmem:[%s859 + $0x1b0] sm:%s851] %v1076
        %v1078 = vld [vmem:[%s858 + $0x1b8] sm:%s851]
        %1079 = vst [vmem:[%s859 + $0x1b4] sm:%s851] %v1078
        %v1080 = vld [vmem:[%s858 + $0x1b4] sm:%s851]
        %1081 = vst [vmem:[%s859 + $0x1b8] sm:%s851] %v1080
        %v1082 = vld [vmem:[%s858 + $0x1bc] sm:%s851]
        %1083 = vst [vmem:[%s859 + $0x1bc] sm:%s851] %v1082
        %v1084 = vld [vmem:[%s858 + $0x1c0] sm:%s851]
        %1085 = vst [vmem:[%s859 + $0x1c0] sm:%s851] %v1084
        %v1086 = vld [vmem:[%s858 + $0x1c8] sm:%s851]
        %1087 = vst [vmem:[%s859 + $0x1c4] sm:%s851] %v1086
        %v1088 = vld [vmem:[%s858 + $0x1c4] sm:%s851]
        %1089 = vst [vmem:[%s859 + $0x1c8] sm:%s851] %v1088
        %v1090 = vld [vmem:[%s858 + $0x1cc] sm:%s851]
        %1091 = vst [vmem:[%s859 + $0x1cc] sm:%s851] %v1090
        %v1092 = vld [vmem:[%s858 + $0x1d0] sm:%s851]
        %1093 = vst [vmem:[%s859 + $0x1d0] sm:%s851] %v1092
        %v1094 = vld [vmem:[%s858 + $0x1d8] sm:%s851]
        %1095 = vst [vmem:[%s859 + $0x1d4] sm:%s851] %v1094
        %v1096 = vld [vmem:[%s858 + $0x1d4] sm:%s851]
        %1097 = vst [vmem:[%s859 + $0x1d8] sm:%s851] %v1096
        %v1098 = vld [vmem:[%s858 + $0x1dc] sm:%s851]
        %1099 = vst [vmem:[%s859 + $0x1dc] sm:%s851] %v1098
        %v1100 = vld [vmem:[%s858 + $0x1e0] sm:%s851]
        %1101 = vst [vmem:[%s859 + $0x1e0] sm:%s851] %v1100
        %v1102 = vld [vmem:[%s858 + $0x1e8] sm:%s851]
        %1103 = vst [vmem:[%s859 + $0x1e4] sm:%s851] %v1102
        %v1104 = vld [vmem:[%s858 + $0x1e4] sm:%s851]
        %1105 = vst [vmem:[%s859 + $0x1e8] sm:%s851] %v1104
        %v1106 = vld [vmem:[%s858 + $0x1ec] sm:%s851]
        %1107 = vst [vmem:[%s859 + $0x1ec] sm:%s851] %v1106
        %v1108 = vld [vmem:[%s858 + $0x1f0] sm:%s851]
        %1109 = vst [vmem:[%s859 + $0x1f0] sm:%s851] %v1108
        %v1110 = vld [vmem:[%s858 + $0x1f8] sm:%s851]
        %1111 = vst [vmem:[%s859 + $0x1f4] sm:%s851] %v1110
        %v1112 = vld [vmem:[%s858 + $0x1f4] sm:%s851]
        %1113 = vst [vmem:[%s859 + $0x1f8] sm:%s851] %v1112
        %v1114 = vld [vmem:[%s858 + $0x1fc] sm:%s851]
        %1115 = vst [vmem:[%s859 + $0x1fc] sm:%s851] %v1114
        %v1116 = vld [vmem:[%s858 + $0x200] sm:%s851]
        %1117 = vst [vmem:[%s859 + $0x200] sm:%s851] %v1116
        %v1118 = vld [vmem:[%s858 + $0x208] sm:%s851]
        %1119 = vst [vmem:[%s859 + $0x204] sm:%s851] %v1118
        %v1120 = vld [vmem:[%s858 + $0x204] sm:%s851]
        %1121 = vst [vmem:[%s859 + $0x208] sm:%s851] %v1120
        %v1122 = vld [vmem:[%s858 + $0x20c] sm:%s851]
        %1123 = vst [vmem:[%s859 + $0x20c] sm:%s851] %v1122
        %v1124 = vld [vmem:[%s858 + $0x210] sm:%s851]
        %1125 = vst [vmem:[%s859 + $0x210] sm:%s851] %v1124
        %v1126 = vld [vmem:[%s858 + $0x218] sm:%s851]
        %1127 = vst [vmem:[%s859 + $0x214] sm:%s851] %v1126
        %v1128 = vld [vmem:[%s858 + $0x214] sm:%s851]
        %1129 = vst [vmem:[%s859 + $0x218] sm:%s851] %v1128
        %v1130 = vld [vmem:[%s858 + $0x21c] sm:%s851]
        %1131 = vst [vmem:[%s859 + $0x21c] sm:%s851] %v1130
        %v1132 = vld [vmem:[%s858 + $0x220] sm:%s851]
        %1133 = vst [vmem:[%s859 + $0x220] sm:%s851] %v1132
        %v1134 = vld [vmem:[%s858 + $0x228] sm:%s851]
        %1135 = vst [vmem:[%s859 + $0x224] sm:%s851] %v1134
        %v1136 = vld [vmem:[%s858 + $0x224] sm:%s851]
        %1137 = vst [vmem:[%s859 + $0x228] sm:%s851] %v1136
        %v1138 = vld [vmem:[%s858 + $0x22c] sm:%s851]
        %1139 = vst [vmem:[%s859 + $0x22c] sm:%s851] %v1138
        %v1140 = vld [vmem:[%s858 + $0x230] sm:%s851]
        %1141 = vst [vmem:[%s859 + $0x230] sm:%s851] %v1140
        %v1142 = vld [vmem:[%s858 + $0x238] sm:%s851]
        %1143 = vst [vmem:[%s859 + $0x234] sm:%s851] %v1142
        %v1144 = vld [vmem:[%s858 + $0x234] sm:%s851]
        %1145 = vst [vmem:[%s859 + $0x238] sm:%s851] %v1144
        %v1146 = vld [vmem:[%s858 + $0x23c] sm:%s851]
        %1147 = vst [vmem:[%s859 + $0x23c] sm:%s851] %v1146
        %v1148 = vld [vmem:[%s858 + $0x240] sm:%s851]
        %1149 = vst [vmem:[%s859 + $0x240] sm:%s851] %v1148
        %v1150 = vld [vmem:[%s858 + $0x248] sm:%s851]
        %1151 = vst [vmem:[%s859 + $0x244] sm:%s851] %v1150
        %v1152 = vld [vmem:[%s858 + $0x244] sm:%s851]
        %1153 = vst [vmem:[%s859 + $0x248] sm:%s851] %v1152
        %v1154 = vld [vmem:[%s858 + $0x24c] sm:%s851]
        %1155 = vst [vmem:[%s859 + $0x24c] sm:%s851] %v1154
        %v1156 = vld [vmem:[%s858 + $0x250] sm:%s851]
        %1157 = vst [vmem:[%s859 + $0x250] sm:%s851] %v1156
        %v1158 = vld [vmem:[%s858 + $0x258] sm:%s851]
        %1159 = vst [vmem:[%s859 + $0x254] sm:%s851] %v1158
        %v1160 = vld [vmem:[%s858 + $0x254] sm:%s851]
        %1161 = vst [vmem:[%s859 + $0x258] sm:%s851] %v1160
        %v1162 = vld [vmem:[%s858 + $0x25c] sm:%s851]
        %1163 = vst [vmem:[%s859 + $0x25c] sm:%s851] %v1162
        %v1164 = vld [vmem:[%s858 + $0x260] sm:%s851]
        %1165 = vst [vmem:[%s859 + $0x260] sm:%s851] %v1164
        %v1166 = vld [vmem:[%s858 + $0x268] sm:%s851]
        %1167 = vst [vmem:[%s859 + $0x264] sm:%s851] %v1166
        %v1168 = vld [vmem:[%s858 + $0x264] sm:%s851]
        %1169 = vst [vmem:[%s859 + $0x268] sm:%s851] %v1168
        %v1170 = vld [vmem:[%s858 + $0x26c] sm:%s851]
        %1171 = vst [vmem:[%s859 + $0x26c] sm:%s851] %v1170
        %v1172 = vld [vmem:[%s858 + $0x270] sm:%s851]
        %1173 = vst [vmem:[%s859 + $0x270] sm:%s851] %v1172
        %v1174 = vld [vmem:[%s858 + $0x278] sm:%s851]
        %1175 = vst [vmem:[%s859 + $0x274] sm:%s851] %v1174
        %v1176 = vld [vmem:[%s858 + $0x274] sm:%s851]
        %1177 = vst [vmem:[%s859 + $0x278] sm:%s851] %v1176
        %v1178 = vld [vmem:[%s858 + $0x27c] sm:%s851]
        %1179 = vst [vmem:[%s859 + $0x27c] sm:%s851] %v1178
        %v1180 = vld [vmem:[%s858 + $0x280] sm:%s851]
        %1181 = vst [vmem:[%s859 + $0x280] sm:%s851] %v1180
        %v1182 = vld [vmem:[%s858 + $0x288] sm:%s851]
        %1183 = vst [vmem:[%s859 + $0x284] sm:%s851] %v1182
        %v1184 = vld [vmem:[%s858 + $0x284] sm:%s851]
        %1185 = vst [vmem:[%s859 + $0x288] sm:%s851] %v1184
        %v1186 = vld [vmem:[%s858 + $0x28c] sm:%s851]
        %1187 = vst [vmem:[%s859 + $0x28c] sm:%s851] %v1186
        %v1188 = vld [vmem:[%s858 + $0x290] sm:%s851]
        %1189 = vst [vmem:[%s859 + $0x290] sm:%s851] %v1188
        %v1190 = vld [vmem:[%s858 + $0x298] sm:%s851]
        %1191 = vst [vmem:[%s859 + $0x294] sm:%s851] %v1190
        %v1192 = vld [vmem:[%s858 + $0x294] sm:%s851]
        %1193 = vst [vmem:[%s859 + $0x298] sm:%s851] %v1192
        %v1194 = vld [vmem:[%s858 + $0x29c] sm:%s851]
        %1195 = vst [vmem:[%s859 + $0x29c] sm:%s851] %v1194
        %v1196 = vld [vmem:[%s858 + $0x2a0] sm:%s851]
        %1197 = vst [vmem:[%s859 + $0x2a0] sm:%s851] %v1196
        %v1198 = vld [vmem:[%s858 + $0x2a8] sm:%s851]
        %1199 = vst [vmem:[%s859 + $0x2a4] sm:%s851] %v1198
        %v1200 = vld [vmem:[%s858 + $0x2a4] sm:%s851]
        %1201 = vst [vmem:[%s859 + $0x2a8] sm:%s851] %v1200
        %v1202 = vld [vmem:[%s858 + $0x2ac] sm:%s851]
        %1203 = vst [vmem:[%s859 + $0x2ac] sm:%s851] %v1202
        %v1204 = vld [vmem:[%s858 + $0x2b0] sm:%s851]
        %1205 = vst [vmem:[%s859 + $0x2b0] sm:%s851] %v1204
        %v1206 = vld [vmem:[%s858 + $0x2b8] sm:%s851]
        %1207 = vst [vmem:[%s859 + $0x2b4] sm:%s851] %v1206
        %v1208 = vld [vmem:[%s858 + $0x2b4] sm:%s851]
        %1209 = vst [vmem:[%s859 + $0x2b8] sm:%s851] %v1208
        %v1210 = vld [vmem:[%s858 + $0x2bc] sm:%s851]
        %1211 = vst [vmem:[%s859 + $0x2bc] sm:%s851] %v1210
        %v1212 = vld [vmem:[%s858 + $0x2c0] sm:%s851]
        %1213 = vst [vmem:[%s859 + $0x2c0] sm:%s851] %v1212
        %v1214 = vld [vmem:[%s858 + $0x2c8] sm:%s851]
        %1215 = vst [vmem:[%s859 + $0x2c4] sm:%s851] %v1214
        %v1216 = vld [vmem:[%s858 + $0x2c4] sm:%s851]
        %1217 = vst [vmem:[%s859 + $0x2c8] sm:%s851] %v1216
        %v1218 = vld [vmem:[%s858 + $0x2cc] sm:%s851]
        %1219 = vst [vmem:[%s859 + $0x2cc] sm:%s851] %v1218
        %v1220 = vld [vmem:[%s858 + $0x2d0] sm:%s851]
        %1221 = vst [vmem:[%s859 + $0x2d0] sm:%s851] %v1220
        %v1222 = vld [vmem:[%s858 + $0x2d8] sm:%s851]
        %1223 = vst [vmem:[%s859 + $0x2d4] sm:%s851] %v1222
        %v1224 = vld [vmem:[%s858 + $0x2d4] sm:%s851]
        %1225 = vst [vmem:[%s859 + $0x2d8] sm:%s851] %v1224
        %v1226 = vld [vmem:[%s858 + $0x2dc] sm:%s851]
        %1227 = vst [vmem:[%s859 + $0x2dc] sm:%s851] %v1226
        %v1228 = vld [vmem:[%s858 + $0x2e0] sm:%s851]
        %1229 = vst [vmem:[%s859 + $0x2e0] sm:%s851] %v1228
        %v1230 = vld [vmem:[%s858 + $0x2e8] sm:%s851]
        %1231 = vst [vmem:[%s859 + $0x2e4] sm:%s851] %v1230
        %v1232 = vld [vmem:[%s858 + $0x2e4] sm:%s851]
        %1233 = vst [vmem:[%s859 + $0x2e8] sm:%s851] %v1232
        %v1234 = vld [vmem:[%s858 + $0x2ec] sm:%s851]
        %1235 = vst [vmem:[%s859 + $0x2ec] sm:%s851] %v1234
        %v1236 = vld [vmem:[%s858 + $0x2f0] sm:%s851]
        %1237 = vst [vmem:[%s859 + $0x2f0] sm:%s851] %v1236
        %v1238 = vld [vmem:[%s858 + $0x2f8] sm:%s851]
        %1239 = vst [vmem:[%s859 + $0x2f4] sm:%s851] %v1238
        %v1240 = vld [vmem:[%s858 + $0x2f4] sm:%s851]
        %1241 = vst [vmem:[%s859 + $0x2f8] sm:%s851] %v1240
        %v1242 = vld [vmem:[%s858 + $0x2fc] sm:%s851]
        %1243 = vst [vmem:[%s859 + $0x2fc] sm:%s851] %v1242
        %v1244 = vld [vmem:[%s858 + $0x300] sm:%s851]
        %1245 = vst [vmem:[%s859 + $0x300] sm:%s851] %v1244
        %v1246 = vld [vmem:[%s858 + $0x308] sm:%s851]
        %1247 = vst [vmem:[%s859 + $0x304] sm:%s851] %v1246
        %v1248 = vld [vmem:[%s858 + $0x304] sm:%s851]
        %1249 = vst [vmem:[%s859 + $0x308] sm:%s851] %v1248
        %v1250 = vld [vmem:[%s858 + $0x30c] sm:%s851]
        %1251 = vst [vmem:[%s859 + $0x30c] sm:%s851] %v1250
        %v1252 = vld [vmem:[%s858 + $0x310] sm:%s851]
        %1253 = vst [vmem:[%s859 + $0x310] sm:%s851] %v1252
        %v1254 = vld [vmem:[%s858 + $0x318] sm:%s851]
        %1255 = vst [vmem:[%s859 + $0x314] sm:%s851] %v1254
        %v1256 = vld [vmem:[%s858 + $0x314] sm:%s851]
        %1257 = vst [vmem:[%s859 + $0x318] sm:%s851] %v1256
        %v1258 = vld [vmem:[%s858 + $0x31c] sm:%s851]
        %1259 = vst [vmem:[%s859 + $0x31c] sm:%s851] %v1258
        %v1260 = vld [vmem:[%s858 + $0x320] sm:%s851]
        %1261 = vst [vmem:[%s859 + $0x320] sm:%s851] %v1260
        %v1262 = vld [vmem:[%s858 + $0x328] sm:%s851]
        %1263 = vst [vmem:[%s859 + $0x324] sm:%s851] %v1262
        %v1264 = vld [vmem:[%s858 + $0x324] sm:%s851]
        %1265 = vst [vmem:[%s859 + $0x328] sm:%s851] %v1264
        %v1266 = vld [vmem:[%s858 + $0x32c] sm:%s851]
        %1267 = vst [vmem:[%s859 + $0x32c] sm:%s851] %v1266
        %v1268 = vld [vmem:[%s858 + $0x330] sm:%s851]
        %1269 = vst [vmem:[%s859 + $0x330] sm:%s851] %v1268
        %v1270 = vld [vmem:[%s858 + $0x338] sm:%s851]
        %1271 = vst [vmem:[%s859 + $0x334] sm:%s851] %v1270
        %v1272 = vld [vmem:[%s858 + $0x334] sm:%s851]
        %1273 = vst [vmem:[%s859 + $0x338] sm:%s851] %v1272
        %v1274 = vld [vmem:[%s858 + $0x33c] sm:%s851]
        %1275 = vst [vmem:[%s859 + $0x33c] sm:%s851] %v1274
        %v1276 = vld [vmem:[%s858 + $0x340] sm:%s851]
        %1277 = vst [vmem:[%s859 + $0x340] sm:%s851] %v1276
        %v1278 = vld [vmem:[%s858 + $0x348] sm:%s851]
        %1279 = vst [vmem:[%s859 + $0x344] sm:%s851] %v1278
        %v1280 = vld [vmem:[%s858 + $0x344] sm:%s851]
        %1281 = vst [vmem:[%s859 + $0x348] sm:%s851] %v1280
        %v1282 = vld [vmem:[%s858 + $0x34c] sm:%s851]
        %1283 = vst [vmem:[%s859 + $0x34c] sm:%s851] %v1282
        %v1284 = vld [vmem:[%s858 + $0x350] sm:%s851]
        %1285 = vst [vmem:[%s859 + $0x350] sm:%s851] %v1284
        %v1286 = vld [vmem:[%s858 + $0x358] sm:%s851]
        %1287 = vst [vmem:[%s859 + $0x354] sm:%s851] %v1286
        %v1288 = vld [vmem:[%s858 + $0x354] sm:%s851]
        %1289 = vst [vmem:[%s859 + $0x358] sm:%s851] %v1288
        %v1290 = vld [vmem:[%s858 + $0x35c] sm:%s851]
        %1291 = vst [vmem:[%s859 + $0x35c] sm:%s851] %v1290
        %v1292 = vld [vmem:[%s858 + $0x360] sm:%s851]
        %1293 = vst [vmem:[%s859 + $0x360] sm:%s851] %v1292
        %v1294 = vld [vmem:[%s858 + $0x368] sm:%s851]
        %1295 = vst [vmem:[%s859 + $0x364] sm:%s851] %v1294
        %v1296 = vld [vmem:[%s858 + $0x364] sm:%s851]
        %1297 = vst [vmem:[%s859 + $0x368] sm:%s851] %v1296
        %v1298 = vld [vmem:[%s858 + $0x36c] sm:%s851]
        %1299 = vst [vmem:[%s859 + $0x36c] sm:%s851] %v1298
        %v1300 = vld [vmem:[%s858 + $0x370] sm:%s851]
        %1301 = vst [vmem:[%s859 + $0x370] sm:%s851] %v1300
        %v1302 = vld [vmem:[%s858 + $0x378] sm:%s851]
        %1303 = vst [vmem:[%s859 + $0x374] sm:%s851] %v1302
        %v1304 = vld [vmem:[%s858 + $0x374] sm:%s851]
        %1305 = vst [vmem:[%s859 + $0x378] sm:%s851] %v1304
        %v1306 = vld [vmem:[%s858 + $0x37c] sm:%s851]
        %1307 = vst [vmem:[%s859 + $0x37c] sm:%s851] %v1306
        %v1308 = vld [vmem:[%s858 + $0x380] sm:%s851]
        %1309 = vst [vmem:[%s859 + $0x380] sm:%s851] %v1308
        %v1310 = vld [vmem:[%s858 + $0x388] sm:%s851]
        %1311 = vst [vmem:[%s859 + $0x384] sm:%s851] %v1310
        %v1312 = vld [vmem:[%s858 + $0x384] sm:%s851]
        %1313 = vst [vmem:[%s859 + $0x388] sm:%s851] %v1312
        %v1314 = vld [vmem:[%s858 + $0x38c] sm:%s851]
        %1315 = vst [vmem:[%s859 + $0x38c] sm:%s851] %v1314
        %v1316 = vld [vmem:[%s858 + $0x390] sm:%s851]
        %1317 = vst [vmem:[%s859 + $0x390] sm:%s851] %v1316
        %v1318 = vld [vmem:[%s858 + $0x398] sm:%s851]
        %1319 = vst [vmem:[%s859 + $0x394] sm:%s851] %v1318
        %v1320 = vld [vmem:[%s858 + $0x394] sm:%s851]
        %1321 = vst [vmem:[%s859 + $0x398] sm:%s851] %v1320
        %v1322 = vld [vmem:[%s858 + $0x39c] sm:%s851]
        %1323 = vst [vmem:[%s859 + $0x39c] sm:%s851] %v1322
        %v1324 = vld [vmem:[%s858 + $0x3a0] sm:%s851]
        %1325 = vst [vmem:[%s859 + $0x3a0] sm:%s851] %v1324
        %v1326 = vld [vmem:[%s858 + $0x3a8] sm:%s851]
        %1327 = vst [vmem:[%s859 + $0x3a4] sm:%s851] %v1326
        %v1328 = vld [vmem:[%s858 + $0x3a4] sm:%s851]
        %1329 = vst [vmem:[%s859 + $0x3a8] sm:%s851] %v1328
        %v1330 = vld [vmem:[%s858 + $0x3ac] sm:%s851]
        %1331 = vst [vmem:[%s859 + $0x3ac] sm:%s851] %v1330
        %v1332 = vld [vmem:[%s858 + $0x3b0] sm:%s851]
        %1333 = vst [vmem:[%s859 + $0x3b0] sm:%s851] %v1332
        %v1334 = vld [vmem:[%s858 + $0x3b8] sm:%s851]
        %1335 = vst [vmem:[%s859 + $0x3b4] sm:%s851] %v1334
        %v1336 = vld [vmem:[%s858 + $0x3b4] sm:%s851]
        %1337 = vst [vmem:[%s859 + $0x3b8] sm:%s851] %v1336
        %v1338 = vld [vmem:[%s858 + $0x3bc] sm:%s851]
        %1339 = vst [vmem:[%s859 + $0x3bc] sm:%s851] %v1338
        %v1340 = vld [vmem:[%s858 + $0x3c0] sm:%s851]
        %1341 = vst [vmem:[%s859 + $0x3c0] sm:%s851] %v1340
        %v1342 = vld [vmem:[%s858 + $0x3c8] sm:%s851]
        %1343 = vst [vmem:[%s859 + $0x3c4] sm:%s851] %v1342
        %v1344 = vld [vmem:[%s858 + $0x3c4] sm:%s851]
        %1345 = vst [vmem:[%s859 + $0x3c8] sm:%s851] %v1344
        %v1346 = vld [vmem:[%s858 + $0x3cc] sm:%s851]
        %1347 = vst [vmem:[%s859 + $0x3cc] sm:%s851] %v1346
        %v1348 = vld [vmem:[%s858 + $0x3d0] sm:%s851]
        %1349 = vst [vmem:[%s859 + $0x3d0] sm:%s851] %v1348
        %v1350 = vld [vmem:[%s858 + $0x3d8] sm:%s851]
        %1351 = vst [vmem:[%s859 + $0x3d4] sm:%s851] %v1350
        %v1352 = vld [vmem:[%s858 + $0x3d4] sm:%s851]
        %1353 = vst [vmem:[%s859 + $0x3d8] sm:%s851] %v1352
        %v1354 = vld [vmem:[%s858 + $0x3dc] sm:%s851]
        %1355 = vst [vmem:[%s859 + $0x3dc] sm:%s851] %v1354
        %v1356 = vld [vmem:[%s858 + $0x3e0] sm:%s851]
        %1357 = vst [vmem:[%s859 + $0x3e0] sm:%s851] %v1356
        %v1358 = vld [vmem:[%s858 + $0x3e8] sm:%s851]
        %1359 = vst [vmem:[%s859 + $0x3e4] sm:%s851] %v1358
        %v1360 = vld [vmem:[%s858 + $0x3e4] sm:%s851]
        %1361 = vst [vmem:[%s859 + $0x3e8] sm:%s851] %v1360
        %v1362 = vld [vmem:[%s858 + $0x3ec] sm:%s851]
        %1363 = vst [vmem:[%s859 + $0x3ec] sm:%s851] %v1362
        %v1364 = vld [vmem:[%s858 + $0x3f0] sm:%s851]
        %1365 = vst [vmem:[%s859 + $0x3f0] sm:%s851] %v1364
        %v1366 = vld [vmem:[%s858 + $0x3f8] sm:%s851]
        %1367 = vst [vmem:[%s859 + $0x3f4] sm:%s851] %v1366
        %v1368 = vld [vmem:[%s858 + $0x3f4] sm:%s851]
        %1369 = vst [vmem:[%s859 + $0x3f8] sm:%s851] %v1368
        %v1370 = vld [vmem:[%s858 + $0x3fc] sm:%s851]
        %1371 = vst [vmem:[%s859 + $0x3fc] sm:%s851] %v1370
        %v1372 = vld [vmem:[%s858 + $0x400] sm:%s851]
        %1373 = vst [vmem:[%s859 + $0x400] sm:%s851] %v1372
        %v1374 = vld [vmem:[%s858 + $0x408] sm:%s851]
        %1375 = vst [vmem:[%s859 + $0x404] sm:%s851] %v1374
        %v1376 = vld [vmem:[%s858 + $0x404] sm:%s851]
        %1377 = vst [vmem:[%s859 + $0x408] sm:%s851] %v1376
        %v1378 = vld [vmem:[%s858 + $0x40c] sm:%s851]
        %1379 = vst [vmem:[%s859 + $0x40c] sm:%s851] %v1378
        %v1380 = vld [vmem:[%s858 + $0x410] sm:%s851]
        %1381 = vst [vmem:[%s859 + $0x410] sm:%s851] %v1380
        %v1382 = vld [vmem:[%s858 + $0x418] sm:%s851]
        %1383 = vst [vmem:[%s859 + $0x414] sm:%s851] %v1382
        %v1384 = vld [vmem:[%s858 + $0x414] sm:%s851]
        %1385 = vst [vmem:[%s859 + $0x418] sm:%s851] %v1384
        %v1386 = vld [vmem:[%s858 + $0x41c] sm:%s851]
        %1387 = vst [vmem:[%s859 + $0x41c] sm:%s851] %v1386
        %v1388 = vld [vmem:[%s858 + $0x420] sm:%s851]
        %1389 = vst [vmem:[%s859 + $0x420] sm:%s851] %v1388
        %v1390 = vld [vmem:[%s858 + $0x428] sm:%s851]
        %1391 = vst [vmem:[%s859 + $0x424] sm:%s851] %v1390
        %v1392 = vld [vmem:[%s858 + $0x424] sm:%s851]
        %1393 = vst [vmem:[%s859 + $0x428] sm:%s851] %v1392
        %v1394 = vld [vmem:[%s858 + $0x42c] sm:%s851]
        %1395 = vst [vmem:[%s859 + $0x42c] sm:%s851] %v1394
        %v1396 = vld [vmem:[%s858 + $0x430] sm:%s851]
        %1397 = vst [vmem:[%s859 + $0x430] sm:%s851] %v1396
        %v1398 = vld [vmem:[%s858 + $0x438] sm:%s851]
        %1399 = vst [vmem:[%s859 + $0x434] sm:%s851] %v1398
        %v1400 = vld [vmem:[%s858 + $0x434] sm:%s851]
        %1401 = vst [vmem:[%s859 + $0x438] sm:%s851] %v1400
        %v1402 = vld [vmem:[%s858 + $0x43c] sm:%s851]
        %1403 = vst [vmem:[%s859 + $0x43c] sm:%s851] %v1402
        %v1404 = vld [vmem:[%s858 + $0x440] sm:%s851]
        %1405 = vst [vmem:[%s859 + $0x440] sm:%s851] %v1404
        %v1406 = vld [vmem:[%s858 + $0x448] sm:%s851]
        %1407 = vst [vmem:[%s859 + $0x444] sm:%s851] %v1406
        %v1408 = vld [vmem:[%s858 + $0x444] sm:%s851]
        %1409 = vst [vmem:[%s859 + $0x448] sm:%s851] %v1408
        %v1410 = vld [vmem:[%s858 + $0x44c] sm:%s851]
        %1411 = vst [vmem:[%s859 + $0x44c] sm:%s851] %v1410
        %v1412 = vld [vmem:[%s858 + $0x450] sm:%s851]
        %1413 = vst [vmem:[%s859 + $0x450] sm:%s851] %v1412
        %v1414 = vld [vmem:[%s858 + $0x458] sm:%s851]
        %1415 = vst [vmem:[%s859 + $0x454] sm:%s851] %v1414
        %v1416 = vld [vmem:[%s858 + $0x454] sm:%s851]
        %1417 = vst [vmem:[%s859 + $0x458] sm:%s851] %v1416
        %v1418 = vld [vmem:[%s858 + $0x45c] sm:%s851]
        %1419 = vst [vmem:[%s859 + $0x45c] sm:%s851] %v1418
        %v1420 = vld [vmem:[%s858 + $0x460] sm:%s851]
        %1421 = vst [vmem:[%s859 + $0x460] sm:%s851] %v1420
        %v1422 = vld [vmem:[%s858 + $0x468] sm:%s851]
        %1423 = vst [vmem:[%s859 + $0x464] sm:%s851] %v1422
        %v1424 = vld [vmem:[%s858 + $0x464] sm:%s851]
        %1425 = vst [vmem:[%s859 + $0x468] sm:%s851] %v1424
        %v1426 = vld [vmem:[%s858 + $0x46c] sm:%s851]
        %1427 = vst [vmem:[%s859 + $0x46c] sm:%s851] %v1426
        %v1428 = vld [vmem:[%s858 + $0x470] sm:%s851]
        %1429 = vst [vmem:[%s859 + $0x470] sm:%s851] %v1428
        %v1430 = vld [vmem:[%s858 + $0x478] sm:%s851]
        %1431 = vst [vmem:[%s859 + $0x474] sm:%s851] %v1430
        %v1432 = vld [vmem:[%s858 + $0x474] sm:%s851]
        %1433 = vst [vmem:[%s859 + $0x478] sm:%s851] %v1432
        %v1434 = vld [vmem:[%s858 + $0x47c] sm:%s851]
        %1435 = vst [vmem:[%s859 + $0x47c] sm:%s851] %v1434
        %v1436 = vld [vmem:[%s858 + $0x480] sm:%s851]
        %1437 = vst [vmem:[%s859 + $0x480] sm:%s851] %v1436
        %v1438 = vld [vmem:[%s858 + $0x488] sm:%s851]
        %1439 = vst [vmem:[%s859 + $0x484] sm:%s851] %v1438
        %v1440 = vld [vmem:[%s858 + $0x484] sm:%s851]
        %1441 = vst [vmem:[%s859 + $0x488] sm:%s851] %v1440
        %v1442 = vld [vmem:[%s858 + $0x48c] sm:%s851]
        %1443 = vst [vmem:[%s859 + $0x48c] sm:%s851] %v1442
        %v1444 = vld [vmem:[%s858 + $0x490] sm:%s851]
        %1445 = vst [vmem:[%s859 + $0x490] sm:%s851] %v1444
        %v1446 = vld [vmem:[%s858 + $0x498] sm:%s851]
        %1447 = vst [vmem:[%s859 + $0x494] sm:%s851] %v1446
        %v1448 = vld [vmem:[%s858 + $0x494] sm:%s851]
        %1449 = vst [vmem:[%s859 + $0x498] sm:%s851] %v1448
        %v1450 = vld [vmem:[%s858 + $0x49c] sm:%s851]
        %1451 = vst [vmem:[%s859 + $0x49c] sm:%s851] %v1450
        %v1452 = vld [vmem:[%s858 + $0x4a0] sm:%s851]
        %1453 = vst [vmem:[%s859 + $0x4a0] sm:%s851] %v1452
        %v1454 = vld [vmem:[%s858 + $0x4a8] sm:%s851]
        %1455 = vst [vmem:[%s859 + $0x4a4] sm:%s851] %v1454
        %v1456 = vld [vmem:[%s858 + $0x4a4] sm:%s851]
        %1457 = vst [vmem:[%s859 + $0x4a8] sm:%s851] %v1456
        %v1458 = vld [vmem:[%s858 + $0x4ac] sm:%s851]
        %1459 = vst [vmem:[%s859 + $0x4ac] sm:%s851] %v1458
        %v1460 = vld [vmem:[%s858 + $0x4b0] sm:%s851]
        %1461 = vst [vmem:[%s859 + $0x4b0] sm:%s851] %v1460
        %v1462 = vld [vmem:[%s858 + $0x4b8] sm:%s851]
        %1463 = vst [vmem:[%s859 + $0x4b4] sm:%s851] %v1462
        %v1464 = vld [vmem:[%s858 + $0x4b4] sm:%s851]
        %1465 = vst [vmem:[%s859 + $0x4b8] sm:%s851] %v1464
        %v1466 = vld [vmem:[%s858 + $0x4bc] sm:%s851]
        %1467 = vst [vmem:[%s859 + $0x4bc] sm:%s851] %v1466
        %v1468 = vld [vmem:[%s858 + $0x4c0] sm:%s851]
        %1469 = vst [vmem:[%s859 + $0x4c0] sm:%s851] %v1468
        %v1470 = vld [vmem:[%s858 + $0x4c8] sm:%s851]
        %1471 = vst [vmem:[%s859 + $0x4c4] sm:%s851] %v1470
        %v1472 = vld [vmem:[%s858 + $0x4c4] sm:%s851]
        %1473 = vst [vmem:[%s859 + $0x4c8] sm:%s851] %v1472
        %v1474 = vld [vmem:[%s858 + $0x4cc] sm:%s851]
        %1475 = vst [vmem:[%s859 + $0x4cc] sm:%s851] %v1474
        %v1476 = vld [vmem:[%s858 + $0x4d0] sm:%s851]
        %1477 = vst [vmem:[%s859 + $0x4d0] sm:%s851] %v1476
        %v1478 = vld [vmem:[%s858 + $0x4d8] sm:%s851]
        %1479 = vst [vmem:[%s859 + $0x4d4] sm:%s851] %v1478
        %v1480 = vld [vmem:[%s858 + $0x4d4] sm:%s851]
        %1481 = vst [vmem:[%s859 + $0x4d8] sm:%s851] %v1480
        %v1482 = vld [vmem:[%s858 + $0x4dc] sm:%s851]
        %1483 = vst [vmem:[%s859 + $0x4dc] sm:%s851] %v1482
        %v1484 = vld [vmem:[%s858 + $0x4e0] sm:%s851]
        %1485 = vst [vmem:[%s859 + $0x4e0] sm:%s851] %v1484
        %v1486 = vld [vmem:[%s858 + $0x4e8] sm:%s851]
        %1487 = vst [vmem:[%s859 + $0x4e4] sm:%s851] %v1486
        %v1488 = vld [vmem:[%s858 + $0x4e4] sm:%s851]
        %1489 = vst [vmem:[%s859 + $0x4e8] sm:%s851] %v1488
        %v1490 = vld [vmem:[%s858 + $0x4ec] sm:%s851]
        %1491 = vst [vmem:[%s859 + $0x4ec] sm:%s851] %v1490
        %v1492 = vld [vmem:[%s858 + $0x4f0] sm:%s851]
        %1493 = vst [vmem:[%s859 + $0x4f0] sm:%s851] %v1492
        %v1494 = vld [vmem:[%s858 + $0x4f8] sm:%s851]
        %1495 = vst [vmem:[%s859 + $0x4f4] sm:%s851] %v1494
        %v1496 = vld [vmem:[%s858 + $0x4f4] sm:%s851]
        %1497 = vst [vmem:[%s859 + $0x4f8] sm:%s851] %v1496
        %v1498 = vld [vmem:[%s858 + $0x4fc] sm:%s851]
        %1499 = vst [vmem:[%s859 + $0x4fc] sm:%s851] %v1498
        %v1500 = vld [vmem:[%s858 + $0x500] sm:%s851]
        %1501 = vst [vmem:[%s859 + $0x500] sm:%s851] %v1500
        %v1502 = vld [vmem:[%s858 + $0x508] sm:%s851]
        %1503 = vst [vmem:[%s859 + $0x504] sm:%s851] %v1502
        %v1504 = vld [vmem:[%s858 + $0x504] sm:%s851]
        %1505 = vst [vmem:[%s859 + $0x508] sm:%s851] %v1504
        %v1506 = vld [vmem:[%s858 + $0x50c] sm:%s851]
        %1507 = vst [vmem:[%s859 + $0x50c] sm:%s851] %v1506
        %v1508 = vld [vmem:[%s858 + $0x510] sm:%s851]
        %1509 = vst [vmem:[%s859 + $0x510] sm:%s851] %v1508
        %v1510 = vld [vmem:[%s858 + $0x518] sm:%s851]
        %1511 = vst [vmem:[%s859 + $0x514] sm:%s851] %v1510
        %v1512 = vld [vmem:[%s858 + $0x514] sm:%s851]
        %1513 = vst [vmem:[%s859 + $0x518] sm:%s851] %v1512
        %v1514 = vld [vmem:[%s858 + $0x51c] sm:%s851]
        %1515 = vst [vmem:[%s859 + $0x51c] sm:%s851] %v1514
        %v1516 = vld [vmem:[%s858 + $0x520] sm:%s851]
        %1517 = vst [vmem:[%s859 + $0x520] sm:%s851] %v1516
        %v1518 = vld [vmem:[%s858 + $0x528] sm:%s851]
        %1519 = vst [vmem:[%s859 + $0x524] sm:%s851] %v1518
        %v1520 = vld [vmem:[%s858 + $0x524] sm:%s851]
        %1521 = vst [vmem:[%s859 + $0x528] sm:%s851] %v1520
        %v1522 = vld [vmem:[%s858 + $0x52c] sm:%s851]
        %1523 = vst [vmem:[%s859 + $0x52c] sm:%s851] %v1522
        %v1524 = vld [vmem:[%s858 + $0x530] sm:%s851]
        %1525 = vst [vmem:[%s859 + $0x530] sm:%s851] %v1524
        %v1526 = vld [vmem:[%s858 + $0x538] sm:%s851]
        %1527 = vst [vmem:[%s859 + $0x534] sm:%s851] %v1526
        %v1528 = vld [vmem:[%s858 + $0x534] sm:%s851]
        %1529 = vst [vmem:[%s859 + $0x538] sm:%s851] %v1528
        %v1530 = vld [vmem:[%s858 + $0x53c] sm:%s851]
        %1531 = vst [vmem:[%s859 + $0x53c] sm:%s851] %v1530
        %v1532 = vld [vmem:[%s858 + $0x540] sm:%s851]
        %1533 = vst [vmem:[%s859 + $0x540] sm:%s851] %v1532
        %v1534 = vld [vmem:[%s858 + $0x548] sm:%s851]
        %1535 = vst [vmem:[%s859 + $0x544] sm:%s851] %v1534
        %v1536 = vld [vmem:[%s858 + $0x544] sm:%s851]
        %1537 = vst [vmem:[%s859 + $0x548] sm:%s851] %v1536
        %v1538 = vld [vmem:[%s858 + $0x54c] sm:%s851]
        %1539 = vst [vmem:[%s859 + $0x54c] sm:%s851] %v1538
        %v1540 = vld [vmem:[%s858 + $0x550] sm:%s851]
        %1541 = vst [vmem:[%s859 + $0x550] sm:%s851] %v1540
        %v1542 = vld [vmem:[%s858 + $0x558] sm:%s851]
        %1543 = vst [vmem:[%s859 + $0x554] sm:%s851] %v1542
        %v1544 = vld [vmem:[%s858 + $0x554] sm:%s851]
        %1545 = vst [vmem:[%s859 + $0x558] sm:%s851] %v1544
        %v1546 = vld [vmem:[%s858 + $0x55c] sm:%s851]
        %1547 = vst [vmem:[%s859 + $0x55c] sm:%s851] %v1546
        %v1548 = vld [vmem:[%s858 + $0x560] sm:%s851]
        %1549 = vst [vmem:[%s859 + $0x560] sm:%s851] %v1548
        %v1550 = vld [vmem:[%s858 + $0x568] sm:%s851]
        %1551 = vst [vmem:[%s859 + $0x564] sm:%s851] %v1550
        %v1552 = vld [vmem:[%s858 + $0x564] sm:%s851]
        %1553 = vst [vmem:[%s859 + $0x568] sm:%s851] %v1552
        %v1554 = vld [vmem:[%s858 + $0x56c] sm:%s851]
        %1555 = vst [vmem:[%s859 + $0x56c] sm:%s851] %v1554
        %v1556 = vld [vmem:[%s858 + $0x570] sm:%s851]
        %1557 = vst [vmem:[%s859 + $0x570] sm:%s851] %v1556
        %v1558 = vld [vmem:[%s858 + $0x578] sm:%s851]
        %1559 = vst [vmem:[%s859 + $0x574] sm:%s851] %v1558
        %v1560 = vld [vmem:[%s858 + $0x574] sm:%s851]
        %1561 = vst [vmem:[%s859 + $0x578] sm:%s851] %v1560
        %v1562 = vld [vmem:[%s858 + $0x57c] sm:%s851]
        %1563 = vst [vmem:[%s859 + $0x57c] sm:%s851] %v1562
        %v1564 = vld [vmem:[%s858 + $0x580] sm:%s851]
        %1565 = vst [vmem:[%s859 + $0x580] sm:%s851] %v1564
        %v1566 = vld [vmem:[%s858 + $0x588] sm:%s851]
        %1567 = vst [vmem:[%s859 + $0x584] sm:%s851] %v1566
        %v1568 = vld [vmem:[%s858 + $0x584] sm:%s851]
        %1569 = vst [vmem:[%s859 + $0x588] sm:%s851] %v1568
        %v1570 = vld [vmem:[%s858 + $0x58c] sm:%s851]
        %1571 = vst [vmem:[%s859 + $0x58c] sm:%s851] %v1570
        %v1572 = vld [vmem:[%s858 + $0x590] sm:%s851]
        %1573 = vst [vmem:[%s859 + $0x590] sm:%s851] %v1572
        %v1574 = vld [vmem:[%s858 + $0x598] sm:%s851]
        %1575 = vst [vmem:[%s859 + $0x594] sm:%s851] %v1574
        %v1576 = vld [vmem:[%s858 + $0x594] sm:%s851]
        %1577 = vst [vmem:[%s859 + $0x598] sm:%s851] %v1576
        %v1578 = vld [vmem:[%s858 + $0x59c] sm:%s851]
        %1579 = vst [vmem:[%s859 + $0x59c] sm:%s851] %v1578
        %v1580 = vld [vmem:[%s858 + $0x5a0] sm:%s851]
        %1581 = vst [vmem:[%s859 + $0x5a0] sm:%s851] %v1580
        %v1582 = vld [vmem:[%s858 + $0x5a8] sm:%s851]
        %1583 = vst [vmem:[%s859 + $0x5a4] sm:%s851] %v1582
        %v1584 = vld [vmem:[%s858 + $0x5a4] sm:%s851]
        %1585 = vst [vmem:[%s859 + $0x5a8] sm:%s851] %v1584
        %v1586 = vld [vmem:[%s858 + $0x5ac] sm:%s851]
        %1587 = vst [vmem:[%s859 + $0x5ac] sm:%s851] %v1586
        %v1588 = vld [vmem:[%s858 + $0x5b0] sm:%s851]
        %1589 = vst [vmem:[%s859 + $0x5b0] sm:%s851] %v1588
        %v1590 = vld [vmem:[%s858 + $0x5b8] sm:%s851]
        %1591 = vst [vmem:[%s859 + $0x5b4] sm:%s851] %v1590
        %v1592 = vld [vmem:[%s858 + $0x5b4] sm:%s851]
        %1593 = vst [vmem:[%s859 + $0x5b8] sm:%s851] %v1592
        %v1594 = vld [vmem:[%s858 + $0x5bc] sm:%s851]
        %1595 = vst [vmem:[%s859 + $0x5bc] sm:%s851] %v1594
        %v1596 = vld [vmem:[%s858 + $0x5c0] sm:%s851]
        %1597 = vst [vmem:[%s859 + $0x5c0] sm:%s851] %v1596
        %v1598 = vld [vmem:[%s858 + $0x5c8] sm:%s851]
        %1599 = vst [vmem:[%s859 + $0x5c4] sm:%s851] %v1598
        %v1600 = vld [vmem:[%s858 + $0x5c4] sm:%s851]
        %1601 = vst [vmem:[%s859 + $0x5c8] sm:%s851] %v1600
        %v1602 = vld [vmem:[%s858 + $0x5cc] sm:%s851]
        %1603 = vst [vmem:[%s859 + $0x5cc] sm:%s851] %v1602
        %v1604 = vld [vmem:[%s858 + $0x5d0] sm:%s851]
        %1605 = vst [vmem:[%s859 + $0x5d0] sm:%s851] %v1604
        %v1606 = vld [vmem:[%s858 + $0x5d8] sm:%s851]
        %1607 = vst [vmem:[%s859 + $0x5d4] sm:%s851] %v1606
        %v1608 = vld [vmem:[%s858 + $0x5d4] sm:%s851]
        %1609 = vst [vmem:[%s859 + $0x5d8] sm:%s851] %v1608
        %v1610 = vld [vmem:[%s858 + $0x5dc] sm:%s851]
        %1611 = vst [vmem:[%s859 + $0x5dc] sm:%s851] %v1610
        %v1612 = vld [vmem:[%s858 + $0x5e0] sm:%s851]
        %1613 = vst [vmem:[%s859 + $0x5e0] sm:%s851] %v1612
        %v1614 = vld [vmem:[%s858 + $0x5e8] sm:%s851]
        %1615 = vst [vmem:[%s859 + $0x5e4] sm:%s851] %v1614
        %v1616 = vld [vmem:[%s858 + $0x5e4] sm:%s851]
        %1617 = vst [vmem:[%s859 + $0x5e8] sm:%s851] %v1616
        %v1618 = vld [vmem:[%s858 + $0x5ec] sm:%s851]
        %1619 = vst [vmem:[%s859 + $0x5ec] sm:%s851] %v1618
        %v1620 = vld [vmem:[%s858 + $0x5f0] sm:%s851]
        %1621 = vst [vmem:[%s859 + $0x5f0] sm:%s851] %v1620
        %v1622 = vld [vmem:[%s858 + $0x5f8] sm:%s851]
        %1623 = vst [vmem:[%s859 + $0x5f4] sm:%s851] %v1622
        %v1624 = vld [vmem:[%s858 + $0x5f4] sm:%s851]
        %1625 = vst [vmem:[%s859 + $0x5f8] sm:%s851] %v1624
        %v1626 = vld [vmem:[%s858 + $0x5fc] sm:%s851]
        %1627 = vst [vmem:[%s859 + $0x5fc] sm:%s851] %v1626
      $region84: #{simple_conv_forward.1} parent=71 // loop_footer
        %s857 = sadd.s32 1, %s853
      $region85: #{simple_conv_forward.1} parent=71 // loop_footer_branch
        %852 = sbr.rel target = $region81
      $region86: #{simple_conv_forward.1} parent=71 // loop_exit
        _
    $region72: #{simple_conv_forward.1} parent=56 // pred_fallthru
      _
  $region57: #{simple_conv_forward.1} parent=0 // pred_fallthru
    _
  // Predicated region
  $region58: #{simple_conv_forward.1} parent=0 // pred_check
    %p53 = pneg %p49
  $region59: #{simple_conv_forward.1} parent=0 // pred_check_branch
    %55 = sbr.rel (%p53) target = $region61
  $region60: #{simple_conv_forward.1} parent=0 // pred_region
    %s56 = sshllo.u32 0, 4
    loop: start=0, step=1, limit=1
    $region62: #{simple_conv_forward.1} parent=60 // loop_pre_header
      _
    $region63: #{simple_conv_forward.1} parent=60 // loop_header
      %s58 = sphi 0, %s62
      %p59 = scmp.ge.s32.totalorder %s58, 1
      %s63 = sphi %s10, %s10
      %s64 = sphi [#allocation2], [#allocation2]
    $region64: #{simple_conv_forward.1} parent=60 // loop_header_branch
      %61 = sbr.rel (%p59) target = $region68
    $region65: #{simple_conv_forward.1} parent=60 // loop_body
      %v65 = vld [vmem:[%s63] sm:%s56]
      %66 = vst [vmem:[%s64] sm:%s56] %v65
      %v67 = vld [vmem:[%s63 + $0x8] sm:%s56]
      %68 = vst [vmem:[%s64 + $0x4] sm:%s56] %v67
      %v69 = vld [vmem:[%s63 + $0x4] sm:%s56]
      %70 = vst [vmem:[%s64 + $0x8] sm:%s56] %v69
      %v71 = vld [vmem:[%s63 + $0xc] sm:%s56]
      %72 = vst [vmem:[%s64 + $0xc] sm:%s56] %v71
      %v73 = vld [vmem:[%s63 + $0x10] sm:%s56]
      %74 = vst [vmem:[%s64 + $0x10] sm:%s56] %v73
      %v75 = vld [vmem:[%s63 + $0x18] sm:%s56]
      %76 = vst [vmem:[%s64 + $0x14] sm:%s56] %v75
      %v77 = vld [vmem:[%s63 + $0x14] sm:%s56]
      %78 = vst [vmem:[%s64 + $0x18] sm:%s56] %v77
      %v79 = vld [vmem:[%s63 + $0x1c] sm:%s56]
      %80 = vst [vmem:[%s64 + $0x1c] sm:%s56] %v79
      %v81 = vld [vmem:[%s63 + $0x20] sm:%s56]
      %82 = vst [vmem:[%s64 + $0x20] sm:%s56] %v81
      %v83 = vld [vmem:[%s63 + $0x28] sm:%s56]
      %84 = vst [vmem:[%s64 + $0x24] sm:%s56] %v83
      %v85 = vld [vmem:[%s63 + $0x24] sm:%s56]
      %86 = vst [vmem:[%s64 + $0x28] sm:%s56] %v85
      %v87 = vld [vmem:[%s63 + $0x2c] sm:%s56]
      %88 = vst [vmem:[%s64 + $0x2c] sm:%s56] %v87
      %v89 = vld [vmem:[%s63 + $0x30] sm:%s56]
      %90 = vst [vmem:[%s64 + $0x30] sm:%s56] %v89
      %v91 = vld [vmem:[%s63 + $0x38] sm:%s56]
      %92 = vst [vmem:[%s64 + $0x34] sm:%s56] %v91
      %v93 = vld [vmem:[%s63 + $0x34] sm:%s56]
      %94 = vst [vmem:[%s64 + $0x38] sm:%s56] %v93
      %v95 = vld [vmem:[%s63 + $0x3c] sm:%s56]
      %96 = vst [vmem:[%s64 + $0x3c] sm:%s56] %v95
      %v97 = vld [vmem:[%s63 + $0x40] sm:%s56]
      %98 = vst [vmem:[%s64 + $0x40] sm:%s56] %v97
      %v99 = vld [vmem:[%s63 + $0x48] sm:%s56]
      %100 = vst [vmem:[%s64 + $0x44] sm:%s56] %v99
      %v101 = vld [vmem:[%s63 + $0x44] sm:%s56]
      %102 = vst [vmem:[%s64 + $0x48] sm:%s56] %v101
      %v103 = vld [vmem:[%s63 + $0x4c] sm:%s56]
      %104 = vst [vmem:[%s64 + $0x4c] sm:%s56] %v103
      %v105 = vld [vmem:[%s63 + $0x50] sm:%s56]
      %106 = vst [vmem:[%s64 + $0x50] sm:%s56] %v105
      %v107 = vld [vmem:[%s63 + $0x58] sm:%s56]
      %108 = vst [vmem:[%s64 + $0x54] sm:%s56] %v107
      %v109 = vld [vmem:[%s63 + $0x54] sm:%s56]
      %110 = vst [vmem:[%s64 + $0x58] sm:%s56] %v109
      %v111 = vld [vmem:[%s63 + $0x5c] sm:%s56]
      %112 = vst [vmem:[%s64 + $0x5c] sm:%s56] %v111
      %v113 = vld [vmem:[%s63 + $0x60] sm:%s56]
      %114 = vst [vmem:[%s64 + $0x60] sm:%s56] %v113
      %v115 = vld [vmem:[%s63 + $0x68] sm:%s56]
      %116 = vst [vmem:[%s64 + $0x64] sm:%s56] %v115
      %v117 = vld [vmem:[%s63 + $0x64] sm:%s56]
      %118 = vst [vmem:[%s64 + $0x68] sm:%s56] %v117
      %v119 = vld [vmem:[%s63 + $0x6c] sm:%s56]
      %120 = vst [vmem:[%s64 + $0x6c] sm:%s56] %v119
      %v121 = vld [vmem:[%s63 + $0x70] sm:%s56]
      %122 = vst [vmem:[%s64 + $0x70] sm:%s56] %v121
      %v123 = vld [vmem:[%s63 + $0x78] sm:%s56]
      %124 = vst [vmem:[%s64 + $0x74] sm:%s56] %v123
      %v125 = vld [vmem:[%s63 + $0x74] sm:%s56]
      %126 = vst [vmem:[%s64 + $0x78] sm:%s56] %v125
      %v127 = vld [vmem:[%s63 + $0x7c] sm:%s56]
      %128 = vst [vmem:[%s64 + $0x7c] sm:%s56] %v127
      %v129 = vld [vmem:[%s63 + $0x80] sm:%s56]
      %130 = vst [vmem:[%s64 + $0x80] sm:%s56] %v129
      %v131 = vld [vmem:[%s63 + $0x88] sm:%s56]
      %132 = vst [vmem:[%s64 + $0x84] sm:%s56] %v131
      %v133 = vld [vmem:[%s63 + $0x84] sm:%s56]
      %134 = vst [vmem:[%s64 + $0x88] sm:%s56] %v133
      %v135 = vld [vmem:[%s63 + $0x8c] sm:%s56]
      %136 = vst [vmem:[%s64 + $0x8c] sm:%s56] %v135
      %v137 = vld [vmem:[%s63 + $0x90] sm:%s56]
      %138 = vst [vmem:[%s64 + $0x90] sm:%s56] %v137
      %v139 = vld [vmem:[%s63 + $0x98] sm:%s56]
      %140 = vst [vmem:[%s64 + $0x94] sm:%s56] %v139
      %v141 = vld [vmem:[%s63 + $0x94] sm:%s56]
      %142 = vst [vmem:[%s64 + $0x98] sm:%s56] %v141
      %v143 = vld [vmem:[%s63 + $0x9c] sm:%s56]
      %144 = vst [vmem:[%s64 + $0x9c] sm:%s56] %v143
      %v145 = vld [vmem:[%s63 + $0xa0] sm:%s56]
      %146 = vst [vmem:[%s64 + $0xa0] sm:%s56] %v145
      %v147 = vld [vmem:[%s63 + $0xa8] sm:%s56]
      %148 = vst [vmem:[%s64 + $0xa4] sm:%s56] %v147
      %v149 = vld [vmem:[%s63 + $0xa4] sm:%s56]
      %150 = vst [vmem:[%s64 + $0xa8] sm:%s56] %v149
      %v151 = vld [vmem:[%s63 + $0xac] sm:%s56]
      %152 = vst [vmem:[%s64 + $0xac] sm:%s56] %v151
      %v153 = vld [vmem:[%s63 + $0xb0] sm:%s56]
      %154 = vst [vmem:[%s64 + $0xb0] sm:%s56] %v153
      %v155 = vld [vmem:[%s63 + $0xb8] sm:%s56]
      %156 = vst [vmem:[%s64 + $0xb4] sm:%s56] %v155
      %v157 = vld [vmem:[%s63 + $0xb4] sm:%s56]
      %158 = vst [vmem:[%s64 + $0xb8] sm:%s56] %v157
      %v159 = vld [vmem:[%s63 + $0xbc] sm:%s56]
      %160 = vst [vmem:[%s64 + $0xbc] sm:%s56] %v159
      %v161 = vld [vmem:[%s63 + $0xc0] sm:%s56]
      %162 = vst [vmem:[%s64 + $0xc0] sm:%s56] %v161
      %v163 = vld [vmem:[%s63 + $0xc8] sm:%s56]
      %164 = vst [vmem:[%s64 + $0xc4] sm:%s56] %v163
      %v165 = vld [vmem:[%s63 + $0xc4] sm:%s56]
      %166 = vst [vmem:[%s64 + $0xc8] sm:%s56] %v165
      %v167 = vld [vmem:[%s63 + $0xcc] sm:%s56]
      %168 = vst [vmem:[%s64 + $0xcc] sm:%s56] %v167
      %v169 = vld [vmem:[%s63 + $0xd0] sm:%s56]
      %170 = vst [vmem:[%s64 + $0xd0] sm:%s56] %v169
      %v171 = vld [vmem:[%s63 + $0xd8] sm:%s56]
      %172 = vst [vmem:[%s64 + $0xd4] sm:%s56] %v171
      %v173 = vld [vmem:[%s63 + $0xd4] sm:%s56]
      %174 = vst [vmem:[%s64 + $0xd8] sm:%s56] %v173
      %v175 = vld [vmem:[%s63 + $0xdc] sm:%s56]
      %176 = vst [vmem:[%s64 + $0xdc] sm:%s56] %v175
      %v177 = vld [vmem:[%s63 + $0xe0] sm:%s56]
      %178 = vst [vmem:[%s64 + $0xe0] sm:%s56] %v177
      %v179 = vld [vmem:[%s63 + $0xe8] sm:%s56]
      %180 = vst [vmem:[%s64 + $0xe4] sm:%s56] %v179
      %v181 = vld [vmem:[%s63 + $0xe4] sm:%s56]
      %182 = vst [vmem:[%s64 + $0xe8] sm:%s56] %v181
      %v183 = vld [vmem:[%s63 + $0xec] sm:%s56]
      %184 = vst [vmem:[%s64 + $0xec] sm:%s56] %v183
      %v185 = vld [vmem:[%s63 + $0xf0] sm:%s56]
      %186 = vst [vmem:[%s64 + $0xf0] sm:%s56] %v185
      %v187 = vld [vmem:[%s63 + $0xf8] sm:%s56]
      %188 = vst [vmem:[%s64 + $0xf4] sm:%s56] %v187
      %v189 = vld [vmem:[%s63 + $0xf4] sm:%s56]
      %190 = vst [vmem:[%s64 + $0xf8] sm:%s56] %v189
      %v191 = vld [vmem:[%s63 + $0xfc] sm:%s56]
      %192 = vst [vmem:[%s64 + $0xfc] sm:%s56] %v191
      %v193 = vld [vmem:[%s63 + $0x100] sm:%s56]
      %194 = vst [vmem:[%s64 + $0x100] sm:%s56] %v193
      %v195 = vld [vmem:[%s63 + $0x108] sm:%s56]
      %196 = vst [vmem:[%s64 + $0x104] sm:%s56] %v195
      %v197 = vld [vmem:[%s63 + $0x104] sm:%s56]
      %198 = vst [vmem:[%s64 + $0x108] sm:%s56] %v197
      %v199 = vld [vmem:[%s63 + $0x10c] sm:%s56]
      %200 = vst [vmem:[%s64 + $0x10c] sm:%s56] %v199
      %v201 = vld [vmem:[%s63 + $0x110] sm:%s56]
      %202 = vst [vmem:[%s64 + $0x110] sm:%s56] %v201
      %v203 = vld [vmem:[%s63 + $0x118] sm:%s56]
      %204 = vst [vmem:[%s64 + $0x114] sm:%s56] %v203
      %v205 = vld [vmem:[%s63 + $0x114] sm:%s56]
      %206 = vst [vmem:[%s64 + $0x118] sm:%s56] %v205
      %v207 = vld [vmem:[%s63 + $0x11c] sm:%s56]
      %208 = vst [vmem:[%s64 + $0x11c] sm:%s56] %v207
      %v209 = vld [vmem:[%s63 + $0x120] sm:%s56]
      %210 = vst [vmem:[%s64 + $0x120] sm:%s56] %v209
      %v211 = vld [vmem:[%s63 + $0x128] sm:%s56]
      %212 = vst [vmem:[%s64 + $0x124] sm:%s56] %v211
      %v213 = vld [vmem:[%s63 + $0x124] sm:%s56]
      %214 = vst [vmem:[%s64 + $0x128] sm:%s56] %v213
      %v215 = vld [vmem:[%s63 + $0x12c] sm:%s56]
      %216 = vst [vmem:[%s64 + $0x12c] sm:%s56] %v215
      %v217 = vld [vmem:[%s63 + $0x130] sm:%s56]
      %218 = vst [vmem:[%s64 + $0x130] sm:%s56] %v217
      %v219 = vld [vmem:[%s63 + $0x138] sm:%s56]
      %220 = vst [vmem:[%s64 + $0x134] sm:%s56] %v219
      %v221 = vld [vmem:[%s63 + $0x134] sm:%s56]
      %222 = vst [vmem:[%s64 + $0x138] sm:%s56] %v221
      %v223 = vld [vmem:[%s63 + $0x13c] sm:%s56]
      %224 = vst [vmem:[%s64 + $0x13c] sm:%s56] %v223
      %v225 = vld [vmem:[%s63 + $0x140] sm:%s56]
      %226 = vst [vmem:[%s64 + $0x140] sm:%s56] %v225
      %v227 = vld [vmem:[%s63 + $0x148] sm:%s56]
      %228 = vst [vmem:[%s64 + $0x144] sm:%s56] %v227
      %v229 = vld [vmem:[%s63 + $0x144] sm:%s56]
      %230 = vst [vmem:[%s64 + $0x148] sm:%s56] %v229
      %v231 = vld [vmem:[%s63 + $0x14c] sm:%s56]
      %232 = vst [vmem:[%s64 + $0x14c] sm:%s56] %v231
      %v233 = vld [vmem:[%s63 + $0x150] sm:%s56]
      %234 = vst [vmem:[%s64 + $0x150] sm:%s56] %v233
      %v235 = vld [vmem:[%s63 + $0x158] sm:%s56]
      %236 = vst [vmem:[%s64 + $0x154] sm:%s56] %v235
      %v237 = vld [vmem:[%s63 + $0x154] sm:%s56]
      %238 = vst [vmem:[%s64 + $0x158] sm:%s56] %v237
      %v239 = vld [vmem:[%s63 + $0x15c] sm:%s56]
      %240 = vst [vmem:[%s64 + $0x15c] sm:%s56] %v239
      %v241 = vld [vmem:[%s63 + $0x160] sm:%s56]
      %242 = vst [vmem:[%s64 + $0x160] sm:%s56] %v241
      %v243 = vld [vmem:[%s63 + $0x168] sm:%s56]
      %244 = vst [vmem:[%s64 + $0x164] sm:%s56] %v243
      %v245 = vld [vmem:[%s63 + $0x164] sm:%s56]
      %246 = vst [vmem:[%s64 + $0x168] sm:%s56] %v245
      %v247 = vld [vmem:[%s63 + $0x16c] sm:%s56]
      %248 = vst [vmem:[%s64 + $0x16c] sm:%s56] %v247
      %v249 = vld [vmem:[%s63 + $0x170] sm:%s56]
      %250 = vst [vmem:[%s64 + $0x170] sm:%s56] %v249
      %v251 = vld [vmem:[%s63 + $0x178] sm:%s56]
      %252 = vst [vmem:[%s64 + $0x174] sm:%s56] %v251
      %v253 = vld [vmem:[%s63 + $0x174] sm:%s56]
      %254 = vst [vmem:[%s64 + $0x178] sm:%s56] %v253
      %v255 = vld [vmem:[%s63 + $0x17c] sm:%s56]
      %256 = vst [vmem:[%s64 + $0x17c] sm:%s56] %v255
      %v257 = vld [vmem:[%s63 + $0x180] sm:%s56]
      %258 = vst [vmem:[%s64 + $0x180] sm:%s56] %v257
      %v259 = vld [vmem:[%s63 + $0x188] sm:%s56]
      %260 = vst [vmem:[%s64 + $0x184] sm:%s56] %v259
      %v261 = vld [vmem:[%s63 + $0x184] sm:%s56]
      %262 = vst [vmem:[%s64 + $0x188] sm:%s56] %v261
      %v263 = vld [vmem:[%s63 + $0x18c] sm:%s56]
      %264 = vst [vmem:[%s64 + $0x18c] sm:%s56] %v263
      %v265 = vld [vmem:[%s63 + $0x190] sm:%s56]
      %266 = vst [vmem:[%s64 + $0x190] sm:%s56] %v265
      %v267 = vld [vmem:[%s63 + $0x198] sm:%s56]
      %268 = vst [vmem:[%s64 + $0x194] sm:%s56] %v267
      %v269 = vld [vmem:[%s63 + $0x194] sm:%s56]
      %270 = vst [vmem:[%s64 + $0x198] sm:%s56] %v269
      %v271 = vld [vmem:[%s63 + $0x19c] sm:%s56]
      %272 = vst [vmem:[%s64 + $0x19c] sm:%s56] %v271
      %v273 = vld [vmem:[%s63 + $0x1a0] sm:%s56]
      %274 = vst [vmem:[%s64 + $0x1a0] sm:%s56] %v273
      %v275 = vld [vmem:[%s63 + $0x1a8] sm:%s56]
      %276 = vst [vmem:[%s64 + $0x1a4] sm:%s56] %v275
      %v277 = vld [vmem:[%s63 + $0x1a4] sm:%s56]
      %278 = vst [vmem:[%s64 + $0x1a8] sm:%s56] %v277
      %v279 = vld [vmem:[%s63 + $0x1ac] sm:%s56]
      %280 = vst [vmem:[%s64 + $0x1ac] sm:%s56] %v279
      %v281 = vld [vmem:[%s63 + $0x1b0] sm:%s56]
      %282 = vst [vmem:[%s64 + $0x1b0] sm:%s56] %v281
      %v283 = vld [vmem:[%s63 + $0x1b8] sm:%s56]
      %284 = vst [vmem:[%s64 + $0x1b4] sm:%s56] %v283
      %v285 = vld [vmem:[%s63 + $0x1b4] sm:%s56]
      %286 = vst [vmem:[%s64 + $0x1b8] sm:%s56] %v285
      %v287 = vld [vmem:[%s63 + $0x1bc] sm:%s56]
      %288 = vst [vmem:[%s64 + $0x1bc] sm:%s56] %v287
      %v289 = vld [vmem:[%s63 + $0x1c0] sm:%s56]
      %290 = vst [vmem:[%s64 + $0x1c0] sm:%s56] %v289
      %v291 = vld [vmem:[%s63 + $0x1c8] sm:%s56]
      %292 = vst [vmem:[%s64 + $0x1c4] sm:%s56] %v291
      %v293 = vld [vmem:[%s63 + $0x1c4] sm:%s56]
      %294 = vst [vmem:[%s64 + $0x1c8] sm:%s56] %v293
      %v295 = vld [vmem:[%s63 + $0x1cc] sm:%s56]
      %296 = vst [vmem:[%s64 + $0x1cc] sm:%s56] %v295
      %v297 = vld [vmem:[%s63 + $0x1d0] sm:%s56]
      %298 = vst [vmem:[%s64 + $0x1d0] sm:%s56] %v297
      %v299 = vld [vmem:[%s63 + $0x1d8] sm:%s56]
      %300 = vst [vmem:[%s64 + $0x1d4] sm:%s56] %v299
      %v301 = vld [vmem:[%s63 + $0x1d4] sm:%s56]
      %302 = vst [vmem:[%s64 + $0x1d8] sm:%s56] %v301
      %v303 = vld [vmem:[%s63 + $0x1dc] sm:%s56]
      %304 = vst [vmem:[%s64 + $0x1dc] sm:%s56] %v303
      %v305 = vld [vmem:[%s63 + $0x1e0] sm:%s56]
      %306 = vst [vmem:[%s64 + $0x1e0] sm:%s56] %v305
      %v307 = vld [vmem:[%s63 + $0x1e8] sm:%s56]
      %308 = vst [vmem:[%s64 + $0x1e4] sm:%s56] %v307
      %v309 = vld [vmem:[%s63 + $0x1e4] sm:%s56]
      %310 = vst [vmem:[%s64 + $0x1e8] sm:%s56] %v309
      %v311 = vld [vmem:[%s63 + $0x1ec] sm:%s56]
      %312 = vst [vmem:[%s64 + $0x1ec] sm:%s56] %v311
      %v313 = vld [vmem:[%s63 + $0x1f0] sm:%s56]
      %314 = vst [vmem:[%s64 + $0x1f0] sm:%s56] %v313
      %v315 = vld [vmem:[%s63 + $0x1f8] sm:%s56]
      %316 = vst [vmem:[%s64 + $0x1f4] sm:%s56] %v315
      %v317 = vld [vmem:[%s63 + $0x1f4] sm:%s56]
      %318 = vst [vmem:[%s64 + $0x1f8] sm:%s56] %v317
      %v319 = vld [vmem:[%s63 + $0x1fc] sm:%s56]
      %320 = vst [vmem:[%s64 + $0x1fc] sm:%s56] %v319
      %v321 = vld [vmem:[%s63 + $0x200] sm:%s56]
      %322 = vst [vmem:[%s64 + $0x200] sm:%s56] %v321
      %v323 = vld [vmem:[%s63 + $0x208] sm:%s56]
      %324 = vst [vmem:[%s64 + $0x204] sm:%s56] %v323
      %v325 = vld [vmem:[%s63 + $0x204] sm:%s56]
      %326 = vst [vmem:[%s64 + $0x208] sm:%s56] %v325
      %v327 = vld [vmem:[%s63 + $0x20c] sm:%s56]
      %328 = vst [vmem:[%s64 + $0x20c] sm:%s56] %v327
      %v329 = vld [vmem:[%s63 + $0x210] sm:%s56]
      %330 = vst [vmem:[%s64 + $0x210] sm:%s56] %v329
      %v331 = vld [vmem:[%s63 + $0x218] sm:%s56]
      %332 = vst [vmem:[%s64 + $0x214] sm:%s56] %v331
      %v333 = vld [vmem:[%s63 + $0x214] sm:%s56]
      %334 = vst [vmem:[%s64 + $0x218] sm:%s56] %v333
      %v335 = vld [vmem:[%s63 + $0x21c] sm:%s56]
      %336 = vst [vmem:[%s64 + $0x21c] sm:%s56] %v335
      %v337 = vld [vmem:[%s63 + $0x220] sm:%s56]
      %338 = vst [vmem:[%s64 + $0x220] sm:%s56] %v337
      %v339 = vld [vmem:[%s63 + $0x228] sm:%s56]
      %340 = vst [vmem:[%s64 + $0x224] sm:%s56] %v339
      %v341 = vld [vmem:[%s63 + $0x224] sm:%s56]
      %342 = vst [vmem:[%s64 + $0x228] sm:%s56] %v341
      %v343 = vld [vmem:[%s63 + $0x22c] sm:%s56]
      %344 = vst [vmem:[%s64 + $0x22c] sm:%s56] %v343
      %v345 = vld [vmem:[%s63 + $0x230] sm:%s56]
      %346 = vst [vmem:[%s64 + $0x230] sm:%s56] %v345
      %v347 = vld [vmem:[%s63 + $0x238] sm:%s56]
      %348 = vst [vmem:[%s64 + $0x234] sm:%s56] %v347
      %v349 = vld [vmem:[%s63 + $0x234] sm:%s56]
      %350 = vst [vmem:[%s64 + $0x238] sm:%s56] %v349
      %v351 = vld [vmem:[%s63 + $0x23c] sm:%s56]
      %352 = vst [vmem:[%s64 + $0x23c] sm:%s56] %v351
      %v353 = vld [vmem:[%s63 + $0x240] sm:%s56]
      %354 = vst [vmem:[%s64 + $0x240] sm:%s56] %v353
      %v355 = vld [vmem:[%s63 + $0x248] sm:%s56]
      %356 = vst [vmem:[%s64 + $0x244] sm:%s56] %v355
      %v357 = vld [vmem:[%s63 + $0x244] sm:%s56]
      %358 = vst [vmem:[%s64 + $0x248] sm:%s56] %v357
      %v359 = vld [vmem:[%s63 + $0x24c] sm:%s56]
      %360 = vst [vmem:[%s64 + $0x24c] sm:%s56] %v359
      %v361 = vld [vmem:[%s63 + $0x250] sm:%s56]
      %362 = vst [vmem:[%s64 + $0x250] sm:%s56] %v361
      %v363 = vld [vmem:[%s63 + $0x258] sm:%s56]
      %364 = vst [vmem:[%s64 + $0x254] sm:%s56] %v363
      %v365 = vld [vmem:[%s63 + $0x254] sm:%s56]
      %366 = vst [vmem:[%s64 + $0x258] sm:%s56] %v365
      %v367 = vld [vmem:[%s63 + $0x25c] sm:%s56]
      %368 = vst [vmem:[%s64 + $0x25c] sm:%s56] %v367
      %v369 = vld [vmem:[%s63 + $0x260] sm:%s56]
      %370 = vst [vmem:[%s64 + $0x260] sm:%s56] %v369
      %v371 = vld [vmem:[%s63 + $0x268] sm:%s56]
      %372 = vst [vmem:[%s64 + $0x264] sm:%s56] %v371
      %v373 = vld [vmem:[%s63 + $0x264] sm:%s56]
      %374 = vst [vmem:[%s64 + $0x268] sm:%s56] %v373
      %v375 = vld [vmem:[%s63 + $0x26c] sm:%s56]
      %376 = vst [vmem:[%s64 + $0x26c] sm:%s56] %v375
      %v377 = vld [vmem:[%s63 + $0x270] sm:%s56]
      %378 = vst [vmem:[%s64 + $0x270] sm:%s56] %v377
      %v379 = vld [vmem:[%s63 + $0x278] sm:%s56]
      %380 = vst [vmem:[%s64 + $0x274] sm:%s56] %v379
      %v381 = vld [vmem:[%s63 + $0x274] sm:%s56]
      %382 = vst [vmem:[%s64 + $0x278] sm:%s56] %v381
      %v383 = vld [vmem:[%s63 + $0x27c] sm:%s56]
      %384 = vst [vmem:[%s64 + $0x27c] sm:%s56] %v383
      %v385 = vld [vmem:[%s63 + $0x280] sm:%s56]
      %386 = vst [vmem:[%s64 + $0x280] sm:%s56] %v385
      %v387 = vld [vmem:[%s63 + $0x288] sm:%s56]
      %388 = vst [vmem:[%s64 + $0x284] sm:%s56] %v387
      %v389 = vld [vmem:[%s63 + $0x284] sm:%s56]
      %390 = vst [vmem:[%s64 + $0x288] sm:%s56] %v389
      %v391 = vld [vmem:[%s63 + $0x28c] sm:%s56]
      %392 = vst [vmem:[%s64 + $0x28c] sm:%s56] %v391
      %v393 = vld [vmem:[%s63 + $0x290] sm:%s56]
      %394 = vst [vmem:[%s64 + $0x290] sm:%s56] %v393
      %v395 = vld [vmem:[%s63 + $0x298] sm:%s56]
      %396 = vst [vmem:[%s64 + $0x294] sm:%s56] %v395
      %v397 = vld [vmem:[%s63 + $0x294] sm:%s56]
      %398 = vst [vmem:[%s64 + $0x298] sm:%s56] %v397
      %v399 = vld [vmem:[%s63 + $0x29c] sm:%s56]
      %400 = vst [vmem:[%s64 + $0x29c] sm:%s56] %v399
      %v401 = vld [vmem:[%s63 + $0x2a0] sm:%s56]
      %402 = vst [vmem:[%s64 + $0x2a0] sm:%s56] %v401
      %v403 = vld [vmem:[%s63 + $0x2a8] sm:%s56]
      %404 = vst [vmem:[%s64 + $0x2a4] sm:%s56] %v403
      %v405 = vld [vmem:[%s63 + $0x2a4] sm:%s56]
      %406 = vst [vmem:[%s64 + $0x2a8] sm:%s56] %v405
      %v407 = vld [vmem:[%s63 + $0x2ac] sm:%s56]
      %408 = vst [vmem:[%s64 + $0x2ac] sm:%s56] %v407
      %v409 = vld [vmem:[%s63 + $0x2b0] sm:%s56]
      %410 = vst [vmem:[%s64 + $0x2b0] sm:%s56] %v409
      %v411 = vld [vmem:[%s63 + $0x2b8] sm:%s56]
      %412 = vst [vmem:[%s64 + $0x2b4] sm:%s56] %v411
      %v413 = vld [vmem:[%s63 + $0x2b4] sm:%s56]
      %414 = vst [vmem:[%s64 + $0x2b8] sm:%s56] %v413
      %v415 = vld [vmem:[%s63 + $0x2bc] sm:%s56]
      %416 = vst [vmem:[%s64 + $0x2bc] sm:%s56] %v415
      %v417 = vld [vmem:[%s63 + $0x2c0] sm:%s56]
      %418 = vst [vmem:[%s64 + $0x2c0] sm:%s56] %v417
      %v419 = vld [vmem:[%s63 + $0x2c8] sm:%s56]
      %420 = vst [vmem:[%s64 + $0x2c4] sm:%s56] %v419
      %v421 = vld [vmem:[%s63 + $0x2c4] sm:%s56]
      %422 = vst [vmem:[%s64 + $0x2c8] sm:%s56] %v421
      %v423 = vld [vmem:[%s63 + $0x2cc] sm:%s56]
      %424 = vst [vmem:[%s64 + $0x2cc] sm:%s56] %v423
      %v425 = vld [vmem:[%s63 + $0x2d0] sm:%s56]
      %426 = vst [vmem:[%s64 + $0x2d0] sm:%s56] %v425
      %v427 = vld [vmem:[%s63 + $0x2d8] sm:%s56]
      %428 = vst [vmem:[%s64 + $0x2d4] sm:%s56] %v427
      %v429 = vld [vmem:[%s63 + $0x2d4] sm:%s56]
      %430 = vst [vmem:[%s64 + $0x2d8] sm:%s56] %v429
      %v431 = vld [vmem:[%s63 + $0x2dc] sm:%s56]
      %432 = vst [vmem:[%s64 + $0x2dc] sm:%s56] %v431
      %v433 = vld [vmem:[%s63 + $0x2e0] sm:%s56]
      %434 = vst [vmem:[%s64 + $0x2e0] sm:%s56] %v433
      %v435 = vld [vmem:[%s63 + $0x2e8] sm:%s56]
      %436 = vst [vmem:[%s64 + $0x2e4] sm:%s56] %v435
      %v437 = vld [vmem:[%s63 + $0x2e4] sm:%s56]
      %438 = vst [vmem:[%s64 + $0x2e8] sm:%s56] %v437
      %v439 = vld [vmem:[%s63 + $0x2ec] sm:%s56]
      %440 = vst [vmem:[%s64 + $0x2ec] sm:%s56] %v439
      %v441 = vld [vmem:[%s63 + $0x2f0] sm:%s56]
      %442 = vst [vmem:[%s64 + $0x2f0] sm:%s56] %v441
      %v443 = vld [vmem:[%s63 + $0x2f8] sm:%s56]
      %444 = vst [vmem:[%s64 + $0x2f4] sm:%s56] %v443
      %v445 = vld [vmem:[%s63 + $0x2f4] sm:%s56]
      %446 = vst [vmem:[%s64 + $0x2f8] sm:%s56] %v445
      %v447 = vld [vmem:[%s63 + $0x2fc] sm:%s56]
      %448 = vst [vmem:[%s64 + $0x2fc] sm:%s56] %v447
      %v449 = vld [vmem:[%s63 + $0x300] sm:%s56]
      %450 = vst [vmem:[%s64 + $0x300] sm:%s56] %v449
      %v451 = vld [vmem:[%s63 + $0x308] sm:%s56]
      %452 = vst [vmem:[%s64 + $0x304] sm:%s56] %v451
      %v453 = vld [vmem:[%s63 + $0x304] sm:%s56]
      %454 = vst [vmem:[%s64 + $0x308] sm:%s56] %v453
      %v455 = vld [vmem:[%s63 + $0x30c] sm:%s56]
      %456 = vst [vmem:[%s64 + $0x30c] sm:%s56] %v455
      %v457 = vld [vmem:[%s63 + $0x310] sm:%s56]
      %458 = vst [vmem:[%s64 + $0x310] sm:%s56] %v457
      %v459 = vld [vmem:[%s63 + $0x318] sm:%s56]
      %460 = vst [vmem:[%s64 + $0x314] sm:%s56] %v459
      %v461 = vld [vmem:[%s63 + $0x314] sm:%s56]
      %462 = vst [vmem:[%s64 + $0x318] sm:%s56] %v461
      %v463 = vld [vmem:[%s63 + $0x31c] sm:%s56]
      %464 = vst [vmem:[%s64 + $0x31c] sm:%s56] %v463
      %v465 = vld [vmem:[%s63 + $0x320] sm:%s56]
      %466 = vst [vmem:[%s64 + $0x320] sm:%s56] %v465
      %v467 = vld [vmem:[%s63 + $0x328] sm:%s56]
      %468 = vst [vmem:[%s64 + $0x324] sm:%s56] %v467
      %v469 = vld [vmem:[%s63 + $0x324] sm:%s56]
      %470 = vst [vmem:[%s64 + $0x328] sm:%s56] %v469
      %v471 = vld [vmem:[%s63 + $0x32c] sm:%s56]
      %472 = vst [vmem:[%s64 + $0x32c] sm:%s56] %v471
      %v473 = vld [vmem:[%s63 + $0x330] sm:%s56]
      %474 = vst [vmem:[%s64 + $0x330] sm:%s56] %v473
      %v475 = vld [vmem:[%s63 + $0x338] sm:%s56]
      %476 = vst [vmem:[%s64 + $0x334] sm:%s56] %v475
      %v477 = vld [vmem:[%s63 + $0x334] sm:%s56]
      %478 = vst [vmem:[%s64 + $0x338] sm:%s56] %v477
      %v479 = vld [vmem:[%s63 + $0x33c] sm:%s56]
      %480 = vst [vmem:[%s64 + $0x33c] sm:%s56] %v479
      %v481 = vld [vmem:[%s63 + $0x340] sm:%s56]
      %482 = vst [vmem:[%s64 + $0x340] sm:%s56] %v481
      %v483 = vld [vmem:[%s63 + $0x348] sm:%s56]
      %484 = vst [vmem:[%s64 + $0x344] sm:%s56] %v483
      %v485 = vld [vmem:[%s63 + $0x344] sm:%s56]
      %486 = vst [vmem:[%s64 + $0x348] sm:%s56] %v485
      %v487 = vld [vmem:[%s63 + $0x34c] sm:%s56]
      %488 = vst [vmem:[%s64 + $0x34c] sm:%s56] %v487
      %v489 = vld [vmem:[%s63 + $0x350] sm:%s56]
      %490 = vst [vmem:[%s64 + $0x350] sm:%s56] %v489
      %v491 = vld [vmem:[%s63 + $0x358] sm:%s56]
      %492 = vst [vmem:[%s64 + $0x354] sm:%s56] %v491
      %v493 = vld [vmem:[%s63 + $0x354] sm:%s56]
      %494 = vst [vmem:[%s64 + $0x358] sm:%s56] %v493
      %v495 = vld [vmem:[%s63 + $0x35c] sm:%s56]
      %496 = vst [vmem:[%s64 + $0x35c] sm:%s56] %v495
      %v497 = vld [vmem:[%s63 + $0x360] sm:%s56]
      %498 = vst [vmem:[%s64 + $0x360] sm:%s56] %v497
      %v499 = vld [vmem:[%s63 + $0x368] sm:%s56]
      %500 = vst [vmem:[%s64 + $0x364] sm:%s56] %v499
      %v501 = vld [vmem:[%s63 + $0x364] sm:%s56]
      %502 = vst [vmem:[%s64 + $0x368] sm:%s56] %v501
      %v503 = vld [vmem:[%s63 + $0x36c] sm:%s56]
      %504 = vst [vmem:[%s64 + $0x36c] sm:%s56] %v503
      %v505 = vld [vmem:[%s63 + $0x370] sm:%s56]
      %506 = vst [vmem:[%s64 + $0x370] sm:%s56] %v505
      %v507 = vld [vmem:[%s63 + $0x378] sm:%s56]
      %508 = vst [vmem:[%s64 + $0x374] sm:%s56] %v507
      %v509 = vld [vmem:[%s63 + $0x374] sm:%s56]
      %510 = vst [vmem:[%s64 + $0x378] sm:%s56] %v509
      %v511 = vld [vmem:[%s63 + $0x37c] sm:%s56]
      %512 = vst [vmem:[%s64 + $0x37c] sm:%s56] %v511
      %v513 = vld [vmem:[%s63 + $0x380] sm:%s56]
      %514 = vst [vmem:[%s64 + $0x380] sm:%s56] %v513
      %v515 = vld [vmem:[%s63 + $0x388] sm:%s56]
      %516 = vst [vmem:[%s64 + $0x384] sm:%s56] %v515
      %v517 = vld [vmem:[%s63 + $0x384] sm:%s56]
      %518 = vst [vmem:[%s64 + $0x388] sm:%s56] %v517
      %v519 = vld [vmem:[%s63 + $0x38c] sm:%s56]
      %520 = vst [vmem:[%s64 + $0x38c] sm:%s56] %v519
      %v521 = vld [vmem:[%s63 + $0x390] sm:%s56]
      %522 = vst [vmem:[%s64 + $0x390] sm:%s56] %v521
      %v523 = vld [vmem:[%s63 + $0x398] sm:%s56]
      %524 = vst [vmem:[%s64 + $0x394] sm:%s56] %v523
      %v525 = vld [vmem:[%s63 + $0x394] sm:%s56]
      %526 = vst [vmem:[%s64 + $0x398] sm:%s56] %v525
      %v527 = vld [vmem:[%s63 + $0x39c] sm:%s56]
      %528 = vst [vmem:[%s64 + $0x39c] sm:%s56] %v527
      %v529 = vld [vmem:[%s63 + $0x3a0] sm:%s56]
      %530 = vst [vmem:[%s64 + $0x3a0] sm:%s56] %v529
      %v531 = vld [vmem:[%s63 + $0x3a8] sm:%s56]
      %532 = vst [vmem:[%s64 + $0x3a4] sm:%s56] %v531
      %v533 = vld [vmem:[%s63 + $0x3a4] sm:%s56]
      %534 = vst [vmem:[%s64 + $0x3a8] sm:%s56] %v533
      %v535 = vld [vmem:[%s63 + $0x3ac] sm:%s56]
      %536 = vst [vmem:[%s64 + $0x3ac] sm:%s56] %v535
      %v537 = vld [vmem:[%s63 + $0x3b0] sm:%s56]
      %538 = vst [vmem:[%s64 + $0x3b0] sm:%s56] %v537
      %v539 = vld [vmem:[%s63 + $0x3b8] sm:%s56]
      %540 = vst [vmem:[%s64 + $0x3b4] sm:%s56] %v539
      %v541 = vld [vmem:[%s63 + $0x3b4] sm:%s56]
      %542 = vst [vmem:[%s64 + $0x3b8] sm:%s56] %v541
      %v543 = vld [vmem:[%s63 + $0x3bc] sm:%s56]
      %544 = vst [vmem:[%s64 + $0x3bc] sm:%s56] %v543
      %v545 = vld [vmem:[%s63 + $0x3c0] sm:%s56]
      %546 = vst [vmem:[%s64 + $0x3c0] sm:%s56] %v545
      %v547 = vld [vmem:[%s63 + $0x3c8] sm:%s56]
      %548 = vst [vmem:[%s64 + $0x3c4] sm:%s56] %v547
      %v549 = vld [vmem:[%s63 + $0x3c4] sm:%s56]
      %550 = vst [vmem:[%s64 + $0x3c8] sm:%s56] %v549
      %v551 = vld [vmem:[%s63 + $0x3cc] sm:%s56]
      %552 = vst [vmem:[%s64 + $0x3cc] sm:%s56] %v551
      %v553 = vld [vmem:[%s63 + $0x3d0] sm:%s56]
      %554 = vst [vmem:[%s64 + $0x3d0] sm:%s56] %v553
      %v555 = vld [vmem:[%s63 + $0x3d8] sm:%s56]
      %556 = vst [vmem:[%s64 + $0x3d4] sm:%s56] %v555
      %v557 = vld [vmem:[%s63 + $0x3d4] sm:%s56]
      %558 = vst [vmem:[%s64 + $0x3d8] sm:%s56] %v557
      %v559 = vld [vmem:[%s63 + $0x3dc] sm:%s56]
      %560 = vst [vmem:[%s64 + $0x3dc] sm:%s56] %v559
      %v561 = vld [vmem:[%s63 + $0x3e0] sm:%s56]
      %562 = vst [vmem:[%s64 + $0x3e0] sm:%s56] %v561
      %v563 = vld [vmem:[%s63 + $0x3e8] sm:%s56]
      %564 = vst [vmem:[%s64 + $0x3e4] sm:%s56] %v563
      %v565 = vld [vmem:[%s63 + $0x3e4] sm:%s56]
      %566 = vst [vmem:[%s64 + $0x3e8] sm:%s56] %v565
      %v567 = vld [vmem:[%s63 + $0x3ec] sm:%s56]
      %568 = vst [vmem:[%s64 + $0x3ec] sm:%s56] %v567
      %v569 = vld [vmem:[%s63 + $0x3f0] sm:%s56]
      %570 = vst [vmem:[%s64 + $0x3f0] sm:%s56] %v569
      %v571 = vld [vmem:[%s63 + $0x3f8] sm:%s56]
      %572 = vst [vmem:[%s64 + $0x3f4] sm:%s56] %v571
      %v573 = vld [vmem:[%s63 + $0x3f4] sm:%s56]
      %574 = vst [vmem:[%s64 + $0x3f8] sm:%s56] %v573
      %v575 = vld [vmem:[%s63 + $0x3fc] sm:%s56]
      %576 = vst [vmem:[%s64 + $0x3fc] sm:%s56] %v575
      %v577 = vld [vmem:[%s63 + $0x400] sm:%s56]
      %578 = vst [vmem:[%s64 + $0x400] sm:%s56] %v577
      %v579 = vld [vmem:[%s63 + $0x408] sm:%s56]
      %580 = vst [vmem:[%s64 + $0x404] sm:%s56] %v579
      %v581 = vld [vmem:[%s63 + $0x404] sm:%s56]
      %582 = vst [vmem:[%s64 + $0x408] sm:%s56] %v581
      %v583 = vld [vmem:[%s63 + $0x40c] sm:%s56]
      %584 = vst [vmem:[%s64 + $0x40c] sm:%s56] %v583
      %v585 = vld [vmem:[%s63 + $0x410] sm:%s56]
      %586 = vst [vmem:[%s64 + $0x410] sm:%s56] %v585
      %v587 = vld [vmem:[%s63 + $0x418] sm:%s56]
      %588 = vst [vmem:[%s64 + $0x414] sm:%s56] %v587
      %v589 = vld [vmem:[%s63 + $0x414] sm:%s56]
      %590 = vst [vmem:[%s64 + $0x418] sm:%s56] %v589
      %v591 = vld [vmem:[%s63 + $0x41c] sm:%s56]
      %592 = vst [vmem:[%s64 + $0x41c] sm:%s56] %v591
      %v593 = vld [vmem:[%s63 + $0x420] sm:%s56]
      %594 = vst [vmem:[%s64 + $0x420] sm:%s56] %v593
      %v595 = vld [vmem:[%s63 + $0x428] sm:%s56]
      %596 = vst [vmem:[%s64 + $0x424] sm:%s56] %v595
      %v597 = vld [vmem:[%s63 + $0x424] sm:%s56]
      %598 = vst [vmem:[%s64 + $0x428] sm:%s56] %v597
      %v599 = vld [vmem:[%s63 + $0x42c] sm:%s56]
      %600 = vst [vmem:[%s64 + $0x42c] sm:%s56] %v599
      %v601 = vld [vmem:[%s63 + $0x430] sm:%s56]
      %602 = vst [vmem:[%s64 + $0x430] sm:%s56] %v601
      %v603 = vld [vmem:[%s63 + $0x438] sm:%s56]
      %604 = vst [vmem:[%s64 + $0x434] sm:%s56] %v603
      %v605 = vld [vmem:[%s63 + $0x434] sm:%s56]
      %606 = vst [vmem:[%s64 + $0x438] sm:%s56] %v605
      %v607 = vld [vmem:[%s63 + $0x43c] sm:%s56]
      %608 = vst [vmem:[%s64 + $0x43c] sm:%s56] %v607
      %v609 = vld [vmem:[%s63 + $0x440] sm:%s56]
      %610 = vst [vmem:[%s64 + $0x440] sm:%s56] %v609
      %v611 = vld [vmem:[%s63 + $0x448] sm:%s56]
      %612 = vst [vmem:[%s64 + $0x444] sm:%s56] %v611
      %v613 = vld [vmem:[%s63 + $0x444] sm:%s56]
      %614 = vst [vmem:[%s64 + $0x448] sm:%s56] %v613
      %v615 = vld [vmem:[%s63 + $0x44c] sm:%s56]
      %616 = vst [vmem:[%s64 + $0x44c] sm:%s56] %v615
      %v617 = vld [vmem:[%s63 + $0x450] sm:%s56]
      %618 = vst [vmem:[%s64 + $0x450] sm:%s56] %v617
      %v619 = vld [vmem:[%s63 + $0x458] sm:%s56]
      %620 = vst [vmem:[%s64 + $0x454] sm:%s56] %v619
      %v621 = vld [vmem:[%s63 + $0x454] sm:%s56]
      %622 = vst [vmem:[%s64 + $0x458] sm:%s56] %v621
      %v623 = vld [vmem:[%s63 + $0x45c] sm:%s56]
      %624 = vst [vmem:[%s64 + $0x45c] sm:%s56] %v623
      %v625 = vld [vmem:[%s63 + $0x460] sm:%s56]
      %626 = vst [vmem:[%s64 + $0x460] sm:%s56] %v625
      %v627 = vld [vmem:[%s63 + $0x468] sm:%s56]
      %628 = vst [vmem:[%s64 + $0x464] sm:%s56] %v627
      %v629 = vld [vmem:[%s63 + $0x464] sm:%s56]
      %630 = vst [vmem:[%s64 + $0x468] sm:%s56] %v629
      %v631 = vld [vmem:[%s63 + $0x46c] sm:%s56]
      %632 = vst [vmem:[%s64 + $0x46c] sm:%s56] %v631
      %v633 = vld [vmem:[%s63 + $0x470] sm:%s56]
      %634 = vst [vmem:[%s64 + $0x470] sm:%s56] %v633
      %v635 = vld [vmem:[%s63 + $0x478] sm:%s56]
      %636 = vst [vmem:[%s64 + $0x474] sm:%s56] %v635
      %v637 = vld [vmem:[%s63 + $0x474] sm:%s56]
      %638 = vst [vmem:[%s64 + $0x478] sm:%s56] %v637
      %v639 = vld [vmem:[%s63 + $0x47c] sm:%s56]
      %640 = vst [vmem:[%s64 + $0x47c] sm:%s56] %v639
      %v641 = vld [vmem:[%s63 + $0x480] sm:%s56]
      %642 = vst [vmem:[%s64 + $0x480] sm:%s56] %v641
      %v643 = vld [vmem:[%s63 + $0x488] sm:%s56]
      %644 = vst [vmem:[%s64 + $0x484] sm:%s56] %v643
      %v645 = vld [vmem:[%s63 + $0x484] sm:%s56]
      %646 = vst [vmem:[%s64 + $0x488] sm:%s56] %v645
      %v647 = vld [vmem:[%s63 + $0x48c] sm:%s56]
      %648 = vst [vmem:[%s64 + $0x48c] sm:%s56] %v647
      %v649 = vld [vmem:[%s63 + $0x490] sm:%s56]
      %650 = vst [vmem:[%s64 + $0x490] sm:%s56] %v649
      %v651 = vld [vmem:[%s63 + $0x498] sm:%s56]
      %652 = vst [vmem:[%s64 + $0x494] sm:%s56] %v651
      %v653 = vld [vmem:[%s63 + $0x494] sm:%s56]
      %654 = vst [vmem:[%s64 + $0x498] sm:%s56] %v653
      %v655 = vld [vmem:[%s63 + $0x49c] sm:%s56]
      %656 = vst [vmem:[%s64 + $0x49c] sm:%s56] %v655
      %v657 = vld [vmem:[%s63 + $0x4a0] sm:%s56]
      %658 = vst [vmem:[%s64 + $0x4a0] sm:%s56] %v657
      %v659 = vld [vmem:[%s63 + $0x4a8] sm:%s56]
      %660 = vst [vmem:[%s64 + $0x4a4] sm:%s56] %v659
      %v661 = vld [vmem:[%s63 + $0x4a4] sm:%s56]
      %662 = vst [vmem:[%s64 + $0x4a8] sm:%s56] %v661
      %v663 = vld [vmem:[%s63 + $0x4ac] sm:%s56]
      %664 = vst [vmem:[%s64 + $0x4ac] sm:%s56] %v663
      %v665 = vld [vmem:[%s63 + $0x4b0] sm:%s56]
      %666 = vst [vmem:[%s64 + $0x4b0] sm:%s56] %v665
      %v667 = vld [vmem:[%s63 + $0x4b8] sm:%s56]
      %668 = vst [vmem:[%s64 + $0x4b4] sm:%s56] %v667
      %v669 = vld [vmem:[%s63 + $0x4b4] sm:%s56]
      %670 = vst [vmem:[%s64 + $0x4b8] sm:%s56] %v669
      %v671 = vld [vmem:[%s63 + $0x4bc] sm:%s56]
      %672 = vst [vmem:[%s64 + $0x4bc] sm:%s56] %v671
      %v673 = vld [vmem:[%s63 + $0x4c0] sm:%s56]
      %674 = vst [vmem:[%s64 + $0x4c0] sm:%s56] %v673
      %v675 = vld [vmem:[%s63 + $0x4c8] sm:%s56]
      %676 = vst [vmem:[%s64 + $0x4c4] sm:%s56] %v675
      %v677 = vld [vmem:[%s63 + $0x4c4] sm:%s56]
      %678 = vst [vmem:[%s64 + $0x4c8] sm:%s56] %v677
      %v679 = vld [vmem:[%s63 + $0x4cc] sm:%s56]
      %680 = vst [vmem:[%s64 + $0x4cc] sm:%s56] %v679
      %v681 = vld [vmem:[%s63 + $0x4d0] sm:%s56]
      %682 = vst [vmem:[%s64 + $0x4d0] sm:%s56] %v681
      %v683 = vld [vmem:[%s63 + $0x4d8] sm:%s56]
      %684 = vst [vmem:[%s64 + $0x4d4] sm:%s56] %v683
      %v685 = vld [vmem:[%s63 + $0x4d4] sm:%s56]
      %686 = vst [vmem:[%s64 + $0x4d8] sm:%s56] %v685
      %v687 = vld [vmem:[%s63 + $0x4dc] sm:%s56]
      %688 = vst [vmem:[%s64 + $0x4dc] sm:%s56] %v687
      %v689 = vld [vmem:[%s63 + $0x4e0] sm:%s56]
      %690 = vst [vmem:[%s64 + $0x4e0] sm:%s56] %v689
      %v691 = vld [vmem:[%s63 + $0x4e8] sm:%s56]
      %692 = vst [vmem:[%s64 + $0x4e4] sm:%s56] %v691
      %v693 = vld [vmem:[%s63 + $0x4e4] sm:%s56]
      %694 = vst [vmem:[%s64 + $0x4e8] sm:%s56] %v693
      %v695 = vld [vmem:[%s63 + $0x4ec] sm:%s56]
      %696 = vst [vmem:[%s64 + $0x4ec] sm:%s56] %v695
      %v697 = vld [vmem:[%s63 + $0x4f0] sm:%s56]
      %698 = vst [vmem:[%s64 + $0x4f0] sm:%s56] %v697
      %v699 = vld [vmem:[%s63 + $0x4f8] sm:%s56]
      %700 = vst [vmem:[%s64 + $0x4f4] sm:%s56] %v699
      %v701 = vld [vmem:[%s63 + $0x4f4] sm:%s56]
      %702 = vst [vmem:[%s64 + $0x4f8] sm:%s56] %v701
      %v703 = vld [vmem:[%s63 + $0x4fc] sm:%s56]
      %704 = vst [vmem:[%s64 + $0x4fc] sm:%s56] %v703
      %v705 = vld [vmem:[%s63 + $0x500] sm:%s56]
      %706 = vst [vmem:[%s64 + $0x500] sm:%s56] %v705
      %v707 = vld [vmem:[%s63 + $0x508] sm:%s56]
      %708 = vst [vmem:[%s64 + $0x504] sm:%s56] %v707
      %v709 = vld [vmem:[%s63 + $0x504] sm:%s56]
      %710 = vst [vmem:[%s64 + $0x508] sm:%s56] %v709
      %v711 = vld [vmem:[%s63 + $0x50c] sm:%s56]
      %712 = vst [vmem:[%s64 + $0x50c] sm:%s56] %v711
      %v713 = vld [vmem:[%s63 + $0x510] sm:%s56]
      %714 = vst [vmem:[%s64 + $0x510] sm:%s56] %v713
      %v715 = vld [vmem:[%s63 + $0x518] sm:%s56]
      %716 = vst [vmem:[%s64 + $0x514] sm:%s56] %v715
      %v717 = vld [vmem:[%s63 + $0x514] sm:%s56]
      %718 = vst [vmem:[%s64 + $0x518] sm:%s56] %v717
      %v719 = vld [vmem:[%s63 + $0x51c] sm:%s56]
      %720 = vst [vmem:[%s64 + $0x51c] sm:%s56] %v719
      %v721 = vld [vmem:[%s63 + $0x520] sm:%s56]
      %722 = vst [vmem:[%s64 + $0x520] sm:%s56] %v721
      %v723 = vld [vmem:[%s63 + $0x528] sm:%s56]
      %724 = vst [vmem:[%s64 + $0x524] sm:%s56] %v723
      %v725 = vld [vmem:[%s63 + $0x524] sm:%s56]
      %726 = vst [vmem:[%s64 + $0x528] sm:%s56] %v725
      %v727 = vld [vmem:[%s63 + $0x52c] sm:%s56]
      %728 = vst [vmem:[%s64 + $0x52c] sm:%s56] %v727
      %v729 = vld [vmem:[%s63 + $0x530] sm:%s56]
      %730 = vst [vmem:[%s64 + $0x530] sm:%s56] %v729
      %v731 = vld [vmem:[%s63 + $0x538] sm:%s56]
      %732 = vst [vmem:[%s64 + $0x534] sm:%s56] %v731
      %v733 = vld [vmem:[%s63 + $0x534] sm:%s56]
      %734 = vst [vmem:[%s64 + $0x538] sm:%s56] %v733
      %v735 = vld [vmem:[%s63 + $0x53c] sm:%s56]
      %736 = vst [vmem:[%s64 + $0x53c] sm:%s56] %v735
      %v737 = vld [vmem:[%s63 + $0x540] sm:%s56]
      %738 = vst [vmem:[%s64 + $0x540] sm:%s56] %v737
      %v739 = vld [vmem:[%s63 + $0x548] sm:%s56]
      %740 = vst [vmem:[%s64 + $0x544] sm:%s56] %v739
      %v741 = vld [vmem:[%s63 + $0x544] sm:%s56]
      %742 = vst [vmem:[%s64 + $0x548] sm:%s56] %v741
      %v743 = vld [vmem:[%s63 + $0x54c] sm:%s56]
      %744 = vst [vmem:[%s64 + $0x54c] sm:%s56] %v743
      %v745 = vld [vmem:[%s63 + $0x550] sm:%s56]
      %746 = vst [vmem:[%s64 + $0x550] sm:%s56] %v745
      %v747 = vld [vmem:[%s63 + $0x558] sm:%s56]
      %748 = vst [vmem:[%s64 + $0x554] sm:%s56] %v747
      %v749 = vld [vmem:[%s63 + $0x554] sm:%s56]
      %750 = vst [vmem:[%s64 + $0x558] sm:%s56] %v749
      %v751 = vld [vmem:[%s63 + $0x55c] sm:%s56]
      %752 = vst [vmem:[%s64 + $0x55c] sm:%s56] %v751
      %v753 = vld [vmem:[%s63 + $0x560] sm:%s56]
      %754 = vst [vmem:[%s64 + $0x560] sm:%s56] %v753
      %v755 = vld [vmem:[%s63 + $0x568] sm:%s56]
      %756 = vst [vmem:[%s64 + $0x564] sm:%s56] %v755
      %v757 = vld [vmem:[%s63 + $0x564] sm:%s56]
      %758 = vst [vmem:[%s64 + $0x568] sm:%s56] %v757
      %v759 = vld [vmem:[%s63 + $0x56c] sm:%s56]
      %760 = vst [vmem:[%s64 + $0x56c] sm:%s56] %v759
      %v761 = vld [vmem:[%s63 + $0x570] sm:%s56]
      %762 = vst [vmem:[%s64 + $0x570] sm:%s56] %v761
      %v763 = vld [vmem:[%s63 + $0x578] sm:%s56]
      %764 = vst [vmem:[%s64 + $0x574] sm:%s56] %v763
      %v765 = vld [vmem:[%s63 + $0x574] sm:%s56]
      %766 = vst [vmem:[%s64 + $0x578] sm:%s56] %v765
      %v767 = vld [vmem:[%s63 + $0x57c] sm:%s56]
      %768 = vst [vmem:[%s64 + $0x57c] sm:%s56] %v767
      %v769 = vld [vmem:[%s63 + $0x580] sm:%s56]
      %770 = vst [vmem:[%s64 + $0x580] sm:%s56] %v769
      %v771 = vld [vmem:[%s63 + $0x588] sm:%s56]
      %772 = vst [vmem:[%s64 + $0x584] sm:%s56] %v771
      %v773 = vld [vmem:[%s63 + $0x584] sm:%s56]
      %774 = vst [vmem:[%s64 + $0x588] sm:%s56] %v773
      %v775 = vld [vmem:[%s63 + $0x58c] sm:%s56]
      %776 = vst [vmem:[%s64 + $0x58c] sm:%s56] %v775
      %v777 = vld [vmem:[%s63 + $0x590] sm:%s56]
      %778 = vst [vmem:[%s64 + $0x590] sm:%s56] %v777
      %v779 = vld [vmem:[%s63 + $0x598] sm:%s56]
      %780 = vst [vmem:[%s64 + $0x594] sm:%s56] %v779
      %v781 = vld [vmem:[%s63 + $0x594] sm:%s56]
      %782 = vst [vmem:[%s64 + $0x598] sm:%s56] %v781
      %v783 = vld [vmem:[%s63 + $0x59c] sm:%s56]
      %784 = vst [vmem:[%s64 + $0x59c] sm:%s56] %v783
      %v785 = vld [vmem:[%s63 + $0x5a0] sm:%s56]
      %786 = vst [vmem:[%s64 + $0x5a0] sm:%s56] %v785
      %v787 = vld [vmem:[%s63 + $0x5a8] sm:%s56]
      %788 = vst [vmem:[%s64 + $0x5a4] sm:%s56] %v787
      %v789 = vld [vmem:[%s63 + $0x5a4] sm:%s56]
      %790 = vst [vmem:[%s64 + $0x5a8] sm:%s56] %v789
      %v791 = vld [vmem:[%s63 + $0x5ac] sm:%s56]
      %792 = vst [vmem:[%s64 + $0x5ac] sm:%s56] %v791
      %v793 = vld [vmem:[%s63 + $0x5b0] sm:%s56]
      %794 = vst [vmem:[%s64 + $0x5b0] sm:%s56] %v793
      %v795 = vld [vmem:[%s63 + $0x5b8] sm:%s56]
      %796 = vst [vmem:[%s64 + $0x5b4] sm:%s56] %v795
      %v797 = vld [vmem:[%s63 + $0x5b4] sm:%s56]
      %798 = vst [vmem:[%s64 + $0x5b8] sm:%s56] %v797
      %v799 = vld [vmem:[%s63 + $0x5bc] sm:%s56]
      %800 = vst [vmem:[%s64 + $0x5bc] sm:%s56] %v799
      %v801 = vld [vmem:[%s63 + $0x5c0] sm:%s56]
      %802 = vst [vmem:[%s64 + $0x5c0] sm:%s56] %v801
      %v803 = vld [vmem:[%s63 + $0x5c8] sm:%s56]
      %804 = vst [vmem:[%s64 + $0x5c4] sm:%s56] %v803
      %v805 = vld [vmem:[%s63 + $0x5c4] sm:%s56]
      %806 = vst [vmem:[%s64 + $0x5c8] sm:%s56] %v805
      %v807 = vld [vmem:[%s63 + $0x5cc] sm:%s56]
      %808 = vst [vmem:[%s64 + $0x5cc] sm:%s56] %v807
      %v809 = vld [vmem:[%s63 + $0x5d0] sm:%s56]
      %810 = vst [vmem:[%s64 + $0x5d0] sm:%s56] %v809
      %v811 = vld [vmem:[%s63 + $0x5d8] sm:%s56]
      %812 = vst [vmem:[%s64 + $0x5d4] sm:%s56] %v811
      %v813 = vld [vmem:[%s63 + $0x5d4] sm:%s56]
      %814 = vst [vmem:[%s64 + $0x5d8] sm:%s56] %v813
      %v815 = vld [vmem:[%s63 + $0x5dc] sm:%s56]
      %816 = vst [vmem:[%s64 + $0x5dc] sm:%s56] %v815
      %v817 = vld [vmem:[%s63 + $0x5e0] sm:%s56]
      %818 = vst [vmem:[%s64 + $0x5e0] sm:%s56] %v817
      %v819 = vld [vmem:[%s63 + $0x5e8] sm:%s56]
      %820 = vst [vmem:[%s64 + $0x5e4] sm:%s56] %v819
      %v821 = vld [vmem:[%s63 + $0x5e4] sm:%s56]
      %822 = vst [vmem:[%s64 + $0x5e8] sm:%s56] %v821
      %v823 = vld [vmem:[%s63 + $0x5ec] sm:%s56]
      %824 = vst [vmem:[%s64 + $0x5ec] sm:%s56] %v823
      %v825 = vld [vmem:[%s63 + $0x5f0] sm:%s56]
      %826 = vst [vmem:[%s64 + $0x5f0] sm:%s56] %v825
      %v827 = vld [vmem:[%s63 + $0x5f8] sm:%s56]
      %828 = vst [vmem:[%s64 + $0x5f4] sm:%s56] %v827
      %v829 = vld [vmem:[%s63 + $0x5f4] sm:%s56]
      %830 = vst [vmem:[%s64 + $0x5f8] sm:%s56] %v829
      %v831 = vld [vmem:[%s63 + $0x5fc] sm:%s56]
      %832 = vst [vmem:[%s64 + $0x5fc] sm:%s56] %v831
    $region66: #{simple_conv_forward.1} parent=60 // loop_footer
      %s62 = sadd.s32 1, %s58
    $region67: #{simple_conv_forward.1} parent=60 // loop_footer_branch
      %57 = sbr.rel target = $region63
    $region68: #{simple_conv_forward.1} parent=60 // loop_exit
      _
  $region61: #{simple_conv_forward.1} parent=0 // pred_fallthru
    _
  // Predicated region
  $region87: #{simple_conv_forward.1} parent=0 // pred_check
    _
  $region88: #{simple_conv_forward.1} parent=0 // pred_check_branch
    %1630 = sbr.rel (0) target = $region90
  $region89: #{simple_conv_forward.1} parent=0 // pred_region
    %1631 = vsyncadd [#allocation5], 24576
  $region90: #{simple_conv_forward.1} parent=0 // pred_fallthru
    _
  %s1632 = scalar_lea.sflag [#allocation5], 1
  %p1634 = scmp.lt.u32.totalorder 360, 8
  %p1635 = pneg %p1634
  // Predicated region
  $region91: #{simple_conv_forward.1} parent=0 // pred_check
    _
  $region92: #{simple_conv_forward.1} parent=0 // pred_check_branch
    %1637 = sbr.rel (%p1634) target = $region94
  $region93: #{simple_conv_forward.1} parent=0 // pred_region
    %s1652 = sand.u32 360, 7
    %p1653 = scmp.eq.s32.totalorder %s1652, 0
    // Predicated region
    $region106: #{simple_conv_forward.1} parent=93 // pred_check
      %p1654 = pneg %p1653
    $region107: #{simple_conv_forward.1} parent=93 // pred_check_branch
      %1656 = sbr.rel (%p1654) target = $region109
    $region108: #{simple_conv_forward.1} parent=93 // pred_region
      loop: start=0, step=1, limit=1
      $region110: #{simple_conv_forward.1} parent=108 // loop_pre_header
        _
      $region111: #{simple_conv_forward.1} parent=108 // loop_header
        %s1658 = sphi 0, %s1662
        %p1659 = scmp.ge.s32.totalorder %s1658, 1
        %s1663 = sphi %s12, %s12
        %s1664 = sphi [#allocation3], [#allocation3]
      $region112: #{simple_conv_forward.1} parent=108 // loop_header_branch
        %1661 = sbr.rel (%p1659) target = $region116
      $region113: #{simple_conv_forward.1} parent=108 // loop_body
        %v1665 = vld [vmem:[%s1663] sm:$0xff]
        %1666 = vst [vmem:[%s1664] sm:$0xff] %v1665
        %v1667 = vld [vmem:[%s1663 + $0x8] sm:$0xff]
        %1668 = vst [vmem:[%s1664 + $0x8] sm:$0xff] %v1667
        %v1669 = vld [vmem:[%s1663 + $0x10] sm:$0xff]
        %1670 = vst [vmem:[%s1664 + $0x10] sm:$0xff] %v1669
        %v1671 = vld [vmem:[%s1663 + $0x18] sm:$0xff]
        %1672 = vst [vmem:[%s1664 + $0x18] sm:$0xff] %v1671
        %v1673 = vld [vmem:[%s1663 + $0x20] sm:$0xff]
        %1674 = vst [vmem:[%s1664 + $0x20] sm:$0xff] %v1673
        %v1675 = vld [vmem:[%s1663 + $0x28] sm:$0xff]
        %1676 = vst [vmem:[%s1664 + $0x28] sm:$0xff] %v1675
        %v1677 = vld [vmem:[%s1663 + $0x30] sm:$0xff]
        %1678 = vst [vmem:[%s1664 + $0x30] sm:$0xff] %v1677
        %v1679 = vld [vmem:[%s1663 + $0x38] sm:$0xff]
        %1680 = vst [vmem:[%s1664 + $0x38] sm:$0xff] %v1679
        %v1681 = vld [vmem:[%s1663 + $0x40] sm:$0xff]
        %1682 = vst [vmem:[%s1664 + $0x40] sm:$0xff] %v1681
        %v1683 = vld [vmem:[%s1663 + $0x48] sm:$0xff]
        %1684 = vst [vmem:[%s1664 + $0x48] sm:$0xff] %v1683
        %v1685 = vld [vmem:[%s1663 + $0x50] sm:$0xff]
        %1686 = vst [vmem:[%s1664 + $0x50] sm:$0xff] %v1685
        %v1687 = vld [vmem:[%s1663 + $0x58] sm:$0xff]
        %1688 = vst [vmem:[%s1664 + $0x58] sm:$0xff] %v1687
        %v1689 = vld [vmem:[%s1663 + $0x60] sm:$0xff]
        %1690 = vst [vmem:[%s1664 + $0x60] sm:$0xff] %v1689
        %v1691 = vld [vmem:[%s1663 + $0x68] sm:$0xff]
        %1692 = vst [vmem:[%s1664 + $0x68] sm:$0xff] %v1691
        %v1693 = vld [vmem:[%s1663 + $0x70] sm:$0xff]
        %1694 = vst [vmem:[%s1664 + $0x70] sm:$0xff] %v1693
        %v1695 = vld [vmem:[%s1663 + $0x78] sm:$0xff]
        %1696 = vst [vmem:[%s1664 + $0x78] sm:$0xff] %v1695
        %v1697 = vld [vmem:[%s1663 + $0x80] sm:$0xff]
        %1698 = vst [vmem:[%s1664 + $0x80] sm:$0xff] %v1697
        %v1699 = vld [vmem:[%s1663 + $0x88] sm:$0xff]
        %1700 = vst [vmem:[%s1664 + $0x88] sm:$0xff] %v1699
        %v1701 = vld [vmem:[%s1663 + $0x90] sm:$0xff]
        %1702 = vst [vmem:[%s1664 + $0x90] sm:$0xff] %v1701
        %v1703 = vld [vmem:[%s1663 + $0x98] sm:$0xff]
        %1704 = vst [vmem:[%s1664 + $0x98] sm:$0xff] %v1703
        %v1705 = vld [vmem:[%s1663 + $0xa0] sm:$0xff]
        %1706 = vst [vmem:[%s1664 + $0xa0] sm:$0xff] %v1705
        %v1707 = vld [vmem:[%s1663 + $0xa8] sm:$0xff]
        %1708 = vst [vmem:[%s1664 + $0xa8] sm:$0xff] %v1707
        %v1709 = vld [vmem:[%s1663 + $0xb0] sm:$0xff]
        %1710 = vst [vmem:[%s1664 + $0xb0] sm:$0xff] %v1709
        %v1711 = vld [vmem:[%s1663 + $0xb8] sm:$0xff]
        %1712 = vst [vmem:[%s1664 + $0xb8] sm:$0xff] %v1711
        %v1713 = vld [vmem:[%s1663 + $0xc0] sm:$0xff]
        %1714 = vst [vmem:[%s1664 + $0xc0] sm:$0xff] %v1713
        %v1715 = vld [vmem:[%s1663 + $0xc8] sm:$0xff]
        %1716 = vst [vmem:[%s1664 + $0xc8] sm:$0xff] %v1715
        %v1717 = vld [vmem:[%s1663 + $0xd0] sm:$0xff]
        %1718 = vst [vmem:[%s1664 + $0xd0] sm:$0xff] %v1717
        %v1719 = vld [vmem:[%s1663 + $0xd8] sm:$0xff]
        %1720 = vst [vmem:[%s1664 + $0xd8] sm:$0xff] %v1719
        %v1721 = vld [vmem:[%s1663 + $0xe0] sm:$0xff]
        %1722 = vst [vmem:[%s1664 + $0xe0] sm:$0xff] %v1721
        %v1723 = vld [vmem:[%s1663 + $0xe8] sm:$0xff]
        %1724 = vst [vmem:[%s1664 + $0xe8] sm:$0xff] %v1723
        %v1725 = vld [vmem:[%s1663 + $0xf0] sm:$0xff]
        %1726 = vst [vmem:[%s1664 + $0xf0] sm:$0xff] %v1725
        %v1727 = vld [vmem:[%s1663 + $0xf8] sm:$0xff]
        %1728 = vst [vmem:[%s1664 + $0xf8] sm:$0xff] %v1727
        %v1729 = vld [vmem:[%s1663 + $0x100] sm:$0xff]
        %1730 = vst [vmem:[%s1664 + $0x100] sm:$0xff] %v1729
        %v1731 = vld [vmem:[%s1663 + $0x108] sm:$0xff]
        %1732 = vst [vmem:[%s1664 + $0x108] sm:$0xff] %v1731
        %v1733 = vld [vmem:[%s1663 + $0x110] sm:$0xff]
        %1734 = vst [vmem:[%s1664 + $0x110] sm:$0xff] %v1733
        %v1735 = vld [vmem:[%s1663 + $0x118] sm:$0xff]
        %1736 = vst [vmem:[%s1664 + $0x118] sm:$0xff] %v1735
        %v1737 = vld [vmem:[%s1663 + $0x120] sm:$0xff]
        %1738 = vst [vmem:[%s1664 + $0x120] sm:$0xff] %v1737
        %v1739 = vld [vmem:[%s1663 + $0x128] sm:$0xff]
        %1740 = vst [vmem:[%s1664 + $0x128] sm:$0xff] %v1739
        %v1741 = vld [vmem:[%s1663 + $0x130] sm:$0xff]
        %1742 = vst [vmem:[%s1664 + $0x130] sm:$0xff] %v1741
        %v1743 = vld [vmem:[%s1663 + $0x138] sm:$0xff]
        %1744 = vst [vmem:[%s1664 + $0x138] sm:$0xff] %v1743
        %v1745 = vld [vmem:[%s1663 + $0x140] sm:$0xff]
        %1746 = vst [vmem:[%s1664 + $0x140] sm:$0xff] %v1745
        %v1747 = vld [vmem:[%s1663 + $0x148] sm:$0xff]
        %1748 = vst [vmem:[%s1664 + $0x148] sm:$0xff] %v1747
        %v1749 = vld [vmem:[%s1663 + $0x150] sm:$0xff]
        %1750 = vst [vmem:[%s1664 + $0x150] sm:$0xff] %v1749
        %v1751 = vld [vmem:[%s1663 + $0x158] sm:$0xff]
        %1752 = vst [vmem:[%s1664 + $0x158] sm:$0xff] %v1751
        %v1753 = vld [vmem:[%s1663 + $0x160] sm:$0xff]
        %1754 = vst [vmem:[%s1664 + $0x160] sm:$0xff] %v1753
      $region114: #{simple_conv_forward.1} parent=108 // loop_footer
        %s1662 = sadd.s32 1, %s1658
      $region115: #{simple_conv_forward.1} parent=108 // loop_footer_branch
        %1657 = sbr.rel target = $region111
      $region116: #{simple_conv_forward.1} parent=108 // loop_exit
        _
    $region109: #{simple_conv_forward.1} parent=93 // pred_fallthru
      _
    %p1755 = pneg %p1653
    // Predicated region
    $region117: #{simple_conv_forward.1} parent=93 // pred_check
      _
    $region118: #{simple_conv_forward.1} parent=93 // pred_check_branch
      %1757 = sbr.rel (%p1653) target = $region120
    $region119: #{simple_conv_forward.1} parent=93 // pred_region
      %s1758 = sand.u32 360, 7
    $region120: #{simple_conv_forward.1} parent=93 // pred_fallthru
      _
  $region94: #{simple_conv_forward.1} parent=0 // pred_fallthru
    _
  // Predicated region
  $region95: #{simple_conv_forward.1} parent=0 // pred_check
    %p1638 = pneg %p1634
  $region96: #{simple_conv_forward.1} parent=0 // pred_check_branch
    %1640 = sbr.rel (%p1638) target = $region98
  $region97: #{simple_conv_forward.1} parent=0 // pred_region
    %s1641 = sshllo.u32 0, 360
    loop: start=0, step=1, limit=1
    $region99: #{simple_conv_forward.1} parent=97 // loop_pre_header
      _
    $region100: #{simple_conv_forward.1} parent=97 // loop_header
      %s1643 = sphi 0, %s1647
      %p1644 = scmp.ge.s32.totalorder %s1643, 1
      %s1648 = sphi %s12, %s12
      %s1649 = sphi [#allocation3], [#allocation3]
    $region101: #{simple_conv_forward.1} parent=97 // loop_header_branch
      %1646 = sbr.rel (%p1644) target = $region105
    $region102: #{simple_conv_forward.1} parent=97 // loop_body
      %v1650 = vld [vmem:[%s1648] sm:%s1641]
      %1651 = vst [vmem:[%s1649] sm:%s1641] %v1650
    $region103: #{simple_conv_forward.1} parent=97 // loop_footer
      %s1647 = sadd.s32 1, %s1643
    $region104: #{simple_conv_forward.1} parent=97 // loop_footer_branch
      %1642 = sbr.rel target = $region100
    $region105: #{simple_conv_forward.1} parent=97 // loop_exit
      _
  $region98: #{simple_conv_forward.1} parent=0 // pred_fallthru
    _
  // Predicated region
  $region121: #{simple_conv_forward.1} parent=0 // pred_check
    _
  $region122: #{simple_conv_forward.1} parent=0 // pred_check_branch
    %1761 = sbr.rel (0) target = $region124
  $region123: #{simple_conv_forward.1} parent=0 // pred_region
    %1762 = vsyncadd %s1632, 5760
  $region124: #{simple_conv_forward.1} parent=0 // pred_fallthru
    _
  %s1763 = scalar_lea.sflag [#allocation5], 2
  %p1765 = scmp.lt.u32.totalorder 96, 8
  %p1766 = pneg %p1765
  // Predicated region
  $region125: #{simple_conv_forward.1} parent=0 // pred_check
    _
  $region126: #{simple_conv_forward.1} parent=0 // pred_check_branch
    %1768 = sbr.rel (%p1765) target = $region128
  $region127: #{simple_conv_forward.1} parent=0 // pred_region
    %s1783 = sand.u32 96, 7
    %p1784 = scmp.eq.s32.totalorder %s1783, 0
    // Predicated region
    $region140: #{simple_conv_forward.1} parent=127 // pred_check
      %p1785 = pneg %p1784
    $region141: #{simple_conv_forward.1} parent=127 // pred_check_branch
      %1787 = sbr.rel (%p1785) target = $region143
    $region142: #{simple_conv_forward.1} parent=127 // pred_region
      loop: start=0, step=1, limit=1
      $region144: #{simple_conv_forward.1} parent=142 // loop_pre_header
        _
      $region145: #{simple_conv_forward.1} parent=142 // loop_header
        %s1789 = sphi 0, %s1793
        %p1790 = scmp.ge.s32.totalorder %s1789, 1
        %s1794 = sphi %s14, %s14
        %s1795 = sphi [#allocation4], [#allocation4]
      $region146: #{simple_conv_forward.1} parent=142 // loop_header_branch
        %1792 = sbr.rel (%p1790) target = $region150
      $region147: #{simple_conv_forward.1} parent=142 // loop_body
        %v1796 = vld [vmem:[%s1794] sm:$0xff]
        %1797 = vst [vmem:[%s1795] sm:$0xff] %v1796
        %v1798 = vld [vmem:[%s1794 + $0x8] sm:$0xff]
        %1799 = vst [vmem:[%s1795 + $0x8] sm:$0xff] %v1798
        %v1800 = vld [vmem:[%s1794 + $0x10] sm:$0xff]
        %1801 = vst [vmem:[%s1795 + $0x10] sm:$0xff] %v1800
        %v1802 = vld [vmem:[%s1794 + $0x18] sm:$0xff]
        %1803 = vst [vmem:[%s1795 + $0x18] sm:$0xff] %v1802
        %v1804 = vld [vmem:[%s1794 + $0x20] sm:$0xff]
        %1805 = vst [vmem:[%s1795 + $0x20] sm:$0xff] %v1804
        %v1806 = vld [vmem:[%s1794 + $0x28] sm:$0xff]
        %1807 = vst [vmem:[%s1795 + $0x28] sm:$0xff] %v1806
        %v1808 = vld [vmem:[%s1794 + $0x30] sm:$0xff]
        %1809 = vst [vmem:[%s1795 + $0x30] sm:$0xff] %v1808
        %v1810 = vld [vmem:[%s1794 + $0x38] sm:$0xff]
        %1811 = vst [vmem:[%s1795 + $0x38] sm:$0xff] %v1810
        %v1812 = vld [vmem:[%s1794 + $0x40] sm:$0xff]
        %1813 = vst [vmem:[%s1795 + $0x40] sm:$0xff] %v1812
        %v1814 = vld [vmem:[%s1794 + $0x48] sm:$0xff]
        %1815 = vst [vmem:[%s1795 + $0x48] sm:$0xff] %v1814
        %v1816 = vld [vmem:[%s1794 + $0x50] sm:$0xff]
        %1817 = vst [vmem:[%s1795 + $0x50] sm:$0xff] %v1816
        %v1818 = vld [vmem:[%s1794 + $0x58] sm:$0xff]
        %1819 = vst [vmem:[%s1795 + $0x58] sm:$0xff] %v1818
      $region148: #{simple_conv_forward.1} parent=142 // loop_footer
        %s1793 = sadd.s32 1, %s1789
      $region149: #{simple_conv_forward.1} parent=142 // loop_footer_branch
        %1788 = sbr.rel target = $region145
      $region150: #{simple_conv_forward.1} parent=142 // loop_exit
        _
    $region143: #{simple_conv_forward.1} parent=127 // pred_fallthru
      _
    %p1820 = pneg %p1784
    // Predicated region
    $region151: #{simple_conv_forward.1} parent=127 // pred_check
      _
    $region152: #{simple_conv_forward.1} parent=127 // pred_check_branch
      %1822 = sbr.rel (%p1784) target = $region154
    $region153: #{simple_conv_forward.1} parent=127 // pred_region
      %s1823 = sand.u32 96, 7
    $region154: #{simple_conv_forward.1} parent=127 // pred_fallthru
      _
  $region128: #{simple_conv_forward.1} parent=0 // pred_fallthru
    _
  // Predicated region
  $region129: #{simple_conv_forward.1} parent=0 // pred_check
    %p1769 = pneg %p1765
  $region130: #{simple_conv_forward.1} parent=0 // pred_check_branch
    %1771 = sbr.rel (%p1769) target = $region132
  $region131: #{simple_conv_forward.1} parent=0 // pred_region
    %s1772 = sshllo.u32 0, 96
    loop: start=0, step=1, limit=1
    $region133: #{simple_conv_forward.1} parent=131 // loop_pre_header
      _
    $region134: #{simple_conv_forward.1} parent=131 // loop_header
      %s1774 = sphi 0, %s1778
      %p1775 = scmp.ge.s32.totalorder %s1774, 1
      %s1779 = sphi %s14, %s14
      %s1780 = sphi [#allocation4], [#allocation4]
    $region135: #{simple_conv_forward.1} parent=131 // loop_header_branch
      %1777 = sbr.rel (%p1775) target = $region139
    $region136: #{simple_conv_forward.1} parent=131 // loop_body
      %v1781 = vld [vmem:[%s1779] sm:%s1772]
      %1782 = vst [vmem:[%s1780] sm:%s1772] %v1781
    $region137: #{simple_conv_forward.1} parent=131 // loop_footer
      %s1778 = sadd.s32 1, %s1774
    $region138: #{simple_conv_forward.1} parent=131 // loop_footer_branch
      %1773 = sbr.rel target = $region134
    $region139: #{simple_conv_forward.1} parent=131 // loop_exit
      _
  $region132: #{simple_conv_forward.1} parent=0 // pred_fallthru
    _
  // Predicated region
  $region155: #{simple_conv_forward.1} parent=0 // pred_check
    _
  $region156: #{simple_conv_forward.1} parent=0 // pred_check_branch
    %1826 = sbr.rel (0) target = $region158
  $region157: #{simple_conv_forward.1} parent=0 // pred_region
    %1827 = vsyncadd %s1763, 1536
  $region158: #{simple_conv_forward.1} parent=0 // pred_fallthru
    _
  %v1828 = vld [vmem:[%s2] sm:$0xff]
  %v1829 = vld [vmem:[%s2 + $0x8] sm:$0xff]
  %v1830 = vld [vmem:[%s2 + $0x10] sm:$0xff]
  %v1831 = vld [vmem:[%s2 + $0x18] sm:$0xff]
  %v1832 = vld [vmem:[%s3] sm:$0xff]
  %v1833 = vld [vmem:[%s3 + $0x8] sm:$0xff]
  %v1834 = vld [vmem:[%s3 + $0x10] sm:$0xff]
  %v1835 = vld [vmem:[%s3 + $0x18] sm:$0xff]
  %v1836 = vld [vmem:[%s0] sm:$0xf]
  %v1837 = vld [vmem:[%s0 + $0x4] sm:$0xf]
  %v1838 = vld [vmem:[%s0 + $0x8] sm:$0xf]
  %v1839 = vld [vmem:[%s0 + $0xc] sm:$0xf]
  %v1840 = vld [vmem:[%s4] sm:$0xf]
  %v1841 = vld [vmem:[%s4 + $0x4] sm:$0xf]
  %v1846 = vunpack.c.l.b16 %v1836
  %v1847 = vunpack.c.l.b16 %v1837
  %v1848 = vunpack.c.l.b16 %v1838
  %v1849 = vunpack.c.l.b16 %v1839
  %v1850 = vpack.c.b16 %v1847, %v1846
  %v1851 = vpack.c.b16 %v1849, %v1848
  %v1854 = vunpack.c.l.b16 %v1840
  %v1855 = vunpack.c.l.b16 %v1841
  %v1856 = vpack.c.b16 %v1855, %v1854
  %vm1858 = vcmask 130048
  %v1860 = vsel %vm1858, %v1850, 0
  %v1863 = vsel %vm1858, %v1851, 0
  %1865 = vmatprep.subr.bf16.mxu0 0
  %1866 = vmatpush1.bf16.msra.mxu0 %v1856
  %1867 = vmatprep.subr.bf16.mxu0 0
  %1868 = vmatpush1.bf16.msra.mxu0 0
  %1869 = vmatprep.subr.bf16.mxu0 0
  %1870 = vmatpush1.bf16.msra.mxu0 0
  %1871 = vmatprep.subr.bf16.mxu0 0
  %1872 = vmatpush1.bf16.msra.mxu0 0
  %1873 = vmatprep.subr.bf16.mxu0 0
  %1874 = vmatpush1.bf16.msra.mxu0 0
  %1875 = vmatprep.subr.bf16.mxu0 0
  %1876 = vmatpush1.bf16.msra.mxu0 0
  %1877 = vmatprep.subr.bf16.mxu0 0
  %1878 = vmatpush1.bf16.msra.mxu0 0
  %1879 = vmatprep.subr.bf16.mxu0 0
  %1880 = vmatpush1.bf16.msra.mxu0 0
  %1881 = vmatprep.subr.bf16.mxu0 0
  %1882 = vmatpush1.bf16.msra.mxu0 0
  %1883 = vmatprep.subr.bf16.mxu0 0
  %1884 = vmatpush1.bf16.msra.mxu0 0
  %1885 = vmatprep.subr.bf16.mxu0 0
  %1886 = vmatpush1.bf16.msra.mxu0 0
  %1887 = vmatprep.subr.bf16.mxu0 0
  %1888 = vmatpush1.bf16.msra.mxu0 0
  %1889 = vmatprep.subr.bf16.mxu0 0
  %1890 = vmatpush1.bf16.msra.mxu0 0
  %1891 = vmatprep.subr.bf16.mxu0 0
  %1892 = vmatpush1.bf16.msra.mxu0 0
  %1893 = vmatprep.subr.bf16.mxu0 0
  %1894 = vmatpush1.bf16.msra.mxu0 0
  %1895 = vmatprep.subr.bf16.mxu0 0
  %1896 = vmatpush1.bf16.msra.mxu0 0
  %1897 = vmatprep.mubr.bf16.mxu0 0
  %1898 = vmatmul.mubr.bf16.gmra.mrb[0].mxu0 %v1860
  %v1899 = vpop.f32.mrb[0].mxu0
  %v1900 = vadd.f32 0.0, %v1899
  %v1901 = vpop.f32.mrb[0].mxu0
  %v1902 = vpop.f32.mrb[0].mxu0
  %v1903 = vadd.f32 0.0, %v1902
  %v1904 = vpop.f32.mrb[0].mxu0
  %1905 = vmatprep.mubr.bf16.mxu0 0
  %1906 = vmatmul.mubr.bf16.gmra.mrb[0].mxu0 %v1863
  %v1907 = vpop.f32.mrb[0].mxu0
  %v1908 = vadd.f32 0.0, %v1907
  %v1909 = vpop.f32.mrb[0].mxu0
  %v1910 = vpop.f32.mrb[0].mxu0
  %v1911 = vadd.f32 0.0, %v1910
  %v1912 = vpop.f32.mrb[0].mxu0
  %1913 = vdwg.mxu0
  %s1914 = scalar_lea.vmem %s4, 8
  %v1915 = vld [vmem:[%s1914] sm:$0xf]
  %v1916 = vld [vmem:[%s1914 + $0x4] sm:$0xf]
  %s1917 = scalar_lea.vmem %s4, 16
  %v1918 = vld [vmem:[%s1917] sm:$0xf]
  %v1919 = vld [vmem:[%s1917 + $0x4] sm:$0xf]
  %v1922 = vunpack.c.l.b16 %v1918
  %v1923 = vunpack.c.l.b16 %v1919
  %v1924 = vpack.c.b16 %v1923, %v1922
  %1926 = vmatprep.subr.bf16.mxu0 0
  %1927 = vmatpush1.bf16.msra.mxu0 %v1924
  %1928 = vmatprep.subr.bf16.mxu0 0
  %1929 = vmatpush1.bf16.msra.mxu0 0
  %1930 = vmatprep.subr.bf16.mxu0 0
  %1931 = vmatpush1.bf16.msra.mxu0 0
  %1932 = vmatprep.subr.bf16.mxu0 0
  %1933 = vmatpush1.bf16.msra.mxu0 0
  %1934 = vmatprep.subr.bf16.mxu0 0
  %1935 = vmatpush1.bf16.msra.mxu0 0
  %1936 = vmatprep.subr.bf16.mxu0 0
  %1937 = vmatpush1.bf16.msra.mxu0 0
  %1938 = vmatprep.subr.bf16.mxu0 0
  %1939 = vmatpush1.bf16.msra.mxu0 0
  %1940 = vmatprep.subr.bf16.mxu0 0
  %1941 = vmatpush1.bf16.msra.mxu0 0
  %1942 = vmatprep.subr.bf16.mxu0 0
  %1943 = vmatpush1.bf16.msra.mxu0 0
  %1944 = vmatprep.subr.bf16.mxu0 0
  %1945 = vmatpush1.bf16.msra.mxu0 0
  %1946 = vmatprep.subr.bf16.mxu0 0
  %1947 = vmatpush1.bf16.msra.mxu0 0
  %1948 = vmatprep.subr.bf16.mxu0 0
  %1949 = vmatpush1.bf16.msra.mxu0 0
  %1950 = vmatprep.subr.bf16.mxu0 0
  %1951 = vmatpush1.bf16.msra.mxu0 0
  %1952 = vmatprep.subr.bf16.mxu0 0
  %1953 = vmatpush1.bf16.msra.mxu0 0
  %1954 = vmatprep.subr.bf16.mxu0 0
  %1955 = vmatpush1.bf16.msra.mxu0 0
  %1956 = vmatprep.subr.bf16.mxu0 0
  %1957 = vmatpush1.bf16.msra.mxu0 0
  %1958 = vmatprep.mubr.bf16.mxu0 0
  %1959 = vmatmul.mubr.bf16.gmra.mrb[0].mxu0 %v1860
  %v1960 = vpop.f32.mrb[0].mxu0
  %v1961 = vadd.f32 0.0, %v1960
  %v1962 = vpop.f32.mrb[0].mxu0
  %v1963 = vpop.f32.mrb[0].mxu0
  %v1964 = vadd.f32 0.0, %v1963
  %v1965 = vpop.f32.mrb[0].mxu0
  %1966 = vmatprep.mubr.bf16.mxu0 0
  %1967 = vmatmul.mubr.bf16.gmra.mrb[0].mxu0 %v1863
  %v1968 = vpop.f32.mrb[0].mxu0
  %v1969 = vadd.f32 0.0, %v1968
  %v1970 = vpop.f32.mrb[0].mxu0
  %v1971 = vpop.f32.mrb[0].mxu0
  %v1972 = vadd.f32 0.0, %v1971
  %v1973 = vpop.f32.mrb[0].mxu0
  %1974 = vdwg.mxu0
  %vm1975 = vcmask 261120
  %v1977 = vsel %vm1975, %v1828, 0
  %v1980 = vsel %vm1975, %v1829, 0
  %v1983 = vsel %vm1975, %v1830, 0
  %v1986 = vsel %vm1975, %v1831, 0
  %1988 = vmatprep.subr.mxu0 0.0
  %1989 = vmatpush1.msra.mxu0 %v1900
  %1990 = vmatprep.subr.mxu0 0.0
  %1991 = vmatpush1.msra.mxu0 %v1903
  %1992 = vmatprep.subr.mxu0 0.0
  %1993 = vmatpush1.msra.mxu0 %v1908
  %1994 = vmatprep.subr.mxu0 0.0
  %1995 = vmatpush1.msra.mxu0 %v1911
  %1996 = vmatprep.subr.mxu0 0.0
  %1997 = vmatpush1.msra.mxu0 0.0
  %1998 = vmatprep.subr.mxu0 0.0
  %1999 = vmatpush1.msra.mxu0 0.0
  %2000 = vmatprep.subr.mxu0 0.0
  %2001 = vmatpush1.msra.mxu0 0.0
  %2002 = vmatprep.subr.mxu0 0.0
  %2003 = vmatpush1.msra.mxu0 0.0
  %2004 = vmatprep.subr.mxu0 0.0
  %2005 = vmatpush1.msra.mxu0 0.0
  %2006 = vmatprep.subr.mxu0 0.0
  %2007 = vmatpush1.msra.mxu0 0.0
  %2008 = vmatprep.subr.mxu0 0.0
  %2009 = vmatpush1.msra.mxu0 0.0
  %2010 = vmatprep.subr.mxu0 0.0
  %2011 = vmatpush1.msra.mxu0 0.0
  %2012 = vmatprep.subr.mxu0 0.0
  %2013 = vmatpush1.msra.mxu0 0.0
  %2014 = vmatprep.subr.mxu0 0.0
  %2015 = vmatpush1.msra.mxu0 0.0
  %2016 = vmatprep.subr.mxu0 0.0
  %2017 = vmatpush1.msra.mxu0 0.0
  %2018 = vmatprep.subr.mxu0 0.0
  %2019 = vmatpush1.msra.mxu0 0.0
  %2020 = vmatprep.subr.mxu0 0.0
  %2021 = vmatpush1.msra.mxu0 0.0
  %2022 = vmatprep.subr.mxu0 0.0
  %2023 = vmatpush1.msra.mxu0 0.0
  %2024 = vmatprep.subr.mxu0 0.0
  %2025 = vmatpush1.msra.mxu0 0.0
  %2026 = vmatprep.subr.mxu0 0.0
  %2027 = vmatpush1.msra.mxu0 0.0
  %2028 = vmatprep.subr.mxu0 0.0
  %2029 = vmatpush1.msra.mxu0 0.0
  %2030 = vmatprep.subr.mxu0 0.0
  %2031 = vmatpush1.msra.mxu0 0.0
  %2032 = vmatprep.subr.mxu0 0.0
  %2033 = vmatpush1.msra.mxu0 0.0
  %2034 = vmatprep.subr.mxu0 0.0
  %2035 = vmatpush1.msra.mxu0 0.0
  %2036 = vmatprep.subr.mxu0 0.0
  %2037 = vmatpush1.msra.mxu0 0.0
  %2038 = vmatprep.subr.mxu0 0.0
  %2039 = vmatpush1.msra.mxu0 0.0
  %2040 = vmatprep.subr.mxu0 0.0
  %2041 = vmatpush1.msra.mxu0 0.0
  %2042 = vmatprep.subr.mxu0 0.0
  %2043 = vmatpush1.msra.mxu0 0.0
  %2044 = vmatprep.subr.mxu0 0.0
  %2045 = vmatpush1.msra.mxu0 0.0
  %2046 = vmatprep.subr.mxu0 0.0
  %2047 = vmatpush1.msra.mxu0 0.0
  %2048 = vmatprep.subr.mxu0 0.0
  %2049 = vmatpush1.msra.mxu0 0.0
  %2050 = vmatprep.subr.mxu0 0.0
  %2051 = vmatpush1.msra.mxu0 0.0
  %2052 = vmatprep.mubr.f32.mxu0 0.0
  %2053 = vmatmul.mubr.f32.gmra.mrb[0].mxu0 %v1977
  %v2054 = vpop.f32.mrb[0].mxu0
  %v2055 = vadd.f32 0.0, %v2054
  %v2056 = vpop.f32.mrb[0].mxu0
  %2057 = vmatprep.mubr.f32.mxu0 0.0
  %2058 = vmatmul.mubr.f32.gmra.mrb[0].mxu0 %v1980
  %v2059 = vpop.f32.mrb[0].mxu0
  %v2060 = vadd.f32 0.0, %v2059
  %v2061 = vpop.f32.mrb[0].mxu0
  %2062 = vmatprep.mubr.f32.mxu0 0.0
  %2063 = vmatmul.mubr.f32.gmra.mrb[0].mxu0 %v1983
  %v2064 = vpop.f32.mrb[0].mxu0
  %v2065 = vadd.f32 0.0, %v2064
  %v2066 = vpop.f32.mrb[0].mxu0
  %2067 = vmatprep.mubr.f32.mxu0 0.0
  %2068 = vmatmul.mubr.f32.gmra.mrb[0].mxu0 %v1986
  %v2069 = vpop.f32.mrb[0].mxu0
  %v2070 = vadd.f32 0.0, %v2069
  %v2071 = vpop.f32.mrb[0].mxu0
  %2072 = vdwg.mxu0
  %v2075 = vunpack.c.l.b16 %v1915
  %v2076 = vunpack.c.l.b16 %v1916
  %v2077 = vpack.c.b16 %v2076, %v2075
  %2079 = vmatprep.subr.bf16.mxu0 0
  %2080 = vmatpush1.bf16.msra.mxu0 %v2077
  %2081 = vmatprep.subr.bf16.mxu0 0
  %2082 = vmatpush1.bf16.msra.mxu0 0
  %2083 = vmatprep.subr.bf16.mxu0 0
  %2084 = vmatpush1.bf16.msra.mxu0 0
  %2085 = vmatprep.subr.bf16.mxu0 0
  %2086 = vmatpush1.bf16.msra.mxu0 0
  %2087 = vmatprep.subr.bf16.mxu0 0
  %2088 = vmatpush1.bf16.msra.mxu0 0
  %2089 = vmatprep.subr.bf16.mxu0 0
  %2090 = vmatpush1.bf16.msra.mxu0 0
  %2091 = vmatprep.subr.bf16.mxu0 0
  %2092 = vmatpush1.bf16.msra.mxu0 0
  %2093 = vmatprep.subr.bf16.mxu0 0
  %2094 = vmatpush1.bf16.msra.mxu0 0
  %2095 = vmatprep.subr.bf16.mxu0 0
  %2096 = vmatpush1.bf16.msra.mxu0 0
  %2097 = vmatprep.subr.bf16.mxu0 0
  %2098 = vmatpush1.bf16.msra.mxu0 0
  %2099 = vmatprep.subr.bf16.mxu0 0
  %2100 = vmatpush1.bf16.msra.mxu0 0
  %2101 = vmatprep.subr.bf16.mxu0 0
  %2102 = vmatpush1.bf16.msra.mxu0 0
  %2103 = vmatprep.subr.bf16.mxu0 0
  %2104 = vmatpush1.bf16.msra.mxu0 0
  %2105 = vmatprep.subr.bf16.mxu0 0
  %2106 = vmatpush1.bf16.msra.mxu0 0
  %2107 = vmatprep.subr.bf16.mxu0 0
  %2108 = vmatpush1.bf16.msra.mxu0 0
  %2109 = vmatprep.subr.bf16.mxu0 0
  %2110 = vmatpush1.bf16.msra.mxu0 0
  %2111 = vmatprep.mubr.bf16.mxu0 0
  %2112 = vmatmul.mubr.bf16.gmra.mrb[0].mxu0 %v1860
  %v2113 = vpop.f32.mrb[0].mxu0
  %v2114 = vadd.f32 %v2055, %v2113
  %v2115 = vpop.f32.mrb[0].mxu0
  %v2116 = vpop.f32.mrb[0].mxu0
  %v2117 = vadd.f32 %v2060, %v2116
  %v2118 = vpop.f32.mrb[0].mxu0
  %2119 = vmatprep.mubr.bf16.mxu0 0
  %2120 = vmatmul.mubr.bf16.gmra.mrb[0].mxu0 %v1863
  %v2121 = vpop.f32.mrb[0].mxu0
  %v2122 = vadd.f32 %v2065, %v2121
  %v2123 = vpop.f32.mrb[0].mxu0
  %v2124 = vpop.f32.mrb[0].mxu0
  %v2125 = vadd.f32 %v2070, %v2124
  %v2126 = vpop.f32.mrb[0].mxu0
  %2127 = vdwg.mxu0
  %v2129 = vsel %vm1975, %v1832, 0
  %v2132 = vsel %vm1975, %v1833, 0
  %v2135 = vsel %vm1975, %v1834, 0
  %v2138 = vsel %vm1975, %v1835, 0
  %2140 = vmatprep.subr.mxu0 0.0
  %2141 = vmatpush1.msra.mxu0 %v1961
  %2142 = vmatprep.subr.mxu0 0.0
  %2143 = vmatpush1.msra.mxu0 %v1964
  %2144 = vmatprep.subr.mxu0 0.0
  %2145 = vmatpush1.msra.mxu0 %v1969
  %2146 = vmatprep.subr.mxu0 0.0
  %2147 = vmatpush1.msra.mxu0 %v1972
  %2148 = vmatprep.subr.mxu0 0.0
  %2149 = vmatpush1.msra.mxu0 0.0
  %2150 = vmatprep.subr.mxu0 0.0
  %2151 = vmatpush1.msra.mxu0 0.0
  %2152 = vmatprep.subr.mxu0 0.0
  %2153 = vmatpush1.msra.mxu0 0.0
  %2154 = vmatprep.subr.mxu0 0.0
  %2155 = vmatpush1.msra.mxu0 0.0
  %2156 = vmatprep.subr.mxu0 0.0
  %2157 = vmatpush1.msra.mxu0 0.0
  %2158 = vmatprep.subr.mxu0 0.0
  %2159 = vmatpush1.msra.mxu0 0.0
  %2160 = vmatprep.subr.mxu0 0.0
  %2161 = vmatpush1.msra.mxu0 0.0
  %2162 = vmatprep.subr.mxu0 0.0
  %2163 = vmatpush1.msra.mxu0 0.0
  %2164 = vmatprep.subr.mxu0 0.0
  %2165 = vmatpush1.msra.mxu0 0.0
  %2166 = vmatprep.subr.mxu0 0.0
  %2167 = vmatpush1.msra.mxu0 0.0
  %2168 = vmatprep.subr.mxu0 0.0
  %2169 = vmatpush1.msra.mxu0 0.0
  %2170 = vmatprep.subr.mxu0 0.0
  %2171 = vmatpush1.msra.mxu0 0.0
  %2172 = vmatprep.subr.mxu0 0.0
  %2173 = vmatpush1.msra.mxu0 0.0
  %2174 = vmatprep.subr.mxu0 0.0
  %2175 = vmatpush1.msra.mxu0 0.0
  %2176 = vmatprep.subr.mxu0 0.0
  %2177 = vmatpush1.msra.mxu0 0.0
  %2178 = vmatprep.subr.mxu0 0.0
  %2179 = vmatpush1.msra.mxu0 0.0
  %2180 = vmatprep.subr.mxu0 0.0
  %2181 = vmatpush1.msra.mxu0 0.0
  %2182 = vmatprep.subr.mxu0 0.0
  %2183 = vmatpush1.msra.mxu0 0.0
  %2184 = vmatprep.subr.mxu0 0.0
  %2185 = vmatpush1.msra.mxu0 0.0
  %2186 = vmatprep.subr.mxu0 0.0
  %2187 = vmatpush1.msra.mxu0 0.0
  %2188 = vmatprep.subr.mxu0 0.0
  %2189 = vmatpush1.msra.mxu0 0.0
  %2190 = vmatprep.subr.mxu0 0.0
  %2191 = vmatpush1.msra.mxu0 0.0
  %2192 = vmatprep.subr.mxu0 0.0
  %2193 = vmatpush1.msra.mxu0 0.0
  %2194 = vmatprep.subr.mxu0 0.0
  %2195 = vmatpush1.msra.mxu0 0.0
  %2196 = vmatprep.subr.mxu0 0.0
  %2197 = vmatpush1.msra.mxu0 0.0
  %2198 = vmatprep.subr.mxu0 0.0
  %2199 = vmatpush1.msra.mxu0 0.0
  %2200 = vmatprep.subr.mxu0 0.0
  %2201 = vmatpush1.msra.mxu0 0.0
  %2202 = vmatprep.subr.mxu0 0.0
  %2203 = vmatpush1.msra.mxu0 0.0
  %2204 = vmatprep.mubr.f32.mxu0 0.0
  %2205 = vmatmul.mubr.f32.gmra.mrb[0].mxu0 %v2129
  %v2206 = vpop.f32.mrb[0].mxu0
  %v2207 = vadd.f32 0.0, %v2206
  %v2208 = vpop.f32.mrb[0].mxu0
  %2209 = vmatprep.mubr.f32.mxu0 0.0
  %2210 = vmatmul.mubr.f32.gmra.mrb[0].mxu0 %v2132
  %v2211 = vpop.f32.mrb[0].mxu0
  %v2212 = vadd.f32 0.0, %v2211
  %v2213 = vpop.f32.mrb[0].mxu0
  %2214 = vmatprep.mubr.f32.mxu0 0.0
  %2215 = vmatmul.mubr.f32.gmra.mrb[0].mxu0 %v2135
  %v2216 = vpop.f32.mrb[0].mxu0
  %v2217 = vadd.f32 0.0, %v2216
  %v2218 = vpop.f32.mrb[0].mxu0
  %2219 = vmatprep.mubr.f32.mxu0 0.0
  %2220 = vmatmul.mubr.f32.gmra.mrb[0].mxu0 %v2138
  %v2221 = vpop.f32.mrb[0].mxu0
  %v2222 = vadd.f32 0.0, %v2221
  %v2223 = vpop.f32.mrb[0].mxu0
  %2224 = vdwg.mxu0
  %v2225 = vadd.f32 %v2114, %v2207
  %v2226 = vadd.f32 %v2117, %v2212
  %v2227 = vadd.f32 %v2122, %v2217
  %v2228 = vadd.f32 %v2125, %v2222
  %v2229 = vld [vmem:[%s5] sm:$0x1]
  %v2231 = vlaneseq
  %v2232 = vshrl.u32 %v2231, 7
  %v2233 = vsub.s32 0, %v2232
  %v2234 = vrot.slane %v2229, %v2233
  %v2236 = vadd.f32 %v2225, %v2234
  %v2237 = vadd.f32 %v2226, %v2234
  %v2238 = vadd.f32 %v2227, %v2234
  %v2239 = vadd.f32 %v2228, %v2234
  %v2240 = vmax.f32 %v2236, 0.0
  %v2241 = vmax.f32 %v2237, 0.0
  %v2242 = vmax.f32 %v2238, 0.0
  %v2243 = vmax.f32 %v2239, 0.0
  %v2244 = vpack.c.bf16 %v2241, %v2240
  %v2245 = vpack.c.bf16 %v2243, %v2242
  %v2246 = vld [vmem:[%s6] sm:$0xff]
  %v2247 = vld [vmem:[%s6 + $0x8] sm:$0xff]
  %v2248 = vld [vmem:[%s6 + $0x10] sm:$0xff]
  %v2249 = vld [vmem:[%s6 + $0x18] sm:$0xff]
  %v2250 = vld [vmem:[%s6 + $0x20] sm:$0xff]
  %v2251 = vld [vmem:[%s6 + $0x28] sm:$0xff]
  %v2252 = vld [vmem:[%s6 + $0x30] sm:$0xff]
  %v2253 = vld [vmem:[%s6 + $0x38] sm:$0xff]
  %v2262 = vunpack.c.l.b16 %v2246
  %v2263 = vunpack.c.h.b16 %v2246
  %v2264 = vunpack.c.l.b16 %v2247
  %v2265 = vunpack.c.h.b16 %v2247
  %v2266 = vunpack.c.l.b16 %v2248
  %v2267 = vunpack.c.h.b16 %v2248
  %v2268 = vunpack.c.l.b16 %v2249
  %v2269 = vunpack.c.h.b16 %v2249
  %v2270 = vunpack.c.l.b16 %v2250
  %v2271 = vunpack.c.h.b16 %v2250
  %v2272 = vunpack.c.l.b16 %v2251
  %v2273 = vunpack.c.h.b16 %v2251
  %v2274 = vunpack.c.l.b16 %v2252
  %v2275 = vunpack.c.h.b16 %v2252
  %v2276 = vunpack.c.l.b16 %v2253
  %v2277 = vunpack.c.h.b16 %v2253
  %v2278 = vpack.c.b16 %v2264, %v2262
  %v2279 = vpack.c.b16 %v2265, %v2263
  %v2280 = vpack.c.b16 %v2268, %v2266
  %v2281 = vpack.c.b16 %v2269, %v2267
  %v2282 = vpack.c.b16 %v2272, %v2270
  %v2283 = vpack.c.b16 %v2273, %v2271
  %v2284 = vpack.c.b16 %v2276, %v2274
  %v2285 = vpack.c.b16 %v2277, %v2275
  %vm2294 = vcmask 523264
  %v2296 = vsel %vm2294, %v2244, 0
  %v2299 = vsel %vm2294, %v2245, 0
  %2301 = vmatprep.subr.bf16.mxu0 %v2279
  %2302 = vmatpush1.bf16.msra.mxu0 %v2278
  %2303 = vmatprep.subr.bf16.mxu0 %v2281
  %2304 = vmatpush1.bf16.msra.mxu0 %v2280
  %2305 = vmatprep.subr.bf16.mxu0 %v2283
  %2306 = vmatpush1.bf16.msra.mxu0 %v2282
  %2307 = vmatprep.subr.bf16.mxu0 %v2285
  %2308 = vmatpush1.bf16.msra.mxu0 %v2284
  %2309 = vmatprep.subr.bf16.mxu0 0
  %2310 = vmatpush1.bf16.msra.mxu0 0
  %2311 = vmatprep.subr.bf16.mxu0 0
  %2312 = vmatpush1.bf16.msra.mxu0 0
  %2313 = vmatprep.subr.bf16.mxu0 0
  %2314 = vmatpush1.bf16.msra.mxu0 0
  %2315 = vmatprep.subr.bf16.mxu0 0
  %2316 = vmatpush1.bf16.msra.mxu0 0
  %2317 = vmatprep.subr.bf16.mxu0 0
  %2318 = vmatpush1.bf16.msra.mxu0 0
  %2319 = vmatprep.subr.bf16.mxu0 0
  %2320 = vmatpush1.bf16.msra.mxu0 0
  %2321 = vmatprep.subr.bf16.mxu0 0
  %2322 = vmatpush1.bf16.msra.mxu0 0
  %2323 = vmatprep.subr.bf16.mxu0 0
  %2324 = vmatpush1.bf16.msra.mxu0 0
  %2325 = vmatprep.subr.bf16.mxu0 0
  %2326 = vmatpush1.bf16.msra.mxu0 0
  %2327 = vmatprep.subr.bf16.mxu0 0
  %2328 = vmatpush1.bf16.msra.mxu0 0
  %2329 = vmatprep.subr.bf16.mxu0 0
  %2330 = vmatpush1.bf16.msra.mxu0 0
  %2331 = vmatprep.subr.bf16.mxu0 0
  %2332 = vmatpush1.bf16.msra.mxu0 0
  %2333 = vmatprep.mubr.bf16.mxu0 0
  %2334 = vmatmul.mubr.bf16.gmra.mrb[0].mxu0 %v2296
  %v2335 = vpop.f32.mrb[0].mxu0
  %v2336 = vadd.f32 0.0, %v2335
  %v2337 = vpop.f32.mrb[0].mxu0
  %v2338 = vadd.f32 0.0, %v2337
  %v2339 = vpop.f32.mrb[0].mxu0
  %v2340 = vadd.f32 0.0, %v2339
  %v2341 = vpop.f32.mrb[0].mxu0
  %v2342 = vadd.f32 0.0, %v2341
  %2343 = vmatprep.mubr.bf16.mxu0 0
  %2344 = vmatmul.mubr.bf16.gmra.mrb[0].mxu0 %v2299
  %v2345 = vpop.f32.mrb[0].mxu0
  %v2346 = vadd.f32 0.0, %v2345
  %v2347 = vpop.f32.mrb[0].mxu0
  %v2348 = vadd.f32 0.0, %v2347
  %v2349 = vpop.f32.mrb[0].mxu0
  %v2350 = vadd.f32 0.0, %v2349
  %v2351 = vpop.f32.mrb[0].mxu0
  %v2352 = vadd.f32 0.0, %v2351
  %2353 = vdwg.mxu0
  %s2354 = scalar_lea.vmem %s6, 64
  %v2355 = vld [vmem:[%s2354] sm:$0xff]
  %v2356 = vld [vmem:[%s2354 + $0x8] sm:$0xff]
  %v2357 = vld [vmem:[%s2354 + $0x10] sm:$0xff]
  %v2358 = vld [vmem:[%s2354 + $0x18] sm:$0xff]
  %v2359 = vld [vmem:[%s2354 + $0x20] sm:$0xff]
  %v2360 = vld [vmem:[%s2354 + $0x28] sm:$0xff]
  %v2361 = vld [vmem:[%s2354 + $0x30] sm:$0xff]
  %v2362 = vld [vmem:[%s2354 + $0x38] sm:$0xff]
  %s2363 = scalar_lea.vmem %s6, 128
  %v2364 = vld [vmem:[%s2363] sm:$0xff]
  %v2365 = vld [vmem:[%s2363 + $0x8] sm:$0xff]
  %v2366 = vld [vmem:[%s2363 + $0x10] sm:$0xff]
  %v2367 = vld [vmem:[%s2363 + $0x18] sm:$0xff]
  %v2368 = vld [vmem:[%s2363 + $0x20] sm:$0xff]
  %v2369 = vld [vmem:[%s2363 + $0x28] sm:$0xff]
  %v2370 = vld [vmem:[%s2363 + $0x30] sm:$0xff]
  %v2371 = vld [vmem:[%s2363 + $0x38] sm:$0xff]
  %v2380 = vunpack.c.l.b16 %v2364
  %v2381 = vunpack.c.h.b16 %v2364
  %v2382 = vunpack.c.l.b16 %v2365
  %v2383 = vunpack.c.h.b16 %v2365
  %v2384 = vunpack.c.l.b16 %v2366
  %v2385 = vunpack.c.h.b16 %v2366
  %v2386 = vunpack.c.l.b16 %v2367
  %v2387 = vunpack.c.h.b16 %v2367
  %v2388 = vunpack.c.l.b16 %v2368
  %v2389 = vunpack.c.h.b16 %v2368
  %v2390 = vunpack.c.l.b16 %v2369
  %v2391 = vunpack.c.h.b16 %v2369
  %v2392 = vunpack.c.l.b16 %v2370
  %v2393 = vunpack.c.h.b16 %v2370
  %v2394 = vunpack.c.l.b16 %v2371
  %v2395 = vunpack.c.h.b16 %v2371
  %v2396 = vpack.c.b16 %v2382, %v2380
  %v2397 = vpack.c.b16 %v2383, %v2381
  %v2398 = vpack.c.b16 %v2386, %v2384
  %v2399 = vpack.c.b16 %v2387, %v2385
  %v2400 = vpack.c.b16 %v2390, %v2388
  %v2401 = vpack.c.b16 %v2391, %v2389
  %v2402 = vpack.c.b16 %v2394, %v2392
  %v2403 = vpack.c.b16 %v2395, %v2393
  %2412 = vmatprep.subr.bf16.mxu0 %v2397
  %2413 = vmatpush1.bf16.msra.mxu0 %v2396
  %2414 = vmatprep.subr.bf16.mxu0 %v2399
  %2415 = vmatpush1.bf16.msra.mxu0 %v2398
  %2416 = vmatprep.subr.bf16.mxu0 %v2401
  %2417 = vmatpush1.bf16.msra.mxu0 %v2400
  %2418 = vmatprep.subr.bf16.mxu0 %v2403
  %2419 = vmatpush1.bf16.msra.mxu0 %v2402
  %2420 = vmatprep.subr.bf16.mxu0 0
  %2421 = vmatpush1.bf16.msra.mxu0 0
  %2422 = vmatprep.subr.bf16.mxu0 0
  %2423 = vmatpush1.bf16.msra.mxu0 0
  %2424 = vmatprep.subr.bf16.mxu0 0
  %2425 = vmatpush1.bf16.msra.mxu0 0
  %2426 = vmatprep.subr.bf16.mxu0 0
  %2427 = vmatpush1.bf16.msra.mxu0 0
  %2428 = vmatprep.subr.bf16.mxu0 0
  %2429 = vmatpush1.bf16.msra.mxu0 0
  %2430 = vmatprep.subr.bf16.mxu0 0
  %2431 = vmatpush1.bf16.msra.mxu0 0
  %2432 = vmatprep.subr.bf16.mxu0 0
  %2433 = vmatpush1.bf16.msra.mxu0 0
  %2434 = vmatprep.subr.bf16.mxu0 0
  %2435 = vmatpush1.bf16.msra.mxu0 0
  %2436 = vmatprep.subr.bf16.mxu0 0
  %2437 = vmatpush1.bf16.msra.mxu0 0
  %2438 = vmatprep.subr.bf16.mxu0 0
  %2439 = vmatpush1.bf16.msra.mxu0 0
  %2440 = vmatprep.subr.bf16.mxu0 0
  %2441 = vmatpush1.bf16.msra.mxu0 0
  %2442 = vmatprep.subr.bf16.mxu0 0
  %2443 = vmatpush1.bf16.msra.mxu0 0
  %2444 = vmatprep.mubr.bf16.mxu0 0
  %2445 = vmatmul.mubr.bf16.gmra.mrb[0].mxu0 %v2296
  %v2446 = vpop.f32.mrb[0].mxu0
  %v2447 = vadd.f32 0.0, %v2446
  %v2448 = vpop.f32.mrb[0].mxu0
  %v2449 = vadd.f32 0.0, %v2448
  %v2450 = vpop.f32.mrb[0].mxu0
  %v2451 = vadd.f32 0.0, %v2450
  %v2452 = vpop.f32.mrb[0].mxu0
  %v2453 = vadd.f32 0.0, %v2452
  %2454 = vmatprep.mubr.bf16.mxu0 0
  %2455 = vmatmul.mubr.bf16.gmra.mrb[0].mxu0 %v2299
  %v2456 = vpop.f32.mrb[0].mxu0
  %v2457 = vadd.f32 0.0, %v2456
  %v2458 = vpop.f32.mrb[0].mxu0
  %v2459 = vadd.f32 0.0, %v2458
  %v2460 = vpop.f32.mrb[0].mxu0
  %v2461 = vadd.f32 0.0, %v2460
  %v2462 = vpop.f32.mrb[0].mxu0
  %v2463 = vadd.f32 0.0, %v2462
  %2464 = vdwg.mxu0
  %2465 = vmatprep.subr.mxu0 %v2338
  %2466 = vmatpush1.msra.mxu0 %v2336
  %2467 = vmatprep.subr.mxu0 %v2342
  %2468 = vmatpush1.msra.mxu0 %v2340
  %2469 = vmatprep.subr.mxu0 %v2348
  %2470 = vmatpush1.msra.mxu0 %v2346
  %2471 = vmatprep.subr.mxu0 %v2352
  %2472 = vmatpush1.msra.mxu0 %v2350
  %2473 = vmatprep.subr.mxu0 0.0
  %2474 = vmatpush1.msra.mxu0 0.0
  %2475 = vmatprep.subr.mxu0 0.0
  %2476 = vmatpush1.msra.mxu0 0.0
  %2477 = vmatprep.subr.mxu0 0.0
  %2478 = vmatpush1.msra.mxu0 0.0
  %2479 = vmatprep.subr.mxu0 0.0
  %2480 = vmatpush1.msra.mxu0 0.0
  %2481 = vmatprep.subr.mxu0 0.0
  %2482 = vmatpush1.msra.mxu0 0.0
  %2483 = vmatprep.subr.mxu0 0.0
  %2484 = vmatpush1.msra.mxu0 0.0
  %2485 = vmatprep.subr.mxu0 0.0
  %2486 = vmatpush1.msra.mxu0 0.0
  %2487 = vmatprep.subr.mxu0 0.0
  %2488 = vmatpush1.msra.mxu0 0.0
  %2489 = vmatprep.subr.mxu0 0.0
  %2490 = vmatpush1.msra.mxu0 0.0
  %2491 = vmatprep.subr.mxu0 0.0
  %2492 = vmatpush1.msra.mxu0 0.0
  %2493 = vmatprep.subr.mxu0 0.0
  %2494 = vmatpush1.msra.mxu0 0.0
  %2495 = vmatprep.subr.mxu0 0.0
  %2496 = vmatpush1.msra.mxu0 0.0
  %2497 = vmatprep.subr.mxu0 0.0
  %2498 = vmatpush1.msra.mxu0 0.0
  %2499 = vmatprep.subr.mxu0 0.0
  %2500 = vmatpush1.msra.mxu0 0.0
  %2501 = vmatprep.subr.mxu0 0.0
  %2502 = vmatpush1.msra.mxu0 0.0
  %2503 = vmatprep.subr.mxu0 0.0
  %2504 = vmatpush1.msra.mxu0 0.0
  %2505 = vmatprep.subr.mxu0 0.0
  %2506 = vmatpush1.msra.mxu0 0.0
  %2507 = vmatprep.subr.mxu0 0.0
  %2508 = vmatpush1.msra.mxu0 0.0
  %2509 = vmatprep.subr.mxu0 0.0
  %2510 = vmatpush1.msra.mxu0 0.0
  %2511 = vmatprep.subr.mxu0 0.0
  %2512 = vmatpush1.msra.mxu0 0.0
  %2513 = vmatprep.subr.mxu0 0.0
  %2514 = vmatpush1.msra.mxu0 0.0
  %2515 = vmatprep.subr.mxu0 0.0
  %2516 = vmatpush1.msra.mxu0 0.0
  %2517 = vmatprep.subr.mxu0 0.0
  %2518 = vmatpush1.msra.mxu0 0.0
  %2519 = vmatprep.subr.mxu0 0.0
  %2520 = vmatpush1.msra.mxu0 0.0
  %2521 = vmatprep.subr.mxu0 0.0
  %2522 = vmatpush1.msra.mxu0 0.0
  %2523 = vmatprep.subr.mxu0 0.0
  %2524 = vmatpush1.msra.mxu0 0.0
  %2525 = vmatprep.subr.mxu0 0.0
  %2526 = vmatpush1.msra.mxu0 0.0
  %2527 = vmatprep.subr.mxu0 0.0
  %2528 = vmatpush1.msra.mxu0 0.0
  %2529 = vmatprep.mubr.f32.mxu0 0.0
  %2530 = vmatmul.mubr.f32.gmra.mrb[0].mxu0 %v1977
  %v2531 = vpop.f32.mrb[0].mxu0
  %v2532 = vadd.f32 0.0, %v2531
  %v2533 = vpop.f32.mrb[0].mxu0
  %v2534 = vadd.f32 0.0, %v2533
  %2535 = vmatprep.mubr.f32.mxu0 0.0
  %2536 = vmatmul.mubr.f32.gmra.mrb[0].mxu0 %v1980
  %v2537 = vpop.f32.mrb[0].mxu0
  %v2538 = vadd.f32 0.0, %v2537
  %v2539 = vpop.f32.mrb[0].mxu0
  %v2540 = vadd.f32 0.0, %v2539
  %2541 = vmatprep.mubr.f32.mxu0 0.0
  %2542 = vmatmul.mubr.f32.gmra.mrb[0].mxu0 %v1983
  %v2543 = vpop.f32.mrb[0].mxu0
  %v2544 = vadd.f32 0.0, %v2543
  %v2545 = vpop.f32.mrb[0].mxu0
  %v2546 = vadd.f32 0.0, %v2545
  %2547 = vmatprep.mubr.f32.mxu0 0.0
  %2548 = vmatmul.mubr.f32.gmra.mrb[0].mxu0 %v1986
  %v2549 = vpop.f32.mrb[0].mxu0
  %v2550 = vadd.f32 0.0, %v2549
  %v2551 = vpop.f32.mrb[0].mxu0
  %v2552 = vadd.f32 0.0, %v2551
  %2553 = vdwg.mxu0
  %v2562 = vunpack.c.l.b16 %v2355
  %v2563 = vunpack.c.h.b16 %v2355
  %v2564 = vunpack.c.l.b16 %v2356
  %v2565 = vunpack.c.h.b16 %v2356
  %v2566 = vunpack.c.l.b16 %v2357
  %v2567 = vunpack.c.h.b16 %v2357
  %v2568 = vunpack.c.l.b16 %v2358
  %v2569 = vunpack.c.h.b16 %v2358
  %v2570 = vunpack.c.l.b16 %v2359
  %v2571 = vunpack.c.h.b16 %v2359
  %v2572 = vunpack.c.l.b16 %v2360
  %v2573 = vunpack.c.h.b16 %v2360
  %v2574 = vunpack.c.l.b16 %v2361
  %v2575 = vunpack.c.h.b16 %v2361
  %v2576 = vunpack.c.l.b16 %v2362
  %v2577 = vunpack.c.h.b16 %v2362
  %v2578 = vpack.c.b16 %v2564, %v2562
  %v2579 = vpack.c.b16 %v2565, %v2563
  %v2580 = vpack.c.b16 %v2568, %v2566
  %v2581 = vpack.c.b16 %v2569, %v2567
  %v2582 = vpack.c.b16 %v2572, %v2570
  %v2583 = vpack.c.b16 %v2573, %v2571
  %v2584 = vpack.c.b16 %v2576, %v2574
  %v2585 = vpack.c.b16 %v2577, %v2575
  %2594 = vmatprep.subr.bf16.mxu0 %v2579
  %2595 = vmatpush1.bf16.msra.mxu0 %v2578
  %2596 = vmatprep.subr.bf16.mxu0 %v2581
  %2597 = vmatpush1.bf16.msra.mxu0 %v2580
  %2598 = vmatprep.subr.bf16.mxu0 %v2583
  %2599 = vmatpush1.bf16.msra.mxu0 %v2582
  %2600 = vmatprep.subr.bf16.mxu0 %v2585
  %2601 = vmatpush1.bf16.msra.mxu0 %v2584
  %2602 = vmatprep.subr.bf16.mxu0 0
  %2603 = vmatpush1.bf16.msra.mxu0 0
  %2604 = vmatprep.subr.bf16.mxu0 0
  %2605 = vmatpush1.bf16.msra.mxu0 0
  %2606 = vmatprep.subr.bf16.mxu0 0
  %2607 = vmatpush1.bf16.msra.mxu0 0
  %2608 = vmatprep.subr.bf16.mxu0 0
  %2609 = vmatpush1.bf16.msra.mxu0 0
  %2610 = vmatprep.subr.bf16.mxu0 0
  %2611 = vmatpush1.bf16.msra.mxu0 0
  %2612 = vmatprep.subr.bf16.mxu0 0
  %2613 = vmatpush1.bf16.msra.mxu0 0
  %2614 = vmatprep.subr.bf16.mxu0 0
  %2615 = vmatpush1.bf16.msra.mxu0 0
  %2616 = vmatprep.subr.bf16.mxu0 0
  %2617 = vmatpush1.bf16.msra.mxu0 0
  %2618 = vmatprep.subr.bf16.mxu0 0
  %2619 = vmatpush1.bf16.msra.mxu0 0
  %2620 = vmatprep.subr.bf16.mxu0 0
  %2621 = vmatpush1.bf16.msra.mxu0 0
  %2622 = vmatprep.subr.bf16.mxu0 0
  %2623 = vmatpush1.bf16.msra.mxu0 0
  %2624 = vmatprep.subr.bf16.mxu0 0
  %2625 = vmatpush1.bf16.msra.mxu0 0
  %2626 = vmatprep.mubr.bf16.mxu0 0
  %2627 = vmatmul.mubr.bf16.gmra.mrb[0].mxu0 %v2296
  %v2628 = vpop.f32.mrb[0].mxu0
  %v2629 = vadd.f32 %v2532, %v2628
  %v2630 = vpop.f32.mrb[0].mxu0
  %v2631 = vadd.f32 %v2534, %v2630
  %v2632 = vpop.f32.mrb[0].mxu0
  %v2633 = vadd.f32 %v2538, %v2632
  %v2634 = vpop.f32.mrb[0].mxu0
  %v2635 = vadd.f32 %v2540, %v2634
  %2636 = vmatprep.mubr.bf16.mxu0 0
  %2637 = vmatmul.mubr.bf16.gmra.mrb[0].mxu0 %v2299
  %v2638 = vpop.f32.mrb[0].mxu0
  %v2639 = vadd.f32 %v2544, %v2638
  %v2640 = vpop.f32.mrb[0].mxu0
  %v2641 = vadd.f32 %v2546, %v2640
  %v2642 = vpop.f32.mrb[0].mxu0
  %v2643 = vadd.f32 %v2550, %v2642
  %v2644 = vpop.f32.mrb[0].mxu0
  %v2645 = vadd.f32 %v2552, %v2644
  %2646 = vdwg.mxu0
  %2647 = vmatprep.subr.mxu0 %v2449
  %2648 = vmatpush1.msra.mxu0 %v2447
  %2649 = vmatprep.subr.mxu0 %v2453
  %2650 = vmatpush1.msra.mxu0 %v2451
  %2651 = vmatprep.subr.mxu0 %v2459
  %2652 = vmatpush1.msra.mxu0 %v2457
  %2653 = vmatprep.subr.mxu0 %v2463
  %2654 = vmatpush1.msra.mxu0 %v2461
  %2655 = vmatprep.subr.mxu0 0.0
  %2656 = vmatpush1.msra.mxu0 0.0
  %2657 = vmatprep.subr.mxu0 0.0
  %2658 = vmatpush1.msra.mxu0 0.0
  %2659 = vmatprep.subr.mxu0 0.0
  %2660 = vmatpush1.msra.mxu0 0.0
  %2661 = vmatprep.subr.mxu0 0.0
  %2662 = vmatpush1.msra.mxu0 0.0
  %2663 = vmatprep.subr.mxu0 0.0
  %2664 = vmatpush1.msra.mxu0 0.0
  %2665 = vmatprep.subr.mxu0 0.0
  %2666 = vmatpush1.msra.mxu0 0.0
  %2667 = vmatprep.subr.mxu0 0.0
  %2668 = vmatpush1.msra.mxu0 0.0
  %2669 = vmatprep.subr.mxu0 0.0
  %2670 = vmatpush1.msra.mxu0 0.0
  %2671 = vmatprep.subr.mxu0 0.0
  %2672 = vmatpush1.msra.mxu0 0.0
  %2673 = vmatprep.subr.mxu0 0.0
  %2674 = vmatpush1.msra.mxu0 0.0
  %2675 = vmatprep.subr.mxu0 0.0
  %2676 = vmatpush1.msra.mxu0 0.0
  %2677 = vmatprep.subr.mxu0 0.0
  %2678 = vmatpush1.msra.mxu0 0.0
  %2679 = vmatprep.subr.mxu0 0.0
  %2680 = vmatpush1.msra.mxu0 0.0
  %2681 = vmatprep.subr.mxu0 0.0
  %2682 = vmatpush1.msra.mxu0 0.0
  %2683 = vmatprep.subr.mxu0 0.0
  %2684 = vmatpush1.msra.mxu0 0.0
  %2685 = vmatprep.subr.mxu0 0.0
  %2686 = vmatpush1.msra.mxu0 0.0
  %2687 = vmatprep.subr.mxu0 0.0
  %2688 = vmatpush1.msra.mxu0 0.0
  %2689 = vmatprep.subr.mxu0 0.0
  %2690 = vmatpush1.msra.mxu0 0.0
  %2691 = vmatprep.subr.mxu0 0.0
  %2692 = vmatpush1.msra.mxu0 0.0
  %2693 = vmatprep.subr.mxu0 0.0
  %2694 = vmatpush1.msra.mxu0 0.0
  %2695 = vmatprep.subr.mxu0 0.0
  %2696 = vmatpush1.msra.mxu0 0.0
  %2697 = vmatprep.subr.mxu0 0.0
  %2698 = vmatpush1.msra.mxu0 0.0
  %2699 = vmatprep.subr.mxu0 0.0
  %2700 = vmatpush1.msra.mxu0 0.0
  %2701 = vmatprep.subr.mxu0 0.0
  %2702 = vmatpush1.msra.mxu0 0.0
  %2703 = vmatprep.subr.mxu0 0.0
  %2704 = vmatpush1.msra.mxu0 0.0
  %2705 = vmatprep.subr.mxu0 0.0
  %2706 = vmatpush1.msra.mxu0 0.0
  %2707 = vmatprep.subr.mxu0 0.0
  %2708 = vmatpush1.msra.mxu0 0.0
  %2709 = vmatprep.subr.mxu0 0.0
  %2710 = vmatpush1.msra.mxu0 0.0
  %2711 = vmatprep.mubr.f32.mxu0 0.0
  %2712 = vmatmul.mubr.f32.gmra.mrb[0].mxu0 %v2129
  %v2713 = vpop.f32.mrb[0].mxu0
  %v2714 = vadd.f32 0.0, %v2713
  %v2715 = vpop.f32.mrb[0].mxu0
  %v2716 = vadd.f32 0.0, %v2715
  %2717 = vmatprep.mubr.f32.mxu0 0.0
  %2718 = vmatmul.mubr.f32.gmra.mrb[0].mxu0 %v2132
  %v2719 = vpop.f32.mrb[0].mxu0
  %v2720 = vadd.f32 0.0, %v2719
  %v2721 = vpop.f32.mrb[0].mxu0
  %v2722 = vadd.f32 0.0, %v2721
  %2723 = vmatprep.mubr.f32.mxu0 0.0
  %2724 = vmatmul.mubr.f32.gmra.mrb[0].mxu0 %v2135
  %v2725 = vpop.f32.mrb[0].mxu0
  %v2726 = vadd.f32 0.0, %v2725
  %v2727 = vpop.f32.mrb[0].mxu0
  %v2728 = vadd.f32 0.0, %v2727
  %2729 = vmatprep.mubr.f32.mxu0 0.0
  %2730 = vmatmul.mubr.f32.gmra.mrb[0].mxu0 %v2138
  %v2731 = vpop.f32.mrb[0].mxu0
  %v2732 = vadd.f32 0.0, %v2731
  %v2733 = vpop.f32.mrb[0].mxu0
  %v2734 = vadd.f32 0.0, %v2733
  %2735 = vdwg.mxu0
  %v2736 = vadd.f32 %v2629, %v2714
  %v2737 = vadd.f32 %v2631, %v2716
  %v2738 = vadd.f32 %v2633, %v2720
  %v2739 = vadd.f32 %v2635, %v2722
  %v2740 = vadd.f32 %v2639, %v2726
  %v2741 = vadd.f32 %v2641, %v2728
  %v2742 = vadd.f32 %v2643, %v2732
  %v2743 = vadd.f32 %v2645, %v2734
  %v2744 = vld [vmem:[%s7] sm:$0x3]
  %v2746 = vlaneseq
  %v2747 = vshrl.u32 %v2746, 7
  %v2748 = vsub.s32 0, %v2747
  %v2749 = vrot.slane %v2744, %v2748
  %v2750 = vlaneseq
  %v2751 = vshrl.u32 %v2750, 7
  %v2752 = vsub.s32 1, %v2751
  %v2753 = vrot.slane %v2744, %v2752
  %v2756 = vadd.f32 %v2736, %v2749
  %v2757 = vadd.f32 %v2737, %v2753
  %v2758 = vadd.f32 %v2738, %v2749
  %v2759 = vadd.f32 %v2739, %v2753
  %v2760 = vadd.f32 %v2740, %v2749
  %v2761 = vadd.f32 %v2741, %v2753
  %v2762 = vadd.f32 %v2742, %v2749
  %v2763 = vadd.f32 %v2743, %v2753
  %v2764 = vmax.f32 %v2756, 0.0
  %v2765 = vmax.f32 %v2757, 0.0
  %v2766 = vmax.f32 %v2758, 0.0
  %v2767 = vmax.f32 %v2759, 0.0
  %v2768 = vmax.f32 %v2760, 0.0
  %v2769 = vmax.f32 %v2761, 0.0
  %v2770 = vmax.f32 %v2762, 0.0
  %v2771 = vmax.f32 %v2763, 0.0
  %v2772 = vpack.c.bf16 %v2766, %v2764
  %v2773 = vpack.c.bf16 %v2767, %v2765
  %v2774 = vpack.c.bf16 %v2770, %v2768
  %v2775 = vpack.c.bf16 %v2771, %v2769
  %v2776 = vld [vmem:[%s8] sm:$0xff]
  %v2777 = vld [vmem:[%s8 + $0x8] sm:$0xff]
  %v2778 = vld [vmem:[%s8 + $0x10] sm:$0xff]
  %v2779 = vld [vmem:[%s8 + $0x18] sm:$0xff]
  %v2780 = vld [vmem:[%s8 + $0x20] sm:$0xff]
  %v2781 = vld [vmem:[%s8 + $0x28] sm:$0xff]
  %v2782 = vld [vmem:[%s8 + $0x30] sm:$0xff]
  %v2783 = vld [vmem:[%s8 + $0x38] sm:$0xff]
  %v2784 = vld [vmem:[%s8 + $0x40] sm:$0xff]
  %v2785 = vld [vmem:[%s8 + $0x48] sm:$0xff]
  %v2786 = vld [vmem:[%s8 + $0x50] sm:$0xff]
  %v2787 = vld [vmem:[%s8 + $0x58] sm:$0xff]
  %v2788 = vld [vmem:[%s8 + $0x60] sm:$0xff]
  %v2789 = vld [vmem:[%s8 + $0x68] sm:$0xff]
  %v2790 = vld [vmem:[%s8 + $0x70] sm:$0xff]
  %v2791 = vld [vmem:[%s8 + $0x78] sm:$0xff]
  %v2792 = vld [vmem:[%s8 + $0x80] sm:$0xff]
  %v2793 = vld [vmem:[%s8 + $0x88] sm:$0xff]
  %v2794 = vld [vmem:[%s8 + $0x90] sm:$0xff]
  %v2795 = vld [vmem:[%s8 + $0x98] sm:$0xff]
  %v2796 = vld [vmem:[%s8 + $0xa0] sm:$0xff]
  %v2797 = vld [vmem:[%s8 + $0xa8] sm:$0xff]
  %v2798 = vld [vmem:[%s8 + $0xb0] sm:$0xff]
  %v2799 = vld [vmem:[%s8 + $0xb8] sm:$0xff]
  %v2800 = vld [vmem:[%s8 + $0xc0] sm:$0xff]
  %v2801 = vld [vmem:[%s8 + $0xc8] sm:$0xff]
  %v2802 = vld [vmem:[%s8 + $0xd0] sm:$0xff]
  %v2803 = vld [vmem:[%s8 + $0xd8] sm:$0xff]
  %v2804 = vld [vmem:[%s8 + $0xe0] sm:$0xff]
  %v2805 = vld [vmem:[%s8 + $0xe8] sm:$0xff]
  %v2806 = vld [vmem:[%s8 + $0xf0] sm:$0xff]
  %v2807 = vld [vmem:[%s8 + $0xf8] sm:$0xff]
  %v2808 = vld [vmem:[%s8 + $0x100] sm:$0xff]
  %v2809 = vld [vmem:[%s8 + $0x108] sm:$0xff]
  %v2810 = vld [vmem:[%s8 + $0x110] sm:$0xff]
  %v2811 = vld [vmem:[%s8 + $0x118] sm:$0xff]
  %v2812 = vld [vmem:[%s8 + $0x120] sm:$0xff]
  %v2813 = vld [vmem:[%s8 + $0x128] sm:$0xff]
  %v2814 = vld [vmem:[%s8 + $0x130] sm:$0xff]
  %v2815 = vld [vmem:[%s8 + $0x138] sm:$0xff]
  %v2816 = vld [vmem:[%s8 + $0x140] sm:$0xff]
  %v2817 = vld [vmem:[%s8 + $0x148] sm:$0xff]
  %v2818 = vld [vmem:[%s8 + $0x150] sm:$0xff]
  %v2819 = vld [vmem:[%s8 + $0x158] sm:$0xff]
  %v2820 = vld [vmem:[%s8 + $0x160] sm:$0xff]
  %v2821 = vld [vmem:[%s8 + $0x168] sm:$0xff]
  %v2822 = vld [vmem:[%s8 + $0x170] sm:$0xff]
  %v2823 = vld [vmem:[%s8 + $0x178] sm:$0xff]
  %v2824 = vld [vmem:[%s8 + $0x180] sm:$0xff]
  %v2825 = vld [vmem:[%s8 + $0x188] sm:$0xff]
  %v2826 = vld [vmem:[%s8 + $0x190] sm:$0xff]
  %v2827 = vld [vmem:[%s8 + $0x198] sm:$0xff]
  %v2828 = vld [vmem:[%s8 + $0x1a0] sm:$0xff]
  %v2829 = vld [vmem:[%s8 + $0x1a8] sm:$0xff]
  %v2830 = vld [vmem:[%s8 + $0x1b0] sm:$0xff]
  %v2831 = vld [vmem:[%s8 + $0x1b8] sm:$0xff]
  %v2832 = vld [vmem:[%s8 + $0x1c0] sm:$0xff]
  %v2833 = vld [vmem:[%s8 + $0x1c8] sm:$0xff]
  %v2834 = vld [vmem:[%s8 + $0x1d0] sm:$0xff]
  %v2835 = vld [vmem:[%s8 + $0x1d8] sm:$0xff]
  %v2836 = vld [vmem:[%s8 + $0x1e0] sm:$0xff]
  %v2837 = vld [vmem:[%s8 + $0x1e8] sm:$0xff]
  %v2838 = vld [vmem:[%s8 + $0x1f0] sm:$0xff]
  %v2839 = vld [vmem:[%s8 + $0x1f8] sm:$0xff]
  %v2904 = vunpack.c.l.b16 %v2776
  %v2905 = vunpack.c.h.b16 %v2776
  %v2906 = vunpack.c.l.b16 %v2777
  %v2907 = vunpack.c.h.b16 %v2777
  %v2908 = vunpack.c.l.b16 %v2778
  %v2909 = vunpack.c.h.b16 %v2778
  %v2910 = vunpack.c.l.b16 %v2779
  %v2911 = vunpack.c.h.b16 %v2779
  %v2912 = vunpack.c.l.b16 %v2780
  %v2913 = vunpack.c.h.b16 %v2780
  %v2914 = vunpack.c.l.b16 %v2781
  %v2915 = vunpack.c.h.b16 %v2781
  %v2916 = vunpack.c.l.b16 %v2782
  %v2917 = vunpack.c.h.b16 %v2782
  %v2918 = vunpack.c.l.b16 %v2783
  %v2919 = vunpack.c.h.b16 %v2783
  %v2920 = vunpack.c.l.b16 %v2784
  %v2921 = vunpack.c.h.b16 %v2784
  %v2922 = vunpack.c.l.b16 %v2785
  %v2923 = vunpack.c.h.b16 %v2785
  %v2924 = vunpack.c.l.b16 %v2786
  %v2925 = vunpack.c.h.b16 %v2786
  %v2926 = vunpack.c.l.b16 %v2787
  %v2927 = vunpack.c.h.b16 %v2787
  %v2928 = vunpack.c.l.b16 %v2788
  %v2929 = vunpack.c.h.b16 %v2788
  %v2930 = vunpack.c.l.b16 %v2789
  %v2931 = vunpack.c.h.b16 %v2789
  %v2932 = vunpack.c.l.b16 %v2790
  %v2933 = vunpack.c.h.b16 %v2790
  %v2934 = vunpack.c.l.b16 %v2791
  %v2935 = vunpack.c.h.b16 %v2791
  %v2936 = vunpack.c.l.b16 %v2792
  %v2937 = vunpack.c.h.b16 %v2792
  %v2938 = vunpack.c.l.b16 %v2793
  %v2939 = vunpack.c.h.b16 %v2793
  %v2940 = vunpack.c.l.b16 %v2794
  %v2941 = vunpack.c.h.b16 %v2794
  %v2942 = vunpack.c.l.b16 %v2795
  %v2943 = vunpack.c.h.b16 %v2795
  %v2944 = vunpack.c.l.b16 %v2796
  %v2945 = vunpack.c.h.b16 %v2796
  %v2946 = vunpack.c.l.b16 %v2797
  %v2947 = vunpack.c.h.b16 %v2797
  %v2948 = vunpack.c.l.b16 %v2798
  %v2949 = vunpack.c.h.b16 %v2798
  %v2950 = vunpack.c.l.b16 %v2799
  %v2951 = vunpack.c.h.b16 %v2799
  %v2952 = vunpack.c.l.b16 %v2800
  %v2953 = vunpack.c.h.b16 %v2800
  %v2954 = vunpack.c.l.b16 %v2801
  %v2955 = vunpack.c.h.b16 %v2801
  %v2956 = vunpack.c.l.b16 %v2802
  %v2957 = vunpack.c.h.b16 %v2802
  %v2958 = vunpack.c.l.b16 %v2803
  %v2959 = vunpack.c.h.b16 %v2803
  %v2960 = vunpack.c.l.b16 %v2804
  %v2961 = vunpack.c.h.b16 %v2804
  %v2962 = vunpack.c.l.b16 %v2805
  %v2963 = vunpack.c.h.b16 %v2805
  %v2964 = vunpack.c.l.b16 %v2806
  %v2965 = vunpack.c.h.b16 %v2806
  %v2966 = vunpack.c.l.b16 %v2807
  %v2967 = vunpack.c.h.b16 %v2807
  %v2968 = vunpack.c.l.b16 %v2808
  %v2969 = vunpack.c.h.b16 %v2808
  %v2970 = vunpack.c.l.b16 %v2809
  %v2971 = vunpack.c.h.b16 %v2809
  %v2972 = vunpack.c.l.b16 %v2810
  %v2973 = vunpack.c.h.b16 %v2810
  %v2974 = vunpack.c.l.b16 %v2811
  %v2975 = vunpack.c.h.b16 %v2811
  %v2976 = vunpack.c.l.b16 %v2812
  %v2977 = vunpack.c.h.b16 %v2812
  %v2978 = vunpack.c.l.b16 %v2813
  %v2979 = vunpack.c.h.b16 %v2813
  %v2980 = vunpack.c.l.b16 %v2814
  %v2981 = vunpack.c.h.b16 %v2814
  %v2982 = vunpack.c.l.b16 %v2815
  %v2983 = vunpack.c.h.b16 %v2815
  %v2984 = vunpack.c.l.b16 %v2816
  %v2985 = vunpack.c.h.b16 %v2816
  %v2986 = vunpack.c.l.b16 %v2817
  %v2987 = vunpack.c.h.b16 %v2817
  %v2988 = vunpack.c.l.b16 %v2818
  %v2989 = vunpack.c.h.b16 %v2818
  %v2990 = vunpack.c.l.b16 %v2819
  %v2991 = vunpack.c.h.b16 %v2819
  %v2992 = vunpack.c.l.b16 %v2820
  %v2993 = vunpack.c.h.b16 %v2820
  %v2994 = vunpack.c.l.b16 %v2821
  %v2995 = vunpack.c.h.b16 %v2821
  %v2996 = vunpack.c.l.b16 %v2822
  %v2997 = vunpack.c.h.b16 %v2822
  %v2998 = vunpack.c.l.b16 %v2823
  %v2999 = vunpack.c.h.b16 %v2823
  %v3000 = vunpack.c.l.b16 %v2824
  %v3001 = vunpack.c.h.b16 %v2824
  %v3002 = vunpack.c.l.b16 %v2825
  %v3003 = vunpack.c.h.b16 %v2825
  %v3004 = vunpack.c.l.b16 %v2826
  %v3005 = vunpack.c.h.b16 %v2826
  %v3006 = vunpack.c.l.b16 %v2827
  %v3007 = vunpack.c.h.b16 %v2827
  %v3008 = vunpack.c.l.b16 %v2828
  %v3009 = vunpack.c.h.b16 %v2828
  %v3010 = vunpack.c.l.b16 %v2829
  %v3011 = vunpack.c.h.b16 %v2829
  %v3012 = vunpack.c.l.b16 %v2830
  %v3013 = vunpack.c.h.b16 %v2830
  %v3014 = vunpack.c.l.b16 %v2831
  %v3015 = vunpack.c.h.b16 %v2831
  %v3016 = vunpack.c.l.b16 %v2832
  %v3017 = vunpack.c.h.b16 %v2832
  %v3018 = vunpack.c.l.b16 %v2833
  %v3019 = vunpack.c.h.b16 %v2833
  %v3020 = vunpack.c.l.b16 %v2834
  %v3021 = vunpack.c.h.b16 %v2834
  %v3022 = vunpack.c.l.b16 %v2835
  %v3023 = vunpack.c.h.b16 %v2835
  %v3024 = vunpack.c.l.b16 %v2836
  %v3025 = vunpack.c.h.b16 %v2836
  %v3026 = vunpack.c.l.b16 %v2837
  %v3027 = vunpack.c.h.b16 %v2837
  %v3028 = vunpack.c.l.b16 %v2838
  %v3029 = vunpack.c.h.b16 %v2838
  %v3030 = vunpack.c.l.b16 %v2839
  %v3031 = vunpack.c.h.b16 %v2839
  %v3032 = vpack.c.b16 %v2908, %v2904
  %v3033 = vpack.c.b16 %v2909, %v2905
  %v3034 = vpack.c.b16 %v2910, %v2906
  %v3035 = vpack.c.b16 %v2911, %v2907
  %v3036 = vpack.c.b16 %v2916, %v2912
  %v3037 = vpack.c.b16 %v2917, %v2913
  %v3038 = vpack.c.b16 %v2918, %v2914
  %v3039 = vpack.c.b16 %v2919, %v2915
  %v3040 = vpack.c.b16 %v2924, %v2920
  %v3041 = vpack.c.b16 %v2925, %v2921
  %v3042 = vpack.c.b16 %v2926, %v2922
  %v3043 = vpack.c.b16 %v2927, %v2923
  %v3044 = vpack.c.b16 %v2932, %v2928
  %v3045 = vpack.c.b16 %v2933, %v2929
  %v3046 = vpack.c.b16 %v2934, %v2930
  %v3047 = vpack.c.b16 %v2935, %v2931
  %v3048 = vpack.c.b16 %v2940, %v2936
  %v3049 = vpack.c.b16 %v2941, %v2937
  %v3050 = vpack.c.b16 %v2942, %v2938
  %v3051 = vpack.c.b16 %v2943, %v2939
  %v3052 = vpack.c.b16 %v2948, %v2944
  %v3053 = vpack.c.b16 %v2949, %v2945
  %v3054 = vpack.c.b16 %v2950, %v2946
  %v3055 = vpack.c.b16 %v2951, %v2947
  %v3056 = vpack.c.b16 %v2956, %v2952
  %v3057 = vpack.c.b16 %v2957, %v2953
  %v3058 = vpack.c.b16 %v2958, %v2954
  %v3059 = vpack.c.b16 %v2959, %v2955
  %v3060 = vpack.c.b16 %v2964, %v2960
  %v3061 = vpack.c.b16 %v2965, %v2961
  %v3062 = vpack.c.b16 %v2966, %v2962
  %v3063 = vpack.c.b16 %v2967, %v2963
  %v3064 = vpack.c.b16 %v2972, %v2968
  %v3065 = vpack.c.b16 %v2973, %v2969
  %v3066 = vpack.c.b16 %v2974, %v2970
  %v3067 = vpack.c.b16 %v2975, %v2971
  %v3068 = vpack.c.b16 %v2980, %v2976
  %v3069 = vpack.c.b16 %v2981, %v2977
  %v3070 = vpack.c.b16 %v2982, %v2978
  %v3071 = vpack.c.b16 %v2983, %v2979
  %v3072 = vpack.c.b16 %v2988, %v2984
  %v3073 = vpack.c.b16 %v2989, %v2985
  %v3074 = vpack.c.b16 %v2990, %v2986
  %v3075 = vpack.c.b16 %v2991, %v2987
  %v3076 = vpack.c.b16 %v2996, %v2992
  %v3077 = vpack.c.b16 %v2997, %v2993
  %v3078 = vpack.c.b16 %v2998, %v2994
  %v3079 = vpack.c.b16 %v2999, %v2995
  %v3080 = vpack.c.b16 %v3004, %v3000
  %v3081 = vpack.c.b16 %v3005, %v3001
  %v3082 = vpack.c.b16 %v3006, %v3002
  %v3083 = vpack.c.b16 %v3007, %v3003
  %v3084 = vpack.c.b16 %v3012, %v3008
  %v3085 = vpack.c.b16 %v3013, %v3009
  %v3086 = vpack.c.b16 %v3014, %v3010
  %v3087 = vpack.c.b16 %v3015, %v3011
  %v3088 = vpack.c.b16 %v3020, %v3016
  %v3089 = vpack.c.b16 %v3021, %v3017
  %v3090 = vpack.c.b16 %v3022, %v3018
  %v3091 = vpack.c.b16 %v3023, %v3019
  %v3092 = vpack.c.b16 %v3028, %v3024
  %v3093 = vpack.c.b16 %v3029, %v3025
  %v3094 = vpack.c.b16 %v3030, %v3026
  %v3095 = vpack.c.b16 %v3031, %v3027
  %3160 = vmatprep.subr.bf16.mxu0 %v3033
  %3161 = vmatpush1.bf16.msra.mxu0 %v3032
  %3162 = vmatprep.subr.bf16.mxu0 %v3037
  %3163 = vmatpush1.bf16.msra.mxu0 %v3036
  %3164 = vmatprep.subr.bf16.mxu0 %v3041
  %3165 = vmatpush1.bf16.msra.mxu0 %v3040
  %3166 = vmatprep.subr.bf16.mxu0 %v3045
  %3167 = vmatpush1.bf16.msra.mxu0 %v3044
  %3168 = vmatprep.subr.bf16.mxu0 %v3049
  %3169 = vmatpush1.bf16.msra.mxu0 %v3048
  %3170 = vmatprep.subr.bf16.mxu0 %v3053
  %3171 = vmatpush1.bf16.msra.mxu0 %v3052
  %3172 = vmatprep.subr.bf16.mxu0 %v3057
  %3173 = vmatpush1.bf16.msra.mxu0 %v3056
  %3174 = vmatprep.subr.bf16.mxu0 %v3061
  %3175 = vmatpush1.bf16.msra.mxu0 %v3060
  %3176 = vmatprep.subr.bf16.mxu0 %v3065
  %3177 = vmatpush1.bf16.msra.mxu0 %v3064
  %3178 = vmatprep.subr.bf16.mxu0 %v3069
  %3179 = vmatpush1.bf16.msra.mxu0 %v3068
  %3180 = vmatprep.subr.bf16.mxu0 %v3073
  %3181 = vmatpush1.bf16.msra.mxu0 %v3072
  %3182 = vmatprep.subr.bf16.mxu0 %v3077
  %3183 = vmatpush1.bf16.msra.mxu0 %v3076
  %3184 = vmatprep.subr.bf16.mxu0 %v3081
  %3185 = vmatpush1.bf16.msra.mxu0 %v3080
  %3186 = vmatprep.subr.bf16.mxu0 %v3085
  %3187 = vmatpush1.bf16.msra.mxu0 %v3084
  %3188 = vmatprep.subr.bf16.mxu0 %v3089
  %3189 = vmatpush1.bf16.msra.mxu0 %v3088
  %3190 = vmatprep.subr.bf16.mxu0 %v3093
  %3191 = vmatpush1.bf16.msra.mxu0 %v3092
  %3192 = vmatprep.mubr.bf16.mxu0 %v2773
  %3193 = vmatmul.mubr.bf16.gmra.mrb[0].mxu0 %v2772
  %v3194 = vpop.f32.mrb[0].mxu0
  %v3195 = vadd.f32 0.0, %v3194
  %v3196 = vpop.f32.mrb[0].mxu0
  %v3197 = vadd.f32 0.0, %v3196
  %v3198 = vpop.f32.mrb[0].mxu0
  %v3199 = vadd.f32 0.0, %v3198
  %v3200 = vpop.f32.mrb[0].mxu0
  %v3201 = vadd.f32 0.0, %v3200
  %3202 = vmatprep.mubr.bf16.mxu0 %v2775
  %3203 = vmatmul.mubr.bf16.gmra.mrb[0].mxu0 %v2774
  %v3204 = vpop.f32.mrb[0].mxu0
  %v3205 = vadd.f32 0.0, %v3204
  %v3206 = vpop.f32.mrb[0].mxu0
  %v3207 = vadd.f32 0.0, %v3206
  %v3208 = vpop.f32.mrb[0].mxu0
  %v3209 = vadd.f32 0.0, %v3208
  %v3210 = vpop.f32.mrb[0].mxu0
  %v3211 = vadd.f32 0.0, %v3210
  %3212 = vdwg.mxu0
  %3213 = vmatprep.subr.bf16.mxu0 %v3035
  %3214 = vmatpush1.bf16.msra.mxu0 %v3034
  %3215 = vmatprep.subr.bf16.mxu0 %v3039
  %3216 = vmatpush1.bf16.msra.mxu0 %v3038
  %3217 = vmatprep.subr.bf16.mxu0 %v3043
  %3218 = vmatpush1.bf16.msra.mxu0 %v3042
  %3219 = vmatprep.subr.bf16.mxu0 %v3047
  %3220 = vmatpush1.bf16.msra.mxu0 %v3046
  %3221 = vmatprep.subr.bf16.mxu0 %v3051
  %3222 = vmatpush1.bf16.msra.mxu0 %v3050
  %3223 = vmatprep.subr.bf16.mxu0 %v3055
  %3224 = vmatpush1.bf16.msra.mxu0 %v3054
  %3225 = vmatprep.subr.bf16.mxu0 %v3059
  %3226 = vmatpush1.bf16.msra.mxu0 %v3058
  %3227 = vmatprep.subr.bf16.mxu0 %v3063
  %3228 = vmatpush1.bf16.msra.mxu0 %v3062
  %3229 = vmatprep.subr.bf16.mxu0 %v3067
  %3230 = vmatpush1.bf16.msra.mxu0 %v3066
  %3231 = vmatprep.subr.bf16.mxu0 %v3071
  %3232 = vmatpush1.bf16.msra.mxu0 %v3070
  %3233 = vmatprep.subr.bf16.mxu0 %v3075
  %3234 = vmatpush1.bf16.msra.mxu0 %v3074
  %3235 = vmatprep.subr.bf16.mxu0 %v3079
  %3236 = vmatpush1.bf16.msra.mxu0 %v3078
  %3237 = vmatprep.subr.bf16.mxu0 %v3083
  %3238 = vmatpush1.bf16.msra.mxu0 %v3082
  %3239 = vmatprep.subr.bf16.mxu0 %v3087
  %3240 = vmatpush1.bf16.msra.mxu0 %v3086
  %3241 = vmatprep.subr.bf16.mxu0 %v3091
  %3242 = vmatpush1.bf16.msra.mxu0 %v3090
  %3243 = vmatprep.subr.bf16.mxu0 %v3095
  %3244 = vmatpush1.bf16.msra.mxu0 %v3094
  %3245 = vmatprep.mubr.bf16.mxu0 %v2773
  %3246 = vmatmul.mubr.bf16.gmra.mrb[0].mxu0 %v2772
  %v3247 = vpop.f32.mrb[0].mxu0
  %v3248 = vadd.f32 0.0, %v3247
  %v3249 = vpop.f32.mrb[0].mxu0
  %v3250 = vadd.f32 0.0, %v3249
  %v3251 = vpop.f32.mrb[0].mxu0
  %v3252 = vadd.f32 0.0, %v3251
  %v3253 = vpop.f32.mrb[0].mxu0
  %v3254 = vadd.f32 0.0, %v3253
  %3255 = vmatprep.mubr.bf16.mxu0 %v2775
  %3256 = vmatmul.mubr.bf16.gmra.mrb[0].mxu0 %v2774
  %v3257 = vpop.f32.mrb[0].mxu0
  %v3258 = vadd.f32 0.0, %v3257
  %v3259 = vpop.f32.mrb[0].mxu0
  %v3260 = vadd.f32 0.0, %v3259
  %v3261 = vpop.f32.mrb[0].mxu0
  %v3262 = vadd.f32 0.0, %v3261
  %v3263 = vpop.f32.mrb[0].mxu0
  %v3264 = vadd.f32 0.0, %v3263
  %3265 = vdwg.mxu0
  %s3266 = scalar_lea.vmem %s8, 512
  %v3267 = vld [vmem:[%s3266] sm:$0xff]
  %v3268 = vld [vmem:[%s3266 + $0x8] sm:$0xff]
  %v3269 = vld [vmem:[%s3266 + $0x10] sm:$0xff]
  %v3270 = vld [vmem:[%s3266 + $0x18] sm:$0xff]
  %v3271 = vld [vmem:[%s3266 + $0x20] sm:$0xff]
  %v3272 = vld [vmem:[%s3266 + $0x28] sm:$0xff]
  %v3273 = vld [vmem:[%s3266 + $0x30] sm:$0xff]
  %v3274 = vld [vmem:[%s3266 + $0x38] sm:$0xff]
  %v3275 = vld [vmem:[%s3266 + $0x40] sm:$0xff]
  %v3276 = vld [vmem:[%s3266 + $0x48] sm:$0xff]
  %v3277 = vld [vmem:[%s3266 + $0x50] sm:$0xff]
  %v3278 = vld [vmem:[%s3266 + $0x58] sm:$0xff]
  %v3279 = vld [vmem:[%s3266 + $0x60] sm:$0xff]
  %v3280 = vld [vmem:[%s3266 + $0x68] sm:$0xff]
  %v3281 = vld [vmem:[%s3266 + $0x70] sm:$0xff]
  %v3282 = vld [vmem:[%s3266 + $0x78] sm:$0xff]
  %v3283 = vld [vmem:[%s3266 + $0x80] sm:$0xff]
  %v3284 = vld [vmem:[%s3266 + $0x88] sm:$0xff]
  %v3285 = vld [vmem:[%s3266 + $0x90] sm:$0xff]
  %v3286 = vld [vmem:[%s3266 + $0x98] sm:$0xff]
  %v3287 = vld [vmem:[%s3266 + $0xa0] sm:$0xff]
  %v3288 = vld [vmem:[%s3266 + $0xa8] sm:$0xff]
  %v3289 = vld [vmem:[%s3266 + $0xb0] sm:$0xff]
  %v3290 = vld [vmem:[%s3266 + $0xb8] sm:$0xff]
  %v3291 = vld [vmem:[%s3266 + $0xc0] sm:$0xff]
  %v3292 = vld [vmem:[%s3266 + $0xc8] sm:$0xff]
  %v3293 = vld [vmem:[%s3266 + $0xd0] sm:$0xff]
  %v3294 = vld [vmem:[%s3266 + $0xd8] sm:$0xff]
  %v3295 = vld [vmem:[%s3266 + $0xe0] sm:$0xff]
  %v3296 = vld [vmem:[%s3266 + $0xe8] sm:$0xff]
  %v3297 = vld [vmem:[%s3266 + $0xf0] sm:$0xff]
  %v3298 = vld [vmem:[%s3266 + $0xf8] sm:$0xff]
  %v3299 = vld [vmem:[%s3266 + $0x100] sm:$0xff]
  %v3300 = vld [vmem:[%s3266 + $0x108] sm:$0xff]
  %v3301 = vld [vmem:[%s3266 + $0x110] sm:$0xff]
  %v3302 = vld [vmem:[%s3266 + $0x118] sm:$0xff]
  %v3303 = vld [vmem:[%s3266 + $0x120] sm:$0xff]
  %v3304 = vld [vmem:[%s3266 + $0x128] sm:$0xff]
  %v3305 = vld [vmem:[%s3266 + $0x130] sm:$0xff]
  %v3306 = vld [vmem:[%s3266 + $0x138] sm:$0xff]
  %v3307 = vld [vmem:[%s3266 + $0x140] sm:$0xff]
  %v3308 = vld [vmem:[%s3266 + $0x148] sm:$0xff]
  %v3309 = vld [vmem:[%s3266 + $0x150] sm:$0xff]
  %v3310 = vld [vmem:[%s3266 + $0x158] sm:$0xff]
  %v3311 = vld [vmem:[%s3266 + $0x160] sm:$0xff]
  %v3312 = vld [vmem:[%s3266 + $0x168] sm:$0xff]
  %v3313 = vld [vmem:[%s3266 + $0x170] sm:$0xff]
  %v3314 = vld [vmem:[%s3266 + $0x178] sm:$0xff]
  %v3315 = vld [vmem:[%s3266 + $0x180] sm:$0xff]
  %v3316 = vld [vmem:[%s3266 + $0x188] sm:$0xff]
  %v3317 = vld [vmem:[%s3266 + $0x190] sm:$0xff]
  %v3318 = vld [vmem:[%s3266 + $0x198] sm:$0xff]
  %v3319 = vld [vmem:[%s3266 + $0x1a0] sm:$0xff]
  %v3320 = vld [vmem:[%s3266 + $0x1a8] sm:$0xff]
  %v3321 = vld [vmem:[%s3266 + $0x1b0] sm:$0xff]
  %v3322 = vld [vmem:[%s3266 + $0x1b8] sm:$0xff]
  %v3323 = vld [vmem:[%s3266 + $0x1c0] sm:$0xff]
  %v3324 = vld [vmem:[%s3266 + $0x1c8] sm:$0xff]
  %v3325 = vld [vmem:[%s3266 + $0x1d0] sm:$0xff]
  %v3326 = vld [vmem:[%s3266 + $0x1d8] sm:$0xff]
  %v3327 = vld [vmem:[%s3266 + $0x1e0] sm:$0xff]
  %v3328 = vld [vmem:[%s3266 + $0x1e8] sm:$0xff]
  %v3329 = vld [vmem:[%s3266 + $0x1f0] sm:$0xff]
  %v3330 = vld [vmem:[%s3266 + $0x1f8] sm:$0xff]
  %s3331 = scalar_lea.vmem %s8, 1024
  %v3332 = vld [vmem:[%s3331] sm:$0xff]
  %v3333 = vld [vmem:[%s3331 + $0x8] sm:$0xff]
  %v3334 = vld [vmem:[%s3331 + $0x10] sm:$0xff]
  %v3335 = vld [vmem:[%s3331 + $0x18] sm:$0xff]
  %v3336 = vld [vmem:[%s3331 + $0x20] sm:$0xff]
  %v3337 = vld [vmem:[%s3331 + $0x28] sm:$0xff]
  %v3338 = vld [vmem:[%s3331 + $0x30] sm:$0xff]
  %v3339 = vld [vmem:[%s3331 + $0x38] sm:$0xff]
  %v3340 = vld [vmem:[%s3331 + $0x40] sm:$0xff]
  %v3341 = vld [vmem:[%s3331 + $0x48] sm:$0xff]
  %v3342 = vld [vmem:[%s3331 + $0x50] sm:$0xff]
  %v3343 = vld [vmem:[%s3331 + $0x58] sm:$0xff]
  %v3344 = vld [vmem:[%s3331 + $0x60] sm:$0xff]
  %v3345 = vld [vmem:[%s3331 + $0x68] sm:$0xff]
  %v3346 = vld [vmem:[%s3331 + $0x70] sm:$0xff]
  %v3347 = vld [vmem:[%s3331 + $0x78] sm:$0xff]
  %v3348 = vld [vmem:[%s3331 + $0x80] sm:$0xff]
  %v3349 = vld [vmem:[%s3331 + $0x88] sm:$0xff]
  %v3350 = vld [vmem:[%s3331 + $0x90] sm:$0xff]
  %v3351 = vld [vmem:[%s3331 + $0x98] sm:$0xff]
  %v3352 = vld [vmem:[%s3331 + $0xa0] sm:$0xff]
  %v3353 = vld [vmem:[%s3331 + $0xa8] sm:$0xff]
  %v3354 = vld [vmem:[%s3331 + $0xb0] sm:$0xff]
  %v3355 = vld [vmem:[%s3331 + $0xb8] sm:$0xff]
  %v3356 = vld [vmem:[%s3331 + $0xc0] sm:$0xff]
  %v3357 = vld [vmem:[%s3331 + $0xc8] sm:$0xff]
  %v3358 = vld [vmem:[%s3331 + $0xd0] sm:$0xff]
  %v3359 = vld [vmem:[%s3331 + $0xd8] sm:$0xff]
  %v3360 = vld [vmem:[%s3331 + $0xe0] sm:$0xff]
  %v3361 = vld [vmem:[%s3331 + $0xe8] sm:$0xff]
  %v3362 = vld [vmem:[%s3331 + $0xf0] sm:$0xff]
  %v3363 = vld [vmem:[%s3331 + $0xf8] sm:$0xff]
  %v3364 = vld [vmem:[%s3331 + $0x100] sm:$0xff]
  %v3365 = vld [vmem:[%s3331 + $0x108] sm:$0xff]
  %v3366 = vld [vmem:[%s3331 + $0x110] sm:$0xff]
  %v3367 = vld [vmem:[%s3331 + $0x118] sm:$0xff]
  %v3368 = vld [vmem:[%s3331 + $0x120] sm:$0xff]
  %v3369 = vld [vmem:[%s3331 + $0x128] sm:$0xff]
  %v3370 = vld [vmem:[%s3331 + $0x130] sm:$0xff]
  %v3371 = vld [vmem:[%s3331 + $0x138] sm:$0xff]
  %v3372 = vld [vmem:[%s3331 + $0x140] sm:$0xff]
  %v3373 = vld [vmem:[%s3331 + $0x148] sm:$0xff]
  %v3374 = vld [vmem:[%s3331 + $0x150] sm:$0xff]
  %v3375 = vld [vmem:[%s3331 + $0x158] sm:$0xff]
  %v3376 = vld [vmem:[%s3331 + $0x160] sm:$0xff]
  %v3377 = vld [vmem:[%s3331 + $0x168] sm:$0xff]
  %v3378 = vld [vmem:[%s3331 + $0x170] sm:$0xff]
  %v3379 = vld [vmem:[%s3331 + $0x178] sm:$0xff]
  %v3380 = vld [vmem:[%s3331 + $0x180] sm:$0xff]
  %v3381 = vld [vmem:[%s3331 + $0x188] sm:$0xff]
  %v3382 = vld [vmem:[%s3331 + $0x190] sm:$0xff]
  %v3383 = vld [vmem:[%s3331 + $0x198] sm:$0xff]
  %v3384 = vld [vmem:[%s3331 + $0x1a0] sm:$0xff]
  %v3385 = vld [vmem:[%s3331 + $0x1a8] sm:$0xff]
  %v3386 = vld [vmem:[%s3331 + $0x1b0] sm:$0xff]
  %v3387 = vld [vmem:[%s3331 + $0x1b8] sm:$0xff]
  %v3388 = vld [vmem:[%s3331 + $0x1c0] sm:$0xff]
  %v3389 = vld [vmem:[%s3331 + $0x1c8] sm:$0xff]
  %v3390 = vld [vmem:[%s3331 + $0x1d0] sm:$0xff]
  %v3391 = vld [vmem:[%s3331 + $0x1d8] sm:$0xff]
  %v3392 = vld [vmem:[%s3331 + $0x1e0] sm:$0xff]
  %v3393 = vld [vmem:[%s3331 + $0x1e8] sm:$0xff]
  %v3394 = vld [vmem:[%s3331 + $0x1f0] sm:$0xff]
  %v3395 = vld [vmem:[%s3331 + $0x1f8] sm:$0xff]
  %v3460 = vunpack.c.l.b16 %v3332
  %v3461 = vunpack.c.h.b16 %v3332
  %v3462 = vunpack.c.l.b16 %v3333
  %v3463 = vunpack.c.h.b16 %v3333
  %v3464 = vunpack.c.l.b16 %v3334
  %v3465 = vunpack.c.h.b16 %v3334
  %v3466 = vunpack.c.l.b16 %v3335
  %v3467 = vunpack.c.h.b16 %v3335
  %v3468 = vunpack.c.l.b16 %v3336
  %v3469 = vunpack.c.h.b16 %v3336
  %v3470 = vunpack.c.l.b16 %v3337
  %v3471 = vunpack.c.h.b16 %v3337
  %v3472 = vunpack.c.l.b16 %v3338
  %v3473 = vunpack.c.h.b16 %v3338
  %v3474 = vunpack.c.l.b16 %v3339
  %v3475 = vunpack.c.h.b16 %v3339
  %v3476 = vunpack.c.l.b16 %v3340
  %v3477 = vunpack.c.h.b16 %v3340
  %v3478 = vunpack.c.l.b16 %v3341
  %v3479 = vunpack.c.h.b16 %v3341
  %v3480 = vunpack.c.l.b16 %v3342
  %v3481 = vunpack.c.h.b16 %v3342
  %v3482 = vunpack.c.l.b16 %v3343
  %v3483 = vunpack.c.h.b16 %v3343
  %v3484 = vunpack.c.l.b16 %v3344
  %v3485 = vunpack.c.h.b16 %v3344
  %v3486 = vunpack.c.l.b16 %v3345
  %v3487 = vunpack.c.h.b16 %v3345
  %v3488 = vunpack.c.l.b16 %v3346
  %v3489 = vunpack.c.h.b16 %v3346
  %v3490 = vunpack.c.l.b16 %v3347
  %v3491 = vunpack.c.h.b16 %v3347
  %v3492 = vunpack.c.l.b16 %v3348
  %v3493 = vunpack.c.h.b16 %v3348
  %v3494 = vunpack.c.l.b16 %v3349
  %v3495 = vunpack.c.h.b16 %v3349
  %v3496 = vunpack.c.l.b16 %v3350
  %v3497 = vunpack.c.h.b16 %v3350
  %v3498 = vunpack.c.l.b16 %v3351
  %v3499 = vunpack.c.h.b16 %v3351
  %v3500 = vunpack.c.l.b16 %v3352
  %v3501 = vunpack.c.h.b16 %v3352
  %v3502 = vunpack.c.l.b16 %v3353
  %v3503 = vunpack.c.h.b16 %v3353
  %v3504 = vunpack.c.l.b16 %v3354
  %v3505 = vunpack.c.h.b16 %v3354
  %v3506 = vunpack.c.l.b16 %v3355
  %v3507 = vunpack.c.h.b16 %v3355
  %v3508 = vunpack.c.l.b16 %v3356
  %v3509 = vunpack.c.h.b16 %v3356
  %v3510 = vunpack.c.l.b16 %v3357
  %v3511 = vunpack.c.h.b16 %v3357
  %v3512 = vunpack.c.l.b16 %v3358
  %v3513 = vunpack.c.h.b16 %v3358
  %v3514 = vunpack.c.l.b16 %v3359
  %v3515 = vunpack.c.h.b16 %v3359
  %v3516 = vunpack.c.l.b16 %v3360
  %v3517 = vunpack.c.h.b16 %v3360
  %v3518 = vunpack.c.l.b16 %v3361
  %v3519 = vunpack.c.h.b16 %v3361
  %v3520 = vunpack.c.l.b16 %v3362
  %v3521 = vunpack.c.h.b16 %v3362
  %v3522 = vunpack.c.l.b16 %v3363
  %v3523 = vunpack.c.h.b16 %v3363
  %v3524 = vunpack.c.l.b16 %v3364
  %v3525 = vunpack.c.h.b16 %v3364
  %v3526 = vunpack.c.l.b16 %v3365
  %v3527 = vunpack.c.h.b16 %v3365
  %v3528 = vunpack.c.l.b16 %v3366
  %v3529 = vunpack.c.h.b16 %v3366
  %v3530 = vunpack.c.l.b16 %v3367
  %v3531 = vunpack.c.h.b16 %v3367
  %v3532 = vunpack.c.l.b16 %v3368
  %v3533 = vunpack.c.h.b16 %v3368
  %v3534 = vunpack.c.l.b16 %v3369
  %v3535 = vunpack.c.h.b16 %v3369
  %v3536 = vunpack.c.l.b16 %v3370
  %v3537 = vunpack.c.h.b16 %v3370
  %v3538 = vunpack.c.l.b16 %v3371
  %v3539 = vunpack.c.h.b16 %v3371
  %v3540 = vunpack.c.l.b16 %v3372
  %v3541 = vunpack.c.h.b16 %v3372
  %v3542 = vunpack.c.l.b16 %v3373
  %v3543 = vunpack.c.h.b16 %v3373
  %v3544 = vunpack.c.l.b16 %v3374
  %v3545 = vunpack.c.h.b16 %v3374
  %v3546 = vunpack.c.l.b16 %v3375
  %v3547 = vunpack.c.h.b16 %v3375
  %v3548 = vunpack.c.l.b16 %v3376
  %v3549 = vunpack.c.h.b16 %v3376
  %v3550 = vunpack.c.l.b16 %v3377
  %v3551 = vunpack.c.h.b16 %v3377
  %v3552 = vunpack.c.l.b16 %v3378
  %v3553 = vunpack.c.h.b16 %v3378
  %v3554 = vunpack.c.l.b16 %v3379
  %v3555 = vunpack.c.h.b16 %v3379
  %v3556 = vunpack.c.l.b16 %v3380
  %v3557 = vunpack.c.h.b16 %v3380
  %v3558 = vunpack.c.l.b16 %v3381
  %v3559 = vunpack.c.h.b16 %v3381
  %v3560 = vunpack.c.l.b16 %v3382
  %v3561 = vunpack.c.h.b16 %v3382
  %v3562 = vunpack.c.l.b16 %v3383
  %v3563 = vunpack.c.h.b16 %v3383
  %v3564 = vunpack.c.l.b16 %v3384
  %v3565 = vunpack.c.h.b16 %v3384
  %v3566 = vunpack.c.l.b16 %v3385
  %v3567 = vunpack.c.h.b16 %v3385
  %v3568 = vunpack.c.l.b16 %v3386
  %v3569 = vunpack.c.h.b16 %v3386
  %v3570 = vunpack.c.l.b16 %v3387
  %v3571 = vunpack.c.h.b16 %v3387
  %v3572 = vunpack.c.l.b16 %v3388
  %v3573 = vunpack.c.h.b16 %v3388
  %v3574 = vunpack.c.l.b16 %v3389
  %v3575 = vunpack.c.h.b16 %v3389
  %v3576 = vunpack.c.l.b16 %v3390
  %v3577 = vunpack.c.h.b16 %v3390
  %v3578 = vunpack.c.l.b16 %v3391
  %v3579 = vunpack.c.h.b16 %v3391
  %v3580 = vunpack.c.l.b16 %v3392
  %v3581 = vunpack.c.h.b16 %v3392
  %v3582 = vunpack.c.l.b16 %v3393
  %v3583 = vunpack.c.h.b16 %v3393
  %v3584 = vunpack.c.l.b16 %v3394
  %v3585 = vunpack.c.h.b16 %v3394
  %v3586 = vunpack.c.l.b16 %v3395
  %v3587 = vunpack.c.h.b16 %v3395
  %v3588 = vpack.c.b16 %v3464, %v3460
  %v3589 = vpack.c.b16 %v3465, %v3461
  %v3590 = vpack.c.b16 %v3466, %v3462
  %v3591 = vpack.c.b16 %v3467, %v3463
  %v3592 = vpack.c.b16 %v3472, %v3468
  %v3593 = vpack.c.b16 %v3473, %v3469
  %v3594 = vpack.c.b16 %v3474, %v3470
  %v3595 = vpack.c.b16 %v3475, %v3471
  %v3596 = vpack.c.b16 %v3480, %v3476
  %v3597 = vpack.c.b16 %v3481, %v3477
  %v3598 = vpack.c.b16 %v3482, %v3478
  %v3599 = vpack.c.b16 %v3483, %v3479
  %v3600 = vpack.c.b16 %v3488, %v3484
  %v3601 = vpack.c.b16 %v3489, %v3485
  %v3602 = vpack.c.b16 %v3490, %v3486
  %v3603 = vpack.c.b16 %v3491, %v3487
  %v3604 = vpack.c.b16 %v3496, %v3492
  %v3605 = vpack.c.b16 %v3497, %v3493
  %v3606 = vpack.c.b16 %v3498, %v3494
  %v3607 = vpack.c.b16 %v3499, %v3495
  %v3608 = vpack.c.b16 %v3504, %v3500
  %v3609 = vpack.c.b16 %v3505, %v3501
  %v3610 = vpack.c.b16 %v3506, %v3502
  %v3611 = vpack.c.b16 %v3507, %v3503
  %v3612 = vpack.c.b16 %v3512, %v3508
  %v3613 = vpack.c.b16 %v3513, %v3509
  %v3614 = vpack.c.b16 %v3514, %v3510
  %v3615 = vpack.c.b16 %v3515, %v3511
  %v3616 = vpack.c.b16 %v3520, %v3516
  %v3617 = vpack.c.b16 %v3521, %v3517
  %v3618 = vpack.c.b16 %v3522, %v3518
  %v3619 = vpack.c.b16 %v3523, %v3519
  %v3620 = vpack.c.b16 %v3528, %v3524
  %v3621 = vpack.c.b16 %v3529, %v3525
  %v3622 = vpack.c.b16 %v3530, %v3526
  %v3623 = vpack.c.b16 %v3531, %v3527
  %v3624 = vpack.c.b16 %v3536, %v3532
  %v3625 = vpack.c.b16 %v3537, %v3533
  %v3626 = vpack.c.b16 %v3538, %v3534
  %v3627 = vpack.c.b16 %v3539, %v3535
  %v3628 = vpack.c.b16 %v3544, %v3540
  %v3629 = vpack.c.b16 %v3545, %v3541
  %v3630 = vpack.c.b16 %v3546, %v3542
  %v3631 = vpack.c.b16 %v3547, %v3543
  %v3632 = vpack.c.b16 %v3552, %v3548
  %v3633 = vpack.c.b16 %v3553, %v3549
  %v3634 = vpack.c.b16 %v3554, %v3550
  %v3635 = vpack.c.b16 %v3555, %v3551
  %v3636 = vpack.c.b16 %v3560, %v3556
  %v3637 = vpack.c.b16 %v3561, %v3557
  %v3638 = vpack.c.b16 %v3562, %v3558
  %v3639 = vpack.c.b16 %v3563, %v3559
  %v3640 = vpack.c.b16 %v3568, %v3564
  %v3641 = vpack.c.b16 %v3569, %v3565
  %v3642 = vpack.c.b16 %v3570, %v3566
  %v3643 = vpack.c.b16 %v3571, %v3567
  %v3644 = vpack.c.b16 %v3576, %v3572
  %v3645 = vpack.c.b16 %v3577, %v3573
  %v3646 = vpack.c.b16 %v3578, %v3574
  %v3647 = vpack.c.b16 %v3579, %v3575
  %v3648 = vpack.c.b16 %v3584, %v3580
  %v3649 = vpack.c.b16 %v3585, %v3581
  %v3650 = vpack.c.b16 %v3586, %v3582
  %v3651 = vpack.c.b16 %v3587, %v3583
  %3716 = vmatprep.subr.bf16.mxu0 %v3589
  %3717 = vmatpush1.bf16.msra.mxu0 %v3588
  %3718 = vmatprep.subr.bf16.mxu0 %v3593
  %3719 = vmatpush1.bf16.msra.mxu0 %v3592
  %3720 = vmatprep.subr.bf16.mxu0 %v3597
  %3721 = vmatpush1.bf16.msra.mxu0 %v3596
  %3722 = vmatprep.subr.bf16.mxu0 %v3601
  %3723 = vmatpush1.bf16.msra.mxu0 %v3600
  %3724 = vmatprep.subr.bf16.mxu0 %v3605
  %3725 = vmatpush1.bf16.msra.mxu0 %v3604
  %3726 = vmatprep.subr.bf16.mxu0 %v3609
  %3727 = vmatpush1.bf16.msra.mxu0 %v3608
  %3728 = vmatprep.subr.bf16.mxu0 %v3613
  %3729 = vmatpush1.bf16.msra.mxu0 %v3612
  %3730 = vmatprep.subr.bf16.mxu0 %v3617
  %3731 = vmatpush1.bf16.msra.mxu0 %v3616
  %3732 = vmatprep.subr.bf16.mxu0 %v3621
  %3733 = vmatpush1.bf16.msra.mxu0 %v3620
  %3734 = vmatprep.subr.bf16.mxu0 %v3625
  %3735 = vmatpush1.bf16.msra.mxu0 %v3624
  %3736 = vmatprep.subr.bf16.mxu0 %v3629
  %3737 = vmatpush1.bf16.msra.mxu0 %v3628
  %3738 = vmatprep.subr.bf16.mxu0 %v3633
  %3739 = vmatpush1.bf16.msra.mxu0 %v3632
  %3740 = vmatprep.subr.bf16.mxu0 %v3637
  %3741 = vmatpush1.bf16.msra.mxu0 %v3636
  %3742 = vmatprep.subr.bf16.mxu0 %v3641
  %3743 = vmatpush1.bf16.msra.mxu0 %v3640
  %3744 = vmatprep.subr.bf16.mxu0 %v3645
  %3745 = vmatpush1.bf16.msra.mxu0 %v3644
  %3746 = vmatprep.subr.bf16.mxu0 %v3649
  %3747 = vmatpush1.bf16.msra.mxu0 %v3648
  %3748 = vmatprep.mubr.bf16.mxu0 %v2773
  %3749 = vmatmul.mubr.bf16.gmra.mrb[0].mxu0 %v2772
  %v3750 = vpop.f32.mrb[0].mxu0
  %v3751 = vadd.f32 0.0, %v3750
  %v3752 = vpop.f32.mrb[0].mxu0
  %v3753 = vadd.f32 0.0, %v3752
  %v3754 = vpop.f32.mrb[0].mxu0
  %v3755 = vadd.f32 0.0, %v3754
  %v3756 = vpop.f32.mrb[0].mxu0
  %v3757 = vadd.f32 0.0, %v3756
  %3758 = vmatprep.mubr.bf16.mxu0 %v2775
  %3759 = vmatmul.mubr.bf16.gmra.mrb[0].mxu0 %v2774
  %v3760 = vpop.f32.mrb[0].mxu0
  %v3761 = vadd.f32 0.0, %v3760
  %v3762 = vpop.f32.mrb[0].mxu0
  %v3763 = vadd.f32 0.0, %v3762
  %v3764 = vpop.f32.mrb[0].mxu0
  %v3765 = vadd.f32 0.0, %v3764
  %v3766 = vpop.f32.mrb[0].mxu0
  %v3767 = vadd.f32 0.0, %v3766
  %3768 = vdwg.mxu0
  %3769 = vmatprep.subr.bf16.mxu0 %v3591
  %3770 = vmatpush1.bf16.msra.mxu0 %v3590
  %3771 = vmatprep.subr.bf16.mxu0 %v3595
  %3772 = vmatpush1.bf16.msra.mxu0 %v3594
  %3773 = vmatprep.subr.bf16.mxu0 %v3599
  %3774 = vmatpush1.bf16.msra.mxu0 %v3598
  %3775 = vmatprep.subr.bf16.mxu0 %v3603
  %3776 = vmatpush1.bf16.msra.mxu0 %v3602
  %3777 = vmatprep.subr.bf16.mxu0 %v3607
  %3778 = vmatpush1.bf16.msra.mxu0 %v3606
  %3779 = vmatprep.subr.bf16.mxu0 %v3611
  %3780 = vmatpush1.bf16.msra.mxu0 %v3610
  %3781 = vmatprep.subr.bf16.mxu0 %v3615
  %3782 = vmatpush1.bf16.msra.mxu0 %v3614
  %3783 = vmatprep.subr.bf16.mxu0 %v3619
  %3784 = vmatpush1.bf16.msra.mxu0 %v3618
  %3785 = vmatprep.subr.bf16.mxu0 %v3623
  %3786 = vmatpush1.bf16.msra.mxu0 %v3622
  %3787 = vmatprep.subr.bf16.mxu0 %v3627
  %3788 = vmatpush1.bf16.msra.mxu0 %v3626
  %3789 = vmatprep.subr.bf16.mxu0 %v3631
  %3790 = vmatpush1.bf16.msra.mxu0 %v3630
  %3791 = vmatprep.subr.bf16.mxu0 %v3635
  %3792 = vmatpush1.bf16.msra.mxu0 %v3634
  %3793 = vmatprep.subr.bf16.mxu0 %v3639
  %3794 = vmatpush1.bf16.msra.mxu0 %v3638
  %3795 = vmatprep.subr.bf16.mxu0 %v3643
  %3796 = vmatpush1.bf16.msra.mxu0 %v3642
  %3797 = vmatprep.subr.bf16.mxu0 %v3647
  %3798 = vmatpush1.bf16.msra.mxu0 %v3646
  %3799 = vmatprep.subr.bf16.mxu0 %v3651
  %3800 = vmatpush1.bf16.msra.mxu0 %v3650
  %3801 = vmatprep.mubr.bf16.mxu0 %v2773
  %3802 = vmatmul.mubr.bf16.gmra.mrb[0].mxu0 %v2772
  %v3803 = vpop.f32.mrb[0].mxu0
  %v3804 = vadd.f32 0.0, %v3803
  %v3805 = vpop.f32.mrb[0].mxu0
  %v3806 = vadd.f32 0.0, %v3805
  %v3807 = vpop.f32.mrb[0].mxu0
  %v3808 = vadd.f32 0.0, %v3807
  %v3809 = vpop.f32.mrb[0].mxu0
  %v3810 = vadd.f32 0.0, %v3809
  %3811 = vmatprep.mubr.bf16.mxu0 %v2775
  %3812 = vmatmul.mubr.bf16.gmra.mrb[0].mxu0 %v2774
  %v3813 = vpop.f32.mrb[0].mxu0
  %v3814 = vadd.f32 0.0, %v3813
  %v3815 = vpop.f32.mrb[0].mxu0
  %v3816 = vadd.f32 0.0, %v3815
  %v3817 = vpop.f32.mrb[0].mxu0
  %v3818 = vadd.f32 0.0, %v3817
  %v3819 = vpop.f32.mrb[0].mxu0
  %v3820 = vadd.f32 0.0, %v3819
  %3821 = vdwg.mxu0
  %3822 = vmatprep.subr.mxu0 %v3197
  %3823 = vmatpush1.msra.mxu0 %v3195
  %3824 = vmatprep.subr.mxu0 %v3201
  %3825 = vmatpush1.msra.mxu0 %v3199
  %3826 = vmatprep.subr.mxu0 %v3207
  %3827 = vmatpush1.msra.mxu0 %v3205
  %3828 = vmatprep.subr.mxu0 %v3211
  %3829 = vmatpush1.msra.mxu0 %v3209
  %3830 = vmatprep.subr.mxu0 0.0
  %3831 = vmatpush1.msra.mxu0 0.0
  %3832 = vmatprep.subr.mxu0 0.0
  %3833 = vmatpush1.msra.mxu0 0.0
  %3834 = vmatprep.subr.mxu0 0.0
  %3835 = vmatpush1.msra.mxu0 0.0
  %3836 = vmatprep.subr.mxu0 0.0
  %3837 = vmatpush1.msra.mxu0 0.0
  %3838 = vmatprep.subr.mxu0 0.0
  %3839 = vmatpush1.msra.mxu0 0.0
  %3840 = vmatprep.subr.mxu0 0.0
  %3841 = vmatpush1.msra.mxu0 0.0
  %3842 = vmatprep.subr.mxu0 0.0
  %3843 = vmatpush1.msra.mxu0 0.0
  %3844 = vmatprep.subr.mxu0 0.0
  %3845 = vmatpush1.msra.mxu0 0.0
  %3846 = vmatprep.subr.mxu0 0.0
  %3847 = vmatpush1.msra.mxu0 0.0
  %3848 = vmatprep.subr.mxu0 0.0
  %3849 = vmatpush1.msra.mxu0 0.0
  %3850 = vmatprep.subr.mxu0 0.0
  %3851 = vmatpush1.msra.mxu0 0.0
  %3852 = vmatprep.subr.mxu0 0.0
  %3853 = vmatpush1.msra.mxu0 0.0
  %3854 = vmatprep.subr.mxu0 0.0
  %3855 = vmatpush1.msra.mxu0 0.0
  %3856 = vmatprep.subr.mxu0 0.0
  %3857 = vmatpush1.msra.mxu0 0.0
  %3858 = vmatprep.subr.mxu0 0.0
  %3859 = vmatpush1.msra.mxu0 0.0
  %3860 = vmatprep.subr.mxu0 0.0
  %3861 = vmatpush1.msra.mxu0 0.0
  %3862 = vmatprep.subr.mxu0 0.0
  %3863 = vmatpush1.msra.mxu0 0.0
  %3864 = vmatprep.subr.mxu0 0.0
  %3865 = vmatpush1.msra.mxu0 0.0
  %3866 = vmatprep.subr.mxu0 0.0
  %3867 = vmatpush1.msra.mxu0 0.0
  %3868 = vmatprep.subr.mxu0 0.0
  %3869 = vmatpush1.msra.mxu0 0.0
  %3870 = vmatprep.subr.mxu0 0.0
  %3871 = vmatpush1.msra.mxu0 0.0
  %3872 = vmatprep.subr.mxu0 0.0
  %3873 = vmatpush1.msra.mxu0 0.0
  %3874 = vmatprep.subr.mxu0 0.0
  %3875 = vmatpush1.msra.mxu0 0.0
  %3876 = vmatprep.subr.mxu0 0.0
  %3877 = vmatpush1.msra.mxu0 0.0
  %3878 = vmatprep.subr.mxu0 0.0
  %3879 = vmatpush1.msra.mxu0 0.0
  %3880 = vmatprep.subr.mxu0 0.0
  %3881 = vmatpush1.msra.mxu0 0.0
  %3882 = vmatprep.subr.mxu0 0.0
  %3883 = vmatpush1.msra.mxu0 0.0
  %3884 = vmatprep.subr.mxu0 0.0
  %3885 = vmatpush1.msra.mxu0 0.0
  %3886 = vmatprep.mubr.f32.mxu0 0.0
  %3887 = vmatmul.mubr.f32.gmra.mrb[0].mxu0 %v1977
  %v3888 = vpop.f32.mrb[0].mxu0
  %v3889 = vadd.f32 0.0, %v3888
  %v3890 = vpop.f32.mrb[0].mxu0
  %v3891 = vadd.f32 0.0, %v3890
  %3892 = vmatprep.mubr.f32.mxu0 0.0
  %3893 = vmatmul.mubr.f32.gmra.mrb[0].mxu0 %v1980
  %v3894 = vpop.f32.mrb[0].mxu0
  %v3895 = vadd.f32 0.0, %v3894
  %v3896 = vpop.f32.mrb[0].mxu0
  %v3897 = vadd.f32 0.0, %v3896
  %3898 = vmatprep.mubr.f32.mxu0 0.0
  %3899 = vmatmul.mubr.f32.gmra.mrb[0].mxu0 %v1983
  %v3900 = vpop.f32.mrb[0].mxu0
  %v3901 = vadd.f32 0.0, %v3900
  %v3902 = vpop.f32.mrb[0].mxu0
  %v3903 = vadd.f32 0.0, %v3902
  %3904 = vmatprep.mubr.f32.mxu0 0.0
  %3905 = vmatmul.mubr.f32.gmra.mrb[0].mxu0 %v1986
  %v3906 = vpop.f32.mrb[0].mxu0
  %v3907 = vadd.f32 0.0, %v3906
  %v3908 = vpop.f32.mrb[0].mxu0
  %v3909 = vadd.f32 0.0, %v3908
  %3910 = vdwg.mxu0
  %3911 = vmatprep.subr.mxu0 %v3250
  %3912 = vmatpush1.msra.mxu0 %v3248
  %3913 = vmatprep.subr.mxu0 %v3254
  %3914 = vmatpush1.msra.mxu0 %v3252
  %3915 = vmatprep.subr.mxu0 %v3260
  %3916 = vmatpush1.msra.mxu0 %v3258
  %3917 = vmatprep.subr.mxu0 %v3264
  %3918 = vmatpush1.msra.mxu0 %v3262
  %3919 = vmatprep.subr.mxu0 0.0
  %3920 = vmatpush1.msra.mxu0 0.0
  %3921 = vmatprep.subr.mxu0 0.0
  %3922 = vmatpush1.msra.mxu0 0.0
  %3923 = vmatprep.subr.mxu0 0.0
  %3924 = vmatpush1.msra.mxu0 0.0
  %3925 = vmatprep.subr.mxu0 0.0
  %3926 = vmatpush1.msra.mxu0 0.0
  %3927 = vmatprep.subr.mxu0 0.0
  %3928 = vmatpush1.msra.mxu0 0.0
  %3929 = vmatprep.subr.mxu0 0.0
  %3930 = vmatpush1.msra.mxu0 0.0
  %3931 = vmatprep.subr.mxu0 0.0
  %3932 = vmatpush1.msra.mxu0 0.0
  %3933 = vmatprep.subr.mxu0 0.0
  %3934 = vmatpush1.msra.mxu0 0.0
  %3935 = vmatprep.subr.mxu0 0.0
  %3936 = vmatpush1.msra.mxu0 0.0
  %3937 = vmatprep.subr.mxu0 0.0
  %3938 = vmatpush1.msra.mxu0 0.0
  %3939 = vmatprep.subr.mxu0 0.0
  %3940 = vmatpush1.msra.mxu0 0.0
  %3941 = vmatprep.subr.mxu0 0.0
  %3942 = vmatpush1.msra.mxu0 0.0
  %3943 = vmatprep.subr.mxu0 0.0
  %3944 = vmatpush1.msra.mxu0 0.0
  %3945 = vmatprep.subr.mxu0 0.0
  %3946 = vmatpush1.msra.mxu0 0.0
  %3947 = vmatprep.subr.mxu0 0.0
  %3948 = vmatpush1.msra.mxu0 0.0
  %3949 = vmatprep.subr.mxu0 0.0
  %3950 = vmatpush1.msra.mxu0 0.0
  %3951 = vmatprep.subr.mxu0 0.0
  %3952 = vmatpush1.msra.mxu0 0.0
  %3953 = vmatprep.subr.mxu0 0.0
  %3954 = vmatpush1.msra.mxu0 0.0
  %3955 = vmatprep.subr.mxu0 0.0
  %3956 = vmatpush1.msra.mxu0 0.0
  %3957 = vmatprep.subr.mxu0 0.0
  %3958 = vmatpush1.msra.mxu0 0.0
  %3959 = vmatprep.subr.mxu0 0.0
  %3960 = vmatpush1.msra.mxu0 0.0
  %3961 = vmatprep.subr.mxu0 0.0
  %3962 = vmatpush1.msra.mxu0 0.0
  %3963 = vmatprep.subr.mxu0 0.0
  %3964 = vmatpush1.msra.mxu0 0.0
  %3965 = vmatprep.subr.mxu0 0.0
  %3966 = vmatpush1.msra.mxu0 0.0
  %3967 = vmatprep.subr.mxu0 0.0
  %3968 = vmatpush1.msra.mxu0 0.0
  %3969 = vmatprep.subr.mxu0 0.0
  %3970 = vmatpush1.msra.mxu0 0.0
  %3971 = vmatprep.subr.mxu0 0.0
  %3972 = vmatpush1.msra.mxu0 0.0
  %3973 = vmatprep.subr.mxu0 0.0
  %3974 = vmatpush1.msra.mxu0 0.0
  %3975 = vmatprep.mubr.f32.mxu0 0.0
  %3976 = vmatmul.mubr.f32.gmra.mrb[0].mxu0 %v1977
  %v3977 = vpop.f32.mrb[0].mxu0
  %v3978 = vadd.f32 0.0, %v3977
  %v3979 = vpop.f32.mrb[0].mxu0
  %v3980 = vadd.f32 0.0, %v3979
  %3981 = vmatprep.mubr.f32.mxu0 0.0
  %3982 = vmatmul.mubr.f32.gmra.mrb[0].mxu0 %v1980
  %v3983 = vpop.f32.mrb[0].mxu0
  %v3984 = vadd.f32 0.0, %v3983
  %v3985 = vpop.f32.mrb[0].mxu0
  %v3986 = vadd.f32 0.0, %v3985
  %3987 = vmatprep.mubr.f32.mxu0 0.0
  %3988 = vmatmul.mubr.f32.gmra.mrb[0].mxu0 %v1983
  %v3989 = vpop.f32.mrb[0].mxu0
  %v3990 = vadd.f32 0.0, %v3989
  %v3991 = vpop.f32.mrb[0].mxu0
  %v3992 = vadd.f32 0.0, %v3991
  %3993 = vmatprep.mubr.f32.mxu0 0.0
  %3994 = vmatmul.mubr.f32.gmra.mrb[0].mxu0 %v1986
  %v3995 = vpop.f32.mrb[0].mxu0
  %v3996 = vadd.f32 0.0, %v3995
  %v3997 = vpop.f32.mrb[0].mxu0
  %v3998 = vadd.f32 0.0, %v3997
  %3999 = vdwg.mxu0
  %v4064 = vunpack.c.l.b16 %v3267
  %v4065 = vunpack.c.h.b16 %v3267
  %v4066 = vunpack.c.l.b16 %v3268
  %v4067 = vunpack.c.h.b16 %v3268
  %v4068 = vunpack.c.l.b16 %v3269
  %v4069 = vunpack.c.h.b16 %v3269
  %v4070 = vunpack.c.l.b16 %v3270
  %v4071 = vunpack.c.h.b16 %v3270
  %v4072 = vunpack.c.l.b16 %v3271
  %v4073 = vunpack.c.h.b16 %v3271
  %v4074 = vunpack.c.l.b16 %v3272
  %v4075 = vunpack.c.h.b16 %v3272
  %v4076 = vunpack.c.l.b16 %v3273
  %v4077 = vunpack.c.h.b16 %v3273
  %v4078 = vunpack.c.l.b16 %v3274
  %v4079 = vunpack.c.h.b16 %v3274
  %v4080 = vunpack.c.l.b16 %v3275
  %v4081 = vunpack.c.h.b16 %v3275
  %v4082 = vunpack.c.l.b16 %v3276
  %v4083 = vunpack.c.h.b16 %v3276
  %v4084 = vunpack.c.l.b16 %v3277
  %v4085 = vunpack.c.h.b16 %v3277
  %v4086 = vunpack.c.l.b16 %v3278
  %v4087 = vunpack.c.h.b16 %v3278
  %v4088 = vunpack.c.l.b16 %v3279
  %v4089 = vunpack.c.h.b16 %v3279
  %v4090 = vunpack.c.l.b16 %v3280
  %v4091 = vunpack.c.h.b16 %v3280
  %v4092 = vunpack.c.l.b16 %v3281
  %v4093 = vunpack.c.h.b16 %v3281
  %v4094 = vunpack.c.l.b16 %v3282
  %v4095 = vunpack.c.h.b16 %v3282
  %v4096 = vunpack.c.l.b16 %v3283
  %v4097 = vunpack.c.h.b16 %v3283
  %v4098 = vunpack.c.l.b16 %v3284
  %v4099 = vunpack.c.h.b16 %v3284
  %v4100 = vunpack.c.l.b16 %v3285
  %v4101 = vunpack.c.h.b16 %v3285
  %v4102 = vunpack.c.l.b16 %v3286
  %v4103 = vunpack.c.h.b16 %v3286
  %v4104 = vunpack.c.l.b16 %v3287
  %v4105 = vunpack.c.h.b16 %v3287
  %v4106 = vunpack.c.l.b16 %v3288
  %v4107 = vunpack.c.h.b16 %v3288
  %v4108 = vunpack.c.l.b16 %v3289
  %v4109 = vunpack.c.h.b16 %v3289
  %v4110 = vunpack.c.l.b16 %v3290
  %v4111 = vunpack.c.h.b16 %v3290
  %v4112 = vunpack.c.l.b16 %v3291
  %v4113 = vunpack.c.h.b16 %v3291
  %v4114 = vunpack.c.l.b16 %v3292
  %v4115 = vunpack.c.h.b16 %v3292
  %v4116 = vunpack.c.l.b16 %v3293
  %v4117 = vunpack.c.h.b16 %v3293
  %v4118 = vunpack.c.l.b16 %v3294
  %v4119 = vunpack.c.h.b16 %v3294
  %v4120 = vunpack.c.l.b16 %v3295
  %v4121 = vunpack.c.h.b16 %v3295
  %v4122 = vunpack.c.l.b16 %v3296
  %v4123 = vunpack.c.h.b16 %v3296
  %v4124 = vunpack.c.l.b16 %v3297
  %v4125 = vunpack.c.h.b16 %v3297
  %v4126 = vunpack.c.l.b16 %v3298
  %v4127 = vunpack.c.h.b16 %v3298
  %v4128 = vunpack.c.l.b16 %v3299
  %v4129 = vunpack.c.h.b16 %v3299
  %v4130 = vunpack.c.l.b16 %v3300
  %v4131 = vunpack.c.h.b16 %v3300
  %v4132 = vunpack.c.l.b16 %v3301
  %v4133 = vunpack.c.h.b16 %v3301
  %v4134 = vunpack.c.l.b16 %v3302
  %v4135 = vunpack.c.h.b16 %v3302
  %v4136 = vunpack.c.l.b16 %v3303
  %v4137 = vunpack.c.h.b16 %v3303
  %v4138 = vunpack.c.l.b16 %v3304
  %v4139 = vunpack.c.h.b16 %v3304
  %v4140 = vunpack.c.l.b16 %v3305
  %v4141 = vunpack.c.h.b16 %v3305
  %v4142 = vunpack.c.l.b16 %v3306
  %v4143 = vunpack.c.h.b16 %v3306
  %v4144 = vunpack.c.l.b16 %v3307
  %v4145 = vunpack.c.h.b16 %v3307
  %v4146 = vunpack.c.l.b16 %v3308
  %v4147 = vunpack.c.h.b16 %v3308
  %v4148 = vunpack.c.l.b16 %v3309
  %v4149 = vunpack.c.h.b16 %v3309
  %v4150 = vunpack.c.l.b16 %v3310
  %v4151 = vunpack.c.h.b16 %v3310
  %v4152 = vunpack.c.l.b16 %v3311
  %v4153 = vunpack.c.h.b16 %v3311
  %v4154 = vunpack.c.l.b16 %v3312
  %v4155 = vunpack.c.h.b16 %v3312
  %v4156 = vunpack.c.l.b16 %v3313
  %v4157 = vunpack.c.h.b16 %v3313
  %v4158 = vunpack.c.l.b16 %v3314
  %v4159 = vunpack.c.h.b16 %v3314
  %v4160 = vunpack.c.l.b16 %v3315
  %v4161 = vunpack.c.h.b16 %v3315
  %v4162 = vunpack.c.l.b16 %v3316
  %v4163 = vunpack.c.h.b16 %v3316
  %v4164 = vunpack.c.l.b16 %v3317
  %v4165 = vunpack.c.h.b16 %v3317
  %v4166 = vunpack.c.l.b16 %v3318
  %v4167 = vunpack.c.h.b16 %v3318
  %v4168 = vunpack.c.l.b16 %v3319
  %v4169 = vunpack.c.h.b16 %v3319
  %v4170 = vunpack.c.l.b16 %v3320
  %v4171 = vunpack.c.h.b16 %v3320
  %v4172 = vunpack.c.l.b16 %v3321
  %v4173 = vunpack.c.h.b16 %v3321
  %v4174 = vunpack.c.l.b16 %v3322
  %v4175 = vunpack.c.h.b16 %v3322
  %v4176 = vunpack.c.l.b16 %v3323
  %v4177 = vunpack.c.h.b16 %v3323
  %v4178 = vunpack.c.l.b16 %v3324
  %v4179 = vunpack.c.h.b16 %v3324
  %v4180 = vunpack.c.l.b16 %v3325
  %v4181 = vunpack.c.h.b16 %v3325
  %v4182 = vunpack.c.l.b16 %v3326
  %v4183 = vunpack.c.h.b16 %v3326
  %v4184 = vunpack.c.l.b16 %v3327
  %v4185 = vunpack.c.h.b16 %v3327
  %v4186 = vunpack.c.l.b16 %v3328
  %v4187 = vunpack.c.h.b16 %v3328
  %v4188 = vunpack.c.l.b16 %v3329
  %v4189 = vunpack.c.h.b16 %v3329
  %v4190 = vunpack.c.l.b16 %v3330
  %v4191 = vunpack.c.h.b16 %v3330
  %v4192 = vpack.c.b16 %v4068, %v4064
  %v4193 = vpack.c.b16 %v4069, %v4065
  %v4194 = vpack.c.b16 %v4070, %v4066
  %v4195 = vpack.c.b16 %v4071, %v4067
  %v4196 = vpack.c.b16 %v4076, %v4072
  %v4197 = vpack.c.b16 %v4077, %v4073
  %v4198 = vpack.c.b16 %v4078, %v4074
  %v4199 = vpack.c.b16 %v4079, %v4075
  %v4200 = vpack.c.b16 %v4084, %v4080
  %v4201 = vpack.c.b16 %v4085, %v4081
  %v4202 = vpack.c.b16 %v4086, %v4082
  %v4203 = vpack.c.b16 %v4087, %v4083
  %v4204 = vpack.c.b16 %v4092, %v4088
  %v4205 = vpack.c.b16 %v4093, %v4089
  %v4206 = vpack.c.b16 %v4094, %v4090
  %v4207 = vpack.c.b16 %v4095, %v4091
  %v4208 = vpack.c.b16 %v4100, %v4096
  %v4209 = vpack.c.b16 %v4101, %v4097
  %v4210 = vpack.c.b16 %v4102, %v4098
  %v4211 = vpack.c.b16 %v4103, %v4099
  %v4212 = vpack.c.b16 %v4108, %v4104
  %v4213 = vpack.c.b16 %v4109, %v4105
  %v4214 = vpack.c.b16 %v4110, %v4106
  %v4215 = vpack.c.b16 %v4111, %v4107
  %v4216 = vpack.c.b16 %v4116, %v4112
  %v4217 = vpack.c.b16 %v4117, %v4113
  %v4218 = vpack.c.b16 %v4118, %v4114
  %v4219 = vpack.c.b16 %v4119, %v4115
  %v4220 = vpack.c.b16 %v4124, %v4120
  %v4221 = vpack.c.b16 %v4125, %v4121
  %v4222 = vpack.c.b16 %v4126, %v4122
  %v4223 = vpack.c.b16 %v4127, %v4123
  %v4224 = vpack.c.b16 %v4132, %v4128
  %v4225 = vpack.c.b16 %v4133, %v4129
  %v4226 = vpack.c.b16 %v4134, %v4130
  %v4227 = vpack.c.b16 %v4135, %v4131
  %v4228 = vpack.c.b16 %v4140, %v4136
  %v4229 = vpack.c.b16 %v4141, %v4137
  %v4230 = vpack.c.b16 %v4142, %v4138
  %v4231 = vpack.c.b16 %v4143, %v4139
  %v4232 = vpack.c.b16 %v4148, %v4144
  %v4233 = vpack.c.b16 %v4149, %v4145
  %v4234 = vpack.c.b16 %v4150, %v4146
  %v4235 = vpack.c.b16 %v4151, %v4147
  %v4236 = vpack.c.b16 %v4156, %v4152
  %v4237 = vpack.c.b16 %v4157, %v4153
  %v4238 = vpack.c.b16 %v4158, %v4154
  %v4239 = vpack.c.b16 %v4159, %v4155
  %v4240 = vpack.c.b16 %v4164, %v4160
  %v4241 = vpack.c.b16 %v4165, %v4161
  %v4242 = vpack.c.b16 %v4166, %v4162
  %v4243 = vpack.c.b16 %v4167, %v4163
  %v4244 = vpack.c.b16 %v4172, %v4168
  %v4245 = vpack.c.b16 %v4173, %v4169
  %v4246 = vpack.c.b16 %v4174, %v4170
  %v4247 = vpack.c.b16 %v4175, %v4171
  %v4248 = vpack.c.b16 %v4180, %v4176
  %v4249 = vpack.c.b16 %v4181, %v4177
  %v4250 = vpack.c.b16 %v4182, %v4178
  %v4251 = vpack.c.b16 %v4183, %v4179
  %v4252 = vpack.c.b16 %v4188, %v4184
  %v4253 = vpack.c.b16 %v4189, %v4185
  %v4254 = vpack.c.b16 %v4190, %v4186
  %v4255 = vpack.c.b16 %v4191, %v4187
  %4320 = vmatprep.subr.bf16.mxu0 %v4193
  %4321 = vmatpush1.bf16.msra.mxu0 %v4192
  %4322 = vmatprep.subr.bf16.mxu0 %v4197
  %4323 = vmatpush1.bf16.msra.mxu0 %v4196
  %4324 = vmatprep.subr.bf16.mxu0 %v4201
  %4325 = vmatpush1.bf16.msra.mxu0 %v4200
  %4326 = vmatprep.subr.bf16.mxu0 %v4205
  %4327 = vmatpush1.bf16.msra.mxu0 %v4204
  %4328 = vmatprep.subr.bf16.mxu0 %v4209
  %4329 = vmatpush1.bf16.msra.mxu0 %v4208
  %4330 = vmatprep.subr.bf16.mxu0 %v4213
  %4331 = vmatpush1.bf16.msra.mxu0 %v4212
  %4332 = vmatprep.subr.bf16.mxu0 %v4217
  %4333 = vmatpush1.bf16.msra.mxu0 %v4216
  %4334 = vmatprep.subr.bf16.mxu0 %v4221
  %4335 = vmatpush1.bf16.msra.mxu0 %v4220
  %4336 = vmatprep.subr.bf16.mxu0 %v4225
  %4337 = vmatpush1.bf16.msra.mxu0 %v4224
  %4338 = vmatprep.subr.bf16.mxu0 %v4229
  %4339 = vmatpush1.bf16.msra.mxu0 %v4228
  %4340 = vmatprep.subr.bf16.mxu0 %v4233
  %4341 = vmatpush1.bf16.msra.mxu0 %v4232
  %4342 = vmatprep.subr.bf16.mxu0 %v4237
  %4343 = vmatpush1.bf16.msra.mxu0 %v4236
  %4344 = vmatprep.subr.bf16.mxu0 %v4241
  %4345 = vmatpush1.bf16.msra.mxu0 %v4240
  %4346 = vmatprep.subr.bf16.mxu0 %v4245
  %4347 = vmatpush1.bf16.msra.mxu0 %v4244
  %4348 = vmatprep.subr.bf16.mxu0 %v4249
  %4349 = vmatpush1.bf16.msra.mxu0 %v4248
  %4350 = vmatprep.subr.bf16.mxu0 %v4253
  %4351 = vmatpush1.bf16.msra.mxu0 %v4252
  %4352 = vmatprep.mubr.bf16.mxu0 %v2773
  %4353 = vmatmul.mubr.bf16.gmra.mrb[0].mxu0 %v2772
  %v4354 = vpop.f32.mrb[0].mxu0
  %v4355 = vadd.f32 %v3889, %v4354
  %v4356 = vpop.f32.mrb[0].mxu0
  %v4357 = vadd.f32 %v3891, %v4356
  %v4358 = vpop.f32.mrb[0].mxu0
  %v4359 = vadd.f32 %v3895, %v4358
  %v4360 = vpop.f32.mrb[0].mxu0
  %v4361 = vadd.f32 %v3897, %v4360
  %4362 = vmatprep.mubr.bf16.mxu0 %v2775
  %4363 = vmatmul.mubr.bf16.gmra.mrb[0].mxu0 %v2774
  %v4364 = vpop.f32.mrb[0].mxu0
  %v4365 = vadd.f32 %v3901, %v4364
  %v4366 = vpop.f32.mrb[0].mxu0
  %v4367 = vadd.f32 %v3903, %v4366
  %v4368 = vpop.f32.mrb[0].mxu0
  %v4369 = vadd.f32 %v3907, %v4368
  %v4370 = vpop.f32.mrb[0].mxu0
  %v4371 = vadd.f32 %v3909, %v4370
  %4372 = vdwg.mxu0
  %4373 = vmatprep.subr.bf16.mxu0 %v4195
  %4374 = vmatpush1.bf16.msra.mxu0 %v4194
  %4375 = vmatprep.subr.bf16.mxu0 %v4199
  %4376 = vmatpush1.bf16.msra.mxu0 %v4198
  %4377 = vmatprep.subr.bf16.mxu0 %v4203
  %4378 = vmatpush1.bf16.msra.mxu0 %v4202
  %4379 = vmatprep.subr.bf16.mxu0 %v4207
  %4380 = vmatpush1.bf16.msra.mxu0 %v4206
  %4381 = vmatprep.subr.bf16.mxu0 %v4211
  %4382 = vmatpush1.bf16.msra.mxu0 %v4210
  %4383 = vmatprep.subr.bf16.mxu0 %v4215
  %4384 = vmatpush1.bf16.msra.mxu0 %v4214
  %4385 = vmatprep.subr.bf16.mxu0 %v4219
  %4386 = vmatpush1.bf16.msra.mxu0 %v4218
  %4387 = vmatprep.subr.bf16.mxu0 %v4223
  %4388 = vmatpush1.bf16.msra.mxu0 %v4222
  %4389 = vmatprep.subr.bf16.mxu0 %v4227
  %4390 = vmatpush1.bf16.msra.mxu0 %v4226
  %4391 = vmatprep.subr.bf16.mxu0 %v4231
  %4392 = vmatpush1.bf16.msra.mxu0 %v4230
  %4393 = vmatprep.subr.bf16.mxu0 %v4235
  %4394 = vmatpush1.bf16.msra.mxu0 %v4234
  %4395 = vmatprep.subr.bf16.mxu0 %v4239
  %4396 = vmatpush1.bf16.msra.mxu0 %v4238
  %4397 = vmatprep.subr.bf16.mxu0 %v4243
  %4398 = vmatpush1.bf16.msra.mxu0 %v4242
  %4399 = vmatprep.subr.bf16.mxu0 %v4247
  %4400 = vmatpush1.bf16.msra.mxu0 %v4246
  %4401 = vmatprep.subr.bf16.mxu0 %v4251
  %4402 = vmatpush1.bf16.msra.mxu0 %v4250
  %4403 = vmatprep.subr.bf16.mxu0 %v4255
  %4404 = vmatpush1.bf16.msra.mxu0 %v4254
  %4405 = vmatprep.mubr.bf16.mxu0 %v2773
  %4406 = vmatmul.mubr.bf16.gmra.mrb[0].mxu0 %v2772
  %v4407 = vpop.f32.mrb[0].mxu0
  %v4408 = vadd.f32 %v3978, %v4407
  %v4409 = vpop.f32.mrb[0].mxu0
  %v4410 = vadd.f32 %v3980, %v4409
  %v4411 = vpop.f32.mrb[0].mxu0
  %v4412 = vadd.f32 %v3984, %v4411
  %v4413 = vpop.f32.mrb[0].mxu0
  %v4414 = vadd.f32 %v3986, %v4413
  %4415 = vmatprep.mubr.bf16.mxu0 %v2775
  %4416 = vmatmul.mubr.bf16.gmra.mrb[0].mxu0 %v2774
  %v4417 = vpop.f32.mrb[0].mxu0
  %v4418 = vadd.f32 %v3990, %v4417
  %v4419 = vpop.f32.mrb[0].mxu0
  %v4420 = vadd.f32 %v3992, %v4419
  %v4421 = vpop.f32.mrb[0].mxu0
  %v4422 = vadd.f32 %v3996, %v4421
  %v4423 = vpop.f32.mrb[0].mxu0
  %v4424 = vadd.f32 %v3998, %v4423
  %4425 = vdwg.mxu0
  %4426 = vmatprep.subr.mxu0 %v3753
  %4427 = vmatpush1.msra.mxu0 %v3751
  %4428 = vmatprep.subr.mxu0 %v3757
  %4429 = vmatpush1.msra.mxu0 %v3755
  %4430 = vmatprep.subr.mxu0 %v3763
  %4431 = vmatpush1.msra.mxu0 %v3761
  %4432 = vmatprep.subr.mxu0 %v3767
  %4433 = vmatpush1.msra.mxu0 %v3765
  %4434 = vmatprep.subr.mxu0 0.0
  %4435 = vmatpush1.msra.mxu0 0.0
  %4436 = vmatprep.subr.mxu0 0.0
  %4437 = vmatpush1.msra.mxu0 0.0
  %4438 = vmatprep.subr.mxu0 0.0
  %4439 = vmatpush1.msra.mxu0 0.0
  %4440 = vmatprep.subr.mxu0 0.0
  %4441 = vmatpush1.msra.mxu0 0.0
  %4442 = vmatprep.subr.mxu0 0.0
  %4443 = vmatpush1.msra.mxu0 0.0
  %4444 = vmatprep.subr.mxu0 0.0
  %4445 = vmatpush1.msra.mxu0 0.0
  %4446 = vmatprep.subr.mxu0 0.0
  %4447 = vmatpush1.msra.mxu0 0.0
  %4448 = vmatprep.subr.mxu0 0.0
  %4449 = vmatpush1.msra.mxu0 0.0
  %4450 = vmatprep.subr.mxu0 0.0
  %4451 = vmatpush1.msra.mxu0 0.0
  %4452 = vmatprep.subr.mxu0 0.0
  %4453 = vmatpush1.msra.mxu0 0.0
  %4454 = vmatprep.subr.mxu0 0.0
  %4455 = vmatpush1.msra.mxu0 0.0
  %4456 = vmatprep.subr.mxu0 0.0
  %4457 = vmatpush1.msra.mxu0 0.0
  %4458 = vmatprep.subr.mxu0 0.0
  %4459 = vmatpush1.msra.mxu0 0.0
  %4460 = vmatprep.subr.mxu0 0.0
  %4461 = vmatpush1.msra.mxu0 0.0
  %4462 = vmatprep.subr.mxu0 0.0
  %4463 = vmatpush1.msra.mxu0 0.0
  %4464 = vmatprep.subr.mxu0 0.0
  %4465 = vmatpush1.msra.mxu0 0.0
  %4466 = vmatprep.subr.mxu0 0.0
  %4467 = vmatpush1.msra.mxu0 0.0
  %4468 = vmatprep.subr.mxu0 0.0
  %4469 = vmatpush1.msra.mxu0 0.0
  %4470 = vmatprep.subr.mxu0 0.0
  %4471 = vmatpush1.msra.mxu0 0.0
  %4472 = vmatprep.subr.mxu0 0.0
  %4473 = vmatpush1.msra.mxu0 0.0
  %4474 = vmatprep.subr.mxu0 0.0
  %4475 = vmatpush1.msra.mxu0 0.0
  %4476 = vmatprep.subr.mxu0 0.0
  %4477 = vmatpush1.msra.mxu0 0.0
  %4478 = vmatprep.subr.mxu0 0.0
  %4479 = vmatpush1.msra.mxu0 0.0
  %4480 = vmatprep.subr.mxu0 0.0
  %4481 = vmatpush1.msra.mxu0 0.0
  %4482 = vmatprep.subr.mxu0 0.0
  %4483 = vmatpush1.msra.mxu0 0.0
  %4484 = vmatprep.subr.mxu0 0.0
  %4485 = vmatpush1.msra.mxu0 0.0
  %4486 = vmatprep.subr.mxu0 0.0
  %4487 = vmatpush1.msra.mxu0 0.0
  %4488 = vmatprep.subr.mxu0 0.0
  %4489 = vmatpush1.msra.mxu0 0.0
  %4490 = vmatprep.mubr.f32.mxu0 0.0
  %4491 = vmatmul.mubr.f32.gmra.mrb[0].mxu0 %v2129
  %v4492 = vpop.f32.mrb[0].mxu0
  %v4493 = vadd.f32 0.0, %v4492
  %v4494 = vpop.f32.mrb[0].mxu0
  %v4495 = vadd.f32 0.0, %v4494
  %4496 = vmatprep.mubr.f32.mxu0 0.0
  %4497 = vmatmul.mubr.f32.gmra.mrb[0].mxu0 %v2132
  %v4498 = vpop.f32.mrb[0].mxu0
  %v4499 = vadd.f32 0.0, %v4498
  %v4500 = vpop.f32.mrb[0].mxu0
  %v4501 = vadd.f32 0.0, %v4500
  %4502 = vmatprep.mubr.f32.mxu0 0.0
  %4503 = vmatmul.mubr.f32.gmra.mrb[0].mxu0 %v2135
  %v4504 = vpop.f32.mrb[0].mxu0
  %v4505 = vadd.f32 0.0, %v4504
  %v4506 = vpop.f32.mrb[0].mxu0
  %v4507 = vadd.f32 0.0, %v4506
  %4508 = vmatprep.mubr.f32.mxu0 0.0
  %4509 = vmatmul.mubr.f32.gmra.mrb[0].mxu0 %v2138
  %v4510 = vpop.f32.mrb[0].mxu0
  %v4511 = vadd.f32 0.0, %v4510
  %v4512 = vpop.f32.mrb[0].mxu0
  %v4513 = vadd.f32 0.0, %v4512
  %4514 = vdwg.mxu0
  %4515 = vmatprep.subr.mxu0 %v3806
  %4516 = vmatpush1.msra.mxu0 %v3804
  %4517 = vmatprep.subr.mxu0 %v3810
  %4518 = vmatpush1.msra.mxu0 %v3808
  %4519 = vmatprep.subr.mxu0 %v3816
  %4520 = vmatpush1.msra.mxu0 %v3814
  %4521 = vmatprep.subr.mxu0 %v3820
  %4522 = vmatpush1.msra.mxu0 %v3818
  %4523 = vmatprep.subr.mxu0 0.0
  %4524 = vmatpush1.msra.mxu0 0.0
  %4525 = vmatprep.subr.mxu0 0.0
  %4526 = vmatpush1.msra.mxu0 0.0
  %4527 = vmatprep.subr.mxu0 0.0
  %4528 = vmatpush1.msra.mxu0 0.0
  %4529 = vmatprep.subr.mxu0 0.0
  %4530 = vmatpush1.msra.mxu0 0.0
  %4531 = vmatprep.subr.mxu0 0.0
  %4532 = vmatpush1.msra.mxu0 0.0
  %4533 = vmatprep.subr.mxu0 0.0
  %4534 = vmatpush1.msra.mxu0 0.0
  %4535 = vmatprep.subr.mxu0 0.0
  %4536 = vmatpush1.msra.mxu0 0.0
  %4537 = vmatprep.subr.mxu0 0.0
  %4538 = vmatpush1.msra.mxu0 0.0
  %4539 = vmatprep.subr.mxu0 0.0
  %4540 = vmatpush1.msra.mxu0 0.0
  %4541 = vmatprep.subr.mxu0 0.0
  %4542 = vmatpush1.msra.mxu0 0.0
  %4543 = vmatprep.subr.mxu0 0.0
  %4544 = vmatpush1.msra.mxu0 0.0
  %4545 = vmatprep.subr.mxu0 0.0
  %4546 = vmatpush1.msra.mxu0 0.0
  %4547 = vmatprep.subr.mxu0 0.0
  %4548 = vmatpush1.msra.mxu0 0.0
  %4549 = vmatprep.subr.mxu0 0.0
  %4550 = vmatpush1.msra.mxu0 0.0
  %4551 = vmatprep.subr.mxu0 0.0
  %4552 = vmatpush1.msra.mxu0 0.0
  %4553 = vmatprep.subr.mxu0 0.0
  %4554 = vmatpush1.msra.mxu0 0.0
  %4555 = vmatprep.subr.mxu0 0.0
  %4556 = vmatpush1.msra.mxu0 0.0
  %4557 = vmatprep.subr.mxu0 0.0
  %4558 = vmatpush1.msra.mxu0 0.0
  %4559 = vmatprep.subr.mxu0 0.0
  %4560 = vmatpush1.msra.mxu0 0.0
  %4561 = vmatprep.subr.mxu0 0.0
  %4562 = vmatpush1.msra.mxu0 0.0
  %4563 = vmatprep.subr.mxu0 0.0
  %4564 = vmatpush1.msra.mxu0 0.0
  %4565 = vmatprep.subr.mxu0 0.0
  %4566 = vmatpush1.msra.mxu0 0.0
  %4567 = vmatprep.subr.mxu0 0.0
  %4568 = vmatpush1.msra.mxu0 0.0
  %4569 = vmatprep.subr.mxu0 0.0
  %4570 = vmatpush1.msra.mxu0 0.0
  %4571 = vmatprep.subr.mxu0 0.0
  %4572 = vmatpush1.msra.mxu0 0.0
  %4573 = vmatprep.subr.mxu0 0.0
  %4574 = vmatpush1.msra.mxu0 0.0
  %4575 = vmatprep.subr.mxu0 0.0
  %4576 = vmatpush1.msra.mxu0 0.0
  %4577 = vmatprep.subr.mxu0 0.0
  %4578 = vmatpush1.msra.mxu0 0.0
  %4579 = vmatprep.mubr.f32.mxu0 0.0
  %4580 = vmatmul.mubr.f32.gmra.mrb[0].mxu0 %v2129
  %v4581 = vpop.f32.mrb[0].mxu0
  %v4582 = vadd.f32 0.0, %v4581
  %v4583 = vpop.f32.mrb[0].mxu0
  %v4584 = vadd.f32 0.0, %v4583
  %4585 = vmatprep.mubr.f32.mxu0 0.0
  %4586 = vmatmul.mubr.f32.gmra.mrb[0].mxu0 %v2132
  %v4587 = vpop.f32.mrb[0].mxu0
  %v4588 = vadd.f32 0.0, %v4587
  %v4589 = vpop.f32.mrb[0].mxu0
  %v4590 = vadd.f32 0.0, %v4589
  %4591 = vmatprep.mubr.f32.mxu0 0.0
  %4592 = vmatmul.mubr.f32.gmra.mrb[0].mxu0 %v2135
  %v4593 = vpop.f32.mrb[0].mxu0
  %v4594 = vadd.f32 0.0, %v4593
  %v4595 = vpop.f32.mrb[0].mxu0
  %v4596 = vadd.f32 0.0, %v4595
  %4597 = vmatprep.mubr.f32.mxu0 0.0
  %4598 = vmatmul.mubr.f32.gmra.mrb[0].mxu0 %v2138
  %v4599 = vpop.f32.mrb[0].mxu0
  %v4600 = vadd.f32 0.0, %v4599
  %v4601 = vpop.f32.mrb[0].mxu0
  %v4602 = vadd.f32 0.0, %v4601
  %4603 = vdwg.mxu0
  %v4604 = vadd.f32 %v4355, %v4493
  %v4605 = vadd.f32 %v4357, %v4495
  %v4606 = vadd.f32 %v4408, %v4582
  %v4607 = vadd.f32 %v4410, %v4584
  %v4608 = vadd.f32 %v4359, %v4499
  %v4609 = vadd.f32 %v4361, %v4501
  %v4610 = vadd.f32 %v4412, %v4588
  %v4611 = vadd.f32 %v4414, %v4590
  %v4612 = vadd.f32 %v4365, %v4505
  %v4613 = vadd.f32 %v4367, %v4507
  %v4614 = vadd.f32 %v4418, %v4594
  %v4615 = vadd.f32 %v4420, %v4596
  %v4616 = vadd.f32 %v4369, %v4511
  %v4617 = vadd.f32 %v4371, %v4513
  %v4618 = vadd.f32 %v4422, %v4600
  %v4619 = vadd.f32 %v4424, %v4602
  %v4620 = vld [vmem:[%s9] sm:$0xf]
  %v4622 = vlaneseq
  %v4623 = vshrl.u32 %v4622, 7
  %v4624 = vsub.s32 0, %v4623
  %v4625 = vrot.slane %v4620, %v4624
  %v4626 = vlaneseq
  %v4627 = vshrl.u32 %v4626, 7
  %v4628 = vsub.s32 1, %v4627
  %v4629 = vrot.slane %v4620, %v4628
  %v4630 = vlaneseq
  %v4631 = vshrl.u32 %v4630, 7
  %v4632 = vsub.s32 2, %v4631
  %v4633 = vrot.slane %v4620, %v4632
  %v4634 = vlaneseq
  %v4635 = vshrl.u32 %v4634, 7
  %v4636 = vsub.s32 3, %v4635
  %v4637 = vrot.slane %v4620, %v4636
  %v4642 = vadd.f32 %v4604, %v4625
  %v4643 = vadd.f32 %v4605, %v4629
  %v4644 = vadd.f32 %v4606, %v4633
  %v4645 = vadd.f32 %v4607, %v4637
  %v4646 = vadd.f32 %v4608, %v4625
  %v4647 = vadd.f32 %v4609, %v4629
  %v4648 = vadd.f32 %v4610, %v4633
  %v4649 = vadd.f32 %v4611, %v4637
  %v4650 = vadd.f32 %v4612, %v4625
  %v4651 = vadd.f32 %v4613, %v4629
  %v4652 = vadd.f32 %v4614, %v4633
  %v4653 = vadd.f32 %v4615, %v4637
  %v4654 = vadd.f32 %v4616, %v4625
  %v4655 = vadd.f32 %v4617, %v4629
  %v4656 = vadd.f32 %v4618, %v4633
  %v4657 = vadd.f32 %v4619, %v4637
  %v4658 = vmax.f32 %v4642, 0.0
  %v4659 = vmax.f32 %v4643, 0.0
  %v4660 = vmax.f32 %v4644, 0.0
  %v4661 = vmax.f32 %v4645, 0.0
  %v4662 = vmax.f32 %v4646, 0.0
  %v4663 = vmax.f32 %v4647, 0.0
  %v4664 = vmax.f32 %v4648, 0.0
  %v4665 = vmax.f32 %v4649, 0.0
  %v4666 = vmax.f32 %v4650, 0.0
  %v4667 = vmax.f32 %v4651, 0.0
  %v4668 = vmax.f32 %v4652, 0.0
  %v4669 = vmax.f32 %v4653, 0.0
  %v4670 = vmax.f32 %v4654, 0.0
  %v4671 = vmax.f32 %v4655, 0.0
  %v4672 = vmax.f32 %v4656, 0.0
  %v4673 = vmax.f32 %v4657, 0.0
  %v4674 = vld [vmem:[%s1] sm:$0xff]
  %v4675 = vld [vmem:[%s1 + $0x8] sm:$0xff]
  %v4676 = vld [vmem:[%s1 + $0x10] sm:$0xff]
  %v4677 = vld [vmem:[%s1 + $0x18] sm:$0xff]
  %4679 = vset.pattern.permute.xlu0 0
  %4680 = vperm.xlu0 %4679, %v4674
  %v4681 = vpop.permute.xlu0 %4680
  %4684 = vset.pattern.permute.xlu0 0
  %4685 = vperm.xlu0 %4684, %v4675
  %v4686 = vpop.permute.xlu0 %4685
  %4689 = vset.pattern.permute.xlu0 0
  %4690 = vperm.xlu0 %4689, %v4676
  %v4691 = vpop.permute.xlu0 %4690
  %4694 = vset.pattern.permute.xlu0 0
  %4695 = vperm.xlu0 %4694, %v4677
  %v4696 = vpop.permute.xlu0 %4695
  %v4698 = vmul.f32 %v4658, %v4681
  %v4699 = vmul.f32 %v4659, %v4681
  %v4700 = vmul.f32 %v4660, %v4681
  %v4701 = vmul.f32 %v4661, %v4681
  %v4702 = vmul.f32 %v4662, %v4686
  %v4703 = vmul.f32 %v4663, %v4686
  %v4704 = vmul.f32 %v4664, %v4686
  %v4705 = vmul.f32 %v4665, %v4686
  %v4706 = vmul.f32 %v4666, %v4691
  %v4707 = vmul.f32 %v4667, %v4691
  %v4708 = vmul.f32 %v4668, %v4691
  %v4709 = vmul.f32 %v4669, %v4691
  %v4710 = vmul.f32 %v4670, %v4696
  %v4711 = vmul.f32 %v4671, %v4696
  %v4712 = vmul.f32 %v4672, %v4696
  %v4713 = vmul.f32 %v4673, %v4696
  %v4714 = vpack.c.bf16 %v4702, %v4698
  %v4715 = vpack.c.bf16 %v4703, %v4699
  %v4716 = vpack.c.bf16 %v4704, %v4700
  %v4717 = vpack.c.bf16 %v4705, %v4701
  %v4718 = vpack.c.bf16 %v4710, %v4706
  %v4719 = vpack.c.bf16 %v4711, %v4707
  %v4720 = vpack.c.bf16 %v4712, %v4708
  %v4721 = vpack.c.bf16 %v4713, %v4709
  %s4722 = smul.u32 4, 3
  %s4723 = smul.u32 %s4722, 64
  %s4724 = smul.u32 %s4723, 2
  %s4725 = sshll.u32 %s4724, 4
  %4726 = dma.done [#allocation5], %s4725
  %v4727 = vld [vmem:[#allocation2] sm:$0xff]
  %v4728 = vld [vmem:[#allocation2 + $0x8] sm:$0xff]
  %v4729 = vld [vmem:[#allocation2 + $0x10] sm:$0xff]
  %v4730 = vld [vmem:[#allocation2 + $0x18] sm:$0xff]
  %v4731 = vld [vmem:[#allocation2 + $0x20] sm:$0xff]
  %v4732 = vld [vmem:[#allocation2 + $0x28] sm:$0xff]
  %v4733 = vld [vmem:[#allocation2 + $0x30] sm:$0xff]
  %v4734 = vld [vmem:[#allocation2 + $0x38] sm:$0xff]
  %v4735 = vld [vmem:[#allocation2 + $0x40] sm:$0xff]
  %v4736 = vld [vmem:[#allocation2 + $0x48] sm:$0xff]
  %v4737 = vld [vmem:[#allocation2 + $0x50] sm:$0xff]
  %v4738 = vld [vmem:[#allocation2 + $0x58] sm:$0xff]
  %v4739 = vld [vmem:[#allocation2 + $0x60] sm:$0xff]
  %v4740 = vld [vmem:[#allocation2 + $0x68] sm:$0xff]
  %v4741 = vld [vmem:[#allocation2 + $0x70] sm:$0xff]
  %v4742 = vld [vmem:[#allocation2 + $0x78] sm:$0xff]
  %v4743 = vld [vmem:[#allocation2 + $0x80] sm:$0xff]
  %v4744 = vld [vmem:[#allocation2 + $0x88] sm:$0xff]
  %v4745 = vld [vmem:[#allocation2 + $0x90] sm:$0xff]
  %v4746 = vld [vmem:[#allocation2 + $0x98] sm:$0xff]
  %v4747 = vld [vmem:[#allocation2 + $0xa0] sm:$0xff]
  %v4748 = vld [vmem:[#allocation2 + $0xa8] sm:$0xff]
  %v4749 = vld [vmem:[#allocation2 + $0xb0] sm:$0xff]
  %v4750 = vld [vmem:[#allocation2 + $0xb8] sm:$0xff]
  %v4751 = vld [vmem:[#allocation2 + $0xc0] sm:$0xff]
  %v4752 = vld [vmem:[#allocation2 + $0xc8] sm:$0xff]
  %v4753 = vld [vmem:[#allocation2 + $0xd0] sm:$0xff]
  %v4754 = vld [vmem:[#allocation2 + $0xd8] sm:$0xff]
  %v4755 = vld [vmem:[#allocation2 + $0xe0] sm:$0xff]
  %v4756 = vld [vmem:[#allocation2 + $0xe8] sm:$0xff]
  %v4757 = vld [vmem:[#allocation2 + $0xf0] sm:$0xff]
  %v4758 = vld [vmem:[#allocation2 + $0xf8] sm:$0xff]
  %v4759 = vld [vmem:[#allocation2 + $0x100] sm:$0xff]
  %v4760 = vld [vmem:[#allocation2 + $0x108] sm:$0xff]
  %v4761 = vld [vmem:[#allocation2 + $0x110] sm:$0xff]
  %v4762 = vld [vmem:[#allocation2 + $0x118] sm:$0xff]
  %v4763 = vld [vmem:[#allocation2 + $0x120] sm:$0xff]
  %v4764 = vld [vmem:[#allocation2 + $0x128] sm:$0xff]
  %v4765 = vld [vmem:[#allocation2 + $0x130] sm:$0xff]
  %v4766 = vld [vmem:[#allocation2 + $0x138] sm:$0xff]
  %v4767 = vld [vmem:[#allocation2 + $0x140] sm:$0xff]
  %v4768 = vld [vmem:[#allocation2 + $0x148] sm:$0xff]
  %v4769 = vld [vmem:[#allocation2 + $0x150] sm:$0xff]
  %v4770 = vld [vmem:[#allocation2 + $0x158] sm:$0xff]
  %v4771 = vld [vmem:[#allocation2 + $0x160] sm:$0xff]
  %v4772 = vld [vmem:[#allocation2 + $0x168] sm:$0xff]
  %v4773 = vld [vmem:[#allocation2 + $0x170] sm:$0xff]
  %v4774 = vld [vmem:[#allocation2 + $0x178] sm:$0xff]
  %v4775 = vld [vmem:[#allocation2 + $0x180] sm:$0xff]
  %v4776 = vld [vmem:[#allocation2 + $0x188] sm:$0xff]
  %v4777 = vld [vmem:[#allocation2 + $0x190] sm:$0xff]
  %v4778 = vld [vmem:[#allocation2 + $0x198] sm:$0xff]
  %v4779 = vld [vmem:[#allocation2 + $0x1a0] sm:$0xff]
  %v4780 = vld [vmem:[#allocation2 + $0x1a8] sm:$0xff]
  %v4781 = vld [vmem:[#allocation2 + $0x1b0] sm:$0xff]
  %v4782 = vld [vmem:[#allocation2 + $0x1b8] sm:$0xff]
  %v4783 = vld [vmem:[#allocation2 + $0x1c0] sm:$0xff]
  %v4784 = vld [vmem:[#allocation2 + $0x1c8] sm:$0xff]
  %v4785 = vld [vmem:[#allocation2 + $0x1d0] sm:$0xff]
  %v4786 = vld [vmem:[#allocation2 + $0x1d8] sm:$0xff]
  %v4787 = vld [vmem:[#allocation2 + $0x1e0] sm:$0xff]
  %v4788 = vld [vmem:[#allocation2 + $0x1e8] sm:$0xff]
  %v4789 = vld [vmem:[#allocation2 + $0x1f0] sm:$0xff]
  %v4790 = vld [vmem:[#allocation2 + $0x1f8] sm:$0xff]
  %4791 = vmatprep.subr.bf16.mxu0 %v4728
  %4792 = vmatpush1.bf16.msra.mxu0 %v4727
  %4793 = vmatprep.subr.bf16.mxu0 %v4730
  %4794 = vmatpush1.bf16.msra.mxu0 %v4729
  %4795 = vmatprep.subr.bf16.mxu0 %v4732
  %4796 = vmatpush1.bf16.msra.mxu0 %v4731
  %4797 = vmatprep.subr.bf16.mxu0 %v4734
  %4798 = vmatpush1.bf16.msra.mxu0 %v4733
  %4799 = vmatprep.subr.bf16.mxu0 %v4736
  %4800 = vmatpush1.bf16.msra.mxu0 %v4735
  %4801 = vmatprep.subr.bf16.mxu0 %v4738
  %4802 = vmatpush1.bf16.msra.mxu0 %v4737
  %4803 = vmatprep.subr.bf16.mxu0 %v4740
  %4804 = vmatpush1.bf16.msra.mxu0 %v4739
  %4805 = vmatprep.subr.bf16.mxu0 %v4742
  %4806 = vmatpush1.bf16.msra.mxu0 %v4741
  %4807 = vmatprep.subr.bf16.mxu0 %v4744
  %4808 = vmatpush1.bf16.msra.mxu0 %v4743
  %4809 = vmatprep.subr.bf16.mxu0 %v4746
  %4810 = vmatpush1.bf16.msra.mxu0 %v4745
  %4811 = vmatprep.subr.bf16.mxu0 %v4748
  %4812 = vmatpush1.bf16.msra.mxu0 %v4747
  %4813 = vmatprep.subr.bf16.mxu0 %v4750
  %4814 = vmatpush1.bf16.msra.mxu0 %v4749
  %4815 = vmatprep.subr.bf16.mxu0 %v4752
  %4816 = vmatpush1.bf16.msra.mxu0 %v4751
  %4817 = vmatprep.subr.bf16.mxu0 %v4754
  %4818 = vmatpush1.bf16.msra.mxu0 %v4753
  %4819 = vmatprep.subr.bf16.mxu0 %v4756
  %4820 = vmatpush1.bf16.msra.mxu0 %v4755
  %4821 = vmatprep.subr.bf16.mxu0 %v4758
  %4822 = vmatpush1.bf16.msra.mxu0 %v4757
  %4823 = vmatprep.mubr.bf16.mxu0 %v4715
  %4824 = vmatmul.mubr.bf16.gmra.mrb[0].mxu0 %v4714
  %v4825 = vpop.f32.mrb[0].mxu0
  %v4826 = vadd.f32 0.0, %v4825
  %v4827 = vpop.f32.mrb[0].mxu0
  %v4828 = vadd.f32 0.0, %v4827
  %v4829 = vpop.f32.mrb[0].mxu0
  %v4830 = vadd.f32 0.0, %v4829
  %v4831 = vpop.f32.mrb[0].mxu0
  %v4832 = vadd.f32 0.0, %v4831
  %4833 = vmatprep.mubr.bf16.mxu0 %v4719
  %4834 = vmatmul.mubr.bf16.gmra.mrb[0].mxu0 %v4718
  %v4835 = vpop.f32.mrb[0].mxu0
  %v4836 = vadd.f32 0.0, %v4835
  %v4837 = vpop.f32.mrb[0].mxu0
  %v4838 = vadd.f32 0.0, %v4837
  %v4839 = vpop.f32.mrb[0].mxu0
  %v4840 = vadd.f32 0.0, %v4839
  %v4841 = vpop.f32.mrb[0].mxu0
  %v4842 = vadd.f32 0.0, %v4841
  %4843 = vdwg.mxu0
  %4844 = vmatprep.subr.bf16.mxu0 %v4760
  %4845 = vmatpush1.bf16.msra.mxu0 %v4759
  %4846 = vmatprep.subr.bf16.mxu0 %v4762
  %4847 = vmatpush1.bf16.msra.mxu0 %v4761
  %4848 = vmatprep.subr.bf16.mxu0 %v4764
  %4849 = vmatpush1.bf16.msra.mxu0 %v4763
  %4850 = vmatprep.subr.bf16.mxu0 %v4766
  %4851 = vmatpush1.bf16.msra.mxu0 %v4765
  %4852 = vmatprep.subr.bf16.mxu0 %v4768
  %4853 = vmatpush1.bf16.msra.mxu0 %v4767
  %4854 = vmatprep.subr.bf16.mxu0 %v4770
  %4855 = vmatpush1.bf16.msra.mxu0 %v4769
  %4856 = vmatprep.subr.bf16.mxu0 %v4772
  %4857 = vmatpush1.bf16.msra.mxu0 %v4771
  %4858 = vmatprep.subr.bf16.mxu0 %v4774
  %4859 = vmatpush1.bf16.msra.mxu0 %v4773
  %4860 = vmatprep.subr.bf16.mxu0 %v4776
  %4861 = vmatpush1.bf16.msra.mxu0 %v4775
  %4862 = vmatprep.subr.bf16.mxu0 %v4778
  %4863 = vmatpush1.bf16.msra.mxu0 %v4777
  %4864 = vmatprep.subr.bf16.mxu0 %v4780
  %4865 = vmatpush1.bf16.msra.mxu0 %v4779
  %4866 = vmatprep.subr.bf16.mxu0 %v4782
  %4867 = vmatpush1.bf16.msra.mxu0 %v4781
  %4868 = vmatprep.subr.bf16.mxu0 %v4784
  %4869 = vmatpush1.bf16.msra.mxu0 %v4783
  %4870 = vmatprep.subr.bf16.mxu0 %v4786
  %4871 = vmatpush1.bf16.msra.mxu0 %v4785
  %4872 = vmatprep.subr.bf16.mxu0 %v4788
  %4873 = vmatpush1.bf16.msra.mxu0 %v4787
  %4874 = vmatprep.subr.bf16.mxu0 %v4790
  %4875 = vmatpush1.bf16.msra.mxu0 %v4789
  %4876 = vmatprep.mubr.bf16.mxu0 %v4717
  %4877 = vmatmul.mubr.bf16.gmra.mrb[0].mxu0 %v4716
  %v4878 = vpop.f32.mrb[0].mxu0
  %v4879 = vadd.f32 %v4826, %v4878
  %v4880 = vpop.f32.mrb[0].mxu0
  %v4881 = vadd.f32 %v4828, %v4880
  %v4882 = vpop.f32.mrb[0].mxu0
  %v4883 = vadd.f32 %v4830, %v4882
  %v4884 = vpop.f32.mrb[0].mxu0
  %v4885 = vadd.f32 %v4832, %v4884
  %4886 = vmatprep.mubr.bf16.mxu0 %v4721
  %4887 = vmatmul.mubr.bf16.gmra.mrb[0].mxu0 %v4720
  %v4888 = vpop.f32.mrb[0].mxu0
  %v4889 = vadd.f32 %v4836, %v4888
  %v4890 = vpop.f32.mrb[0].mxu0
  %v4891 = vadd.f32 %v4838, %v4890
  %v4892 = vpop.f32.mrb[0].mxu0
  %v4893 = vadd.f32 %v4840, %v4892
  %v4894 = vpop.f32.mrb[0].mxu0
  %v4895 = vadd.f32 %v4842, %v4894
  %4896 = vdwg.mxu0
  %s4897 = scalar_lea.vmem [#allocation2], 512
  %v4898 = vld [vmem:[%s4897] sm:$0xff]
  %v4899 = vld [vmem:[%s4897 + $0x8] sm:$0xff]
  %v4900 = vld [vmem:[%s4897 + $0x10] sm:$0xff]
  %v4901 = vld [vmem:[%s4897 + $0x18] sm:$0xff]
  %v4902 = vld [vmem:[%s4897 + $0x20] sm:$0xff]
  %v4903 = vld [vmem:[%s4897 + $0x28] sm:$0xff]
  %v4904 = vld [vmem:[%s4897 + $0x30] sm:$0xff]
  %v4905 = vld [vmem:[%s4897 + $0x38] sm:$0xff]
  %v4906 = vld [vmem:[%s4897 + $0x40] sm:$0xff]
  %v4907 = vld [vmem:[%s4897 + $0x48] sm:$0xff]
  %v4908 = vld [vmem:[%s4897 + $0x50] sm:$0xff]
  %v4909 = vld [vmem:[%s4897 + $0x58] sm:$0xff]
  %v4910 = vld [vmem:[%s4897 + $0x60] sm:$0xff]
  %v4911 = vld [vmem:[%s4897 + $0x68] sm:$0xff]
  %v4912 = vld [vmem:[%s4897 + $0x70] sm:$0xff]
  %v4913 = vld [vmem:[%s4897 + $0x78] sm:$0xff]
  %v4914 = vld [vmem:[%s4897 + $0x80] sm:$0xff]
  %v4915 = vld [vmem:[%s4897 + $0x88] sm:$0xff]
  %v4916 = vld [vmem:[%s4897 + $0x90] sm:$0xff]
  %v4917 = vld [vmem:[%s4897 + $0x98] sm:$0xff]
  %v4918 = vld [vmem:[%s4897 + $0xa0] sm:$0xff]
  %v4919 = vld [vmem:[%s4897 + $0xa8] sm:$0xff]
  %v4920 = vld [vmem:[%s4897 + $0xb0] sm:$0xff]
  %v4921 = vld [vmem:[%s4897 + $0xb8] sm:$0xff]
  %v4922 = vld [vmem:[%s4897 + $0xc0] sm:$0xff]
  %v4923 = vld [vmem:[%s4897 + $0xc8] sm:$0xff]
  %v4924 = vld [vmem:[%s4897 + $0xd0] sm:$0xff]
  %v4925 = vld [vmem:[%s4897 + $0xd8] sm:$0xff]
  %v4926 = vld [vmem:[%s4897 + $0xe0] sm:$0xff]
  %v4927 = vld [vmem:[%s4897 + $0xe8] sm:$0xff]
  %v4928 = vld [vmem:[%s4897 + $0xf0] sm:$0xff]
  %v4929 = vld [vmem:[%s4897 + $0xf8] sm:$0xff]
  %v4930 = vld [vmem:[%s4897 + $0x100] sm:$0xff]
  %v4931 = vld [vmem:[%s4897 + $0x108] sm:$0xff]
  %v4932 = vld [vmem:[%s4897 + $0x110] sm:$0xff]
  %v4933 = vld [vmem:[%s4897 + $0x118] sm:$0xff]
  %v4934 = vld [vmem:[%s4897 + $0x120] sm:$0xff]
  %v4935 = vld [vmem:[%s4897 + $0x128] sm:$0xff]
  %v4936 = vld [vmem:[%s4897 + $0x130] sm:$0xff]
  %v4937 = vld [vmem:[%s4897 + $0x138] sm:$0xff]
  %v4938 = vld [vmem:[%s4897 + $0x140] sm:$0xff]
  %v4939 = vld [vmem:[%s4897 + $0x148] sm:$0xff]
  %v4940 = vld [vmem:[%s4897 + $0x150] sm:$0xff]
  %v4941 = vld [vmem:[%s4897 + $0x158] sm:$0xff]
  %v4942 = vld [vmem:[%s4897 + $0x160] sm:$0xff]
  %v4943 = vld [vmem:[%s4897 + $0x168] sm:$0xff]
  %v4944 = vld [vmem:[%s4897 + $0x170] sm:$0xff]
  %v4945 = vld [vmem:[%s4897 + $0x178] sm:$0xff]
  %v4946 = vld [vmem:[%s4897 + $0x180] sm:$0xff]
  %v4947 = vld [vmem:[%s4897 + $0x188] sm:$0xff]
  %v4948 = vld [vmem:[%s4897 + $0x190] sm:$0xff]
  %v4949 = vld [vmem:[%s4897 + $0x198] sm:$0xff]
  %v4950 = vld [vmem:[%s4897 + $0x1a0] sm:$0xff]
  %v4951 = vld [vmem:[%s4897 + $0x1a8] sm:$0xff]
  %v4952 = vld [vmem:[%s4897 + $0x1b0] sm:$0xff]
  %v4953 = vld [vmem:[%s4897 + $0x1b8] sm:$0xff]
  %v4954 = vld [vmem:[%s4897 + $0x1c0] sm:$0xff]
  %v4955 = vld [vmem:[%s4897 + $0x1c8] sm:$0xff]
  %v4956 = vld [vmem:[%s4897 + $0x1d0] sm:$0xff]
  %v4957 = vld [vmem:[%s4897 + $0x1d8] sm:$0xff]
  %v4958 = vld [vmem:[%s4897 + $0x1e0] sm:$0xff]
  %v4959 = vld [vmem:[%s4897 + $0x1e8] sm:$0xff]
  %v4960 = vld [vmem:[%s4897 + $0x1f0] sm:$0xff]
  %v4961 = vld [vmem:[%s4897 + $0x1f8] sm:$0xff]
  %s4962 = scalar_lea.vmem [#allocation2], 1024
  %v4963 = vld [vmem:[%s4962] sm:$0xff]
  %v4964 = vld [vmem:[%s4962 + $0x8] sm:$0xff]
  %v4965 = vld [vmem:[%s4962 + $0x10] sm:$0xff]
  %v4966 = vld [vmem:[%s4962 + $0x18] sm:$0xff]
  %v4967 = vld [vmem:[%s4962 + $0x20] sm:$0xff]
  %v4968 = vld [vmem:[%s4962 + $0x28] sm:$0xff]
  %v4969 = vld [vmem:[%s4962 + $0x30] sm:$0xff]
  %v4970 = vld [vmem:[%s4962 + $0x38] sm:$0xff]
  %v4971 = vld [vmem:[%s4962 + $0x40] sm:$0xff]
  %v4972 = vld [vmem:[%s4962 + $0x48] sm:$0xff]
  %v4973 = vld [vmem:[%s4962 + $0x50] sm:$0xff]
  %v4974 = vld [vmem:[%s4962 + $0x58] sm:$0xff]
  %v4975 = vld [vmem:[%s4962 + $0x60] sm:$0xff]
  %v4976 = vld [vmem:[%s4962 + $0x68] sm:$0xff]
  %v4977 = vld [vmem:[%s4962 + $0x70] sm:$0xff]
  %v4978 = vld [vmem:[%s4962 + $0x78] sm:$0xff]
  %v4979 = vld [vmem:[%s4962 + $0x80] sm:$0xff]
  %v4980 = vld [vmem:[%s4962 + $0x88] sm:$0xff]
  %v4981 = vld [vmem:[%s4962 + $0x90] sm:$0xff]
  %v4982 = vld [vmem:[%s4962 + $0x98] sm:$0xff]
  %v4983 = vld [vmem:[%s4962 + $0xa0] sm:$0xff]
  %v4984 = vld [vmem:[%s4962 + $0xa8] sm:$0xff]
  %v4985 = vld [vmem:[%s4962 + $0xb0] sm:$0xff]
  %v4986 = vld [vmem:[%s4962 + $0xb8] sm:$0xff]
  %v4987 = vld [vmem:[%s4962 + $0xc0] sm:$0xff]
  %v4988 = vld [vmem:[%s4962 + $0xc8] sm:$0xff]
  %v4989 = vld [vmem:[%s4962 + $0xd0] sm:$0xff]
  %v4990 = vld [vmem:[%s4962 + $0xd8] sm:$0xff]
  %v4991 = vld [vmem:[%s4962 + $0xe0] sm:$0xff]
  %v4992 = vld [vmem:[%s4962 + $0xe8] sm:$0xff]
  %v4993 = vld [vmem:[%s4962 + $0xf0] sm:$0xff]
  %v4994 = vld [vmem:[%s4962 + $0xf8] sm:$0xff]
  %v4995 = vld [vmem:[%s4962 + $0x100] sm:$0xff]
  %v4996 = vld [vmem:[%s4962 + $0x108] sm:$0xff]
  %v4997 = vld [vmem:[%s4962 + $0x110] sm:$0xff]
  %v4998 = vld [vmem:[%s4962 + $0x118] sm:$0xff]
  %v4999 = vld [vmem:[%s4962 + $0x120] sm:$0xff]
  %v5000 = vld [vmem:[%s4962 + $0x128] sm:$0xff]
  %v5001 = vld [vmem:[%s4962 + $0x130] sm:$0xff]
  %v5002 = vld [vmem:[%s4962 + $0x138] sm:$0xff]
  %v5003 = vld [vmem:[%s4962 + $0x140] sm:$0xff]
  %v5004 = vld [vmem:[%s4962 + $0x148] sm:$0xff]
  %v5005 = vld [vmem:[%s4962 + $0x150] sm:$0xff]
  %v5006 = vld [vmem:[%s4962 + $0x158] sm:$0xff]
  %v5007 = vld [vmem:[%s4962 + $0x160] sm:$0xff]
  %v5008 = vld [vmem:[%s4962 + $0x168] sm:$0xff]
  %v5009 = vld [vmem:[%s4962 + $0x170] sm:$0xff]
  %v5010 = vld [vmem:[%s4962 + $0x178] sm:$0xff]
  %v5011 = vld [vmem:[%s4962 + $0x180] sm:$0xff]
  %v5012 = vld [vmem:[%s4962 + $0x188] sm:$0xff]
  %v5013 = vld [vmem:[%s4962 + $0x190] sm:$0xff]
  %v5014 = vld [vmem:[%s4962 + $0x198] sm:$0xff]
  %v5015 = vld [vmem:[%s4962 + $0x1a0] sm:$0xff]
  %v5016 = vld [vmem:[%s4962 + $0x1a8] sm:$0xff]
  %v5017 = vld [vmem:[%s4962 + $0x1b0] sm:$0xff]
  %v5018 = vld [vmem:[%s4962 + $0x1b8] sm:$0xff]
  %v5019 = vld [vmem:[%s4962 + $0x1c0] sm:$0xff]
  %v5020 = vld [vmem:[%s4962 + $0x1c8] sm:$0xff]
  %v5021 = vld [vmem:[%s4962 + $0x1d0] sm:$0xff]
  %v5022 = vld [vmem:[%s4962 + $0x1d8] sm:$0xff]
  %v5023 = vld [vmem:[%s4962 + $0x1e0] sm:$0xff]
  %v5024 = vld [vmem:[%s4962 + $0x1e8] sm:$0xff]
  %v5025 = vld [vmem:[%s4962 + $0x1f0] sm:$0xff]
  %v5026 = vld [vmem:[%s4962 + $0x1f8] sm:$0xff]
  %5027 = vmatprep.subr.bf16.mxu0 %v4964
  %5028 = vmatpush1.bf16.msra.mxu0 %v4963
  %5029 = vmatprep.subr.bf16.mxu0 %v4966
  %5030 = vmatpush1.bf16.msra.mxu0 %v4965
  %5031 = vmatprep.subr.bf16.mxu0 %v4968
  %5032 = vmatpush1.bf16.msra.mxu0 %v4967
  %5033 = vmatprep.subr.bf16.mxu0 %v4970
  %5034 = vmatpush1.bf16.msra.mxu0 %v4969
  %5035 = vmatprep.subr.bf16.mxu0 %v4972
  %5036 = vmatpush1.bf16.msra.mxu0 %v4971
  %5037 = vmatprep.subr.bf16.mxu0 %v4974
  %5038 = vmatpush1.bf16.msra.mxu0 %v4973
  %5039 = vmatprep.subr.bf16.mxu0 %v4976
  %5040 = vmatpush1.bf16.msra.mxu0 %v4975
  %5041 = vmatprep.subr.bf16.mxu0 %v4978
  %5042 = vmatpush1.bf16.msra.mxu0 %v4977
  %5043 = vmatprep.subr.bf16.mxu0 %v4980
  %5044 = vmatpush1.bf16.msra.mxu0 %v4979
  %5045 = vmatprep.subr.bf16.mxu0 %v4982
  %5046 = vmatpush1.bf16.msra.mxu0 %v4981
  %5047 = vmatprep.subr.bf16.mxu0 %v4984
  %5048 = vmatpush1.bf16.msra.mxu0 %v4983
  %5049 = vmatprep.subr.bf16.mxu0 %v4986
  %5050 = vmatpush1.bf16.msra.mxu0 %v4985
  %5051 = vmatprep.subr.bf16.mxu0 %v4988
  %5052 = vmatpush1.bf16.msra.mxu0 %v4987
  %5053 = vmatprep.subr.bf16.mxu0 %v4990
  %5054 = vmatpush1.bf16.msra.mxu0 %v4989
  %5055 = vmatprep.subr.bf16.mxu0 %v4992
  %5056 = vmatpush1.bf16.msra.mxu0 %v4991
  %5057 = vmatprep.subr.bf16.mxu0 %v4994
  %5058 = vmatpush1.bf16.msra.mxu0 %v4993
  %5059 = vmatprep.mubr.bf16.mxu0 %v4715
  %5060 = vmatmul.mubr.bf16.gmra.mrb[0].mxu0 %v4714
  %v5061 = vpop.f32.mrb[0].mxu0
  %v5062 = vadd.f32 0.0, %v5061
  %v5063 = vpop.f32.mrb[0].mxu0
  %v5064 = vadd.f32 0.0, %v5063
  %v5065 = vpop.f32.mrb[0].mxu0
  %v5066 = vadd.f32 0.0, %v5065
  %v5067 = vpop.f32.mrb[0].mxu0
  %v5068 = vadd.f32 0.0, %v5067
  %5069 = vmatprep.mubr.bf16.mxu0 %v4719
  %5070 = vmatmul.mubr.bf16.gmra.mrb[0].mxu0 %v4718
  %v5071 = vpop.f32.mrb[0].mxu0
  %v5072 = vadd.f32 0.0, %v5071
  %v5073 = vpop.f32.mrb[0].mxu0
  %v5074 = vadd.f32 0.0, %v5073
  %v5075 = vpop.f32.mrb[0].mxu0
  %v5076 = vadd.f32 0.0, %v5075
  %v5077 = vpop.f32.mrb[0].mxu0
  %v5078 = vadd.f32 0.0, %v5077
  %5079 = vdwg.mxu0
  %5080 = vmatprep.subr.bf16.mxu0 %v4996
  %5081 = vmatpush1.bf16.msra.mxu0 %v4995
  %5082 = vmatprep.subr.bf16.mxu0 %v4998
  %5083 = vmatpush1.bf16.msra.mxu0 %v4997
  %5084 = vmatprep.subr.bf16.mxu0 %v5000
  %5085 = vmatpush1.bf16.msra.mxu0 %v4999
  %5086 = vmatprep.subr.bf16.mxu0 %v5002
  %5087 = vmatpush1.bf16.msra.mxu0 %v5001
  %5088 = vmatprep.subr.bf16.mxu0 %v5004
  %5089 = vmatpush1.bf16.msra.mxu0 %v5003
  %5090 = vmatprep.subr.bf16.mxu0 %v5006
  %5091 = vmatpush1.bf16.msra.mxu0 %v5005
  %5092 = vmatprep.subr.bf16.mxu0 %v5008
  %5093 = vmatpush1.bf16.msra.mxu0 %v5007
  %5094 = vmatprep.subr.bf16.mxu0 %v5010
  %5095 = vmatpush1.bf16.msra.mxu0 %v5009
  %5096 = vmatprep.subr.bf16.mxu0 %v5012
  %5097 = vmatpush1.bf16.msra.mxu0 %v5011
  %5098 = vmatprep.subr.bf16.mxu0 %v5014
  %5099 = vmatpush1.bf16.msra.mxu0 %v5013
  %5100 = vmatprep.subr.bf16.mxu0 %v5016
  %5101 = vmatpush1.bf16.msra.mxu0 %v5015
  %5102 = vmatprep.subr.bf16.mxu0 %v5018
  %5103 = vmatpush1.bf16.msra.mxu0 %v5017
  %5104 = vmatprep.subr.bf16.mxu0 %v5020
  %5105 = vmatpush1.bf16.msra.mxu0 %v5019
  %5106 = vmatprep.subr.bf16.mxu0 %v5022
  %5107 = vmatpush1.bf16.msra.mxu0 %v5021
  %5108 = vmatprep.subr.bf16.mxu0 %v5024
  %5109 = vmatpush1.bf16.msra.mxu0 %v5023
  %5110 = vmatprep.subr.bf16.mxu0 %v5026
  %5111 = vmatpush1.bf16.msra.mxu0 %v5025
  %5112 = vmatprep.mubr.bf16.mxu0 %v4717
  %5113 = vmatmul.mubr.bf16.gmra.mrb[0].mxu0 %v4716
  %v5114 = vpop.f32.mrb[0].mxu0
  %v5115 = vadd.f32 %v5062, %v5114
  %v5116 = vpop.f32.mrb[0].mxu0
  %v5117 = vadd.f32 %v5064, %v5116
  %v5118 = vpop.f32.mrb[0].mxu0
  %v5119 = vadd.f32 %v5066, %v5118
  %v5120 = vpop.f32.mrb[0].mxu0
  %v5121 = vadd.f32 %v5068, %v5120
  %5122 = vmatprep.mubr.bf16.mxu0 %v4721
  %5123 = vmatmul.mubr.bf16.gmra.mrb[0].mxu0 %v4720
  %v5124 = vpop.f32.mrb[0].mxu0
  %v5125 = vadd.f32 %v5072, %v5124
  %v5126 = vpop.f32.mrb[0].mxu0
  %v5127 = vadd.f32 %v5074, %v5126
  %v5128 = vpop.f32.mrb[0].mxu0
  %v5129 = vadd.f32 %v5076, %v5128
  %v5130 = vpop.f32.mrb[0].mxu0
  %v5131 = vadd.f32 %v5078, %v5130
  %5132 = vdwg.mxu0
  %5133 = vmatprep.subr.mxu0 %v4881
  %5134 = vmatpush1.msra.mxu0 %v4879
  %5135 = vmatprep.subr.mxu0 %v4885
  %5136 = vmatpush1.msra.mxu0 %v4883
  %5137 = vmatprep.subr.mxu0 %v4891
  %5138 = vmatpush1.msra.mxu0 %v4889
  %5139 = vmatprep.subr.mxu0 %v4895
  %5140 = vmatpush1.msra.mxu0 %v4893
  %5141 = vmatprep.subr.mxu0 0.0
  %5142 = vmatpush1.msra.mxu0 0.0
  %5143 = vmatprep.subr.mxu0 0.0
  %5144 = vmatpush1.msra.mxu0 0.0
  %5145 = vmatprep.subr.mxu0 0.0
  %5146 = vmatpush1.msra.mxu0 0.0
  %5147 = vmatprep.subr.mxu0 0.0
  %5148 = vmatpush1.msra.mxu0 0.0
  %5149 = vmatprep.subr.mxu0 0.0
  %5150 = vmatpush1.msra.mxu0 0.0
  %5151 = vmatprep.subr.mxu0 0.0
  %5152 = vmatpush1.msra.mxu0 0.0
  %5153 = vmatprep.subr.mxu0 0.0
  %5154 = vmatpush1.msra.mxu0 0.0
  %5155 = vmatprep.subr.mxu0 0.0
  %5156 = vmatpush1.msra.mxu0 0.0
  %5157 = vmatprep.subr.mxu0 0.0
  %5158 = vmatpush1.msra.mxu0 0.0
  %5159 = vmatprep.subr.mxu0 0.0
  %5160 = vmatpush1.msra.mxu0 0.0
  %5161 = vmatprep.subr.mxu0 0.0
  %5162 = vmatpush1.msra.mxu0 0.0
  %5163 = vmatprep.subr.mxu0 0.0
  %5164 = vmatpush1.msra.mxu0 0.0
  %5165 = vmatprep.subr.mxu0 0.0
  %5166 = vmatpush1.msra.mxu0 0.0
  %5167 = vmatprep.subr.mxu0 0.0
  %5168 = vmatpush1.msra.mxu0 0.0
  %5169 = vmatprep.subr.mxu0 0.0
  %5170 = vmatpush1.msra.mxu0 0.0
  %5171 = vmatprep.subr.mxu0 0.0
  %5172 = vmatpush1.msra.mxu0 0.0
  %5173 = vmatprep.subr.mxu0 0.0
  %5174 = vmatpush1.msra.mxu0 0.0
  %5175 = vmatprep.subr.mxu0 0.0
  %5176 = vmatpush1.msra.mxu0 0.0
  %5177 = vmatprep.subr.mxu0 0.0
  %5178 = vmatpush1.msra.mxu0 0.0
  %5179 = vmatprep.subr.mxu0 0.0
  %5180 = vmatpush1.msra.mxu0 0.0
  %5181 = vmatprep.subr.mxu0 0.0
  %5182 = vmatpush1.msra.mxu0 0.0
  %5183 = vmatprep.subr.mxu0 0.0
  %5184 = vmatpush1.msra.mxu0 0.0
  %5185 = vmatprep.subr.mxu0 0.0
  %5186 = vmatpush1.msra.mxu0 0.0
  %5187 = vmatprep.subr.mxu0 0.0
  %5188 = vmatpush1.msra.mxu0 0.0
  %5189 = vmatprep.subr.mxu0 0.0
  %5190 = vmatpush1.msra.mxu0 0.0
  %5191 = vmatprep.subr.mxu0 0.0
  %5192 = vmatpush1.msra.mxu0 0.0
  %5193 = vmatprep.subr.mxu0 0.0
  %5194 = vmatpush1.msra.mxu0 0.0
  %5195 = vmatprep.subr.mxu0 0.0
  %5196 = vmatpush1.msra.mxu0 0.0
  %5197 = vmatprep.mubr.f32.mxu0 0.0
  %5198 = vmatmul.mubr.f32.gmra.mrb[0].mxu0 %v1977
  %v5199 = vpop.f32.mrb[0].mxu0
  %v5200 = vadd.f32 0.0, %v5199
  %v5201 = vpop.f32.mrb[0].mxu0
  %v5202 = vadd.f32 0.0, %v5201
  %5203 = vmatprep.mubr.f32.mxu0 0.0
  %5204 = vmatmul.mubr.f32.gmra.mrb[0].mxu0 %v1980
  %v5205 = vpop.f32.mrb[0].mxu0
  %v5206 = vadd.f32 0.0, %v5205
  %v5207 = vpop.f32.mrb[0].mxu0
  %v5208 = vadd.f32 0.0, %v5207
  %5209 = vmatprep.mubr.f32.mxu0 0.0
  %5210 = vmatmul.mubr.f32.gmra.mrb[0].mxu0 %v1983
  %v5211 = vpop.f32.mrb[0].mxu0
  %v5212 = vadd.f32 0.0, %v5211
  %v5213 = vpop.f32.mrb[0].mxu0
  %v5214 = vadd.f32 0.0, %v5213
  %5215 = vmatprep.mubr.f32.mxu0 0.0
  %5216 = vmatmul.mubr.f32.gmra.mrb[0].mxu0 %v1986
  %v5217 = vpop.f32.mrb[0].mxu0
  %v5218 = vadd.f32 0.0, %v5217
  %v5219 = vpop.f32.mrb[0].mxu0
  %v5220 = vadd.f32 0.0, %v5219
  %5221 = vdwg.mxu0
  %5222 = vmatprep.subr.bf16.mxu0 %v4899
  %5223 = vmatpush1.bf16.msra.mxu0 %v4898
  %5224 = vmatprep.subr.bf16.mxu0 %v4901
  %5225 = vmatpush1.bf16.msra.mxu0 %v4900
  %5226 = vmatprep.subr.bf16.mxu0 %v4903
  %5227 = vmatpush1.bf16.msra.mxu0 %v4902
  %5228 = vmatprep.subr.bf16.mxu0 %v4905
  %5229 = vmatpush1.bf16.msra.mxu0 %v4904
  %5230 = vmatprep.subr.bf16.mxu0 %v4907
  %5231 = vmatpush1.bf16.msra.mxu0 %v4906
  %5232 = vmatprep.subr.bf16.mxu0 %v4909
  %5233 = vmatpush1.bf16.msra.mxu0 %v4908
  %5234 = vmatprep.subr.bf16.mxu0 %v4911
  %5235 = vmatpush1.bf16.msra.mxu0 %v4910
  %5236 = vmatprep.subr.bf16.mxu0 %v4913
  %5237 = vmatpush1.bf16.msra.mxu0 %v4912
  %5238 = vmatprep.subr.bf16.mxu0 %v4915
  %5239 = vmatpush1.bf16.msra.mxu0 %v4914
  %5240 = vmatprep.subr.bf16.mxu0 %v4917
  %5241 = vmatpush1.bf16.msra.mxu0 %v4916
  %5242 = vmatprep.subr.bf16.mxu0 %v4919
  %5243 = vmatpush1.bf16.msra.mxu0 %v4918
  %5244 = vmatprep.subr.bf16.mxu0 %v4921
  %5245 = vmatpush1.bf16.msra.mxu0 %v4920
  %5246 = vmatprep.subr.bf16.mxu0 %v4923
  %5247 = vmatpush1.bf16.msra.mxu0 %v4922
  %5248 = vmatprep.subr.bf16.mxu0 %v4925
  %5249 = vmatpush1.bf16.msra.mxu0 %v4924
  %5250 = vmatprep.subr.bf16.mxu0 %v4927
  %5251 = vmatpush1.bf16.msra.mxu0 %v4926
  %5252 = vmatprep.subr.bf16.mxu0 %v4929
  %5253 = vmatpush1.bf16.msra.mxu0 %v4928
  %5254 = vmatprep.mubr.bf16.mxu0 %v4715
  %5255 = vmatmul.mubr.bf16.gmra.mrb[0].mxu0 %v4714
  %v5256 = vpop.f32.mrb[0].mxu0
  %v5257 = vadd.f32 %v5200, %v5256
  %v5258 = vpop.f32.mrb[0].mxu0
  %v5259 = vadd.f32 %v5202, %v5258
  %v5260 = vpop.f32.mrb[0].mxu0
  %v5261 = vadd.f32 %v5206, %v5260
  %v5262 = vpop.f32.mrb[0].mxu0
  %v5263 = vadd.f32 %v5208, %v5262
  %5264 = vmatprep.mubr.bf16.mxu0 %v4719
  %5265 = vmatmul.mubr.bf16.gmra.mrb[0].mxu0 %v4718
  %v5266 = vpop.f32.mrb[0].mxu0
  %v5267 = vadd.f32 %v5212, %v5266
  %v5268 = vpop.f32.mrb[0].mxu0
  %v5269 = vadd.f32 %v5214, %v5268
  %v5270 = vpop.f32.mrb[0].mxu0
  %v5271 = vadd.f32 %v5218, %v5270
  %v5272 = vpop.f32.mrb[0].mxu0
  %v5273 = vadd.f32 %v5220, %v5272
  %5274 = vdwg.mxu0
  %5275 = vmatprep.subr.bf16.mxu0 %v4931
  %5276 = vmatpush1.bf16.msra.mxu0 %v4930
  %5277 = vmatprep.subr.bf16.mxu0 %v4933
  %5278 = vmatpush1.bf16.msra.mxu0 %v4932
  %5279 = vmatprep.subr.bf16.mxu0 %v4935
  %5280 = vmatpush1.bf16.msra.mxu0 %v4934
  %5281 = vmatprep.subr.bf16.mxu0 %v4937
  %5282 = vmatpush1.bf16.msra.mxu0 %v4936
  %5283 = vmatprep.subr.bf16.mxu0 %v4939
  %5284 = vmatpush1.bf16.msra.mxu0 %v4938
  %5285 = vmatprep.subr.bf16.mxu0 %v4941
  %5286 = vmatpush1.bf16.msra.mxu0 %v4940
  %5287 = vmatprep.subr.bf16.mxu0 %v4943
  %5288 = vmatpush1.bf16.msra.mxu0 %v4942
  %5289 = vmatprep.subr.bf16.mxu0 %v4945
  %5290 = vmatpush1.bf16.msra.mxu0 %v4944
  %5291 = vmatprep.subr.bf16.mxu0 %v4947
  %5292 = vmatpush1.bf16.msra.mxu0 %v4946
  %5293 = vmatprep.subr.bf16.mxu0 %v4949
  %5294 = vmatpush1.bf16.msra.mxu0 %v4948
  %5295 = vmatprep.subr.bf16.mxu0 %v4951
  %5296 = vmatpush1.bf16.msra.mxu0 %v4950
  %5297 = vmatprep.subr.bf16.mxu0 %v4953
  %5298 = vmatpush1.bf16.msra.mxu0 %v4952
  %5299 = vmatprep.subr.bf16.mxu0 %v4955
  %5300 = vmatpush1.bf16.msra.mxu0 %v4954
  %5301 = vmatprep.subr.bf16.mxu0 %v4957
  %5302 = vmatpush1.bf16.msra.mxu0 %v4956
  %5303 = vmatprep.subr.bf16.mxu0 %v4959
  %5304 = vmatpush1.bf16.msra.mxu0 %v4958
  %5305 = vmatprep.subr.bf16.mxu0 %v4961
  %5306 = vmatpush1.bf16.msra.mxu0 %v4960
  %5307 = vmatprep.mubr.bf16.mxu0 %v4717
  %5308 = vmatmul.mubr.bf16.gmra.mrb[0].mxu0 %v4716
  %v5309 = vpop.f32.mrb[0].mxu0
  %v5310 = vadd.f32 %v5257, %v5309
  %v5311 = vpop.f32.mrb[0].mxu0
  %v5312 = vadd.f32 %v5259, %v5311
  %v5313 = vpop.f32.mrb[0].mxu0
  %v5314 = vadd.f32 %v5261, %v5313
  %v5315 = vpop.f32.mrb[0].mxu0
  %v5316 = vadd.f32 %v5263, %v5315
  %5317 = vmatprep.mubr.bf16.mxu0 %v4721
  %5318 = vmatmul.mubr.bf16.gmra.mrb[0].mxu0 %v4720
  %v5319 = vpop.f32.mrb[0].mxu0
  %v5320 = vadd.f32 %v5267, %v5319
  %v5321 = vpop.f32.mrb[0].mxu0
  %v5322 = vadd.f32 %v5269, %v5321
  %v5323 = vpop.f32.mrb[0].mxu0
  %v5324 = vadd.f32 %v5271, %v5323
  %v5325 = vpop.f32.mrb[0].mxu0
  %v5326 = vadd.f32 %v5273, %v5325
  %5327 = vdwg.mxu0
  %5328 = vmatprep.subr.mxu0 %v5117
  %5329 = vmatpush1.msra.mxu0 %v5115
  %5330 = vmatprep.subr.mxu0 %v5121
  %5331 = vmatpush1.msra.mxu0 %v5119
  %5332 = vmatprep.subr.mxu0 %v5127
  %5333 = vmatpush1.msra.mxu0 %v5125
  %5334 = vmatprep.subr.mxu0 %v5131
  %5335 = vmatpush1.msra.mxu0 %v5129
  %5336 = vmatprep.subr.mxu0 0.0
  %5337 = vmatpush1.msra.mxu0 0.0
  %5338 = vmatprep.subr.mxu0 0.0
  %5339 = vmatpush1.msra.mxu0 0.0
  %5340 = vmatprep.subr.mxu0 0.0
  %5341 = vmatpush1.msra.mxu0 0.0
  %5342 = vmatprep.subr.mxu0 0.0
  %5343 = vmatpush1.msra.mxu0 0.0
  %5344 = vmatprep.subr.mxu0 0.0
  %5345 = vmatpush1.msra.mxu0 0.0
  %5346 = vmatprep.subr.mxu0 0.0
  %5347 = vmatpush1.msra.mxu0 0.0
  %5348 = vmatprep.subr.mxu0 0.0
  %5349 = vmatpush1.msra.mxu0 0.0
  %5350 = vmatprep.subr.mxu0 0.0
  %5351 = vmatpush1.msra.mxu0 0.0
  %5352 = vmatprep.subr.mxu0 0.0
  %5353 = vmatpush1.msra.mxu0 0.0
  %5354 = vmatprep.subr.mxu0 0.0
  %5355 = vmatpush1.msra.mxu0 0.0
  %5356 = vmatprep.subr.mxu0 0.0
  %5357 = vmatpush1.msra.mxu0 0.0
  %5358 = vmatprep.subr.mxu0 0.0
  %5359 = vmatpush1.msra.mxu0 0.0
  %5360 = vmatprep.subr.mxu0 0.0
  %5361 = vmatpush1.msra.mxu0 0.0
  %5362 = vmatprep.subr.mxu0 0.0
  %5363 = vmatpush1.msra.mxu0 0.0
  %5364 = vmatprep.subr.mxu0 0.0
  %5365 = vmatpush1.msra.mxu0 0.0
  %5366 = vmatprep.subr.mxu0 0.0
  %5367 = vmatpush1.msra.mxu0 0.0
  %5368 = vmatprep.subr.mxu0 0.0
  %5369 = vmatpush1.msra.mxu0 0.0
  %5370 = vmatprep.subr.mxu0 0.0
  %5371 = vmatpush1.msra.mxu0 0.0
  %5372 = vmatprep.subr.mxu0 0.0
  %5373 = vmatpush1.msra.mxu0 0.0
  %5374 = vmatprep.subr.mxu0 0.0
  %5375 = vmatpush1.msra.mxu0 0.0
  %5376 = vmatprep.subr.mxu0 0.0
  %5377 = vmatpush1.msra.mxu0 0.0
  %5378 = vmatprep.subr.mxu0 0.0
  %5379 = vmatpush1.msra.mxu0 0.0
  %5380 = vmatprep.subr.mxu0 0.0
  %5381 = vmatpush1.msra.mxu0 0.0
  %5382 = vmatprep.subr.mxu0 0.0
  %5383 = vmatpush1.msra.mxu0 0.0
  %5384 = vmatprep.subr.mxu0 0.0
  %5385 = vmatpush1.msra.mxu0 0.0
  %5386 = vmatprep.subr.mxu0 0.0
  %5387 = vmatpush1.msra.mxu0 0.0
  %5388 = vmatprep.subr.mxu0 0.0
  %5389 = vmatpush1.msra.mxu0 0.0
  %5390 = vmatprep.subr.mxu0 0.0
  %5391 = vmatpush1.msra.mxu0 0.0
  %5392 = vmatprep.mubr.f32.mxu0 0.0
  %5393 = vmatmul.mubr.f32.gmra.mrb[0].mxu0 %v2129
  %v5394 = vpop.f32.mrb[0].mxu0
  %v5395 = vadd.f32 0.0, %v5394
  %v5396 = vpop.f32.mrb[0].mxu0
  %v5397 = vadd.f32 0.0, %v5396
  %5398 = vmatprep.mubr.f32.mxu0 0.0
  %5399 = vmatmul.mubr.f32.gmra.mrb[0].mxu0 %v2132
  %v5400 = vpop.f32.mrb[0].mxu0
  %v5401 = vadd.f32 0.0, %v5400
  %v5402 = vpop.f32.mrb[0].mxu0
  %v5403 = vadd.f32 0.0, %v5402
  %5404 = vmatprep.mubr.f32.mxu0 0.0
  %5405 = vmatmul.mubr.f32.gmra.mrb[0].mxu0 %v2135
  %v5406 = vpop.f32.mrb[0].mxu0
  %v5407 = vadd.f32 0.0, %v5406
  %v5408 = vpop.f32.mrb[0].mxu0
  %v5409 = vadd.f32 0.0, %v5408
  %5410 = vmatprep.mubr.f32.mxu0 0.0
  %5411 = vmatmul.mubr.f32.gmra.mrb[0].mxu0 %v2138
  %v5412 = vpop.f32.mrb[0].mxu0
  %v5413 = vadd.f32 0.0, %v5412
  %v5414 = vpop.f32.mrb[0].mxu0
  %v5415 = vadd.f32 0.0, %v5414
  %5416 = vdwg.mxu0
  %v5417 = vadd.f32 %v5310, %v5395
  %v5418 = vadd.f32 %v5312, %v5397
  %v5419 = vadd.f32 %v5314, %v5401
  %v5420 = vadd.f32 %v5316, %v5403
  %v5421 = vadd.f32 %v5320, %v5407
  %v5422 = vadd.f32 %v5322, %v5409
  %v5423 = vadd.f32 %v5324, %v5413
  %v5424 = vadd.f32 %v5326, %v5415
  %v5425 = vld [vmem:[%s11] sm:$0x3]
  %v5427 = vlaneseq
  %v5428 = vshrl.u32 %v5427, 7
  %v5429 = vsub.s32 0, %v5428
  %v5430 = vrot.slane %v5425, %v5429
  %v5431 = vlaneseq
  %v5432 = vshrl.u32 %v5431, 7
  %v5433 = vsub.s32 1, %v5432
  %v5434 = vrot.slane %v5425, %v5433
  %v5437 = vadd.f32 %v5417, %v5430
  %v5438 = vadd.f32 %v5418, %v5434
  %v5439 = vadd.f32 %v5419, %v5430
  %v5440 = vadd.f32 %v5420, %v5434
  %v5441 = vadd.f32 %v5421, %v5430
  %v5442 = vadd.f32 %v5422, %v5434
  %v5443 = vadd.f32 %v5423, %v5430
  %v5444 = vadd.f32 %v5424, %v5434
  %v5445 = vmax.f32 %v5437, 0.0
  %v5446 = vmax.f32 %v5438, 0.0
  %v5447 = vmax.f32 %v5439, 0.0
  %v5448 = vmax.f32 %v5440, 0.0
  %v5449 = vmax.f32 %v5441, 0.0
  %v5450 = vmax.f32 %v5442, 0.0
  %v5451 = vmax.f32 %v5443, 0.0
  %v5452 = vmax.f32 %v5444, 0.0
  %v5453 = vpack.c.bf16 %v5447, %v5445
  %v5454 = vpack.c.bf16 %v5448, %v5446
  %v5455 = vpack.c.bf16 %v5451, %v5449
  %v5456 = vpack.c.bf16 %v5452, %v5450
  %s5457 = smul.u32 %s4722, 30
  %s5458 = smul.u32 %s5457, 1
  %s5459 = sshll.u32 %s5458, 4
  %5460 = dma.done %s1632, %s5459
  %v5461 = vld [vmem:[#allocation3] sm:$0xff]
  %v5462 = vld [vmem:[#allocation3 + $0x8] sm:$0xff]
  %v5463 = vld [vmem:[#allocation3 + $0x10] sm:$0xff]
  %v5464 = vld [vmem:[#allocation3 + $0x18] sm:$0xff]
  %v5465 = vld [vmem:[#allocation3 + $0x20] sm:$0xff]
  %v5466 = vld [vmem:[#allocation3 + $0x28] sm:$0xff]
  %v5467 = vld [vmem:[#allocation3 + $0x30] sm:$0xff]
  %v5468 = vld [vmem:[#allocation3 + $0x38] sm:$0xff]
  %v5469 = vld [vmem:[#allocation3 + $0x40] sm:$0xff]
  %v5470 = vld [vmem:[#allocation3 + $0x48] sm:$0xff]
  %v5471 = vld [vmem:[#allocation3 + $0x50] sm:$0xff]
  %v5472 = vld [vmem:[#allocation3 + $0x58] sm:$0xff]
  %v5473 = vld [vmem:[#allocation3 + $0x60] sm:$0xff]
  %v5474 = vld [vmem:[#allocation3 + $0x68] sm:$0xff]
  %v5475 = vld [vmem:[#allocation3 + $0x70] sm:$0xff]
  %vm5476 = vcmask 916480
  %v5478 = vsel %vm5476, %v5454, 0
  %v5481 = vsel %vm5476, %v5456, 0
  %5483 = vmatprep.subr.bf16.mxu0 0
  %5484 = vmatpush1.bf16.msra.mxu0 %v5461
  %5485 = vmatprep.subr.bf16.mxu0 0
  %5486 = vmatpush1.bf16.msra.mxu0 %v5462
  %5487 = vmatprep.subr.bf16.mxu0 0
  %5488 = vmatpush1.bf16.msra.mxu0 %v5463
  %5489 = vmatprep.subr.bf16.mxu0 0
  %5490 = vmatpush1.bf16.msra.mxu0 %v5464
  %5491 = vmatprep.subr.bf16.mxu0 0
  %5492 = vmatpush1.bf16.msra.mxu0 %v5465
  %5493 = vmatprep.subr.bf16.mxu0 0
  %5494 = vmatpush1.bf16.msra.mxu0 %v5466
  %5495 = vmatprep.subr.bf16.mxu0 0
  %5496 = vmatpush1.bf16.msra.mxu0 %v5467
  %5497 = vmatprep.subr.bf16.mxu0 0
  %5498 = vmatpush1.bf16.msra.mxu0 %v5468
  %5499 = vmatprep.subr.bf16.mxu0 0
  %5500 = vmatpush1.bf16.msra.mxu0 %v5469
  %5501 = vmatprep.subr.bf16.mxu0 0
  %5502 = vmatpush1.bf16.msra.mxu0 %v5470
  %5503 = vmatprep.subr.bf16.mxu0 0
  %5504 = vmatpush1.bf16.msra.mxu0 %v5471
  %5505 = vmatprep.subr.bf16.mxu0 0
  %5506 = vmatpush1.bf16.msra.mxu0 %v5472
  %5507 = vmatprep.subr.bf16.mxu0 0
  %5508 = vmatpush1.bf16.msra.mxu0 %v5473
  %5509 = vmatprep.subr.bf16.mxu0 0
  %5510 = vmatpush1.bf16.msra.mxu0 %v5474
  %5511 = vmatprep.subr.bf16.mxu0 0
  %5512 = vmatpush1.bf16.msra.mxu0 %v5475
  %5513 = vmatprep.subr.bf16.mxu0 0
  %5514 = vmatpush1.bf16.msra.mxu0 0
  %5515 = vmatprep.mubr.bf16.mxu0 %v5478
  %5516 = vmatmul.mubr.bf16.gmra.mrb[0].mxu0 %v5453
  %v5517 = vpop.f32.mrb[0].mxu0
  %v5518 = vadd.f32 0.0, %v5517
  %v5519 = vpop.f32.mrb[0].mxu0
  %v5520 = vpop.f32.mrb[0].mxu0
  %v5521 = vadd.f32 0.0, %v5520
  %v5522 = vpop.f32.mrb[0].mxu0
  %5523 = vmatprep.mubr.bf16.mxu0 %v5481
  %5524 = vmatmul.mubr.bf16.gmra.mrb[0].mxu0 %v5455
  %v5525 = vpop.f32.mrb[0].mxu0
  %v5526 = vadd.f32 0.0, %v5525
  %v5527 = vpop.f32.mrb[0].mxu0
  %v5528 = vpop.f32.mrb[0].mxu0
  %v5529 = vadd.f32 0.0, %v5528
  %v5530 = vpop.f32.mrb[0].mxu0
  %5531 = vdwg.mxu0
  %s5532 = scalar_lea.vmem [#allocation3], 120
  %v5533 = vld [vmem:[%s5532] sm:$0xff]
  %v5534 = vld [vmem:[%s5532 + $0x8] sm:$0xff]
  %v5535 = vld [vmem:[%s5532 + $0x10] sm:$0xff]
  %v5536 = vld [vmem:[%s5532 + $0x18] sm:$0xff]
  %v5537 = vld [vmem:[%s5532 + $0x20] sm:$0xff]
  %v5538 = vld [vmem:[%s5532 + $0x28] sm:$0xff]
  %v5539 = vld [vmem:[%s5532 + $0x30] sm:$0xff]
  %v5540 = vld [vmem:[%s5532 + $0x38] sm:$0xff]
  %v5541 = vld [vmem:[%s5532 + $0x40] sm:$0xff]
  %v5542 = vld [vmem:[%s5532 + $0x48] sm:$0xff]
  %v5543 = vld [vmem:[%s5532 + $0x50] sm:$0xff]
  %v5544 = vld [vmem:[%s5532 + $0x58] sm:$0xff]
  %v5545 = vld [vmem:[%s5532 + $0x60] sm:$0xff]
  %v5546 = vld [vmem:[%s5532 + $0x68] sm:$0xff]
  %v5547 = vld [vmem:[%s5532 + $0x70] sm:$0xff]
  %s5548 = scalar_lea.vmem [#allocation3], 240
  %v5549 = vld [vmem:[%s5548] sm:$0xff]
  %v5550 = vld [vmem:[%s5548 + $0x8] sm:$0xff]
  %v5551 = vld [vmem:[%s5548 + $0x10] sm:$0xff]
  %v5552 = vld [vmem:[%s5548 + $0x18] sm:$0xff]
  %v5553 = vld [vmem:[%s5548 + $0x20] sm:$0xff]
  %v5554 = vld [vmem:[%s5548 + $0x28] sm:$0xff]
  %v5555 = vld [vmem:[%s5548 + $0x30] sm:$0xff]
  %v5556 = vld [vmem:[%s5548 + $0x38] sm:$0xff]
  %v5557 = vld [vmem:[%s5548 + $0x40] sm:$0xff]
  %v5558 = vld [vmem:[%s5548 + $0x48] sm:$0xff]
  %v5559 = vld [vmem:[%s5548 + $0x50] sm:$0xff]
  %v5560 = vld [vmem:[%s5548 + $0x58] sm:$0xff]
  %v5561 = vld [vmem:[%s5548 + $0x60] sm:$0xff]
  %v5562 = vld [vmem:[%s5548 + $0x68] sm:$0xff]
  %v5563 = vld [vmem:[%s5548 + $0x70] sm:$0xff]
  %5564 = vmatprep.subr.bf16.mxu0 0
  %5565 = vmatpush1.bf16.msra.mxu0 %v5549
  %5566 = vmatprep.subr.bf16.mxu0 0
  %5567 = vmatpush1.bf16.msra.mxu0 %v5550
  %5568 = vmatprep.subr.bf16.mxu0 0
  %5569 = vmatpush1.bf16.msra.mxu0 %v5551
  %5570 = vmatprep.subr.bf16.mxu0 0
  %5571 = vmatpush1.bf16.msra.mxu0 %v5552
  %5572 = vmatprep.subr.bf16.mxu0 0
  %5573 = vmatpush1.bf16.msra.mxu0 %v5553
  %5574 = vmatprep.subr.bf16.mxu0 0
  %5575 = vmatpush1.bf16.msra.mxu0 %v5554
  %5576 = vmatprep.subr.bf16.mxu0 0
  %5577 = vmatpush1.bf16.msra.mxu0 %v5555
  %5578 = vmatprep.subr.bf16.mxu0 0
  %5579 = vmatpush1.bf16.msra.mxu0 %v5556
  %5580 = vmatprep.subr.bf16.mxu0 0
  %5581 = vmatpush1.bf16.msra.mxu0 %v5557
  %5582 = vmatprep.subr.bf16.mxu0 0
  %5583 = vmatpush1.bf16.msra.mxu0 %v5558
  %5584 = vmatprep.subr.bf16.mxu0 0
  %5585 = vmatpush1.bf16.msra.mxu0 %v5559
  %5586 = vmatprep.subr.bf16.mxu0 0
  %5587 = vmatpush1.bf16.msra.mxu0 %v5560
  %5588 = vmatprep.subr.bf16.mxu0 0
  %5589 = vmatpush1.bf16.msra.mxu0 %v5561
  %5590 = vmatprep.subr.bf16.mxu0 0
  %5591 = vmatpush1.bf16.msra.mxu0 %v5562
  %5592 = vmatprep.subr.bf16.mxu0 0
  %5593 = vmatpush1.bf16.msra.mxu0 %v5563
  %5594 = vmatprep.subr.bf16.mxu0 0
  %5595 = vmatpush1.bf16.msra.mxu0 0
  %5596 = vmatprep.mubr.bf16.mxu0 %v5478
  %5597 = vmatmul.mubr.bf16.gmra.mrb[0].mxu0 %v5453
  %v5598 = vpop.f32.mrb[0].mxu0
  %v5599 = vadd.f32 0.0, %v5598
  %v5600 = vpop.f32.mrb[0].mxu0
  %v5601 = vpop.f32.mrb[0].mxu0
  %v5602 = vadd.f32 0.0, %v5601
  %v5603 = vpop.f32.mrb[0].mxu0
  %5604 = vmatprep.mubr.bf16.mxu0 %v5481
  %5605 = vmatmul.mubr.bf16.gmra.mrb[0].mxu0 %v5455
  %v5606 = vpop.f32.mrb[0].mxu0
  %v5607 = vadd.f32 0.0, %v5606
  %v5608 = vpop.f32.mrb[0].mxu0
  %v5609 = vpop.f32.mrb[0].mxu0
  %v5610 = vadd.f32 0.0, %v5609
  %v5611 = vpop.f32.mrb[0].mxu0
  %5612 = vdwg.mxu0
  %5613 = vmatprep.subr.mxu0 0.0
  %5614 = vmatpush1.msra.mxu0 %v5518
  %5615 = vmatprep.subr.mxu0 0.0
  %5616 = vmatpush1.msra.mxu0 %v5521
  %5617 = vmatprep.subr.mxu0 0.0
  %5618 = vmatpush1.msra.mxu0 %v5526
  %5619 = vmatprep.subr.mxu0 0.0
  %5620 = vmatpush1.msra.mxu0 %v5529
  %5621 = vmatprep.subr.mxu0 0.0
  %5622 = vmatpush1.msra.mxu0 0.0
  %5623 = vmatprep.subr.mxu0 0.0
  %5624 = vmatpush1.msra.mxu0 0.0
  %5625 = vmatprep.subr.mxu0 0.0
  %5626 = vmatpush1.msra.mxu0 0.0
  %5627 = vmatprep.subr.mxu0 0.0
  %5628 = vmatpush1.msra.mxu0 0.0
  %5629 = vmatprep.subr.mxu0 0.0
  %5630 = vmatpush1.msra.mxu0 0.0
  %5631 = vmatprep.subr.mxu0 0.0
  %5632 = vmatpush1.msra.mxu0 0.0
  %5633 = vmatprep.subr.mxu0 0.0
  %5634 = vmatpush1.msra.mxu0 0.0
  %5635 = vmatprep.subr.mxu0 0.0
  %5636 = vmatpush1.msra.mxu0 0.0
  %5637 = vmatprep.subr.mxu0 0.0
  %5638 = vmatpush1.msra.mxu0 0.0
  %5639 = vmatprep.subr.mxu0 0.0
  %5640 = vmatpush1.msra.mxu0 0.0
  %5641 = vmatprep.subr.mxu0 0.0
  %5642 = vmatpush1.msra.mxu0 0.0
  %5643 = vmatprep.subr.mxu0 0.0
  %5644 = vmatpush1.msra.mxu0 0.0
  %5645 = vmatprep.subr.mxu0 0.0
  %5646 = vmatpush1.msra.mxu0 0.0
  %5647 = vmatprep.subr.mxu0 0.0
  %5648 = vmatpush1.msra.mxu0 0.0
  %5649 = vmatprep.subr.mxu0 0.0
  %5650 = vmatpush1.msra.mxu0 0.0
  %5651 = vmatprep.subr.mxu0 0.0
  %5652 = vmatpush1.msra.mxu0 0.0
  %5653 = vmatprep.subr.mxu0 0.0
  %5654 = vmatpush1.msra.mxu0 0.0
  %5655 = vmatprep.subr.mxu0 0.0
  %5656 = vmatpush1.msra.mxu0 0.0
  %5657 = vmatprep.subr.mxu0 0.0
  %5658 = vmatpush1.msra.mxu0 0.0
  %5659 = vmatprep.subr.mxu0 0.0
  %5660 = vmatpush1.msra.mxu0 0.0
  %5661 = vmatprep.subr.mxu0 0.0
  %5662 = vmatpush1.msra.mxu0 0.0
  %5663 = vmatprep.subr.mxu0 0.0
  %5664 = vmatpush1.msra.mxu0 0.0
  %5665 = vmatprep.subr.mxu0 0.0
  %5666 = vmatpush1.msra.mxu0 0.0
  %5667 = vmatprep.subr.mxu0 0.0
  %5668 = vmatpush1.msra.mxu0 0.0
  %5669 = vmatprep.subr.mxu0 0.0
  %5670 = vmatpush1.msra.mxu0 0.0
  %5671 = vmatprep.subr.mxu0 0.0
  %5672 = vmatpush1.msra.mxu0 0.0
  %5673 = vmatprep.subr.mxu0 0.0
  %5674 = vmatpush1.msra.mxu0 0.0
  %5675 = vmatprep.subr.mxu0 0.0
  %5676 = vmatpush1.msra.mxu0 0.0
  %5677 = vmatprep.mubr.f32.mxu0 0.0
  %5678 = vmatmul.mubr.f32.gmra.mrb[0].mxu0 %v1977
  %v5679 = vpop.f32.mrb[0].mxu0
  %v5680 = vadd.f32 0.0, %v5679
  %v5681 = vpop.f32.mrb[0].mxu0
  %5682 = vmatprep.mubr.f32.mxu0 0.0
  %5683 = vmatmul.mubr.f32.gmra.mrb[0].mxu0 %v1980
  %v5684 = vpop.f32.mrb[0].mxu0
  %v5685 = vadd.f32 0.0, %v5684
  %v5686 = vpop.f32.mrb[0].mxu0
  %5687 = vmatprep.mubr.f32.mxu0 0.0
  %5688 = vmatmul.mubr.f32.gmra.mrb[0].mxu0 %v1983
  %v5689 = vpop.f32.mrb[0].mxu0
  %v5690 = vadd.f32 0.0, %v5689
  %v5691 = vpop.f32.mrb[0].mxu0
  %5692 = vmatprep.mubr.f32.mxu0 0.0
  %5693 = vmatmul.mubr.f32.gmra.mrb[0].mxu0 %v1986
  %v5694 = vpop.f32.mrb[0].mxu0
  %v5695 = vadd.f32 0.0, %v5694
  %v5696 = vpop.f32.mrb[0].mxu0
  %5697 = vdwg.mxu0
  %5698 = vmatprep.subr.bf16.mxu0 0
  %5699 = vmatpush1.bf16.msra.mxu0 %v5533
  %5700 = vmatprep.subr.bf16.mxu0 0
  %5701 = vmatpush1.bf16.msra.mxu0 %v5534
  %5702 = vmatprep.subr.bf16.mxu0 0
  %5703 = vmatpush1.bf16.msra.mxu0 %v5535
  %5704 = vmatprep.subr.bf16.mxu0 0
  %5705 = vmatpush1.bf16.msra.mxu0 %v5536
  %5706 = vmatprep.subr.bf16.mxu0 0
  %5707 = vmatpush1.bf16.msra.mxu0 %v5537
  %5708 = vmatprep.subr.bf16.mxu0 0
  %5709 = vmatpush1.bf16.msra.mxu0 %v5538
  %5710 = vmatprep.subr.bf16.mxu0 0
  %5711 = vmatpush1.bf16.msra.mxu0 %v5539
  %5712 = vmatprep.subr.bf16.mxu0 0
  %5713 = vmatpush1.bf16.msra.mxu0 %v5540
  %5714 = vmatprep.subr.bf16.mxu0 0
  %5715 = vmatpush1.bf16.msra.mxu0 %v5541
  %5716 = vmatprep.subr.bf16.mxu0 0
  %5717 = vmatpush1.bf16.msra.mxu0 %v5542
  %5718 = vmatprep.subr.bf16.mxu0 0
  %5719 = vmatpush1.bf16.msra.mxu0 %v5543
  %5720 = vmatprep.subr.bf16.mxu0 0
  %5721 = vmatpush1.bf16.msra.mxu0 %v5544
  %5722 = vmatprep.subr.bf16.mxu0 0
  %5723 = vmatpush1.bf16.msra.mxu0 %v5545
  %5724 = vmatprep.subr.bf16.mxu0 0
  %5725 = vmatpush1.bf16.msra.mxu0 %v5546
  %5726 = vmatprep.subr.bf16.mxu0 0
  %5727 = vmatpush1.bf16.msra.mxu0 %v5547
  %5728 = vmatprep.subr.bf16.mxu0 0
  %5729 = vmatpush1.bf16.msra.mxu0 0
  %5730 = vmatprep.mubr.bf16.mxu0 %v5478
  %5731 = vmatmul.mubr.bf16.gmra.mrb[0].mxu0 %v5453
  %v5732 = vpop.f32.mrb[0].mxu0
  %v5733 = vadd.f32 %v5680, %v5732
  %v5734 = vpop.f32.mrb[0].mxu0
  %v5735 = vpop.f32.mrb[0].mxu0
  %v5736 = vadd.f32 %v5685, %v5735
  %v5737 = vpop.f32.mrb[0].mxu0
  %5738 = vmatprep.mubr.bf16.mxu0 %v5481
  %5739 = vmatmul.mubr.bf16.gmra.mrb[0].mxu0 %v5455
  %v5740 = vpop.f32.mrb[0].mxu0
  %v5741 = vadd.f32 %v5690, %v5740
  %v5742 = vpop.f32.mrb[0].mxu0
  %v5743 = vpop.f32.mrb[0].mxu0
  %v5744 = vadd.f32 %v5695, %v5743
  %v5745 = vpop.f32.mrb[0].mxu0
  %5746 = vdwg.mxu0
  %5747 = vmatprep.subr.mxu0 0.0
  %5748 = vmatpush1.msra.mxu0 %v5599
  %5749 = vmatprep.subr.mxu0 0.0
  %5750 = vmatpush1.msra.mxu0 %v5602
  %5751 = vmatprep.subr.mxu0 0.0
  %5752 = vmatpush1.msra.mxu0 %v5607
  %5753 = vmatprep.subr.mxu0 0.0
  %5754 = vmatpush1.msra.mxu0 %v5610
  %5755 = vmatprep.subr.mxu0 0.0
  %5756 = vmatpush1.msra.mxu0 0.0
  %5757 = vmatprep.subr.mxu0 0.0
  %5758 = vmatpush1.msra.mxu0 0.0
  %5759 = vmatprep.subr.mxu0 0.0
  %5760 = vmatpush1.msra.mxu0 0.0
  %5761 = vmatprep.subr.mxu0 0.0
  %5762 = vmatpush1.msra.mxu0 0.0
  %5763 = vmatprep.subr.mxu0 0.0
  %5764 = vmatpush1.msra.mxu0 0.0
  %5765 = vmatprep.subr.mxu0 0.0
  %5766 = vmatpush1.msra.mxu0 0.0
  %5767 = vmatprep.subr.mxu0 0.0
  %5768 = vmatpush1.msra.mxu0 0.0
  %5769 = vmatprep.subr.mxu0 0.0
  %5770 = vmatpush1.msra.mxu0 0.0
  %5771 = vmatprep.subr.mxu0 0.0
  %5772 = vmatpush1.msra.mxu0 0.0
  %5773 = vmatprep.subr.mxu0 0.0
  %5774 = vmatpush1.msra.mxu0 0.0
  %5775 = vmatprep.subr.mxu0 0.0
  %5776 = vmatpush1.msra.mxu0 0.0
  %5777 = vmatprep.subr.mxu0 0.0
  %5778 = vmatpush1.msra.mxu0 0.0
  %5779 = vmatprep.subr.mxu0 0.0
  %5780 = vmatpush1.msra.mxu0 0.0
  %5781 = vmatprep.subr.mxu0 0.0
  %5782 = vmatpush1.msra.mxu0 0.0
  %5783 = vmatprep.subr.mxu0 0.0
  %5784 = vmatpush1.msra.mxu0 0.0
  %5785 = vmatprep.subr.mxu0 0.0
  %5786 = vmatpush1.msra.mxu0 0.0
  %5787 = vmatprep.subr.mxu0 0.0
  %5788 = vmatpush1.msra.mxu0 0.0
  %5789 = vmatprep.subr.mxu0 0.0
  %5790 = vmatpush1.msra.mxu0 0.0
  %5791 = vmatprep.subr.mxu0 0.0
  %5792 = vmatpush1.msra.mxu0 0.0
  %5793 = vmatprep.subr.mxu0 0.0
  %5794 = vmatpush1.msra.mxu0 0.0
  %5795 = vmatprep.subr.mxu0 0.0
  %5796 = vmatpush1.msra.mxu0 0.0
  %5797 = vmatprep.subr.mxu0 0.0
  %5798 = vmatpush1.msra.mxu0 0.0
  %5799 = vmatprep.subr.mxu0 0.0
  %5800 = vmatpush1.msra.mxu0 0.0
  %5801 = vmatprep.subr.mxu0 0.0
  %5802 = vmatpush1.msra.mxu0 0.0
  %5803 = vmatprep.subr.mxu0 0.0
  %5804 = vmatpush1.msra.mxu0 0.0
  %5805 = vmatprep.subr.mxu0 0.0
  %5806 = vmatpush1.msra.mxu0 0.0
  %5807 = vmatprep.subr.mxu0 0.0
  %5808 = vmatpush1.msra.mxu0 0.0
  %5809 = vmatprep.subr.mxu0 0.0
  %5810 = vmatpush1.msra.mxu0 0.0
  %5811 = vmatprep.mubr.f32.mxu0 0.0
  %5812 = vmatmul.mubr.f32.gmra.mrb[0].mxu0 %v2129
  %v5813 = vpop.f32.mrb[0].mxu0
  %v5814 = vadd.f32 0.0, %v5813
  %v5815 = vpop.f32.mrb[0].mxu0
  %5816 = vmatprep.mubr.f32.mxu0 0.0
  %5817 = vmatmul.mubr.f32.gmra.mrb[0].mxu0 %v2132
  %v5818 = vpop.f32.mrb[0].mxu0
  %v5819 = vadd.f32 0.0, %v5818
  %v5820 = vpop.f32.mrb[0].mxu0
  %5821 = vmatprep.mubr.f32.mxu0 0.0
  %5822 = vmatmul.mubr.f32.gmra.mrb[0].mxu0 %v2135
  %v5823 = vpop.f32.mrb[0].mxu0
  %v5824 = vadd.f32 0.0, %v5823
  %v5825 = vpop.f32.mrb[0].mxu0
  %5826 = vmatprep.mubr.f32.mxu0 0.0
  %5827 = vmatmul.mubr.f32.gmra.mrb[0].mxu0 %v2138
  %v5828 = vpop.f32.mrb[0].mxu0
  %v5829 = vadd.f32 0.0, %v5828
  %v5830 = vpop.f32.mrb[0].mxu0
  %5831 = vdwg.mxu0
  %v5832 = vadd.f32 %v5733, %v5814
  %v5833 = vadd.f32 %v5736, %v5819
  %v5834 = vadd.f32 %v5741, %v5824
  %v5835 = vadd.f32 %v5744, %v5829
  %v5836 = vld [vmem:[%s13] sm:$0x1]
  %v5838 = vlaneseq
  %v5839 = vshrl.u32 %v5838, 7
  %v5840 = vsub.s32 0, %v5839
  %v5841 = vrot.slane %v5836, %v5840
  %v5843 = vadd.f32 %v5832, %v5841
  %v5844 = vadd.f32 %v5833, %v5841
  %v5845 = vadd.f32 %v5834, %v5841
  %v5846 = vadd.f32 %v5835, %v5841
  %v5847 = vmax.f32 %v5843, 0.0
  %v5848 = vmax.f32 %v5844, 0.0
  %v5849 = vmax.f32 %v5845, 0.0
  %v5850 = vmax.f32 %v5846, 0.0
  %v5851 = vpack.c.bf16 %v5848, %v5847
  %v5852 = vpack.c.bf16 %v5850, %v5849
  %s5853 = smul.u32 %s4722, 8
  %s5854 = smul.u32 %s5853, 1
  %s5855 = sshll.u32 %s5854, 4
  %5856 = dma.done %s1763, %s5855
  %v5857 = vld [vmem:[#allocation4] sm:$0xf]
  %v5858 = vld [vmem:[#allocation4 + $0x4] sm:$0xf]
  %v5859 = vld [vmem:[#allocation4 + $0x8] sm:$0xf]
  %v5860 = vld [vmem:[#allocation4 + $0xc] sm:$0xf]
  %v5861 = vld [vmem:[#allocation4 + $0x10] sm:$0xf]
  %v5862 = vld [vmem:[#allocation4 + $0x14] sm:$0xf]
  %v5863 = vld [vmem:[#allocation4 + $0x18] sm:$0xf]
  %v5864 = vld [vmem:[#allocation4 + $0x1c] sm:$0x3]
  %v5873 = vunpack.c.l.b16 %v5857
  %v5874 = vunpack.c.l.b16 %v5858
  %v5875 = vunpack.c.l.b16 %v5859
  %v5876 = vunpack.c.l.b16 %v5860
  %v5877 = vunpack.c.l.b16 %v5861
  %v5878 = vunpack.c.l.b16 %v5862
  %v5879 = vunpack.c.l.b16 %v5863
  %v5880 = vunpack.c.l.b16 %v5864
  %v5881 = vpack.c.b16 %v5874, %v5873
  %v5882 = vpack.c.b16 %v5876, %v5875
  %v5883 = vpack.c.b16 %v5878, %v5877
  %v5884 = vpack.c.b16 %v5880, %v5879
  %vm5888 = vcmask 490496
  %v5890 = vsel %vm5888, %v5851, 0
  %v5893 = vsel %vm5888, %v5852, 0
  %vm5895 = vcmask 1045504
  %v5897 = vsel %vm5895, %v5884, 0
  %5899 = vmatprep.subr.bf16.mxu0 0
  %5900 = vmatpush1.bf16.msra.mxu0 %v5881
  %5901 = vmatprep.subr.bf16.mxu0 0
  %5902 = vmatpush1.bf16.msra.mxu0 %v5882
  %5903 = vmatprep.subr.bf16.mxu0 0
  %5904 = vmatpush1.bf16.msra.mxu0 %v5883
  %5905 = vmatprep.subr.bf16.mxu0 0
  %5906 = vmatpush1.bf16.msra.mxu0 %v5897
  %5907 = vmatprep.subr.bf16.mxu0 0
  %5908 = vmatpush1.bf16.msra.mxu0 0
  %5909 = vmatprep.subr.bf16.mxu0 0
  %5910 = vmatpush1.bf16.msra.mxu0 0
  %5911 = vmatprep.subr.bf16.mxu0 0
  %5912 = vmatpush1.bf16.msra.mxu0 0
  %5913 = vmatprep.subr.bf16.mxu0 0
  %5914 = vmatpush1.bf16.msra.mxu0 0
  %5915 = vmatprep.subr.bf16.mxu0 0
  %5916 = vmatpush1.bf16.msra.mxu0 0
  %5917 = vmatprep.subr.bf16.mxu0 0
  %5918 = vmatpush1.bf16.msra.mxu0 0
  %5919 = vmatprep.subr.bf16.mxu0 0
  %5920 = vmatpush1.bf16.msra.mxu0 0
  %5921 = vmatprep.subr.bf16.mxu0 0
  %5922 = vmatpush1.bf16.msra.mxu0 0
  %5923 = vmatprep.subr.bf16.mxu0 0
  %5924 = vmatpush1.bf16.msra.mxu0 0
  %5925 = vmatprep.subr.bf16.mxu0 0
  %5926 = vmatpush1.bf16.msra.mxu0 0
  %5927 = vmatprep.subr.bf16.mxu0 0
  %5928 = vmatpush1.bf16.msra.mxu0 0
  %5929 = vmatprep.subr.bf16.mxu0 0
  %5930 = vmatpush1.bf16.msra.mxu0 0
  %5931 = vmatprep.mubr.bf16.mxu0 0
  %5932 = vmatmul.mubr.bf16.gmra.mrb[0].mxu0 %v5890
  %v5933 = vpop.f32.mrb[0].mxu0
  %v5934 = vadd.f32 0.0, %v5933
  %v5935 = vpop.f32.mrb[0].mxu0
  %v5936 = vpop.f32.mrb[0].mxu0
  %v5937 = vadd.f32 0.0, %v5936
  %v5938 = vpop.f32.mrb[0].mxu0
  %5939 = vmatprep.mubr.bf16.mxu0 0
  %5940 = vmatmul.mubr.bf16.gmra.mrb[0].mxu0 %v5893
  %v5941 = vpop.f32.mrb[0].mxu0
  %v5942 = vadd.f32 0.0, %v5941
  %v5943 = vpop.f32.mrb[0].mxu0
  %v5944 = vpop.f32.mrb[0].mxu0
  %v5945 = vadd.f32 0.0, %v5944
  %v5946 = vpop.f32.mrb[0].mxu0
  %5947 = vdwg.mxu0
  %s5948 = scalar_lea.vmem [#allocation4], 32
  %v5949 = vld [vmem:[%s5948] sm:$0xf]
  %v5950 = vld [vmem:[%s5948 + $0x4] sm:$0xf]
  %v5951 = vld [vmem:[%s5948 + $0x8] sm:$0xf]
  %v5952 = vld [vmem:[%s5948 + $0xc] sm:$0xf]
  %v5953 = vld [vmem:[%s5948 + $0x10] sm:$0xf]
  %v5954 = vld [vmem:[%s5948 + $0x14] sm:$0xf]
  %v5955 = vld [vmem:[%s5948 + $0x18] sm:$0xf]
  %v5956 = vld [vmem:[%s5948 + $0x1c] sm:$0x3]
  %s5957 = scalar_lea.vmem [#allocation4], 64
  %v5958 = vld [vmem:[%s5957] sm:$0xf]
  %v5959 = vld [vmem:[%s5957 + $0x4] sm:$0xf]
  %v5960 = vld [vmem:[%s5957 + $0x8] sm:$0xf]
  %v5961 = vld [vmem:[%s5957 + $0xc] sm:$0xf]
  %v5962 = vld [vmem:[%s5957 + $0x10] sm:$0xf]
  %v5963 = vld [vmem:[%s5957 + $0x14] sm:$0xf]
  %v5964 = vld [vmem:[%s5957 + $0x18] sm:$0xf]
  %v5965 = vld [vmem:[%s5957 + $0x1c] sm:$0x3]
  %v5974 = vunpack.c.l.b16 %v5958
  %v5975 = vunpack.c.l.b16 %v5959
  %v5976 = vunpack.c.l.b16 %v5960
  %v5977 = vunpack.c.l.b16 %v5961
  %v5978 = vunpack.c.l.b16 %v5962
  %v5979 = vunpack.c.l.b16 %v5963
  %v5980 = vunpack.c.l.b16 %v5964
  %v5981 = vunpack.c.l.b16 %v5965
  %v5982 = vpack.c.b16 %v5975, %v5974
  %v5983 = vpack.c.b16 %v5977, %v5976
  %v5984 = vpack.c.b16 %v5979, %v5978
  %v5985 = vpack.c.b16 %v5981, %v5980
  %v5990 = vsel %vm5895, %v5985, 0
  %5992 = vmatprep.subr.bf16.mxu0 0
  %5993 = vmatpush1.bf16.msra.mxu0 %v5982
  %5994 = vmatprep.subr.bf16.mxu0 0
  %5995 = vmatpush1.bf16.msra.mxu0 %v5983
  %5996 = vmatprep.subr.bf16.mxu0 0
  %5997 = vmatpush1.bf16.msra.mxu0 %v5984
  %5998 = vmatprep.subr.bf16.mxu0 0
  %5999 = vmatpush1.bf16.msra.mxu0 %v5990
  %6000 = vmatprep.subr.bf16.mxu0 0
  %6001 = vmatpush1.bf16.msra.mxu0 0
  %6002 = vmatprep.subr.bf16.mxu0 0
  %6003 = vmatpush1.bf16.msra.mxu0 0
  %6004 = vmatprep.subr.bf16.mxu0 0
  %6005 = vmatpush1.bf16.msra.mxu0 0
  %6006 = vmatprep.subr.bf16.mxu0 0
  %6007 = vmatpush1.bf16.msra.mxu0 0
  %6008 = vmatprep.subr.bf16.mxu0 0
  %6009 = vmatpush1.bf16.msra.mxu0 0
  %6010 = vmatprep.subr.bf16.mxu0 0
  %6011 = vmatpush1.bf16.msra.mxu0 0
  %6012 = vmatprep.subr.bf16.mxu0 0
  %6013 = vmatpush1.bf16.msra.mxu0 0
  %6014 = vmatprep.subr.bf16.mxu0 0
  %6015 = vmatpush1.bf16.msra.mxu0 0
  %6016 = vmatprep.subr.bf16.mxu0 0
  %6017 = vmatpush1.bf16.msra.mxu0 0
  %6018 = vmatprep.subr.bf16.mxu0 0
  %6019 = vmatpush1.bf16.msra.mxu0 0
  %6020 = vmatprep.subr.bf16.mxu0 0
  %6021 = vmatpush1.bf16.msra.mxu0 0
  %6022 = vmatprep.subr.bf16.mxu0 0
  %6023 = vmatpush1.bf16.msra.mxu0 0
  %6024 = vmatprep.mubr.bf16.mxu0 0
  %6025 = vmatmul.mubr.bf16.gmra.mrb[0].mxu0 %v5890
  %v6026 = vpop.f32.mrb[0].mxu0
  %v6027 = vadd.f32 0.0, %v6026
  %v6028 = vpop.f32.mrb[0].mxu0
  %v6029 = vpop.f32.mrb[0].mxu0
  %v6030 = vadd.f32 0.0, %v6029
  %v6031 = vpop.f32.mrb[0].mxu0
  %6032 = vmatprep.mubr.bf16.mxu0 0
  %6033 = vmatmul.mubr.bf16.gmra.mrb[0].mxu0 %v5893
  %v6034 = vpop.f32.mrb[0].mxu0
  %v6035 = vadd.f32 0.0, %v6034
  %v6036 = vpop.f32.mrb[0].mxu0
  %v6037 = vpop.f32.mrb[0].mxu0
  %v6038 = vadd.f32 0.0, %v6037
  %v6039 = vpop.f32.mrb[0].mxu0
  %6040 = vdwg.mxu0
  %6041 = vmatprep.subr.mxu0 0.0
  %6042 = vmatpush1.msra.mxu0 %v5934
  %6043 = vmatprep.subr.mxu0 0.0
  %6044 = vmatpush1.msra.mxu0 %v5937
  %6045 = vmatprep.subr.mxu0 0.0
  %6046 = vmatpush1.msra.mxu0 %v5942
  %6047 = vmatprep.subr.mxu0 0.0
  %6048 = vmatpush1.msra.mxu0 %v5945
  %6049 = vmatprep.subr.mxu0 0.0
  %6050 = vmatpush1.msra.mxu0 0.0
  %6051 = vmatprep.subr.mxu0 0.0
  %6052 = vmatpush1.msra.mxu0 0.0
  %6053 = vmatprep.subr.mxu0 0.0
  %6054 = vmatpush1.msra.mxu0 0.0
  %6055 = vmatprep.subr.mxu0 0.0
  %6056 = vmatpush1.msra.mxu0 0.0
  %6057 = vmatprep.subr.mxu0 0.0
  %6058 = vmatpush1.msra.mxu0 0.0
  %6059 = vmatprep.subr.mxu0 0.0
  %6060 = vmatpush1.msra.mxu0 0.0
  %6061 = vmatprep.subr.mxu0 0.0
  %6062 = vmatpush1.msra.mxu0 0.0
  %6063 = vmatprep.subr.mxu0 0.0
  %6064 = vmatpush1.msra.mxu0 0.0
  %6065 = vmatprep.subr.mxu0 0.0
  %6066 = vmatpush1.msra.mxu0 0.0
  %6067 = vmatprep.subr.mxu0 0.0
  %6068 = vmatpush1.msra.mxu0 0.0
  %6069 = vmatprep.subr.mxu0 0.0
  %6070 = vmatpush1.msra.mxu0 0.0
  %6071 = vmatprep.subr.mxu0 0.0
  %6072 = vmatpush1.msra.mxu0 0.0
  %6073 = vmatprep.subr.mxu0 0.0
  %6074 = vmatpush1.msra.mxu0 0.0
  %6075 = vmatprep.subr.mxu0 0.0
  %6076 = vmatpush1.msra.mxu0 0.0
  %6077 = vmatprep.subr.mxu0 0.0
  %6078 = vmatpush1.msra.mxu0 0.0
  %6079 = vmatprep.subr.mxu0 0.0
  %6080 = vmatpush1.msra.mxu0 0.0
  %6081 = vmatprep.subr.mxu0 0.0
  %6082 = vmatpush1.msra.mxu0 0.0
  %6083 = vmatprep.subr.mxu0 0.0
  %6084 = vmatpush1.msra.mxu0 0.0
  %6085 = vmatprep.subr.mxu0 0.0
  %6086 = vmatpush1.msra.mxu0 0.0
  %6087 = vmatprep.subr.mxu0 0.0
  %6088 = vmatpush1.msra.mxu0 0.0
  %6089 = vmatprep.subr.mxu0 0.0
  %6090 = vmatpush1.msra.mxu0 0.0
  %6091 = vmatprep.subr.mxu0 0.0
  %6092 = vmatpush1.msra.mxu0 0.0
  %6093 = vmatprep.subr.mxu0 0.0
  %6094 = vmatpush1.msra.mxu0 0.0
  %6095 = vmatprep.subr.mxu0 0.0
  %6096 = vmatpush1.msra.mxu0 0.0
  %6097 = vmatprep.subr.mxu0 0.0
  %6098 = vmatpush1.msra.mxu0 0.0
  %6099 = vmatprep.subr.mxu0 0.0
  %6100 = vmatpush1.msra.mxu0 0.0
  %6101 = vmatprep.subr.mxu0 0.0
  %6102 = vmatpush1.msra.mxu0 0.0
  %6103 = vmatprep.subr.mxu0 0.0
  %6104 = vmatpush1.msra.mxu0 0.0
  %6105 = vmatprep.mubr.f32.mxu0 0.0
  %6106 = vmatmul.mubr.f32.gmra.mrb[0].mxu0 %v1977
  %v6107 = vpop.f32.mrb[0].mxu0
  %v6108 = vadd.f32 0.0, %v6107
  %v6109 = vpop.f32.mrb[0].mxu0
  %6110 = vmatprep.mubr.f32.mxu0 0.0
  %6111 = vmatmul.mubr.f32.gmra.mrb[0].mxu0 %v1980
  %v6112 = vpop.f32.mrb[0].mxu0
  %v6113 = vadd.f32 0.0, %v6112
  %v6114 = vpop.f32.mrb[0].mxu0
  %6115 = vmatprep.mubr.f32.mxu0 0.0
  %6116 = vmatmul.mubr.f32.gmra.mrb[0].mxu0 %v1983
  %v6117 = vpop.f32.mrb[0].mxu0
  %v6118 = vadd.f32 0.0, %v6117
  %v6119 = vpop.f32.mrb[0].mxu0
  %6120 = vmatprep.mubr.f32.mxu0 0.0
  %6121 = vmatmul.mubr.f32.gmra.mrb[0].mxu0 %v1986
  %v6122 = vpop.f32.mrb[0].mxu0
  %v6123 = vadd.f32 0.0, %v6122
  %v6124 = vpop.f32.mrb[0].mxu0
  %6125 = vdwg.mxu0
  %v6134 = vunpack.c.l.b16 %v5949
  %v6135 = vunpack.c.l.b16 %v5950
  %v6136 = vunpack.c.l.b16 %v5951
  %v6137 = vunpack.c.l.b16 %v5952
  %v6138 = vunpack.c.l.b16 %v5953
  %v6139 = vunpack.c.l.b16 %v5954
  %v6140 = vunpack.c.l.b16 %v5955
  %v6141 = vunpack.c.l.b16 %v5956
  %v6142 = vpack.c.b16 %v6135, %v6134
  %v6143 = vpack.c.b16 %v6137, %v6136
  %v6144 = vpack.c.b16 %v6139, %v6138
  %v6145 = vpack.c.b16 %v6141, %v6140
  %v6150 = vsel %vm5895, %v6145, 0
  %6152 = vmatprep.subr.bf16.mxu0 0
  %6153 = vmatpush1.bf16.msra.mxu0 %v6142
  %6154 = vmatprep.subr.bf16.mxu0 0
  %6155 = vmatpush1.bf16.msra.mxu0 %v6143
  %6156 = vmatprep.subr.bf16.mxu0 0
  %6157 = vmatpush1.bf16.msra.mxu0 %v6144
  %6158 = vmatprep.subr.bf16.mxu0 0
  %6159 = vmatpush1.bf16.msra.mxu0 %v6150
  %6160 = vmatprep.subr.bf16.mxu0 0
  %6161 = vmatpush1.bf16.msra.mxu0 0
  %6162 = vmatprep.subr.bf16.mxu0 0
  %6163 = vmatpush1.bf16.msra.mxu0 0
  %6164 = vmatprep.subr.bf16.mxu0 0
  %6165 = vmatpush1.bf16.msra.mxu0 0
  %6166 = vmatprep.subr.bf16.mxu0 0
  %6167 = vmatpush1.bf16.msra.mxu0 0
  %6168 = vmatprep.subr.bf16.mxu0 0
  %6169 = vmatpush1.bf16.msra.mxu0 0
  %6170 = vmatprep.subr.bf16.mxu0 0
  %6171 = vmatpush1.bf16.msra.mxu0 0
  %6172 = vmatprep.subr.bf16.mxu0 0
  %6173 = vmatpush1.bf16.msra.mxu0 0
  %6174 = vmatprep.subr.bf16.mxu0 0
  %6175 = vmatpush1.bf16.msra.mxu0 0
  %6176 = vmatprep.subr.bf16.mxu0 0
  %6177 = vmatpush1.bf16.msra.mxu0 0
  %6178 = vmatprep.subr.bf16.mxu0 0
  %6179 = vmatpush1.bf16.msra.mxu0 0
  %6180 = vmatprep.subr.bf16.mxu0 0
  %6181 = vmatpush1.bf16.msra.mxu0 0
  %6182 = vmatprep.subr.bf16.mxu0 0
  %6183 = vmatpush1.bf16.msra.mxu0 0
  %6184 = vmatprep.mubr.bf16.mxu0 0
  %6185 = vmatmul.mubr.bf16.gmra.mrb[0].mxu0 %v5890
  %v6186 = vpop.f32.mrb[0].mxu0
  %v6187 = vadd.f32 %v6108, %v6186
  %v6188 = vpop.f32.mrb[0].mxu0
  %v6189 = vpop.f32.mrb[0].mxu0
  %v6190 = vadd.f32 %v6113, %v6189
  %v6191 = vpop.f32.mrb[0].mxu0
  %6192 = vmatprep.mubr.bf16.mxu0 0
  %6193 = vmatmul.mubr.bf16.gmra.mrb[0].mxu0 %v5893
  %v6194 = vpop.f32.mrb[0].mxu0
  %v6195 = vadd.f32 %v6118, %v6194
  %v6196 = vpop.f32.mrb[0].mxu0
  %v6197 = vpop.f32.mrb[0].mxu0
  %v6198 = vadd.f32 %v6123, %v6197
  %v6199 = vpop.f32.mrb[0].mxu0
  %6200 = vdwg.mxu0
  %6201 = vmatprep.subr.mxu0 0.0
  %6202 = vmatpush1.msra.mxu0 %v6027
  %6203 = vmatprep.subr.mxu0 0.0
  %6204 = vmatpush1.msra.mxu0 %v6030
  %6205 = vmatprep.subr.mxu0 0.0
  %6206 = vmatpush1.msra.mxu0 %v6035
  %6207 = vmatprep.subr.mxu0 0.0
  %6208 = vmatpush1.msra.mxu0 %v6038
  %6209 = vmatprep.subr.mxu0 0.0
  %6210 = vmatpush1.msra.mxu0 0.0
  %6211 = vmatprep.subr.mxu0 0.0
  %6212 = vmatpush1.msra.mxu0 0.0
  %6213 = vmatprep.subr.mxu0 0.0
  %6214 = vmatpush1.msra.mxu0 0.0
  %6215 = vmatprep.subr.mxu0 0.0
  %6216 = vmatpush1.msra.mxu0 0.0
  %6217 = vmatprep.subr.mxu0 0.0
  %6218 = vmatpush1.msra.mxu0 0.0
  %6219 = vmatprep.subr.mxu0 0.0
  %6220 = vmatpush1.msra.mxu0 0.0
  %6221 = vmatprep.subr.mxu0 0.0
  %6222 = vmatpush1.msra.mxu0 0.0
  %6223 = vmatprep.subr.mxu0 0.0
  %6224 = vmatpush1.msra.mxu0 0.0
  %6225 = vmatprep.subr.mxu0 0.0
  %6226 = vmatpush1.msra.mxu0 0.0
  %6227 = vmatprep.subr.mxu0 0.0
  %6228 = vmatpush1.msra.mxu0 0.0
  %6229 = vmatprep.subr.mxu0 0.0
  %6230 = vmatpush1.msra.mxu0 0.0
  %6231 = vmatprep.subr.mxu0 0.0
  %6232 = vmatpush1.msra.mxu0 0.0
  %6233 = vmatprep.subr.mxu0 0.0
  %6234 = vmatpush1.msra.mxu0 0.0
  %6235 = vmatprep.subr.mxu0 0.0
  %6236 = vmatpush1.msra.mxu0 0.0
  %6237 = vmatprep.subr.mxu0 0.0
  %6238 = vmatpush1.msra.mxu0 0.0
  %6239 = vmatprep.subr.mxu0 0.0
  %6240 = vmatpush1.msra.mxu0 0.0
  %6241 = vmatprep.subr.mxu0 0.0
  %6242 = vmatpush1.msra.mxu0 0.0
  %6243 = vmatprep.subr.mxu0 0.0
  %6244 = vmatpush1.msra.mxu0 0.0
  %6245 = vmatprep.subr.mxu0 0.0
  %6246 = vmatpush1.msra.mxu0 0.0
  %6247 = vmatprep.subr.mxu0 0.0
  %6248 = vmatpush1.msra.mxu0 0.0
  %6249 = vmatprep.subr.mxu0 0.0
  %6250 = vmatpush1.msra.mxu0 0.0
  %6251 = vmatprep.subr.mxu0 0.0
  %6252 = vmatpush1.msra.mxu0 0.0
  %6253 = vmatprep.subr.mxu0 0.0
  %6254 = vmatpush1.msra.mxu0 0.0
  %6255 = vmatprep.subr.mxu0 0.0
  %6256 = vmatpush1.msra.mxu0 0.0
  %6257 = vmatprep.subr.mxu0 0.0
  %6258 = vmatpush1.msra.mxu0 0.0
  %6259 = vmatprep.subr.mxu0 0.0
  %6260 = vmatpush1.msra.mxu0 0.0
  %6261 = vmatprep.subr.mxu0 0.0
  %6262 = vmatpush1.msra.mxu0 0.0
  %6263 = vmatprep.subr.mxu0 0.0
  %6264 = vmatpush1.msra.mxu0 0.0
  %6265 = vmatprep.mubr.f32.mxu0 0.0
  %6266 = vmatmul.mubr.f32.gmra.mrb[0].mxu0 %v2129
  %v6267 = vpop.f32.mrb[0].mxu0
  %v6268 = vadd.f32 0.0, %v6267
  %v6269 = vpop.f32.mrb[0].mxu0
  %6270 = vmatprep.mubr.f32.mxu0 0.0
  %6271 = vmatmul.mubr.f32.gmra.mrb[0].mxu0 %v2132
  %v6272 = vpop.f32.mrb[0].mxu0
  %v6273 = vadd.f32 0.0, %v6272
  %v6274 = vpop.f32.mrb[0].mxu0
  %6275 = vmatprep.mubr.f32.mxu0 0.0
  %6276 = vmatmul.mubr.f32.gmra.mrb[0].mxu0 %v2135
  %v6277 = vpop.f32.mrb[0].mxu0
  %v6278 = vadd.f32 0.0, %v6277
  %v6279 = vpop.f32.mrb[0].mxu0
  %6280 = vmatprep.mubr.f32.mxu0 0.0
  %6281 = vmatmul.mubr.f32.gmra.mrb[0].mxu0 %v2138
  %v6282 = vpop.f32.mrb[0].mxu0
  %v6283 = vadd.f32 0.0, %v6282
  %v6284 = vpop.f32.mrb[0].mxu0
  %6285 = vdwg.mxu0
  %v6286 = vadd.f32 %v6187, %v6268
  %v6287 = vadd.f32 %v6190, %v6273
  %v6288 = vadd.f32 %v6195, %v6278
  %v6289 = vadd.f32 %v6198, %v6283
  %v6290 = vld [vmem:[%s15] sm:$0x1]
  %v6292 = vlaneseq
  %v6293 = vshrl.u32 %v6292, 7
  %v6294 = vsub.s32 0, %v6293
  %v6295 = vrot.slane %v6290, %v6294
  %v6297 = vadd.f32 %v6286, %v6295
  %v6298 = vadd.f32 %v6287, %v6295
  %v6299 = vadd.f32 %v6288, %v6295
  %v6300 = vadd.f32 %v6289, %v6295
  %v6301 = vmax.f32 %v6297, 0.0
  %v6302 = vmax.f32 %v6298, 0.0
  %v6303 = vmax.f32 %v6299, 0.0
  %v6304 = vmax.f32 %v6300, 0.0
  %vm6305 = vcmask 121856
  %6306 = vst.msk [vmem:[%s16] sm:$0xff] %vm6305, %v6301
  %6307 = vst.msk [vmem:[%s16 + $0x8] sm:$0xff] %vm6305, %v6302
  %6308 = vst.msk [vmem:[%s16 + $0x10] sm:$0xff] %vm6305, %v6303
  %6309 = vst.msk [vmem:[%s16 + $0x18] sm:$0xff] %vm6305, %v6304
  // Predicated region
  $region159: #{simple_conv_forward.1} parent=0 // pred_check
    _
  $region160: #{simple_conv_forward.1} parent=0 // pred_check_branch
    %6311 = sbr.rel (0) target = $region162
  $region161: #{simple_conv_forward.1} parent=0 // pred_region
    _
  $region162: #{simple_conv_forward.1} parent=0 // pred_fallthru
    _
  // Predicated region
  $region163: #{simple_conv_forward.1} parent=0 // pred_check
    _
  $region164: #{simple_conv_forward.1} parent=0 // pred_check_branch
    %6313 = sbr.rel (0) target = $region166
  $region165: #{simple_conv_forward.1} parent=0 // pred_region
    _
  $region166: #{simple_conv_forward.1} parent=0 // pred_fallthru
    _
  %6314 = vsyncmov [#allocation5]
  %s6315 = vpop.sfrf %6314
  %p6316 = scmp.eq.s32.totalorder %s6315, 0
  %p6317 = pneg %p6316
  %6319 = shalt.err (%p6317)
  %s6320 = scalar_lea.sflag [#allocation5], 1
  %6321 = vsyncmov %s6320
  %s6322 = vpop.sfrf %6321
  %p6323 = scmp.eq.s32.totalorder %s6322, 0
  %p6324 = pneg %p6323
  %6326 = shalt.err (%p6324)
  %s6327 = scalar_lea.sflag [#allocation5], 2
  %6328 = vsyncmov %s6327
  %s6329 = vpop.sfrf %6328
  %p6330 = scmp.eq.s32.totalorder %s6329, 0
  %p6331 = pneg %p6330
  %6333 = shalt.err (%p6331)

</llo_original>
